<compile_context>
chip_gen: v6e
topology: v6e:2x2x1
jax: 0.10.0
libtpu: 0.0.40
codegen_flags: <defaults>
</compile_context>

<pallas_src>
import functools

import jax
import jax.numpy as jnp
from jax import lax
from jax.experimental import pallas as pl
from jax.experimental.pallas import tpu as pltpu

C1 = 64        # conv1 out channels
C2 = 128       # conv2 out channels
FC1 = 1024     # fc1 features
OUT_PAD = 128  # lane-dense padding of the fc2 output
EPS = 1e-5
NEG = 0.2      # LeakyReLU slope


def _physical_vmem_bytes():
    """Physical VMEM of the local part (128 MiB v5e/v6e, 64 MiB v7x)."""
    try:
        info = pltpu.get_tpu_info()
        for attr in ("vmem_capacity_bytes", "vmem_size_bytes", "vmem_bytes"):
            v = getattr(info, attr, None)
            if v:
                return int(v)
    except Exception:
        pass
    return 64 << 20   # conservative fallback (v7x floor)


# ----------------------------------------------------------------------------
# Fused kernel factory
# ----------------------------------------------------------------------------

def _make_kernel(*, n, oh2, block_pos):
    hp = oh2 + 1            # parity-buffer spatial extent (incl. conv2 zero pad)
    p_sp = oh2 * oh2        # conv2 output spatial positions
    m2 = p_sp * n           # conv2 GEMM rows (== conv1 rows per parity group)
    kc = 4 * C1             # packed conv2 contraction (4 taps x 64 cin)

    def kernel(p1_ref, w1_ref, b1_ref,
               w2_ref, b2_ref, g2_ref, bt2_ref,
               wf1_ref, bf1_ref, gf1_ref, btf1_ref,
               wf2_ref, bf2_ref,
               out_ref,
               buf0, buf1, buf2, buf3, a2_ref, acc3_ref):
        f32, bf16 = jnp.float32, jnp.bfloat16
        bufs = (buf0, buf1, buf2, buf3)
        k = pl.program_id(0)

        # ---------------------------------------------------------- grid k == 0
        # conv1 -> conv2 -> BatchNorm2d -> LeakyReLU, repacked for the fc1 GEMM.
        # Runs once and overlaps with the DMA of the first streamed wf1 blocks.
        @pl.when(k == 0)
        def _conv_phase():
            # conv1 as one im2col GEMM; rows ordered (parity group, i, j, image).
            h1 = jnp.dot(p1_ref[...], w1_ref[...], preferred_element_type=f32)
            h1 = h1 + b1_ref[...]
            h1 = jnp.maximum(h1, NEG * h1).astype(bf16)     # LeakyReLU, cast once

            # Scatter conv1 activations into 4 parity-deinterleaved zero-padded
            # bf16 buffers.  Only each buffer's single pad row / pad column is
            # zeroed; the interior is fully overwritten by the scatter.
            for g in range(4):
                a, b = g // 2, g % 2          # parity of the conv2-padded coords
                i0, j0 = 1 - a, 1 - b
                pr = 0 if i0 == 1 else hp - 1      # the single unwritten row
                pc = 0 if j0 == 1 else hp - 1      # the single unwritten column
                buf = bufs[g]
                buf[pr:pr + 1, :, :] = jnp.zeros((1, hp * n, C1), bf16)
                buf[:, pc * n:(pc + 1) * n, :] = jnp.zeros((hp, n, C1), bf16)
                chunk = h1[g * m2:(g + 1) * m2, :].reshape(oh2, oh2 * n, C1)
                buf[i0:i0 + oh2, j0 * n:(j0 + oh2) * n, :] = chunk

            # conv2: 4 tap-packed matmuls (K = 4*C1 = 256) accumulated in f32.
            # The 4 taps sharing window offset (rh, rw) are concatenated along
            # the contraction dim; w2 is pre-packed to match (see init_params).
            acc2 = jnp.zeros((m2, C2), f32)
            for q in range(4):
                rh, rw = q // 2, q % 2
                blk = jnp.concatenate(
                    [b_[rh:rh + oh2, rw * n:(rw + oh2) * n, :] for b_ in bufs],
                    axis=-1).reshape(m2, kc)
                acc2 = acc2 + jnp.dot(blk, w2_ref[q], preferred_element_type=f32)

            # BatchNorm2d (training-mode batch stats over all N*H*W rows).
            y2 = acc2 + b2_ref[...]
            mu2 = jnp.mean(y2, axis=0, keepdims=True)
            d2 = y2 - mu2
            var2 = jnp.mean(d2 * d2, axis=0, keepdims=True)
            z2 = d2 * lax.rsqrt(var2 + EPS) * g2_ref[...] + bt2_ref[...]
            act2 = jnp.maximum(z2, NEG * z2).astype(bf16)    # LeakyReLU

            # Repack to batch-major (image, p*C2 + c) K-blocks so fc1 becomes a
            # long-K GEMM (the PyTorch NCHW-flatten transpose is folded into
            # wf1's row order, so this is a pure layout copy).
            for p in range(p_sp):
                kb, lo = p // block_pos, (p % block_pos) * C2
                a2_ref[kb, :, lo:lo + C2] = act2[p * n:(p + 1) * n, :]

            acc3_ref[...] = jnp.zeros_like(acc3_ref)

        # ------------------------------------------------------------ every step
        # fc1: one (N, BK) x (BK, FC1) K-block; wf1 streamed by the pipeline.
        acc3_ref[...] += jnp.dot(a2_ref[k], wf1_ref[...],
                                 preferred_element_type=f32)

        # ------------------------------------------------------------- last step
        @pl.when(k == pl.num_programs(0) - 1)
        def _epilogue():
            # BatchNorm1d (batch stats over N rows) + LeakyReLU.
            y3 = acc3_ref[...] + bf1_ref[...]
            mu3 = jnp.mean(y3, axis=0, keepdims=True)
            d3 = y3 - mu3
            var3 = jnp.mean(d3 * d3, axis=0, keepdims=True)
            z3 = d3 * lax.rsqrt(var3 + EPS) * gf1_ref[...] + btf1_ref[...]
            h3 = jnp.maximum(z3, NEG * z3).astype(bf16)
            # fc2 + sigmoid into a lane-dense (N, 128) slab.
            y4 = jnp.dot(h3, wf2_ref[...], preferred_element_type=f32) + bf2_ref[...]
            out_ref[...] = jax.nn.sigmoid(y4)

    return kernel


# ----------------------------------------------------------------------------
# Glue: conv1 im2col on the raw (tiny) input, rows ordered for the kernel
# ----------------------------------------------------------------------------

def _conv1_patches_parity(x_nhwc):
    """im2col for conv1 (k=4, s=2, p=1).  Rows are grouped by the parity of the
    conv2-padded coordinate and ordered (group, i, j, image) so the kernel can
    scatter conv1's output into its parity buffers with contiguous slices.
    Patch columns are in (kh, kw, cin) order."""
    n, s, _, cin = x_nhwc.shape
    oh1 = s // 2
    xp = jnp.pad(x_nhwc, ((0, 0), (1, 1), (1, 1), (0, 0)))
    taps = []
    for kh in range(4):
        for kw in range(4):
            taps.append(xp[:, kh:kh + 2 * oh1:2, kw:kw + 2 * oh1:2, :])
    pat = jnp.stack(taps, axis=3).reshape(n, oh1, oh1, 16 * cin)
    chunks = []
    for a in (0, 1):                       # parity of padded row index
        for b in (0, 1):                   # parity of padded col index
            sub = pat[:, (1 - a)::2, (1 - b)::2, :]        # (n, gh, gw, 16*cin)
            sub = jnp.transpose(sub, (1, 2, 0, 3))         # (gh, gw, n, 16*cin)
            chunks.append(sub.reshape(-1, 16 * cin))
    return jnp.concatenate(chunks, axis=0)


# ----------------------------------------------------------------------------
# pallas_call wrapper
# ----------------------------------------------------------------------------

def _fused_call(p1, params, *, n, s, cin):
    if s % 4 != 0:
        raise NotImplementedError("input_size must be a multiple of 4")
    oh2 = s // 4
    hp = oh2 + 1
    p_sp = oh2 * oh2
    m2 = p_sp * n
    k_total = p_sp * C2
    if (oh2 * n) % 8 != 0:
        raise NotImplementedError("need (input_size // 4) * batch % 8 == 0")

    # fc1 contraction blocking: wf1 streamed in (block_pos*C2, FC1) blocks.
    block_pos = max(d for d in range(1, min(p_sp, 8) + 1) if p_sp % d == 0)
    bk = block_pos * C2
    n_kb = p_sp // block_pos

    kernel = _make_kernel(n=n, oh2=oh2, block_pos=block_pos)

    inputs = [p1, params["w1"], params["b1"],
              params["w2"], params["b2"], params["g2"], params["beta2"],
              params["wf1"], params["bf1"], params["gf1"], params["betaf1"],
              params["wf2"], params["bf2"]]

    def _const_spec(a):
        nd = a.ndim
        return pl.BlockSpec(a.shape, lambda k, nd=nd: (0,) * nd)

    in_specs = [_const_spec(a) for a in inputs]
    WF1_IDX = 7
    # wf1 streamed along the fc1 contraction dim (default double-buffered).
    in_specs[WF1_IDX] = pl.BlockSpec((bk, FC1), lambda k: (k, 0))

    scratch = [pltpu.VMEM((hp, hp * n, C1), jnp.bfloat16) for _ in range(4)]
    scratch.append(pltpu.VMEM((n_kb, n, bk), jnp.bfloat16))   # conv2 act, K-blocked
    scratch.append(pltpu.VMEM((n, FC1), jnp.float32))         # fc1 accumulator

    def _nbytes(a):
        return int(a.size) * a.dtype.itemsize

    resident = sum(_nbytes(a) for i, a in enumerate(inputs) if i != WF1_IDX)
    streamed = 2 * bk * FC1 * 2                    # double-buffered bf16 wf1 block
    scratch_b = 4 * hp * hp * n * C1 * 2 + n_kb * n * bk * 2 + n * FC1 * 4
    out_b = n * OUT_PAD * 4
    need = 2 * resident + streamed + scratch_b + 2 * out_b
    vmem_limit = min(max(need + (4 << 20), 16 << 20),
                     (3 * _physical_vmem_bytes()) // 4)

    m1 = n * (s // 2) ** 2
    flops = 2 * (m1 * 16 * cin * C1 + m2 * 16 * C1 * C2
                 + n * k_total * FC1 + n * FC1 * OUT_PAD)
    cost = pl.CostEstimate(flops=int(flops),
                           transcendentals=int(n * OUT_PAD),
                           bytes_accessed=int(sum(_nbytes(a) for a in inputs) + out_b))

    return pl.pallas_call(
        kernel,
        out_shape=jax.ShapeDtypeStruct((n, OUT_PAD), jnp.float32),
        grid=(n_kb,),
        in_specs=in_specs,
        out_specs=pl.BlockSpec((n, OUT_PAD), lambda k: (0, 0)),
        scratch_shapes=scratch,
        compiler_params=pltpu.CompilerParams(
            dimension_semantics=("arbitrary",),
            vmem_limit_bytes=int(vmem_limit)),
        cost_estimate=cost,
    )(*inputs)


# ----------------------------------------------------------------------------
# Discriminator forward
# ----------------------------------------------------------------------------

@functools.partial(jax.jit, static_argnames=("output_dim",))
def discriminator_forward(x_nchw, params, output_dim=1):
    # PyTorch NCHW input; the conv path runs in NHWC.  bf16 cast happens BEFORE
    # the im2col expansion to halve its HBM traffic.
    x = jnp.transpose(x_nchw, (0, 2, 3, 1)).astype(jnp.bfloat16)
    n, s, _, cin = x.shape
    p1 = _conv1_patches_parity(x)
    out_pad = _fused_call(p1, params, n=n, s=s, cin=cin)
    return out_pad[:, :output_dim]


def init_params(key, input_dim=1, output_dim=1, input_size=16):
    # Matches utils.initialize_weights: conv/linear weights ~ N(0, 0.02),
    # biases 0; BN gamma ~ N(1, 0.02), beta 0.  (Synthetic deterministic init.)
    assert output_dim <= OUT_PAD
    ks = jax.random.split(key, 6)
    oh2 = input_size // 4
    p_sp = oh2 * oh2
    feat = C2 * p_sp
    bf16, f32 = jnp.bfloat16, jnp.float32

    # conv1 weight rows in (kh, kw, cin) order (matches the im2col patch order).
    w1 = 0.02 * jax.random.normal(ks[0], (16 * input_dim, C1), f32)

    # conv2 weight, canonical (kh, kw, cin, cout), pre-packed for the K=256 tap
    # packing: w2p[rh*2+rw, (a*2+b)*C1 + c, o] = w2[2*rh+a, 2*rw+b, c, o].
    w2 = 0.02 * jax.random.normal(ks[1], (4, 4, C1, C2), f32)
    w2p = jnp.transpose(w2.reshape(2, 2, 2, 2, C1, C2), (0, 2, 1, 3, 4, 5))
    w2p = w2p.reshape(4, 4 * C1, C2)

    # fc1 weight: canonical PyTorch-flatten row order (c*p_sp + p, out) is
    # reordered to (p*C2 + c, out) — the NCHW-flatten transpose folded into the
    # weight at zero runtime cost.
    wf1_canon = 0.02 * jax.random.normal(ks[3], (feat, FC1), f32)
    wf1 = jnp.transpose(wf1_canon.reshape(C2, p_sp, FC1), (1, 0, 2)).reshape(feat, FC1)

    # fc2 weight padded to a lane-dense 128-wide output slab.
    wf2_canon = 0.02 * jax.random.normal(ks[5], (FC1, output_dim), f32)
    wf2 = jnp.zeros((FC1, OUT_PAD), f32).at[:, :output_dim].set(wf2_canon)

    return {
        "w1": w1.astype(bf16), "b1": jnp.zeros((1, C1), f32),
        "w2": w2p.astype(bf16), "b2": jnp.zeros((1, C2), f32),
        "g2": 1.0 + 0.02 * jax.random.normal(ks[2], (1, C2), f32),
        "beta2": jnp.zeros((1, C2), f32),
        "wf1": wf1.astype(bf16), "bf1": jnp.zeros((1, FC1), f32),
        "gf1": 1.0 + 0.02 * jax.random.normal(ks[4], (1, FC1), f32),
        "betaf1": jnp.zeros((1, FC1), f32),
        "wf2": wf2.astype(bf16), "bf2": jnp.zeros((1, OUT_PAD), f32),
    }


if __name__ == "__main__":
    key = jax.random.PRNGKey(0)
    kp, kx = jax.random.split(key)

    batch, input_dim, input_size, output_dim = 4, 1, 16, 1   # BN needs batch > 1
    params = init_params(kp, input_dim=input_dim, output_dim=output_dim,
                         input_size=input_size)
    x = jax.random.normal(kx, (batch, input_dim, input_size, input_size),
                          jnp.float32)

    out = discriminator_forward(x, params, output_dim=output_dim)
    out = jax.block_until_ready(out)

    assert out.shape == (batch, output_dim)
    assert bool(jnp.all(jnp.isfinite(out)))
    assert bool(jnp.all((out >= 0.0) & (out <= 1.0)))
    print("KERNEL_OK")
</pallas_src>

<mosaic_0001>
module attributes {stable_mosaic.version = 11 : i64} {
  func.func @kernel(%arg0: i32, %arg1: memref<256x16xbf16, #tpu.memory_space<vmem>>, %arg2: memref<16x64xbf16, #tpu.memory_space<vmem>>, %arg3: memref<1x64xf32, #tpu.memory_space<vmem>>, %arg4: memref<4x256x128xbf16, #tpu.memory_space<vmem>>, %arg5: memref<1x128xf32, #tpu.memory_space<vmem>>, %arg6: memref<1x128xf32, #tpu.memory_space<vmem>>, %arg7: memref<1x128xf32, #tpu.memory_space<vmem>>, %arg8: memref<1024x1024xbf16, #tpu.memory_space<vmem>>, %arg9: memref<1x1024xf32, #tpu.memory_space<vmem>>, %arg10: memref<1x1024xf32, #tpu.memory_space<vmem>>, %arg11: memref<1x1024xf32, #tpu.memory_space<vmem>>, %arg12: memref<1024x128xbf16, #tpu.memory_space<vmem>>, %arg13: memref<1x128xf32, #tpu.memory_space<vmem>>, %arg14: memref<4x128xf32, #tpu.memory_space<vmem>>, %arg15: memref<5x20x64xbf16, #tpu.memory_space<vmem>>, %arg16: memref<5x20x64xbf16, #tpu.memory_space<vmem>>, %arg17: memref<5x20x64xbf16, #tpu.memory_space<vmem>>, %arg18: memref<5x20x64xbf16, #tpu.memory_space<vmem>>, %arg19: memref<2x4x1024xbf16, #tpu.memory_space<vmem>>, %arg20: memref<4x1024xf32, #tpu.memory_space<vmem>>) attributes {dimension_semantics = [#tpu.dimension_semantics<arbitrary>], iteration_bounds = array<i64: 2>, scalar_prefetch = 0 : i64, scratch_operands = 6 : i64, tpu.core_type = #tpu.core_type<tc>, window_params = [{pipeline_mode = #tpu.pipeline_mode<synchronous>, transform_indices = @transform_0, window_bounds = array<i64: 256, 16>}, {pipeline_mode = #tpu.pipeline_mode<synchronous>, transform_indices = @transform_1, window_bounds = array<i64: 16, 64>}, {pipeline_mode = #tpu.pipeline_mode<synchronous>, transform_indices = @transform_2, window_bounds = array<i64: 1, 64>}, {pipeline_mode = #tpu.pipeline_mode<synchronous>, transform_indices = @transform_3, window_bounds = array<i64: 4, 256, 128>}, {pipeline_mode = #tpu.pipeline_mode<synchronous>, transform_indices = @transform_4, window_bounds = array<i64: 1, 128>}, {pipeline_mode = #tpu.pipeline_mode<synchronous>, transform_indices = @transform_5, window_bounds = array<i64: 1, 128>}, {pipeline_mode = #tpu.pipeline_mode<synchronous>, transform_indices = @transform_6, window_bounds = array<i64: 1, 128>}, {transform_indices = @transform_7, window_bounds = array<i64: 1024, 1024>}, {pipeline_mode = #tpu.pipeline_mode<synchronous>, transform_indices = @transform_8, window_bounds = array<i64: 1, 1024>}, {pipeline_mode = #tpu.pipeline_mode<synchronous>, transform_indices = @transform_9, window_bounds = array<i64: 1, 1024>}, {pipeline_mode = #tpu.pipeline_mode<synchronous>, transform_indices = @transform_10, window_bounds = array<i64: 1, 1024>}, {pipeline_mode = #tpu.pipeline_mode<synchronous>, transform_indices = @transform_11, window_bounds = array<i64: 1024, 128>}, {pipeline_mode = #tpu.pipeline_mode<synchronous>, transform_indices = @transform_12, window_bounds = array<i64: 1, 128>}, {pipeline_mode = #tpu.pipeline_mode<synchronous>, transform_indices = @transform_13, window_bounds = array<i64: 4, 128>}]} {
    %c0_i32 = arith.constant 0 : i32
    %0 = arith.cmpi eq, %arg0, %c0_i32 : i32
    %1 = arith.extui %0 : i1 to i32
    %c0_i32_0 = arith.constant 0 : i32
    %2 = arith.cmpi ne, %1, %c0_i32_0 : i32
    scf.if %2 {
      %c0_9 = arith.constant 0 : index
      %c0_10 = arith.constant 0 : index
      %14 = vector.load %arg1[%c0_9, %c0_10] : memref<256x16xbf16, #tpu.memory_space<vmem>>, vector<256x16xbf16>
      %c0_11 = arith.constant 0 : index
      %c0_12 = arith.constant 0 : index
      %15 = vector.load %arg2[%c0_11, %c0_12] : memref<16x64xbf16, #tpu.memory_space<vmem>>, vector<16x64xbf16>
      %cst_13 = arith.constant dense<0.000000e+00> : vector<256x64xf32>
      %16 = tpu.matmul %14, %15, %cst_13 {dimension_numbers = #tpu.dot_dimension_numbers<[1], [0], [0], [1], [0, 0, 1, 1], [], []>} : vector<256x16xbf16>, vector<16x64xbf16>, vector<256x64xf32> -> vector<256x64xf32>
      %c0_14 = arith.constant 0 : index
      %c0_15 = arith.constant 0 : index
      %17 = vector.load %arg3[%c0_14, %c0_15] : memref<1x64xf32, #tpu.memory_space<vmem>>, vector<1x64xf32>
      %18 = vector.broadcast %17 : vector<1x64xf32> to vector<256x64xf32>
      %19 = arith.addf %16, %18 : vector<256x64xf32>
      %cst_16 = arith.constant 2.000000e-01 : f32
      %20 = vector.broadcast %cst_16 : f32 to vector<256x64xf32>
      %21 = arith.mulf %20, %19 : vector<256x64xf32>
      %22 = arith.maximumf %19, %21 : vector<256x64xf32>
      %23 = arith.truncf %22 : vector<256x64xf32> to vector<256x64xbf16>
      %cst_17 = arith.constant 0.000000e+00 : bf16
      %24 = vector.broadcast %cst_17 : bf16 to vector<1x20x64xbf16>
      %c0_18 = arith.constant 0 : index
      %c0_19 = arith.constant 0 : index
      %c0_20 = arith.constant 0 : index
      %25 = vector.load %arg15[%c0_18, %c0_19, %c0_20] : memref<5x20x64xbf16, #tpu.memory_space<vmem>>, vector<1x20x64xbf16>
      tpu.vector_store %arg15[%c0_18, %c0_19, %c0_20], %24 {strides = array<i32>} : memref<5x20x64xbf16, #tpu.memory_space<vmem>>, vector<1x20x64xbf16>,
      %cst_21 = arith.constant 0.000000e+00 : bf16
      %26 = vector.broadcast %cst_21 : bf16 to vector<5x4x64xbf16>
      %c0_22 = arith.constant 0 : index
      %c0_23 = arith.constant 0 : index
      %c0_24 = arith.constant 0 : index
      %27 = vector.load %arg15[%c0_22, %c0_23, %c0_24] : memref<5x20x64xbf16, #tpu.memory_space<vmem>>, vector<5x4x64xbf16>
      tpu.vector_store %arg15[%c0_22, %c0_23, %c0_24], %26 {strides = array<i32>} : memref<5x20x64xbf16, #tpu.memory_space<vmem>>, vector<5x4x64xbf16>,
      %28 = vector.extract_strided_slice %23 {offsets = [0, 0], sizes = [64, 64], strides = [1, 1]} : vector<256x64xbf16> to vector<64x64xbf16>
      %29 = vector.shape_cast %28 : vector<64x64xbf16> to vector<4x16x64xbf16>
      %c1 = arith.constant 1 : index
      %c4 = arith.constant 4 : index
      %c0_25 = arith.constant 0 : index
      %30 = vector.load %arg15[%c1, %c4, %c0_25] : memref<5x20x64xbf16, #tpu.memory_space<vmem>>, vector<4x16x64xbf16>
      tpu.vector_store %arg15[%c1, %c4, %c0_25], %29 {strides = array<i32>} : memref<5x20x64xbf16, #tpu.memory_space<vmem>>, vector<4x16x64xbf16>,
      %cst_26 = arith.constant 0.000000e+00 : bf16
      %31 = vector.broadcast %cst_26 : bf16 to vector<1x20x64xbf16>
      %c0_27 = arith.constant 0 : index
      %c0_28 = arith.constant 0 : index
      %c0_29 = arith.constant 0 : index
      %32 = vector.load %arg16[%c0_27, %c0_28, %c0_29] : memref<5x20x64xbf16, #tpu.memory_space<vmem>>, vector<1x20x64xbf16>
      tpu.vector_store %arg16[%c0_27, %c0_28, %c0_29], %31 {strides = array<i32>} : memref<5x20x64xbf16, #tpu.memory_space<vmem>>, vector<1x20x64xbf16>,
      %cst_30 = arith.constant 0.000000e+00 : bf16
      %33 = vector.broadcast %cst_30 : bf16 to vector<5x4x64xbf16>
      %c0_31 = arith.constant 0 : index
      %c16 = arith.constant 16 : index
      %c0_32 = arith.constant 0 : index
      %34 = vector.load %arg16[%c0_31, %c16, %c0_32] : memref<5x20x64xbf16, #tpu.memory_space<vmem>>, vector<5x4x64xbf16>
      tpu.vector_store %arg16[%c0_31, %c16, %c0_32], %33 {strides = array<i32>} : memref<5x20x64xbf16, #tpu.memory_space<vmem>>, vector<5x4x64xbf16>,
      %35 = vector.extract_strided_slice %23 {offsets = [64, 0], sizes = [64, 64], strides = [1, 1]} : vector<256x64xbf16> to vector<64x64xbf16>
      %36 = vector.shape_cast %35 : vector<64x64xbf16> to vector<4x16x64xbf16>
      %c1_33 = arith.constant 1 : index
      %c0_34 = arith.constant 0 : index
      %c0_35 = arith.constant 0 : index
      %37 = vector.load %arg16[%c1_33, %c0_34, %c0_35] : memref<5x20x64xbf16, #tpu.memory_space<vmem>>, vector<4x16x64xbf16>
      tpu.vector_store %arg16[%c1_33, %c0_34, %c0_35], %36 {strides = array<i32>} : memref<5x20x64xbf16, #tpu.memory_space<vmem>>, vector<4x16x64xbf16>,
      %cst_36 = arith.constant 0.000000e+00 : bf16
      %38 = vector.broadcast %cst_36 : bf16 to vector<1x20x64xbf16>
      %c4_37 = arith.constant 4 : index
      %c0_38 = arith.constant 0 : index
      %c0_39 = arith.constant 0 : index
      %39 = vector.load %arg17[%c4_37, %c0_38, %c0_39] : memref<5x20x64xbf16, #tpu.memory_space<vmem>>, vector<1x20x64xbf16>
      tpu.vector_store %arg17[%c4_37, %c0_38, %c0_39], %38 {strides = array<i32>} : memref<5x20x64xbf16, #tpu.memory_space<vmem>>, vector<1x20x64xbf16>,
      %cst_40 = arith.constant 0.000000e+00 : bf16
      %40 = vector.broadcast %cst_40 : bf16 to vector<5x4x64xbf16>
      %c0_41 = arith.constant 0 : index
      %c0_42 = arith.constant 0 : index
      %c0_43 = arith.constant 0 : index
      %41 = vector.load %arg17[%c0_41, %c0_42, %c0_43] : memref<5x20x64xbf16, #tpu.memory_space<vmem>>, vector<5x4x64xbf16>
      tpu.vector_store %arg17[%c0_41, %c0_42, %c0_43], %40 {strides = array<i32>} : memref<5x20x64xbf16, #tpu.memory_space<vmem>>, vector<5x4x64xbf16>,
      %42 = vector.extract_strided_slice %23 {offsets = [128, 0], sizes = [64, 64], strides = [1, 1]} : vector<256x64xbf16> to vector<64x64xbf16>
      %43 = vector.shape_cast %42 : vector<64x64xbf16> to vector<4x16x64xbf16>
      %c0_44 = arith.constant 0 : index
      %c4_45 = arith.constant 4 : index
      %c0_46 = arith.constant 0 : index
      %44 = vector.load %arg17[%c0_44, %c4_45, %c0_46] : memref<5x20x64xbf16, #tpu.memory_space<vmem>>, vector<4x16x64xbf16>
      tpu.vector_store %arg17[%c0_44, %c4_45, %c0_46], %43 {strides = array<i32>} : memref<5x20x64xbf16, #tpu.memory_space<vmem>>, vector<4x16x64xbf16>,
      %cst_47 = arith.constant 0.000000e+00 : bf16
      %45 = vector.broadcast %cst_47 : bf16 to vector<1x20x64xbf16>
      %c4_48 = arith.constant 4 : index
      %c0_49 = arith.constant 0 : index
      %c0_50 = arith.constant 0 : index
      %46 = vector.load %arg18[%c4_48, %c0_49, %c0_50] : memref<5x20x64xbf16, #tpu.memory_space<vmem>>, vector<1x20x64xbf16>
      tpu.vector_store %arg18[%c4_48, %c0_49, %c0_50], %45 {strides = array<i32>} : memref<5x20x64xbf16, #tpu.memory_space<vmem>>, vector<1x20x64xbf16>,
      %cst_51 = arith.constant 0.000000e+00 : bf16
      %47 = vector.broadcast %cst_51 : bf16 to vector<5x4x64xbf16>
      %c0_52 = arith.constant 0 : index
      %c16_53 = arith.constant 16 : index
      %c0_54 = arith.constant 0 : index
      %48 = vector.load %arg18[%c0_52, %c16_53, %c0_54] : memref<5x20x64xbf16, #tpu.memory_space<vmem>>, vector<5x4x64xbf16>
      tpu.vector_store %arg18[%c0_52, %c16_53, %c0_54], %47 {strides = array<i32>} : memref<5x20x64xbf16, #tpu.memory_space<vmem>>, vector<5x4x64xbf16>,
      %49 = vector.extract_strided_slice %23 {offsets = [192, 0], sizes = [64, 64], strides = [1, 1]} : vector<256x64xbf16> to vector<64x64xbf16>
      %50 = vector.shape_cast %49 : vector<64x64xbf16> to vector<4x16x64xbf16>
      %c0_55 = arith.constant 0 : index
      %c0_56 = arith.constant 0 : index
      %c0_57 = arith.constant 0 : index
      %51 = vector.load %arg18[%c0_55, %c0_56, %c0_57] : memref<5x20x64xbf16, #tpu.memory_space<vmem>>, vector<4x16x64xbf16>
      tpu.vector_store %arg18[%c0_55, %c0_56, %c0_57], %50 {strides = array<i32>} : memref<5x20x64xbf16, #tpu.memory_space<vmem>>, vector<4x16x64xbf16>,
      %cst_58 = arith.constant 0.000000e+00 : f32
      %52 = vector.broadcast %cst_58 : f32 to vector<64x128xf32>
      %c0_59 = arith.constant 0 : index
      %c0_60 = arith.constant 0 : index
      %c0_61 = arith.constant 0 : index
      %53 = vector.load %arg15[%c0_59, %c0_60, %c0_61] : memref<5x20x64xbf16, #tpu.memory_space<vmem>>, vector<4x16x64xbf16>
      %c0_62 = arith.constant 0 : index
      %c0_63 = arith.constant 0 : index
      %c0_64 = arith.constant 0 : index
      %54 = vector.load %arg16[%c0_62, %c0_63, %c0_64] : memref<5x20x64xbf16, #tpu.memory_space<vmem>>, vector<4x16x64xbf16>
      %c0_65 = arith.constant 0 : index
      %c0_66 = arith.constant 0 : index
      %c0_67 = arith.constant 0 : index
      %55 = vector.load %arg17[%c0_65, %c0_66, %c0_67] : memref<5x20x64xbf16, #tpu.memory_space<vmem>>, vector<4x16x64xbf16>
      %c0_68 = arith.constant 0 : index
      %c0_69 = arith.constant 0 : index
      %c0_70 = arith.constant 0 : index
      %56 = vector.load %arg18[%c0_68, %c0_69, %c0_70] : memref<5x20x64xbf16, #tpu.memory_space<vmem>>, vector<4x16x64xbf16>
      %57 = tpu.concatenate %53, %54, %55, %56 in 2 : vector<4x16x64xbf16>, vector<4x16x64xbf16>, vector<4x16x64xbf16>, vector<4x16x64xbf16> -> vector<4x16x256xbf16>
      %58 = vector.shape_cast %57 : vector<4x16x256xbf16> to vector<64x256xbf16>
      %c0_71 = arith.constant 0 : index
      %c0_72 = arith.constant 0 : index
      %c0_73 = arith.constant 0 : index
      %59 = vector.load %arg4[%c0_71, %c0_72, %c0_73] : memref<4x256x128xbf16, #tpu.memory_space<vmem>>, vector<1x256x128xbf16>
      %60 = vector.shape_cast %59 : vector<1x256x128xbf16> to vector<256x128xbf16>
      %cst_74 = arith.constant dense<0.000000e+00> : vector<64x128xf32>
      %61 = tpu.matmul %58, %60, %cst_74 {dimension_numbers = #tpu.dot_dimension_numbers<[1], [0], [0], [1], [0, 0, 1, 1], [], []>} : vector<64x256xbf16>, vector<256x128xbf16>, vector<64x128xf32> -> vector<64x128xf32>
      %62 = arith.addf %52, %61 : vector<64x128xf32>
      %c0_75 = arith.constant 0 : index
      %c4_76 = arith.constant 4 : index
      %c0_77 = arith.constant 0 : index
      %63 = vector.load %arg15[%c0_75, %c4_76, %c0_77] : memref<5x20x64xbf16, #tpu.memory_space<vmem>>, vector<4x16x64xbf16>
      %c0_78 = arith.constant 0 : index
      %c4_79 = arith.constant 4 : index
      %c0_80 = arith.constant 0 : index
      %64 = vector.load %arg16[%c0_78, %c4_79, %c0_80] : memref<5x20x64xbf16, #tpu.memory_space<vmem>>, vector<4x16x64xbf16>
      %c0_81 = arith.constant 0 : index
      %c4_82 = arith.constant 4 : index
      %c0_83 = arith.constant 0 : index
      %65 = vector.load %arg17[%c0_81, %c4_82, %c0_83] : memref<5x20x64xbf16, #tpu.memory_space<vmem>>, vector<4x16x64xbf16>
      %c0_84 = arith.constant 0 : index
      %c4_85 = arith.constant 4 : index
      %c0_86 = arith.constant 0 : index
      %66 = vector.load %arg18[%c0_84, %c4_85, %c0_86] : memref<5x20x64xbf16, #tpu.memory_space<vmem>>, vector<4x16x64xbf16>
      %67 = tpu.concatenate %63, %64, %65, %66 in 2 : vector<4x16x64xbf16>, vector<4x16x64xbf16>, vector<4x16x64xbf16>, vector<4x16x64xbf16> -> vector<4x16x256xbf16>
      %68 = vector.shape_cast %67 : vector<4x16x256xbf16> to vector<64x256xbf16>
      %c1_87 = arith.constant 1 : index
      %c0_88 = arith.constant 0 : index
      %c0_89 = arith.constant 0 : index
      %69 = vector.load %arg4[%c1_87, %c0_88, %c0_89] : memref<4x256x128xbf16, #tpu.memory_space<vmem>>, vector<1x256x128xbf16>
      %70 = vector.shape_cast %69 : vector<1x256x128xbf16> to vector<256x128xbf16>
      %cst_90 = arith.constant dense<0.000000e+00> : vector<64x128xf32>
      %71 = tpu.matmul %68, %70, %cst_90 {dimension_numbers = #tpu.dot_dimension_numbers<[1], [0], [0], [1], [0, 0, 1, 1], [], []>} : vector<64x256xbf16>, vector<256x128xbf16>, vector<64x128xf32> -> vector<64x128xf32>
      %72 = arith.addf %62, %71 : vector<64x128xf32>
      %c1_91 = arith.constant 1 : index
      %c0_92 = arith.constant 0 : index
      %c0_93 = arith.constant 0 : index
      %73 = vector.load %arg15[%c1_91, %c0_92, %c0_93] : memref<5x20x64xbf16, #tpu.memory_space<vmem>>, vector<4x16x64xbf16>
      %c1_94 = arith.constant 1 : index
      %c0_95 = arith.constant 0 : index
      %c0_96 = arith.constant 0 : index
      %74 = vector.load %arg16[%c1_94, %c0_95, %c0_96] : memref<5x20x64xbf16, #tpu.memory_space<vmem>>, vector<4x16x64xbf16>
      %c1_97 = arith.constant 1 : index
      %c0_98 = arith.constant 0 : index
      %c0_99 = arith.constant 0 : index
      %75 = vector.load %arg17[%c1_97, %c0_98, %c0_99] : memref<5x20x64xbf16, #tpu.memory_space<vmem>>, vector<4x16x64xbf16>
      %c1_100 = arith.constant 1 : index
      %c0_101 = arith.constant 0 : index
      %c0_102 = arith.constant 0 : index
      %76 = vector.load %arg18[%c1_100, %c0_101, %c0_102] : memref<5x20x64xbf16, #tpu.memory_space<vmem>>, vector<4x16x64xbf16>
      %77 = tpu.concatenate %73, %74, %75, %76 in 2 : vector<4x16x64xbf16>, vector<4x16x64xbf16>, vector<4x16x64xbf16>, vector<4x16x64xbf16> -> vector<4x16x256xbf16>
      %78 = vector.shape_cast %77 : vector<4x16x256xbf16> to vector<64x256xbf16>
      %c2 = arith.constant 2 : index
      %c0_103 = arith.constant 0 : index
      %c0_104 = arith.constant 0 : index
      %79 = vector.load %arg4[%c2, %c0_103, %c0_104] : memref<4x256x128xbf16, #tpu.memory_space<vmem>>, vector<1x256x128xbf16>
      %80 = vector.shape_cast %79 : vector<1x256x128xbf16> to vector<256x128xbf16>
      %cst_105 = arith.constant dense<0.000000e+00> : vector<64x128xf32>
      %81 = tpu.matmul %78, %80, %cst_105 {dimension_numbers = #tpu.dot_dimension_numbers<[1], [0], [0], [1], [0, 0, 1, 1], [], []>} : vector<64x256xbf16>, vector<256x128xbf16>, vector<64x128xf32> -> vector<64x128xf32>
      %82 = arith.addf %72, %81 : vector<64x128xf32>
      %c1_106 = arith.constant 1 : index
      %c4_107 = arith.constant 4 : index
      %c0_108 = arith.constant 0 : index
      %83 = vector.load %arg15[%c1_106, %c4_107, %c0_108] : memref<5x20x64xbf16, #tpu.memory_space<vmem>>, vector<4x16x64xbf16>
      %c1_109 = arith.constant 1 : index
      %c4_110 = arith.constant 4 : index
      %c0_111 = arith.constant 0 : index
      %84 = vector.load %arg16[%c1_109, %c4_110, %c0_111] : memref<5x20x64xbf16, #tpu.memory_space<vmem>>, vector<4x16x64xbf16>
      %c1_112 = arith.constant 1 : index
      %c4_113 = arith.constant 4 : index
      %c0_114 = arith.constant 0 : index
      %85 = vector.load %arg17[%c1_112, %c4_113, %c0_114] : memref<5x20x64xbf16, #tpu.memory_space<vmem>>, vector<4x16x64xbf16>
      %c1_115 = arith.constant 1 : index
      %c4_116 = arith.constant 4 : index
      %c0_117 = arith.constant 0 : index
      %86 = vector.load %arg18[%c1_115, %c4_116, %c0_117] : memref<5x20x64xbf16, #tpu.memory_space<vmem>>, vector<4x16x64xbf16>
      %87 = tpu.concatenate %83, %84, %85, %86 in 2 : vector<4x16x64xbf16>, vector<4x16x64xbf16>, vector<4x16x64xbf16>, vector<4x16x64xbf16> -> vector<4x16x256xbf16>
      %88 = vector.shape_cast %87 : vector<4x16x256xbf16> to vector<64x256xbf16>
      %c3 = arith.constant 3 : index
      %c0_118 = arith.constant 0 : index
      %c0_119 = arith.constant 0 : index
      %89 = vector.load %arg4[%c3, %c0_118, %c0_119] : memref<4x256x128xbf16, #tpu.memory_space<vmem>>, vector<1x256x128xbf16>
      %90 = vector.shape_cast %89 : vector<1x256x128xbf16> to vector<256x128xbf16>
      %cst_120 = arith.constant dense<0.000000e+00> : vector<64x128xf32>
      %91 = tpu.matmul %88, %90, %cst_120 {dimension_numbers = #tpu.dot_dimension_numbers<[1], [0], [0], [1], [0, 0, 1, 1], [], []>} : vector<64x256xbf16>, vector<256x128xbf16>, vector<64x128xf32> -> vector<64x128xf32>
      %92 = arith.addf %82, %91 : vector<64x128xf32>
      %c0_121 = arith.constant 0 : index
      %c0_122 = arith.constant 0 : index
      %93 = vector.load %arg5[%c0_121, %c0_122] : memref<1x128xf32, #tpu.memory_space<vmem>>, vector<1x128xf32>
      %94 = vector.broadcast %93 : vector<1x128xf32> to vector<64x128xf32>
      %95 = arith.addf %92, %94 : vector<64x128xf32>
      %cst_123 = arith.constant dense<0.000000e+00> : vector<128xf32>
      %96 = vector.multi_reduction <add>, %95, %cst_123 [0] : vector<64x128xf32> to vector<128xf32>
      %97 = vector.shape_cast %96 : vector<128xf32> to vector<1x128xf32>
      %cst_124 = arith.constant 6.400000e+01 : f32
      %98 = vector.broadcast %cst_124 : f32 to vector<1x128xf32>
      %99 = arith.divf %97, %98 : vector<1x128xf32>
      %100 = vector.broadcast %99 : vector<1x128xf32> to vector<64x128xf32>
      %101 = arith.subf %95, %100 : vector<64x128xf32>
      %102 = arith.mulf %101, %101 : vector<64x128xf32>
      %cst_125 = arith.constant dense<0.000000e+00> : vector<128xf32>
      %103 = vector.multi_reduction <add>, %102, %cst_125 [0] : vector<64x128xf32> to vector<128xf32>
      %104 = vector.shape_cast %103 : vector<128xf32> to vector<1x128xf32>
      %cst_126 = arith.constant 6.400000e+01 : f32
      %105 = vector.broadcast %cst_126 : f32 to vector<1x128xf32>
      %106 = arith.divf %104, %105 : vector<1x128xf32>
      %cst_127 = arith.constant 9.99999974E-6 : f32
      %107 = vector.broadcast %cst_127 : f32 to vector<1x128xf32>
      %108 = arith.addf %106, %107 : vector<1x128xf32>
      %109 = math.rsqrt %108 : vector<1x128xf32>
      %110 = vector.broadcast %109 : vector<1x128xf32> to vector<64x128xf32>
      %111 = arith.mulf %101, %110 : vector<64x128xf32>
      %c0_128 = arith.constant 0 : index
      %c0_129 = arith.constant 0 : index
      %112 = vector.load %arg6[%c0_128, %c0_129] : memref<1x128xf32, #tpu.memory_space<vmem>>, vector<1x128xf32>
      %113 = vector.broadcast %112 : vector<1x128xf32> to vector<64x128xf32>
      %114 = arith.mulf %111, %113 : vector<64x128xf32>
      %c0_130 = arith.constant 0 : index
      %c0_131 = arith.constant 0 : index
      %115 = vector.load %arg7[%c0_130, %c0_131] : memref<1x128xf32, #tpu.memory_space<vmem>>, vector<1x128xf32>
      %116 = vector.broadcast %115 : vector<1x128xf32> to vector<64x128xf32>
      %117 = arith.addf %114, %116 : vector<64x128xf32>
      %cst_132 = arith.constant 2.000000e-01 : f32
      %118 = vector.broadcast %cst_132 : f32 to vector<64x128xf32>
      %119 = arith.mulf %118, %117 : vector<64x128xf32>
      %120 = arith.maximumf %117, %119 : vector<64x128xf32>
      %121 = arith.truncf %120 : vector<64x128xf32> to vector<64x128xbf16>
      %122 = vector.extract_strided_slice %121 {offsets = [0, 0], sizes = [4, 128], strides = [1, 1]} : vector<64x128xbf16> to vector<4x128xbf16>
      %c0_133 = arith.constant 0 : index
      %c0_134 = arith.constant 0 : index
      %c0_135 = arith.constant 0 : index
      %123 = vector.load %arg19[%c0_133, %c0_134, %c0_135] : memref<2x4x1024xbf16, #tpu.memory_space<vmem>>, vector<1x4x128xbf16>
      %124 = vector.shape_cast %123 : vector<1x4x128xbf16> to vector<4x128xbf16>
      %125 = vector.shape_cast %122 : vector<4x128xbf16> to vector<1x4x128xbf16>
      tpu.vector_store %arg19[%c0_133, %c0_134, %c0_135], %125 {strides = array<i32>} : memref<2x4x1024xbf16, #tpu.memory_space<vmem>>, vector<1x4x128xbf16>,
      %126 = vector.extract_strided_slice %121 {offsets = [4, 0], sizes = [4, 128], strides = [1, 1]} : vector<64x128xbf16> to vector<4x128xbf16>
      %c0_136 = arith.constant 0 : index
      %c0_137 = arith.constant 0 : index
      %c128 = arith.constant 128 : index
      %127 = vector.load %arg19[%c0_136, %c0_137, %c128] : memref<2x4x1024xbf16, #tpu.memory_space<vmem>>, vector<1x4x128xbf16>
      %128 = vector.shape_cast %127 : vector<1x4x128xbf16> to vector<4x128xbf16>
      %129 = vector.shape_cast %126 : vector<4x128xbf16> to vector<1x4x128xbf16>
      tpu.vector_store %arg19[%c0_136, %c0_137, %c128], %129 {strides = array<i32>} : memref<2x4x1024xbf16, #tpu.memory_space<vmem>>, vector<1x4x128xbf16>,
      %130 = vector.extract_strided_slice %121 {offsets = [8, 0], sizes = [4, 128], strides = [1, 1]} : vector<64x128xbf16> to vector<4x128xbf16>
      %c0_138 = arith.constant 0 : index
      %c0_139 = arith.constant 0 : index
      %c256 = arith.constant 256 : index
      %131 = vector.load %arg19[%c0_138, %c0_139, %c256] : memref<2x4x1024xbf16, #tpu.memory_space<vmem>>, vector<1x4x128xbf16>
      %132 = vector.shape_cast %131 : vector<1x4x128xbf16> to vector<4x128xbf16>
      %133 = vector.shape_cast %130 : vector<4x128xbf16> to vector<1x4x128xbf16>
      tpu.vector_store %arg19[%c0_138, %c0_139, %c256], %133 {strides = array<i32>} : memref<2x4x1024xbf16, #tpu.memory_space<vmem>>, vector<1x4x128xbf16>,
      %134 = vector.extract_strided_slice %121 {offsets = [12, 0], sizes = [4, 128], strides = [1, 1]} : vector<64x128xbf16> to vector<4x128xbf16>
      %c0_140 = arith.constant 0 : index
      %c0_141 = arith.constant 0 : index
      %c384 = arith.constant 384 : index
      %135 = vector.load %arg19[%c0_140, %c0_141, %c384] : memref<2x4x1024xbf16, #tpu.memory_space<vmem>>, vector<1x4x128xbf16>
      %136 = vector.shape_cast %135 : vector<1x4x128xbf16> to vector<4x128xbf16>
      %137 = vector.shape_cast %134 : vector<4x128xbf16> to vector<1x4x128xbf16>
      tpu.vector_store %arg19[%c0_140, %c0_141, %c384], %137 {strides = array<i32>} : memref<2x4x1024xbf16, #tpu.memory_space<vmem>>, vector<1x4x128xbf16>,
      %138 = vector.extract_strided_slice %121 {offsets = [16, 0], sizes = [4, 128], strides = [1, 1]} : vector<64x128xbf16> to vector<4x128xbf16>
      %c0_142 = arith.constant 0 : index
      %c0_143 = arith.constant 0 : index
      %c512 = arith.constant 512 : index
      %139 = vector.load %arg19[%c0_142, %c0_143, %c512] : memref<2x4x1024xbf16, #tpu.memory_space<vmem>>, vector<1x4x128xbf16>
      %140 = vector.shape_cast %139 : vector<1x4x128xbf16> to vector<4x128xbf16>
      %141 = vector.shape_cast %138 : vector<4x128xbf16> to vector<1x4x128xbf16>
      tpu.vector_store %arg19[%c0_142, %c0_143, %c512], %141 {strides = array<i32>} : memref<2x4x1024xbf16, #tpu.memory_space<vmem>>, vector<1x4x128xbf16>,
      %142 = vector.extract_strided_slice %121 {offsets = [20, 0], sizes = [4, 128], strides = [1, 1]} : vector<64x128xbf16> to vector<4x128xbf16>
      %c0_144 = arith.constant 0 : index
      %c0_145 = arith.constant 0 : index
      %c640 = arith.constant 640 : index
      %143 = vector.load %arg19[%c0_144, %c0_145, %c640] : memref<2x4x1024xbf16, #tpu.memory_space<vmem>>, vector<1x4x128xbf16>
      %144 = vector.shape_cast %143 : vector<1x4x128xbf16> to vector<4x128xbf16>
      %145 = vector.shape_cast %142 : vector<4x128xbf16> to vector<1x4x128xbf16>
      tpu.vector_store %arg19[%c0_144, %c0_145, %c640], %145 {strides = array<i32>} : memref<2x4x1024xbf16, #tpu.memory_space<vmem>>, vector<1x4x128xbf16>,
      %146 = vector.extract_strided_slice %121 {offsets = [24, 0], sizes = [4, 128], strides = [1, 1]} : vector<64x128xbf16> to vector<4x128xbf16>
      %c0_146 = arith.constant 0 : index
      %c0_147 = arith.constant 0 : index
      %c768 = arith.constant 768 : index
      %147 = vector.load %arg19[%c0_146, %c0_147, %c768] : memref<2x4x1024xbf16, #tpu.memory_space<vmem>>, vector<1x4x128xbf16>
      %148 = vector.shape_cast %147 : vector<1x4x128xbf16> to vector<4x128xbf16>
      %149 = vector.shape_cast %146 : vector<4x128xbf16> to vector<1x4x128xbf16>
      tpu.vector_store %arg19[%c0_146, %c0_147, %c768], %149 {strides = array<i32>} : memref<2x4x1024xbf16, #tpu.memory_space<vmem>>, vector<1x4x128xbf16>,
      %150 = vector.extract_strided_slice %121 {offsets = [28, 0], sizes = [4, 128], strides = [1, 1]} : vector<64x128xbf16> to vector<4x128xbf16>
      %c0_148 = arith.constant 0 : index
      %c0_149 = arith.constant 0 : index
      %c896 = arith.constant 896 : index
      %151 = vector.load %arg19[%c0_148, %c0_149, %c896] : memref<2x4x1024xbf16, #tpu.memory_space<vmem>>, vector<1x4x128xbf16>
      %152 = vector.shape_cast %151 : vector<1x4x128xbf16> to vector<4x128xbf16>
      %153 = vector.shape_cast %150 : vector<4x128xbf16> to vector<1x4x128xbf16>
      tpu.vector_store %arg19[%c0_148, %c0_149, %c896], %153 {strides = array<i32>} : memref<2x4x1024xbf16, #tpu.memory_space<vmem>>, vector<1x4x128xbf16>,
      %154 = vector.extract_strided_slice %121 {offsets = [32, 0], sizes = [4, 128], strides = [1, 1]} : vector<64x128xbf16> to vector<4x128xbf16>
      %c1_150 = arith.constant 1 : index
      %c0_151 = arith.constant 0 : index
      %c0_152 = arith.constant 0 : index
      %155 = vector.load %arg19[%c1_150, %c0_151, %c0_152] : memref<2x4x1024xbf16, #tpu.memory_space<vmem>>, vector<1x4x128xbf16>
      %156 = vector.shape_cast %155 : vector<1x4x128xbf16> to vector<4x128xbf16>
      %157 = vector.shape_cast %154 : vector<4x128xbf16> to vector<1x4x128xbf16>
      tpu.vector_store %arg19[%c1_150, %c0_151, %c0_152], %157 {strides = array<i32>} : memref<2x4x1024xbf16, #tpu.memory_space<vmem>>, vector<1x4x128xbf16>,
      %158 = vector.extract_strided_slice %121 {offsets = [36, 0], sizes = [4, 128], strides = [1, 1]} : vector<64x128xbf16> to vector<4x128xbf16>
      %c1_153 = arith.constant 1 : index
      %c0_154 = arith.constant 0 : index
      %c128_155 = arith.constant 128 : index
      %159 = vector.load %arg19[%c1_153, %c0_154, %c128_155] : memref<2x4x1024xbf16, #tpu.memory_space<vmem>>, vector<1x4x128xbf16>
      %160 = vector.shape_cast %159 : vector<1x4x128xbf16> to vector<4x128xbf16>
      %161 = vector.shape_cast %158 : vector<4x128xbf16> to vector<1x4x128xbf16>
      tpu.vector_store %arg19[%c1_153, %c0_154, %c128_155], %161 {strides = array<i32>} : memref<2x4x1024xbf16, #tpu.memory_space<vmem>>, vector<1x4x128xbf16>,
      %162 = vector.extract_strided_slice %121 {offsets = [40, 0], sizes = [4, 128], strides = [1, 1]} : vector<64x128xbf16> to vector<4x128xbf16>
      %c1_156 = arith.constant 1 : index
      %c0_157 = arith.constant 0 : index
      %c256_158 = arith.constant 256 : index
      %163 = vector.load %arg19[%c1_156, %c0_157, %c256_158] : memref<2x4x1024xbf16, #tpu.memory_space<vmem>>, vector<1x4x128xbf16>
      %164 = vector.shape_cast %163 : vector<1x4x128xbf16> to vector<4x128xbf16>
      %165 = vector.shape_cast %162 : vector<4x128xbf16> to vector<1x4x128xbf16>
      tpu.vector_store %arg19[%c1_156, %c0_157, %c256_158], %165 {strides = array<i32>} : memref<2x4x1024xbf16, #tpu.memory_space<vmem>>, vector<1x4x128xbf16>,
      %166 = vector.extract_strided_slice %121 {offsets = [44, 0], sizes = [4, 128], strides = [1, 1]} : vector<64x128xbf16> to vector<4x128xbf16>
      %c1_159 = arith.constant 1 : index
      %c0_160 = arith.constant 0 : index
      %c384_161 = arith.constant 384 : index
      %167 = vector.load %arg19[%c1_159, %c0_160, %c384_161] : memref<2x4x1024xbf16, #tpu.memory_space<vmem>>, vector<1x4x128xbf16>
      %168 = vector.shape_cast %167 : vector<1x4x128xbf16> to vector<4x128xbf16>
      %169 = vector.shape_cast %166 : vector<4x128xbf16> to vector<1x4x128xbf16>
      tpu.vector_store %arg19[%c1_159, %c0_160, %c384_161], %169 {strides = array<i32>} : memref<2x4x1024xbf16, #tpu.memory_space<vmem>>, vector<1x4x128xbf16>,
      %170 = vector.extract_strided_slice %121 {offsets = [48, 0], sizes = [4, 128], strides = [1, 1]} : vector<64x128xbf16> to vector<4x128xbf16>
      %c1_162 = arith.constant 1 : index
      %c0_163 = arith.constant 0 : index
      %c512_164 = arith.constant 512 : index
      %171 = vector.load %arg19[%c1_162, %c0_163, %c512_164] : memref<2x4x1024xbf16, #tpu.memory_space<vmem>>, vector<1x4x128xbf16>
      %172 = vector.shape_cast %171 : vector<1x4x128xbf16> to vector<4x128xbf16>
      %173 = vector.shape_cast %170 : vector<4x128xbf16> to vector<1x4x128xbf16>
      tpu.vector_store %arg19[%c1_162, %c0_163, %c512_164], %173 {strides = array<i32>} : memref<2x4x1024xbf16, #tpu.memory_space<vmem>>, vector<1x4x128xbf16>,
      %174 = vector.extract_strided_slice %121 {offsets = [52, 0], sizes = [4, 128], strides = [1, 1]} : vector<64x128xbf16> to vector<4x128xbf16>
      %c1_165 = arith.constant 1 : index
      %c0_166 = arith.constant 0 : index
      %c640_167 = arith.constant 640 : index
      %175 = vector.load %arg19[%c1_165, %c0_166, %c640_167] : memref<2x4x1024xbf16, #tpu.memory_space<vmem>>, vector<1x4x128xbf16>
      %176 = vector.shape_cast %175 : vector<1x4x128xbf16> to vector<4x128xbf16>
      %177 = vector.shape_cast %174 : vector<4x128xbf16> to vector<1x4x128xbf16>
      tpu.vector_store %arg19[%c1_165, %c0_166, %c640_167], %177 {strides = array<i32>} : memref<2x4x1024xbf16, #tpu.memory_space<vmem>>, vector<1x4x128xbf16>,
      %178 = vector.extract_strided_slice %121 {offsets = [56, 0], sizes = [4, 128], strides = [1, 1]} : vector<64x128xbf16> to vector<4x128xbf16>
      %c1_168 = arith.constant 1 : index
      %c0_169 = arith.constant 0 : index
      %c768_170 = arith.constant 768 : index
      %179 = vector.load %arg19[%c1_168, %c0_169, %c768_170] : memref<2x4x1024xbf16, #tpu.memory_space<vmem>>, vector<1x4x128xbf16>
      %180 = vector.shape_cast %179 : vector<1x4x128xbf16> to vector<4x128xbf16>
      %181 = vector.shape_cast %178 : vector<4x128xbf16> to vector<1x4x128xbf16>
      tpu.vector_store %arg19[%c1_168, %c0_169, %c768_170], %181 {strides = array<i32>} : memref<2x4x1024xbf16, #tpu.memory_space<vmem>>, vector<1x4x128xbf16>,
      %182 = vector.extract_strided_slice %121 {offsets = [60, 0], sizes = [4, 128], strides = [1, 1]} : vector<64x128xbf16> to vector<4x128xbf16>
      %c1_171 = arith.constant 1 : index
      %c0_172 = arith.constant 0 : index
      %c896_173 = arith.constant 896 : index
      %183 = vector.load %arg19[%c1_171, %c0_172, %c896_173] : memref<2x4x1024xbf16, #tpu.memory_space<vmem>>, vector<1x4x128xbf16>
      %184 = vector.shape_cast %183 : vector<1x4x128xbf16> to vector<4x128xbf16>
      %185 = vector.shape_cast %182 : vector<4x128xbf16> to vector<1x4x128xbf16>
      tpu.vector_store %arg19[%c1_171, %c0_172, %c896_173], %185 {strides = array<i32>} : memref<2x4x1024xbf16, #tpu.memory_space<vmem>>, vector<1x4x128xbf16>,
      %cst_174 = arith.constant 0.000000e+00 : f32
      %186 = vector.broadcast %cst_174 : f32 to vector<4x1024xf32>
      %c0_175 = arith.constant 0 : index
      %c0_176 = arith.constant 0 : index
      %187 = vector.load %arg20[%c0_175, %c0_176] : memref<4x1024xf32, #tpu.memory_space<vmem>>, vector<4x1024xf32>
      tpu.vector_store %arg20[%c0_175, %c0_176], %186 {strides = array<i32>} : memref<4x1024xf32, #tpu.memory_space<vmem>>, vector<4x1024xf32>,
    } else {
    }
    %c0 = arith.constant 0 : index
    %c0_1 = arith.constant 0 : index
    %3 = vector.load %arg20[%c0, %c0_1] : memref<4x1024xf32, #tpu.memory_space<vmem>>, vector<4x1024xf32>
    %4 = arith.index_cast %arg0 : i32 to index
    %c0_2 = arith.constant 0 : index
    %c0_3 = arith.constant 0 : index
    %5 = vector.load %arg19[%4, %c0_2, %c0_3] : memref<2x4x1024xbf16, #tpu.memory_space<vmem>>, vector<1x4x1024xbf16>
    %6 = vector.shape_cast %5 : vector<1x4x1024xbf16> to vector<4x1024xbf16>
    %c0_4 = arith.constant 0 : index
    %c0_5 = arith.constant 0 : index
    %7 = vector.load %arg8[%c0_4, %c0_5] : memref<1024x1024xbf16, #tpu.memory_space<vmem>>, vector<1024x1024xbf16>
    %cst = arith.constant dense<0.000000e+00> : vector<4x1024xf32>
    %8 = tpu.matmul %6, %7, %cst {dimension_numbers = #tpu.dot_dimension_numbers<[1], [0], [0], [1], [0, 0, 1, 1], [], []>} : vector<4x1024xbf16>, vector<1024x1024xbf16>, vector<4x1024xf32> -> vector<4x1024xf32>
    %9 = arith.addf %3, %8 : vector<4x1024xf32>
    %c0_6 = arith.constant 0 : index
    %c0_7 = arith.constant 0 : index
    %10 = vector.load %arg20[%c0_6, %c0_7] : memref<4x1024xf32, #tpu.memory_space<vmem>>, vector<4x1024xf32>
    tpu.vector_store %arg20[%c0_6, %c0_7], %9 {strides = array<i32>} : memref<4x1024xf32, #tpu.memory_space<vmem>>, vector<4x1024xf32>,
    %c1_i32 = arith.constant 1 : i32
    %11 = arith.cmpi eq, %arg0, %c1_i32 : i32
    %12 = arith.extui %11 : i1 to i32
    %c0_i32_8 = arith.constant 0 : i32
    %13 = arith.cmpi ne, %12, %c0_i32_8 : i32
    scf.if %13 {
      %c0_9 = arith.constant 0 : index
      %c0_10 = arith.constant 0 : index
      %14 = vector.load %arg20[%c0_9, %c0_10] : memref<4x1024xf32, #tpu.memory_space<vmem>>, vector<4x1024xf32>
      %c0_11 = arith.constant 0 : index
      %c0_12 = arith.constant 0 : index
      %15 = vector.load %arg9[%c0_11, %c0_12] : memref<1x1024xf32, #tpu.memory_space<vmem>>, vector<1x1024xf32>
      %16 = vector.broadcast %15 : vector<1x1024xf32> to vector<4x1024xf32>
      %17 = arith.addf %14, %16 : vector<4x1024xf32>
      %cst_13 = arith.constant dense<0.000000e+00> : vector<1024xf32>
      %18 = vector.multi_reduction <add>, %17, %cst_13 [0] : vector<4x1024xf32> to vector<1024xf32>
      %19 = vector.shape_cast %18 : vector<1024xf32> to vector<1x1024xf32>
      %cst_14 = arith.constant 4.000000e+00 : f32
      %20 = vector.broadcast %cst_14 : f32 to vector<1x1024xf32>
      %21 = arith.divf %19, %20 : vector<1x1024xf32>
      %22 = vector.broadcast %21 : vector<1x1024xf32> to vector<4x1024xf32>
      %23 = arith.subf %17, %22 : vector<4x1024xf32>
      %24 = arith.mulf %23, %23 : vector<4x1024xf32>
      %cst_15 = arith.constant dense<0.000000e+00> : vector<1024xf32>
      %25 = vector.multi_reduction <add>, %24, %cst_15 [0] : vector<4x1024xf32> to vector<1024xf32>
      %26 = vector.shape_cast %25 : vector<1024xf32> to vector<1x1024xf32>
      %cst_16 = arith.constant 4.000000e+00 : f32
      %27 = vector.broadcast %cst_16 : f32 to vector<1x1024xf32>
      %28 = arith.divf %26, %27 : vector<1x1024xf32>
      %cst_17 = arith.constant 9.99999974E-6 : f32
      %29 = vector.broadcast %cst_17 : f32 to vector<1x1024xf32>
      %30 = arith.addf %28, %29 : vector<1x1024xf32>
      %31 = math.rsqrt %30 : vector<1x1024xf32>
      %32 = vector.broadcast %31 : vector<1x1024xf32> to vector<4x1024xf32>
      %33 = arith.mulf %23, %32 : vector<4x1024xf32>
      %c0_18 = arith.constant 0 : index
      %c0_19 = arith.constant 0 : index
      %34 = vector.load %arg10[%c0_18, %c0_19] : memref<1x1024xf32, #tpu.memory_space<vmem>>, vector<1x1024xf32>
      %35 = vector.broadcast %34 : vector<1x1024xf32> to vector<4x1024xf32>
      %36 = arith.mulf %33, %35 : vector<4x1024xf32>
      %c0_20 = arith.constant 0 : index
      %c0_21 = arith.constant 0 : index
      %37 = vector.load %arg11[%c0_20, %c0_21] : memref<1x1024xf32, #tpu.memory_space<vmem>>, vector<1x1024xf32>
      %38 = vector.broadcast %37 : vector<1x1024xf32> to vector<4x1024xf32>
      %39 = arith.addf %36, %38 : vector<4x1024xf32>
      %cst_22 = arith.constant 2.000000e-01 : f32
      %40 = vector.broadcast %cst_22 : f32 to vector<4x1024xf32>
      %41 = arith.mulf %40, %39 : vector<4x1024xf32>
      %42 = arith.maximumf %39, %41 : vector<4x1024xf32>
      %43 = arith.truncf %42 : vector<4x1024xf32> to vector<4x1024xbf16>
      %c0_23 = arith.constant 0 : index
      %c0_24 = arith.constant 0 : index
      %44 = vector.load %arg12[%c0_23, %c0_24] : memref<1024x128xbf16, #tpu.memory_space<vmem>>, vector<1024x128xbf16>
      %cst_25 = arith.constant dense<0.000000e+00> : vector<4x128xf32>
      %45 = tpu.matmul %43, %44, %cst_25 {dimension_numbers = #tpu.dot_dimension_numbers<[1], [0], [0], [1], [0, 0, 1, 1], [], []>} : vector<4x1024xbf16>, vector<1024x128xbf16>, vector<4x128xf32> -> vector<4x128xf32>
      %c0_26 = arith.constant 0 : index
      %c0_27 = arith.constant 0 : index
      %46 = vector.load %arg13[%c0_26, %c0_27] : memref<1x128xf32, #tpu.memory_space<vmem>>, vector<1x128xf32>
      %47 = vector.broadcast %46 : vector<1x128xf32> to vector<4x128xf32>
      %48 = arith.addf %45, %47 : vector<4x128xf32>
      %49 = arith.negf %48 : vector<4x128xf32>
      %50 = math.exp %49 : vector<4x128xf32>
      %cst_28 = arith.constant 1.000000e+00 : f32
      %51 = vector.broadcast %cst_28 : f32 to vector<4x128xf32>
      %52 = arith.addf %51, %50 : vector<4x128xf32>
      %53 = arith.divf %51, %52 : vector<4x128xf32>
      %c0_29 = arith.constant 0 : index
      %c0_30 = arith.constant 0 : index
      %54 = vector.load %arg14[%c0_29, %c0_30] : memref<4x128xf32, #tpu.memory_space<vmem>>, vector<4x128xf32>
      tpu.vector_store %arg14[%c0_29, %c0_30], %53 {strides = array<i32>} : memref<4x128xf32, #tpu.memory_space<vmem>>, vector<4x128xf32>,
    } else {
    }
    return
  }
  func.func @transform_0(%arg0: i32) -> (i32, i32) {
    %c0_i32 = arith.constant 0 : i32
    %c0_i32_0 = arith.constant 0 : i32
    %c0_i32_1 = arith.constant 0 : i32
    return %c0_i32, %c0_i32_0 : i32, i32
  }
  func.func @transform_1(%arg0: i32) -> (i32, i32) {
    %c0_i32 = arith.constant 0 : i32
    %c0_i32_0 = arith.constant 0 : i32
    %c0_i32_1 = arith.constant 0 : i32
    return %c0_i32, %c0_i32_0 : i32, i32
  }
  func.func @transform_2(%arg0: i32) -> (i32, i32) {
    %c0_i32 = arith.constant 0 : i32
    %c0_i32_0 = arith.constant 0 : i32
    %c0_i32_1 = arith.constant 0 : i32
    return %c0_i32, %c0_i32_0 : i32, i32
  }
  func.func @transform_3(%arg0: i32) -> (i32, i32, i32) {
    %c0_i32 = arith.constant 0 : i32
    %c0_i32_0 = arith.constant 0 : i32
    %c0_i32_1 = arith.constant 0 : i32
    %c0_i32_2 = arith.constant 0 : i32
    return %c0_i32, %c0_i32_0, %c0_i32_1 : i32, i32, i32
  }
  func.func @transform_4(%arg0: i32) -> (i32, i32) {
    %c0_i32 = arith.constant 0 : i32
    %c0_i32_0 = arith.constant 0 : i32
    %c0_i32_1 = arith.constant 0 : i32
    return %c0_i32, %c0_i32_0 : i32, i32
  }
  func.func @transform_5(%arg0: i32) -> (i32, i32) {
    %c0_i32 = arith.constant 0 : i32
    %c0_i32_0 = arith.constant 0 : i32
    %c0_i32_1 = arith.constant 0 : i32
    return %c0_i32, %c0_i32_0 : i32, i32
  }
  func.func @transform_6(%arg0: i32) -> (i32, i32) {
    %c0_i32 = arith.constant 0 : i32
    %c0_i32_0 = arith.constant 0 : i32
    %c0_i32_1 = arith.constant 0 : i32
    return %c0_i32, %c0_i32_0 : i32, i32
  }
  func.func @transform_7(%arg0: i32) -> (i32, i32) {
    %c0_i32 = arith.constant 0 : i32
    %c0_i32_0 = arith.constant 0 : i32
    return %arg0, %c0_i32 : i32, i32
  }
  func.func @transform_8(%arg0: i32) -> (i32, i32) {
    %c0_i32 = arith.constant 0 : i32
    %c0_i32_0 = arith.constant 0 : i32
    %c0_i32_1 = arith.constant 0 : i32
    return %c0_i32, %c0_i32_0 : i32, i32
  }
  func.func @transform_9(%arg0: i32) -> (i32, i32) {
    %c0_i32 = arith.constant 0 : i32
    %c0_i32_0 = arith.constant 0 : i32
    %c0_i32_1 = arith.constant 0 : i32
    return %c0_i32, %c0_i32_0 : i32, i32
  }
  func.func @transform_10(%arg0: i32) -> (i32, i32) {
    %c0_i32 = arith.constant 0 : i32
    %c0_i32_0 = arith.constant 0 : i32
    %c0_i32_1 = arith.constant 0 : i32
    return %c0_i32, %c0_i32_0 : i32, i32
  }
  func.func @transform_11(%arg0: i32) -> (i32, i32) {
    %c0_i32 = arith.constant 0 : i32
    %c0_i32_0 = arith.constant 0 : i32
    %c0_i32_1 = arith.constant 0 : i32
    return %c0_i32, %c0_i32_0 : i32, i32
  }
  func.func @transform_12(%arg0: i32) -> (i32, i32) {
    %c0_i32 = arith.constant 0 : i32
    %c0_i32_0 = arith.constant 0 : i32
    %c0_i32_1 = arith.constant 0 : i32
    return %c0_i32, %c0_i32_0 : i32, i32
  }
  func.func @transform_13(%arg0: i32) -> (i32, i32) {
    %c0_i32 = arith.constant 0 : i32
    %c0_i32_0 = arith.constant 0 : i32
    %c0_i32_1 = arith.constant 0 : i32
    return %c0_i32, %c0_i32_0 : i32, i32
  }
}

</mosaic_0001>

<llo_original>
// kernel: discriminator_forward.1
$region0: #{discriminator_forward.1}
  #allocation0 [shape = 'u32[]', space=smem, size = 0x4, offset = 0x4, fixed_abs, tag = 'smem constant byte address 0x4 - core index']
  #allocation1 [shape = 'u32[144,128]{1,0:T(1,128)}', space=vmem, size = 0x12000, scoped, tag = 'internal scratch']
  #allocation2 [shape = 'bf16[5,20,64]{2,1,0:T(8,128)(2,1)}', space=vmem, size = 0x7800, scoped, tag = 'scratch operand']
  #allocation3 [shape = 'bf16[5,20,64]{2,1,0:T(8,128)(2,1)}', space=vmem, size = 0x7800, scoped, tag = 'scratch operand']
  #allocation4 [shape = 'bf16[5,20,64]{2,1,0:T(8,128)(2,1)}', space=vmem, size = 0x7800, scoped, tag = 'scratch operand']
  #allocation5 [shape = 'bf16[5,20,64]{2,1,0:T(8,128)(2,1)}', space=vmem, size = 0x7800, scoped, tag = 'scratch operand']
  #allocation6 [shape = 'bf16[2,4,1024]{2,1,0:T(4,128)(2,1)}', space=vmem, size = 0x4000, scoped, tag = 'scratch operand']
  #allocation7 [shape = 'f32[4,1024]{1,0:T(4,128)}', space=vmem, size = 0x4000, scoped, tag = 'scratch operand']
  %s0 = inlined_call_operand.vmem [shape: bf16[256,16], index: 0, kind: input, shape index: {}]
  %s1 = inlined_call_operand.hbm [shape: bf16[16,64], index: 1, kind: input, shape index: {}]
  %s2 = inlined_call_operand.hbm [shape: f32[1,64], index: 2, kind: input, shape index: {}]
  %s3 = inlined_call_operand.hbm [shape: bf16[4,256,128], index: 3, kind: input, shape index: {}]
  %s4 = inlined_call_operand.hbm [shape: f32[1,128], index: 4, kind: input, shape index: {}]
  %s5 = inlined_call_operand.hbm [shape: f32[1,128], index: 5, kind: input, shape index: {}]
  %s6 = inlined_call_operand.hbm [shape: f32[1,128], index: 6, kind: input, shape index: {}]
  %s7 = inlined_call_operand.hbm [shape: bf16[2048,1024], index: 7, kind: input, shape index: {}]
  %s8 = inlined_call_operand.hbm [shape: f32[1,1024], index: 8, kind: input, shape index: {}]
  %s9 = inlined_call_operand.hbm [shape: f32[1,1024], index: 9, kind: input, shape index: {}]
  %s10 = inlined_call_operand.hbm [shape: f32[1,1024], index: 10, kind: input, shape index: {}]
  %s11 = inlined_call_operand.hbm [shape: bf16[1024,128], index: 11, kind: input, shape index: {}]
  %s12 = inlined_call_operand.hbm [shape: f32[1,128], index: 12, kind: input, shape index: {}]
  %s13 = inlined_call_operand.vmem [shape: f32[4,128], index: 13, kind: output, shape index: {}]
  %s14 = sld [smem:[#allocation0]]
  $region141: #{discriminator_forward.1} parent=0
    _
  %s16 = ssub.s32 1, %s14
  %s17 = scalar_select 0, %s16, %s14
  $region1: #{discriminator_forward.1} parent=0
    #allocation8 [shape = 'u8[4096]{0}', space=vmem, size = 0x1000, scoped, tag = 'input window, operand 1, single buffered']
    #allocation9 [shape = 's32[2]{0}', space=sflag, size = 0x8, scoped, tag = 'scoped memory for discriminator_forward.1']
    #allocation10 [shape = 'u8[512]{0}', space=vmem, size = 0x400, scoped, tag = 'input window, operand 2, single buffered']
    #allocation11 [shape = 's32[1]{0}', space=sflag, size = 0x4, scoped, tag = 'scoped memory for discriminator_forward.1']
    #allocation12 [shape = 'u8[262144]{0}', space=vmem, size = 0x40000, scoped, tag = 'input window, operand 3, single buffered']
    #allocation13 [shape = 'u8[512]{0}', space=vmem, size = 0x400, scoped, tag = 'input window, operand 4, single buffered']
    #allocation14 [shape = 's32[1]{0}', space=sflag, size = 0x4, scoped, tag = 'scoped memory for discriminator_forward.1']
    #allocation15 [shape = 'u8[512]{0}', space=vmem, size = 0x400, scoped, tag = 'input window, operand 5, single buffered']
    #allocation16 [shape = 'u8[512]{0}', space=vmem, size = 0x400, scoped, tag = 'input window, operand 6, single buffered']
    #allocation17 [shape = 's32[1]{0}', space=sflag, size = 0x4, scoped, tag = 'scoped memory for discriminator_forward.1']
    #allocation18 [shape = 'u8[4194304]{0}', space=vmem, size = 0x400000, scoped, tag = 'input window, operand 7']
    #allocation19 [shape = 'u8[4096]{0}', space=vmem, size = 0x1000, scoped, tag = 'input window, operand 8, single buffered']
    #allocation20 [shape = 'u8[4096]{0}', space=vmem, size = 0x1000, scoped, tag = 'input window, operand 9, single buffered']
    #allocation21 [shape = 'u8[4096]{0}', space=vmem, size = 0x1000, scoped, tag = 'input window, operand 10, single buffered']
    #allocation22 [shape = 'u8[262144]{0}', space=vmem, size = 0x40000, scoped, tag = 'input window, operand 11, single buffered']
    #allocation23 [shape = 's32[1]{0}', space=sflag, size = 0x4, scoped, tag = 'scoped memory for discriminator_forward.1']
    #allocation24 [shape = 'u8[512]{0}', space=vmem, size = 0x400, scoped, tag = 'input window, operand 12, single buffered']
    %18 = vsyncpa [#allocation9], 0
    %19 = vsyncpa [#allocation11], 0
    %20 = vsyncpa [#allocation14], 0
    %21 = vsyncpa [#allocation17], 0
    %22 = vsyncpa [#allocation23], 0
    loop: start=0, step=1, limit=4
    $region2: #{discriminator_forward.1} parent=1 // loop_pre_header
      _
    $region3: #{discriminator_forward.1} parent=1 // loop_header
      %s24 = sphi 0, %s28
      %p25 = scmp.ge.s32.totalorder %s24, 4
      %s32 = sphi 0, %s32
      %s34 = sphi 0, %s32
      %s35 = sphi 0, %s34
      %s49 = sphi 0, %s35
      %s53 = sphi 0, %s53
      %s55 = sphi 0, %s53
      %s56 = sphi 0, %s55
      %s70 = sphi 0, %s56
      %s74 = sphi 0, %s74
      %s76 = sphi 0, %s74
      %s77 = sphi 0, %s76
      %s91 = sphi 0, %s77
      %s95 = sphi 0, %s95
      %s97 = sphi 0, %s95
      %s98 = sphi 0, %s97
      %s112 = sphi 0, %s98
      %s116 = sphi 0, %s116
      %s118 = sphi 0, %s116
      %s119 = sphi 0, %s118
      %s133 = sphi 0, %s119
      %s137 = sphi 0, %s137
      %s139 = sphi 0, %s137
      %s140 = sphi 0, %s139
      %s154 = sphi 0, %s140
      %s158 = sphi 0, %s158
      %s160 = sphi 0, %s158
      %s161 = sphi 0, %s160
      %s175 = sphi 0, %s161
      %s181 = sphi 0, %s183
      %s184 = sphi 0, %s181
      %s185 = sphi 0, %s184
      %s201 = sphi 0, %s185
      %s205 = sphi 0, %s205
      %s207 = sphi 0, %s205
      %s208 = sphi 0, %s207
      %s222 = sphi 0, %s208
      %s226 = sphi 0, %s226
      %s228 = sphi 0, %s226
      %s229 = sphi 0, %s228
      %s243 = sphi 0, %s229
      %s247 = sphi 0, %s247
      %s249 = sphi 0, %s247
      %s250 = sphi 0, %s249
      %s264 = sphi 0, %s250
      %s268 = sphi 0, %s268
      %s270 = sphi 0, %s268
      %s271 = sphi 0, %s270
      %s285 = sphi 0, %s271
      %s289 = sphi 0, %s289
      %s291 = sphi 0, %s289
      %s292 = sphi 0, %s291
      %s306 = sphi 0, %s292
      %s310 = sphi 0, %s310
      %s312 = sphi 0, %s310
      %s313 = sphi 0, %s312
      %s327 = sphi 0, %s313
    $region4: #{discriminator_forward.1} parent=1 // loop_header_branch
      %27 = sbr.rel (%p25) target = $region8
    $region5: #{discriminator_forward.1} parent=1 // loop_body
      %s29 = ssub.s32 %s24, 1
      %s30 = ssub.s32 %s24, 2
      %s31 = sadd.s32 %s24, 1
      %s33 = sadd.s32 %s32, 1
      %p36 = scmp.eq.s32.totalorder %s24, 1
      %p37 = scmp.ne.s32.totalorder %s32, %s34
      %p38 = scmp.eq.s32.totalorder %s24, 0
      %p39 = por %p37, %p38
      %p40 = scmp.ne.s32.totalorder %s32, %s34
      %p41 = scmp.eq.s32.totalorder %s29, 1
      %p42 = por %p40, %p41
      %p43 = scmp.ne.s32.totalorder %s34, %s35
      %p44 = scmp.eq.s32.totalorder %s29, 0
      %p45 = por %p43, %p44
      %p46 = scmp.ne.s32.totalorder %s34, %s35
      %p47 = scmp.eq.s32.totalorder %s30, 1
      %p48 = por %p46, %p47
      %p50 = scmp.ne.s32.totalorder %s35, %s49
      %p51 = scmp.eq.s32.totalorder %s30, 0
      %p52 = por %p50, %p51
      %s54 = sadd.s32 %s53, 1
      %p57 = scmp.eq.s32.totalorder %s24, 1
      %p58 = scmp.ne.s32.totalorder %s53, %s55
      %p59 = scmp.eq.s32.totalorder %s24, 0
      %p60 = por %p58, %p59
      %p61 = scmp.ne.s32.totalorder %s53, %s55
      %p62 = scmp.eq.s32.totalorder %s29, 1
      %p63 = por %p61, %p62
      %p64 = scmp.ne.s32.totalorder %s55, %s56
      %p65 = scmp.eq.s32.totalorder %s29, 0
      %p66 = por %p64, %p65
      %p67 = scmp.ne.s32.totalorder %s55, %s56
      %p68 = scmp.eq.s32.totalorder %s30, 1
      %p69 = por %p67, %p68
      %p71 = scmp.ne.s32.totalorder %s56, %s70
      %p72 = scmp.eq.s32.totalorder %s30, 0
      %p73 = por %p71, %p72
      %s75 = sadd.s32 %s74, 1
      %p78 = scmp.eq.s32.totalorder %s24, 1
      %p79 = scmp.ne.s32.totalorder %s74, %s76
      %p80 = scmp.eq.s32.totalorder %s24, 0
      %p81 = por %p79, %p80
      %p82 = scmp.ne.s32.totalorder %s74, %s76
      %p83 = scmp.eq.s32.totalorder %s29, 1
      %p84 = por %p82, %p83
      %p85 = scmp.ne.s32.totalorder %s76, %s77
      %p86 = scmp.eq.s32.totalorder %s29, 0
      %p87 = por %p85, %p86
      %p88 = scmp.ne.s32.totalorder %s76, %s77
      %p89 = scmp.eq.s32.totalorder %s30, 1
      %p90 = por %p88, %p89
      %p92 = scmp.ne.s32.totalorder %s77, %s91
      %p93 = scmp.eq.s32.totalorder %s30, 0
      %p94 = por %p92, %p93
      %s96 = sadd.s32 %s95, 1
      %p99 = scmp.eq.s32.totalorder %s24, 1
      %p100 = scmp.ne.s32.totalorder %s95, %s97
      %p101 = scmp.eq.s32.totalorder %s24, 0
      %p102 = por %p100, %p101
      %p103 = scmp.ne.s32.totalorder %s95, %s97
      %p104 = scmp.eq.s32.totalorder %s29, 1
      %p105 = por %p103, %p104
      %p106 = scmp.ne.s32.totalorder %s97, %s98
      %p107 = scmp.eq.s32.totalorder %s29, 0
      %p108 = por %p106, %p107
      %p109 = scmp.ne.s32.totalorder %s97, %s98
      %p110 = scmp.eq.s32.totalorder %s30, 1
      %p111 = por %p109, %p110
      %p113 = scmp.ne.s32.totalorder %s98, %s112
      %p114 = scmp.eq.s32.totalorder %s30, 0
      %p115 = por %p113, %p114
      %s117 = sadd.s32 %s116, 1
      %p120 = scmp.eq.s32.totalorder %s24, 1
      %p121 = scmp.ne.s32.totalorder %s116, %s118
      %p122 = scmp.eq.s32.totalorder %s24, 0
      %p123 = por %p121, %p122
      %p124 = scmp.ne.s32.totalorder %s116, %s118
      %p125 = scmp.eq.s32.totalorder %s29, 1
      %p126 = por %p124, %p125
      %p127 = scmp.ne.s32.totalorder %s118, %s119
      %p128 = scmp.eq.s32.totalorder %s29, 0
      %p129 = por %p127, %p128
      %p130 = scmp.ne.s32.totalorder %s118, %s119
      %p131 = scmp.eq.s32.totalorder %s30, 1
      %p132 = por %p130, %p131
      %p134 = scmp.ne.s32.totalorder %s119, %s133
      %p135 = scmp.eq.s32.totalorder %s30, 0
      %p136 = por %p134, %p135
      %s138 = sadd.s32 %s137, 1
      %p141 = scmp.eq.s32.totalorder %s24, 1
      %p142 = scmp.ne.s32.totalorder %s137, %s139
      %p143 = scmp.eq.s32.totalorder %s24, 0
      %p144 = por %p142, %p143
      %p145 = scmp.ne.s32.totalorder %s137, %s139
      %p146 = scmp.eq.s32.totalorder %s29, 1
      %p147 = por %p145, %p146
      %p148 = scmp.ne.s32.totalorder %s139, %s140
      %p149 = scmp.eq.s32.totalorder %s29, 0
      %p150 = por %p148, %p149
      %p151 = scmp.ne.s32.totalorder %s139, %s140
      %p152 = scmp.eq.s32.totalorder %s30, 1
      %p153 = por %p151, %p152
      %p155 = scmp.ne.s32.totalorder %s140, %s154
      %p156 = scmp.eq.s32.totalorder %s30, 0
      %p157 = por %p155, %p156
      %s159 = sadd.s32 %s158, 1
      %p162 = scmp.eq.s32.totalorder %s24, 1
      %p163 = scmp.ne.s32.totalorder %s158, %s160
      %p164 = scmp.eq.s32.totalorder %s24, 0
      %p165 = por %p163, %p164
      %p166 = scmp.ne.s32.totalorder %s158, %s160
      %p167 = scmp.eq.s32.totalorder %s29, 1
      %p168 = por %p166, %p167
      %p169 = scmp.ne.s32.totalorder %s160, %s161
      %p170 = scmp.eq.s32.totalorder %s29, 0
      %p171 = por %p169, %p170
      %p172 = scmp.ne.s32.totalorder %s160, %s161
      %p173 = scmp.eq.s32.totalorder %s30, 1
      %p174 = por %p172, %p173
      %p176 = scmp.ne.s32.totalorder %s161, %s175
      %p177 = scmp.eq.s32.totalorder %s30, 0
      %p178 = por %p176, %p177
      %s179 = ssub.s32 %s24, %s31
      %p180 = scmp.eq.s32.totalorder %s179, 0
      %s182 = sadd.s32 %s181, 1
      %s183 = scalar_select %p180, %s181, %s182
      %p186 = pneg %p180
      %p187 = scmp.eq.s32.totalorder %s24, 1
      %p188 = por %p186, %p187
      %p189 = scmp.ne.s32.totalorder %s181, %s184
      %p190 = scmp.eq.s32.totalorder %s24, 0
      %p191 = por %p189, %p190
      %p192 = scmp.ne.s32.totalorder %s181, %s184
      %p193 = scmp.eq.s32.totalorder %s29, 1
      %p194 = por %p192, %p193
      %p195 = scmp.ne.s32.totalorder %s184, %s185
      %p196 = scmp.eq.s32.totalorder %s29, 0
      %p197 = por %p195, %p196
      %p198 = scmp.ne.s32.totalorder %s184, %s185
      %p199 = scmp.eq.s32.totalorder %s30, 1
      %p200 = por %p198, %p199
      %p202 = scmp.ne.s32.totalorder %s185, %s201
      %p203 = scmp.eq.s32.totalorder %s30, 0
      %p204 = por %p202, %p203
      %s206 = sadd.s32 %s205, 1
      %p209 = scmp.eq.s32.totalorder %s24, 1
      %p210 = scmp.ne.s32.totalorder %s205, %s207
      %p211 = scmp.eq.s32.totalorder %s24, 0
      %p212 = por %p210, %p211
      %p213 = scmp.ne.s32.totalorder %s205, %s207
      %p214 = scmp.eq.s32.totalorder %s29, 1
      %p215 = por %p213, %p214
      %p216 = scmp.ne.s32.totalorder %s207, %s208
      %p217 = scmp.eq.s32.totalorder %s29, 0
      %p218 = por %p216, %p217
      %p219 = scmp.ne.s32.totalorder %s207, %s208
      %p220 = scmp.eq.s32.totalorder %s30, 1
      %p221 = por %p219, %p220
      %p223 = scmp.ne.s32.totalorder %s208, %s222
      %p224 = scmp.eq.s32.totalorder %s30, 0
      %p225 = por %p223, %p224
      %s227 = sadd.s32 %s226, 1
      %p230 = scmp.eq.s32.totalorder %s24, 1
      %p231 = scmp.ne.s32.totalorder %s226, %s228
      %p232 = scmp.eq.s32.totalorder %s24, 0
      %p233 = por %p231, %p232
      %p234 = scmp.ne.s32.totalorder %s226, %s228
      %p235 = scmp.eq.s32.totalorder %s29, 1
      %p236 = por %p234, %p235
      %p237 = scmp.ne.s32.totalorder %s228, %s229
      %p238 = scmp.eq.s32.totalorder %s29, 0
      %p239 = por %p237, %p238
      %p240 = scmp.ne.s32.totalorder %s228, %s229
      %p241 = scmp.eq.s32.totalorder %s30, 1
      %p242 = por %p240, %p241
      %p244 = scmp.ne.s32.totalorder %s229, %s243
      %p245 = scmp.eq.s32.totalorder %s30, 0
      %p246 = por %p244, %p245
      %s248 = sadd.s32 %s247, 1
      %p251 = scmp.eq.s32.totalorder %s24, 1
      %p252 = scmp.ne.s32.totalorder %s247, %s249
      %p253 = scmp.eq.s32.totalorder %s24, 0
      %p254 = por %p252, %p253
      %p255 = scmp.ne.s32.totalorder %s247, %s249
      %p256 = scmp.eq.s32.totalorder %s29, 1
      %p257 = por %p255, %p256
      %p258 = scmp.ne.s32.totalorder %s249, %s250
      %p259 = scmp.eq.s32.totalorder %s29, 0
      %p260 = por %p258, %p259
      %p261 = scmp.ne.s32.totalorder %s249, %s250
      %p262 = scmp.eq.s32.totalorder %s30, 1
      %p263 = por %p261, %p262
      %p265 = scmp.ne.s32.totalorder %s250, %s264
      %p266 = scmp.eq.s32.totalorder %s30, 0
      %p267 = por %p265, %p266
      %s269 = sadd.s32 %s268, 1
      %p272 = scmp.eq.s32.totalorder %s24, 1
      %p273 = scmp.ne.s32.totalorder %s268, %s270
      %p274 = scmp.eq.s32.totalorder %s24, 0
      %p275 = por %p273, %p274
      %p276 = scmp.ne.s32.totalorder %s268, %s270
      %p277 = scmp.eq.s32.totalorder %s29, 1
      %p278 = por %p276, %p277
      %p279 = scmp.ne.s32.totalorder %s270, %s271
      %p280 = scmp.eq.s32.totalorder %s29, 0
      %p281 = por %p279, %p280
      %p282 = scmp.ne.s32.totalorder %s270, %s271
      %p283 = scmp.eq.s32.totalorder %s30, 1
      %p284 = por %p282, %p283
      %p286 = scmp.ne.s32.totalorder %s271, %s285
      %p287 = scmp.eq.s32.totalorder %s30, 0
      %p288 = por %p286, %p287
      %s290 = sadd.s32 %s289, 1
      %p293 = scmp.eq.s32.totalorder %s24, 1
      %p294 = scmp.ne.s32.totalorder %s289, %s291
      %p295 = scmp.eq.s32.totalorder %s24, 0
      %p296 = por %p294, %p295
      %p297 = scmp.ne.s32.totalorder %s289, %s291
      %p298 = scmp.eq.s32.totalorder %s29, 1
      %p299 = por %p297, %p298
      %p300 = scmp.ne.s32.totalorder %s291, %s292
      %p301 = scmp.eq.s32.totalorder %s29, 0
      %p302 = por %p300, %p301
      %p303 = scmp.ne.s32.totalorder %s291, %s292
      %p304 = scmp.eq.s32.totalorder %s30, 1
      %p305 = por %p303, %p304
      %p307 = scmp.ne.s32.totalorder %s292, %s306
      %p308 = scmp.eq.s32.totalorder %s30, 0
      %p309 = por %p307, %p308
      %s311 = sadd.s32 %s310, 1
      %p314 = scmp.eq.s32.totalorder %s24, 1
      %p315 = scmp.ne.s32.totalorder %s310, %s312
      %p316 = scmp.eq.s32.totalorder %s24, 0
      %p317 = por %p315, %p316
      %p318 = scmp.ne.s32.totalorder %s310, %s312
      %p319 = scmp.eq.s32.totalorder %s29, 1
      %p320 = por %p318, %p319
      %p321 = scmp.ne.s32.totalorder %s312, %s313
      %p322 = scmp.eq.s32.totalorder %s29, 0
      %p323 = por %p321, %p322
      %p324 = scmp.ne.s32.totalorder %s312, %s313
      %p325 = scmp.eq.s32.totalorder %s30, 1
      %p326 = por %p324, %p325
      %p328 = scmp.ne.s32.totalorder %s313, %s327
      %p329 = scmp.eq.s32.totalorder %s30, 0
      %p330 = por %p328, %p329
      %p331 = scmp.le.s32.totalorder 1, %s24
      %p332 = scmp.lt.s32.totalorder %s24, 3
      %p333 = pnand %p331, %p332
      %p334 = pneg %p333
      // Predicated region
      $region9: #{discriminator_forward.1} parent=5 // pred_check
        _
      $region10: #{discriminator_forward.1} parent=5 // pred_check_branch
        %336 = sbr.rel (%p333) target = $region12
      $region11: #{discriminator_forward.1} parent=5 // pred_region
        %s337 = ssub.s32 %s24, 1
        // Predicated region
        $region13: #{discriminator_forward.1} parent=11 // pred_check
          %p338 = pneg %p45
        $region14: #{discriminator_forward.1} parent=11 // pred_check_branch
          %340 = sbr.rel (%p338) target = $region16
        $region15: #{discriminator_forward.1} parent=11 // pred_region
          _
        $region16: #{discriminator_forward.1} parent=11 // pred_fallthru
          _
        // Predicated region
        $region17: #{discriminator_forward.1} parent=11 // pred_check
          %p341 = pneg %p66
        $region18: #{discriminator_forward.1} parent=11 // pred_check_branch
          %343 = sbr.rel (%p341) target = $region20
        $region19: #{discriminator_forward.1} parent=11 // pred_region
          %s345 = ssub.s32 128, 128
          %346 = vsyncadd [#allocation9], %s345
          %s347 = sshll.u32 [#allocation8], 4
          %s348 = int_to_ptr.vmem [resolvable:$true] %s347
          %353 = dma.hbm_to_vmem [thread:$0]  %s1, 128, %s348, [#allocation9], 64, 64, 4
        $region20: #{discriminator_forward.1} parent=11 // pred_fallthru
          _
        // Predicated region
        $region21: #{discriminator_forward.1} parent=11 // pred_check
          %p354 = pneg %p87
        $region22: #{discriminator_forward.1} parent=11 // pred_check_branch
          %356 = sbr.rel (%p354) target = $region24
        $region23: #{discriminator_forward.1} parent=11 // pred_region
          %s358 = ssub.s32 16, 16
          %359 = vsyncadd [#allocation11], %s358
          %s361 = sshll.u32 [#allocation10], 4
          %s362 = int_to_ptr.vmem [resolvable:$true] %s361
          %364 = dma.hbm_to_vmem [thread:$0]  %s2, 16, %s362, [#allocation11]
        $region24: #{discriminator_forward.1} parent=11 // pred_fallthru
          _
        // Predicated region
        $region25: #{discriminator_forward.1} parent=11 // pred_check
          %p365 = pneg %p108
        $region26: #{discriminator_forward.1} parent=11 // pred_check_branch
          %367 = sbr.rel (%p365) target = $region28
        $region27: #{discriminator_forward.1} parent=11 // pred_region
          %s369 = ssub.s32 8192, 8192
          %370 = vsyncadd [#allocation11], %s369
          %s371 = sshll.u32 [#allocation12], 4
          %s372 = int_to_ptr.vmem [resolvable:$true] %s371
          %377 = dma.hbm_to_vmem [thread:$0]  %s3, 8192, %s372, [#allocation11], 64, 64, 4
        $region28: #{discriminator_forward.1} parent=11 // pred_fallthru
          _
        // Predicated region
        $region29: #{discriminator_forward.1} parent=11 // pred_check
          %p378 = pneg %p129
        $region30: #{discriminator_forward.1} parent=11 // pred_check_branch
          %380 = sbr.rel (%p378) target = $region32
        $region31: #{discriminator_forward.1} parent=11 // pred_region
          %s382 = ssub.s32 16, 16
          %383 = vsyncadd [#allocation14], %s382
          %s385 = sshll.u32 [#allocation13], 4
          %s386 = int_to_ptr.vmem [resolvable:$true] %s385
          %388 = dma.hbm_to_vmem [thread:$0]  %s4, 16, %s386, [#allocation14]
        $region32: #{discriminator_forward.1} parent=11 // pred_fallthru
          _
        // Predicated region
        $region33: #{discriminator_forward.1} parent=11 // pred_check
          %p389 = pneg %p150
        $region34: #{discriminator_forward.1} parent=11 // pred_check_branch
          %391 = sbr.rel (%p389) target = $region36
        $region35: #{discriminator_forward.1} parent=11 // pred_region
          %s393 = ssub.s32 16, 16
          %394 = vsyncadd [#allocation14], %s393
          %s396 = sshll.u32 [#allocation15], 4
          %s397 = int_to_ptr.vmem [resolvable:$true] %s396
          %399 = dma.hbm_to_vmem [thread:$0]  %s5, 16, %s397, [#allocation14]
        $region36: #{discriminator_forward.1} parent=11 // pred_fallthru
          _
        // Predicated region
        $region37: #{discriminator_forward.1} parent=11 // pred_check
          %p400 = pneg %p171
        $region38: #{discriminator_forward.1} parent=11 // pred_check_branch
          %402 = sbr.rel (%p400) target = $region40
        $region39: #{discriminator_forward.1} parent=11 // pred_region
          %s404 = ssub.s32 16, 16
          %405 = vsyncadd [#allocation17], %s404
          %s407 = sshll.u32 [#allocation16], 4
          %s408 = int_to_ptr.vmem [resolvable:$true] %s407
          %410 = dma.hbm_to_vmem [thread:$0]  %s6, 16, %s408, [#allocation17]
        $region40: #{discriminator_forward.1} parent=11 // pred_fallthru
          _
        // Predicated region
        $region41: #{discriminator_forward.1} parent=11 // pred_check
          %p411 = pneg %p218
        $region42: #{discriminator_forward.1} parent=11 // pred_check_branch
          %413 = sbr.rel (%p411) target = $region44
        $region43: #{discriminator_forward.1} parent=11 // pred_region
          %s415 = ssub.s32 128, 128
          %416 = vsyncadd [#allocation11], %s415
          %s418 = sshll.u32 [#allocation19], 4
          %s419 = int_to_ptr.vmem [resolvable:$true] %s418
          %421 = dma.hbm_to_vmem [thread:$0]  %s8, 128, %s419, [#allocation11]
        $region44: #{discriminator_forward.1} parent=11 // pred_fallthru
          _
        // Predicated region
        $region45: #{discriminator_forward.1} parent=11 // pred_check
          %p422 = pneg %p239
        $region46: #{discriminator_forward.1} parent=11 // pred_check_branch
          %424 = sbr.rel (%p422) target = $region48
        $region47: #{discriminator_forward.1} parent=11 // pred_region
          %s426 = ssub.s32 128, 128
          %427 = vsyncadd [#allocation14], %s426
          %s429 = sshll.u32 [#allocation20], 4
          %s430 = int_to_ptr.vmem [resolvable:$true] %s429
          %432 = dma.hbm_to_vmem [thread:$0]  %s9, 128, %s430, [#allocation14]
        $region48: #{discriminator_forward.1} parent=11 // pred_fallthru
          _
        // Predicated region
        $region49: #{discriminator_forward.1} parent=11 // pred_check
          %p433 = pneg %p260
        $region50: #{discriminator_forward.1} parent=11 // pred_check_branch
          %435 = sbr.rel (%p433) target = $region52
        $region51: #{discriminator_forward.1} parent=11 // pred_region
          %s437 = ssub.s32 128, 128
          %438 = vsyncadd [#allocation17], %s437
          %s440 = sshll.u32 [#allocation21], 4
          %s441 = int_to_ptr.vmem [resolvable:$true] %s440
          %443 = dma.hbm_to_vmem [thread:$0]  %s10, 128, %s441, [#allocation17]
        $region52: #{discriminator_forward.1} parent=11 // pred_fallthru
          _
        // Predicated region
        $region53: #{discriminator_forward.1} parent=11 // pred_check
          %p444 = pneg %p281
        $region54: #{discriminator_forward.1} parent=11 // pred_check_branch
          %446 = sbr.rel (%p444) target = $region56
        $region55: #{discriminator_forward.1} parent=11 // pred_region
          %s448 = ssub.s32 8192, 8192
          %449 = vsyncadd [#allocation23], %s448
          %s450 = sshll.u32 [#allocation22], 4
          %s451 = int_to_ptr.vmem [resolvable:$true] %s450
          %456 = dma.hbm_to_vmem [thread:$0]  %s11, 8192, %s451, [#allocation23], 64, 64, 4
        $region56: #{discriminator_forward.1} parent=11 // pred_fallthru
          _
        // Predicated region
        $region57: #{discriminator_forward.1} parent=11 // pred_check
          %p457 = pneg %p302
        $region58: #{discriminator_forward.1} parent=11 // pred_check_branch
          %459 = sbr.rel (%p457) target = $region60
        $region59: #{discriminator_forward.1} parent=11 // pred_region
          %s461 = ssub.s32 16, 16
          %462 = vsyncadd [#allocation23], %s461
          %s464 = sshll.u32 [#allocation24], 4
          %s465 = int_to_ptr.vmem [resolvable:$true] %s464
          %467 = dma.hbm_to_vmem [thread:$0]  %s12, 16, %s465, [#allocation23]
        $region60: #{discriminator_forward.1} parent=11 // pred_fallthru
          _
      $region12: #{discriminator_forward.1} parent=5 // pred_fallthru
        _
      %p468 = scmp.lt.s32.totalorder %s24, 2
      // Predicated region
      $region61: #{discriminator_forward.1} parent=5 // pred_check
        %p469 = pneg %p468
      $region62: #{discriminator_forward.1} parent=5 // pred_check_branch
        %471 = sbr.rel (%p469) target = $region64
      $region63: #{discriminator_forward.1} parent=5 // pred_region
        // Predicated region
        $region65: #{discriminator_forward.1} parent=63 // pred_check
          %p472 = pneg %p191
        $region66: #{discriminator_forward.1} parent=63 // pred_check_branch
          %474 = sbr.rel (%p472) target = $region68
        $region67: #{discriminator_forward.1} parent=63 // pred_region
          %s475 = sand.u32 %s24, 1
          %s476 = scalar_lea.sflag [#allocation9], %s475
          %s477 = sand.u32 %s181, 1
          %s478 = smul.addr %s477, 4096
          %s479 = scalar_lea.vmem [#allocation18], %s478
          %s480 = smul.u32 128, %s24
          %s482 = ssub.s32 65536, 65536
          %483 = vsyncadd %s476, %s482
          %s484 = smul.addr %s480, 8
          %s485 = smul.addr %s484, 64
          %s486 = scalar_lea.hbm %s7, %s485
          %s487 = sshll.u32 %s479, 4
          %s488 = int_to_ptr.vmem [resolvable:$true] %s487
          %493 = dma.hbm_to_vmem [thread:$0]  %s486, 65536, %s488, %s476, 512, 512, 32
        $region68: #{discriminator_forward.1} parent=63 // pred_fallthru
          _
      $region64: #{discriminator_forward.1} parent=5 // pred_fallthru
        _
      %p494 = scmp.le.s32.totalorder 1, %s24
      %p495 = scmp.lt.s32.totalorder %s24, 3
      %p496 = pnand %p494, %p495
      %p497 = pneg %p496
      // Predicated region
      $region69: #{discriminator_forward.1} parent=5 // pred_check
        _
      $region70: #{discriminator_forward.1} parent=5 // pred_check_branch
        %499 = sbr.rel (%p496) target = $region72
      $region71: #{discriminator_forward.1} parent=5 // pred_region
        %s500 = ssub.s32 %s24, 1
        // Predicated region
        $region73: #{discriminator_forward.1} parent=71 // pred_check
          %p501 = pneg %p66
        $region74: #{discriminator_forward.1} parent=71 // pred_check_branch
          %503 = sbr.rel (%p501) target = $region76
        $region75: #{discriminator_forward.1} parent=71 // pred_region
          %504 = dma.done [#allocation9], 128
        $region76: #{discriminator_forward.1} parent=71 // pred_fallthru
          _
        // Predicated region
        $region77: #{discriminator_forward.1} parent=71 // pred_check
          %p505 = pneg %p87
        $region78: #{discriminator_forward.1} parent=71 // pred_check_branch
          %507 = sbr.rel (%p505) target = $region80
        $region79: #{discriminator_forward.1} parent=71 // pred_region
          %508 = dma.done [#allocation11], 16
        $region80: #{discriminator_forward.1} parent=71 // pred_fallthru
          _
        // Predicated region
        $region81: #{discriminator_forward.1} parent=71 // pred_check
          %p509 = pneg %p108
        $region82: #{discriminator_forward.1} parent=71 // pred_check_branch
          %511 = sbr.rel (%p509) target = $region84
        $region83: #{discriminator_forward.1} parent=71 // pred_region
          %512 = dma.done [#allocation11], 8192
        $region84: #{discriminator_forward.1} parent=71 // pred_fallthru
          _
        // Predicated region
        $region85: #{discriminator_forward.1} parent=71 // pred_check
          %p513 = pneg %p129
        $region86: #{discriminator_forward.1} parent=71 // pred_check_branch
          %515 = sbr.rel (%p513) target = $region88
        $region87: #{discriminator_forward.1} parent=71 // pred_region
          %516 = dma.done [#allocation14], 16
        $region88: #{discriminator_forward.1} parent=71 // pred_fallthru
          _
        // Predicated region
        $region89: #{discriminator_forward.1} parent=71 // pred_check
          %p517 = pneg %p150
        $region90: #{discriminator_forward.1} parent=71 // pred_check_branch
          %519 = sbr.rel (%p517) target = $region92
        $region91: #{discriminator_forward.1} parent=71 // pred_region
          %520 = dma.done [#allocation14], 16
        $region92: #{discriminator_forward.1} parent=71 // pred_fallthru
          _
        // Predicated region
        $region93: #{discriminator_forward.1} parent=71 // pred_check
          %p521 = pneg %p171
        $region94: #{discriminator_forward.1} parent=71 // pred_check_branch
          %523 = sbr.rel (%p521) target = $region96
        $region95: #{discriminator_forward.1} parent=71 // pred_region
          %524 = dma.done [#allocation17], 16
        $region96: #{discriminator_forward.1} parent=71 // pred_fallthru
          _
        %s525 = sand.u32 %s29, 1
        %s526 = scalar_lea.sflag [#allocation9], %s525
        %s527 = sand.u32 %s184, 1
        %s528 = smul.addr %s527, 4096
        %s529 = scalar_lea.vmem [#allocation18], %s528
        // Predicated region
        $region97: #{discriminator_forward.1} parent=71 // pred_check
          %p530 = pneg %p197
        $region98: #{discriminator_forward.1} parent=71 // pred_check_branch
          %532 = sbr.rel (%p530) target = $region100
        $region99: #{discriminator_forward.1} parent=71 // pred_region
          %533 = dma.done %s526, 65536
        $region100: #{discriminator_forward.1} parent=71 // pred_fallthru
          _
        // Predicated region
        $region101: #{discriminator_forward.1} parent=71 // pred_check
          %p534 = pneg %p218
        $region102: #{discriminator_forward.1} parent=71 // pred_check_branch
          %536 = sbr.rel (%p534) target = $region104
        $region103: #{discriminator_forward.1} parent=71 // pred_region
          %537 = dma.done [#allocation11], 128
        $region104: #{discriminator_forward.1} parent=71 // pred_fallthru
          _
        // Predicated region
        $region105: #{discriminator_forward.1} parent=71 // pred_check
          %p538 = pneg %p239
        $region106: #{discriminator_forward.1} parent=71 // pred_check_branch
          %540 = sbr.rel (%p538) target = $region108
        $region107: #{discriminator_forward.1} parent=71 // pred_region
          %541 = dma.done [#allocation14], 128
        $region108: #{discriminator_forward.1} parent=71 // pred_fallthru
          _
        // Predicated region
        $region109: #{discriminator_forward.1} parent=71 // pred_check
          %p542 = pneg %p260
        $region110: #{discriminator_forward.1} parent=71 // pred_check_branch
          %544 = sbr.rel (%p542) target = $region112
        $region111: #{discriminator_forward.1} parent=71 // pred_region
          %545 = dma.done [#allocation17], 128
        $region112: #{discriminator_forward.1} parent=71 // pred_fallthru
          _
        // Predicated region
        $region113: #{discriminator_forward.1} parent=71 // pred_check
          %p546 = pneg %p281
        $region114: #{discriminator_forward.1} parent=71 // pred_check_branch
          %548 = sbr.rel (%p546) target = $region116
        $region115: #{discriminator_forward.1} parent=71 // pred_region
          %549 = dma.done [#allocation23], 8192
        $region116: #{discriminator_forward.1} parent=71 // pred_fallthru
          _
        // Predicated region
        $region117: #{discriminator_forward.1} parent=71 // pred_check
          %p550 = pneg %p302
        $region118: #{discriminator_forward.1} parent=71 // pred_check_branch
          %552 = sbr.rel (%p550) target = $region120
        $region119: #{discriminator_forward.1} parent=71 // pred_region
          %553 = dma.done [#allocation23], 16
        $region120: #{discriminator_forward.1} parent=71 // pred_fallthru
          _
        %p554 = pneg %p45
        %p555 = pneg %p42
        %p556 = pneg %p66
        %p557 = pneg %p63
        %p558 = pneg %p87
        %p559 = pneg %p84
        %p560 = pneg %p108
        %p561 = pneg %p105
        %p562 = pneg %p129
        %p563 = pneg %p126
        %p564 = pneg %p150
        %p565 = pneg %p147
        %p566 = pneg %p171
        %p567 = pneg %p168
        %s568 = sand.u32 %s29, 1
        %s569 = scalar_lea.sflag [#allocation9], %s568
        %s570 = sand.u32 %s184, 1
        %s571 = smul.addr %s570, 4096
        %s572 = scalar_lea.vmem [#allocation18], %s571
        %p573 = pneg %p197
        %p574 = pneg %p194
        %p575 = pneg %p218
        %p576 = pneg %p215
        %p577 = pneg %p239
        %p578 = pneg %p236
        %p579 = pneg %p260
        %p580 = pneg %p257
        %p581 = pneg %p281
        %p582 = pneg %p278
        %p583 = pneg %p302
        %p584 = pneg %p299
        %p585 = pneg %p323
        %p586 = pneg %p320
        %s587 = smul.u32 128, %s29
        %p589 = scmp.eq.s32.totalorder %s29, 0
        // Predicated region
        $region121: #{discriminator_forward.1} parent=71 // pred_check
          %p590 = pneg %p589
        $region122: #{discriminator_forward.1} parent=71 // pred_check_branch
          %592 = sbr.rel (%p590) target = $region124
        $region123: #{discriminator_forward.1} parent=71 // pred_region
          %v593 = vld [vmem:[%s0] sm:$0xf]
          %v594 = vld [vmem:[%s0 + $0x4] sm:$0xf]
          %v595 = vld [vmem:[%s0 + $0x8] sm:$0xf]
          %v596 = vld [vmem:[%s0 + $0xc] sm:$0xf]
          %v597 = vld [vmem:[%s0 + $0x10] sm:$0xf]
          %v598 = vld [vmem:[%s0 + $0x14] sm:$0xf]
          %v599 = vld [vmem:[%s0 + $0x18] sm:$0xf]
          %v600 = vld [vmem:[%s0 + $0x1c] sm:$0xf]
          %v601 = vld [vmem:[%s0 + $0x20] sm:$0xf]
          %v602 = vld [vmem:[%s0 + $0x24] sm:$0xf]
          %v603 = vld [vmem:[%s0 + $0x28] sm:$0xf]
          %v604 = vld [vmem:[%s0 + $0x2c] sm:$0xf]
          %v605 = vld [vmem:[%s0 + $0x30] sm:$0xf]
          %v606 = vld [vmem:[%s0 + $0x34] sm:$0xf]
          %v607 = vld [vmem:[%s0 + $0x38] sm:$0xf]
          %v608 = vld [vmem:[%s0 + $0x3c] sm:$0xf]
          %v609 = vld [vmem:[%s0 + $0x40] sm:$0xf]
          %v610 = vld [vmem:[%s0 + $0x44] sm:$0xf]
          %v611 = vld [vmem:[%s0 + $0x48] sm:$0xf]
          %v612 = vld [vmem:[%s0 + $0x4c] sm:$0xf]
          %v613 = vld [vmem:[%s0 + $0x50] sm:$0xf]
          %v614 = vld [vmem:[%s0 + $0x54] sm:$0xf]
          %v615 = vld [vmem:[%s0 + $0x58] sm:$0xf]
          %v616 = vld [vmem:[%s0 + $0x5c] sm:$0xf]
          %v617 = vld [vmem:[%s0 + $0x60] sm:$0xf]
          %v618 = vld [vmem:[%s0 + $0x64] sm:$0xf]
          %v619 = vld [vmem:[%s0 + $0x68] sm:$0xf]
          %v620 = vld [vmem:[%s0 + $0x6c] sm:$0xf]
          %v621 = vld [vmem:[%s0 + $0x70] sm:$0xf]
          %v622 = vld [vmem:[%s0 + $0x74] sm:$0xf]
          %v623 = vld [vmem:[%s0 + $0x78] sm:$0xf]
          %v624 = vld [vmem:[%s0 + $0x7c] sm:$0xf]
          %v625 = vld [vmem:[#allocation8] sm:$0xf]
          %v626 = vld [vmem:[#allocation8 + $0x4] sm:$0xf]
          %v627 = vld [vmem:[#allocation10] sm:$0x1]
          %v629 = vlaneseq
          %v630 = vshrl.u32 %v629, 7
          %v631 = vsub.s32 0, %v630
          %v632 = vrot.slane %v627, %v631
          %v666 = vunpack.c.l.b16 %v593
          %v667 = vunpack.c.l.b16 %v594
          %v668 = vunpack.c.l.b16 %v595
          %v669 = vunpack.c.l.b16 %v596
          %v670 = vunpack.c.l.b16 %v597
          %v671 = vunpack.c.l.b16 %v598
          %v672 = vunpack.c.l.b16 %v599
          %v673 = vunpack.c.l.b16 %v600
          %v674 = vunpack.c.l.b16 %v601
          %v675 = vunpack.c.l.b16 %v602
          %v676 = vunpack.c.l.b16 %v603
          %v677 = vunpack.c.l.b16 %v604
          %v678 = vunpack.c.l.b16 %v605
          %v679 = vunpack.c.l.b16 %v606
          %v680 = vunpack.c.l.b16 %v607
          %v681 = vunpack.c.l.b16 %v608
          %v682 = vunpack.c.l.b16 %v609
          %v683 = vunpack.c.l.b16 %v610
          %v684 = vunpack.c.l.b16 %v611
          %v685 = vunpack.c.l.b16 %v612
          %v686 = vunpack.c.l.b16 %v613
          %v687 = vunpack.c.l.b16 %v614
          %v688 = vunpack.c.l.b16 %v615
          %v689 = vunpack.c.l.b16 %v616
          %v690 = vunpack.c.l.b16 %v617
          %v691 = vunpack.c.l.b16 %v618
          %v692 = vunpack.c.l.b16 %v619
          %v693 = vunpack.c.l.b16 %v620
          %v694 = vunpack.c.l.b16 %v621
          %v695 = vunpack.c.l.b16 %v622
          %v696 = vunpack.c.l.b16 %v623
          %v697 = vunpack.c.l.b16 %v624
          %v698 = vpack.c.b16 %v667, %v666
          %v699 = vpack.c.b16 %v669, %v668
          %v700 = vpack.c.b16 %v671, %v670
          %v701 = vpack.c.b16 %v673, %v672
          %v702 = vpack.c.b16 %v675, %v674
          %v703 = vpack.c.b16 %v677, %v676
          %v704 = vpack.c.b16 %v679, %v678
          %v705 = vpack.c.b16 %v681, %v680
          %v706 = vpack.c.b16 %v683, %v682
          %v707 = vpack.c.b16 %v685, %v684
          %v708 = vpack.c.b16 %v687, %v686
          %v709 = vpack.c.b16 %v689, %v688
          %v710 = vpack.c.b16 %v691, %v690
          %v711 = vpack.c.b16 %v693, %v692
          %v712 = vpack.c.b16 %v695, %v694
          %v713 = vpack.c.b16 %v697, %v696
          %v716 = vunpack.c.l.b16 %v625
          %v717 = vunpack.c.l.b16 %v626
          %v718 = vpack.c.b16 %v717, %v716
          %vm720 = vcmask 130048
          %v722 = vsel %vm720, %v698, 0
          %v725 = vsel %vm720, %v699, 0
          %v728 = vsel %vm720, %v700, 0
          %v731 = vsel %vm720, %v701, 0
          %v734 = vsel %vm720, %v702, 0
          %v737 = vsel %vm720, %v703, 0
          %v740 = vsel %vm720, %v704, 0
          %v743 = vsel %vm720, %v705, 0
          %v746 = vsel %vm720, %v706, 0
          %v749 = vsel %vm720, %v707, 0
          %v752 = vsel %vm720, %v708, 0
          %v755 = vsel %vm720, %v709, 0
          %v758 = vsel %vm720, %v710, 0
          %v761 = vsel %vm720, %v711, 0
          %v764 = vsel %vm720, %v712, 0
          %v767 = vsel %vm720, %v713, 0
          %769 = vmatprep.subr.bf16.mxu0 0
          %770 = vmatpush1.bf16.msra.mxu0 0
          %771 = vmatprep.subr.bf16.mxu0 0
          %772 = vmatpush1.bf16.msra.mxu0 0
          %773 = vmatprep.subr.bf16.mxu0 0
          %774 = vmatpush1.bf16.msra.mxu0 0
          %775 = vmatprep.subr.bf16.mxu0 0
          %776 = vmatpush1.bf16.msra.mxu0 0
          %777 = vmatprep.subr.bf16.mxu0 0
          %778 = vmatpush1.bf16.msra.mxu0 0
          %779 = vmatprep.subr.bf16.mxu0 0
          %780 = vmatpush1.bf16.msra.mxu0 0
          %781 = vmatprep.subr.bf16.mxu0 0
          %782 = vmatpush1.bf16.msra.mxu0 0
          %783 = vmatprep.subr.bf16.mxu0 0
          %784 = vmatpush1.bf16.msra.mxu0 %v718
          %785 = vmatprep.subr.bf16.mxu0 0
          %786 = vmatpush2.bf16.msra.mxu0 0
          %787 = vmatprep.subr.bf16.mxu0 0
          %788 = vmatpush2.bf16.msra.mxu0 0
          %789 = vmatprep.subr.bf16.mxu0 0
          %790 = vmatpush2.bf16.msra.mxu0 0
          %791 = vmatprep.subr.bf16.mxu0 0
          %792 = vmatpush2.bf16.msra.mxu0 0
          %793 = vmatprep.subr.bf16.mxu0 0
          %794 = vmatpush2.bf16.msra.mxu0 0
          %795 = vmatprep.subr.bf16.mxu0 0
          %796 = vmatpush2.bf16.msra.mxu0 0
          %797 = vmatprep.subr.bf16.mxu0 0
          %798 = vmatpush2.bf16.msra.mxu0 0
          %799 = vmatprep.subr.bf16.mxu0 0
          %800 = vmatpush2.bf16.msra.mxu0 0
          %801 = vmatprep.mubr.bf16.mxu0 0
          %802 = vmatmul.mubr.bf16.gmra.mxu0 %v722
          %v803 = vpop.f32.mrf.mxu0
          %v804 = vadd.f32 %v632, %v803
          %v805 = vpop.f32.mrf.mxu0
          %v806 = vpop.f32.mrf.mxu0
          %v807 = vadd.f32 %v632, %v806
          %v808 = vpop.f32.mrf.mxu0
          %809 = vmatprep.mubr.bf16.mxu0 0
          %810 = vmatmul.mubr.bf16.gmra.mxu0 %v725
          %v811 = vpop.f32.mrf.mxu0
          %v812 = vadd.f32 %v632, %v811
          %v813 = vpop.f32.mrf.mxu0
          %v814 = vpop.f32.mrf.mxu0
          %v815 = vadd.f32 %v632, %v814
          %v816 = vpop.f32.mrf.mxu0
          %817 = vmatprep.mubr.bf16.mxu0 0
          %818 = vmatmul.mubr.bf16.gmra.mxu0 %v728
          %v819 = vpop.f32.mrf.mxu0
          %v820 = vadd.f32 %v632, %v819
          %v821 = vpop.f32.mrf.mxu0
          %v822 = vpop.f32.mrf.mxu0
          %v823 = vadd.f32 %v632, %v822
          %v824 = vpop.f32.mrf.mxu0
          %825 = vmatprep.mubr.bf16.mxu0 0
          %826 = vmatmul.mubr.bf16.gmra.mxu0 %v731
          %v827 = vpop.f32.mrf.mxu0
          %v828 = vadd.f32 %v632, %v827
          %v829 = vpop.f32.mrf.mxu0
          %v830 = vpop.f32.mrf.mxu0
          %v831 = vadd.f32 %v632, %v830
          %v832 = vpop.f32.mrf.mxu0
          %833 = vmatprep.mubr.bf16.mxu0 0
          %834 = vmatmul.mubr.bf16.gmra.mxu0 %v734
          %v835 = vpop.f32.mrf.mxu0
          %v836 = vadd.f32 %v632, %v835
          %v837 = vpop.f32.mrf.mxu0
          %v838 = vpop.f32.mrf.mxu0
          %v839 = vadd.f32 %v632, %v838
          %v840 = vpop.f32.mrf.mxu0
          %841 = vmatprep.mubr.bf16.mxu0 0
          %842 = vmatmul.mubr.bf16.gmra.mxu0 %v737
          %v843 = vpop.f32.mrf.mxu0
          %v844 = vadd.f32 %v632, %v843
          %v845 = vpop.f32.mrf.mxu0
          %v846 = vpop.f32.mrf.mxu0
          %v847 = vadd.f32 %v632, %v846
          %v848 = vpop.f32.mrf.mxu0
          %849 = vmatprep.mubr.bf16.mxu0 0
          %850 = vmatmul.mubr.bf16.gmra.mxu0 %v740
          %v851 = vpop.f32.mrf.mxu0
          %v852 = vadd.f32 %v632, %v851
          %v853 = vpop.f32.mrf.mxu0
          %v854 = vpop.f32.mrf.mxu0
          %v855 = vadd.f32 %v632, %v854
          %v856 = vpop.f32.mrf.mxu0
          %857 = vmatprep.mubr.bf16.mxu0 0
          %858 = vmatmul.mubr.bf16.gmra.mxu0 %v743
          %v859 = vpop.f32.mrf.mxu0
          %v860 = vadd.f32 %v632, %v859
          %v861 = vpop.f32.mrf.mxu0
          %v862 = vpop.f32.mrf.mxu0
          %v863 = vadd.f32 %v632, %v862
          %v864 = vpop.f32.mrf.mxu0
          %865 = vmatprep.mubr.bf16.mxu0 0
          %866 = vmatmul.mubr.bf16.gmra.mxu0 %v746
          %v867 = vpop.f32.mrf.mxu0
          %v868 = vadd.f32 %v632, %v867
          %v869 = vpop.f32.mrf.mxu0
          %v870 = vpop.f32.mrf.mxu0
          %v871 = vadd.f32 %v632, %v870
          %v872 = vpop.f32.mrf.mxu0
          %873 = vmatprep.mubr.bf16.mxu0 0
          %874 = vmatmul.mubr.bf16.gmra.mxu0 %v749
          %v875 = vpop.f32.mrf.mxu0
          %v876 = vadd.f32 %v632, %v875
          %v877 = vpop.f32.mrf.mxu0
          %v878 = vpop.f32.mrf.mxu0
          %v879 = vadd.f32 %v632, %v878
          %v880 = vpop.f32.mrf.mxu0
          %881 = vmatprep.mubr.bf16.mxu0 0
          %882 = vmatmul.mubr.bf16.gmra.mxu0 %v752
          %v883 = vpop.f32.mrf.mxu0
          %v884 = vadd.f32 %v632, %v883
          %v885 = vpop.f32.mrf.mxu0
          %v886 = vpop.f32.mrf.mxu0
          %v887 = vadd.f32 %v632, %v886
          %v888 = vpop.f32.mrf.mxu0
          %889 = vmatprep.mubr.bf16.mxu0 0
          %890 = vmatmul.mubr.bf16.gmra.mxu0 %v755
          %v891 = vpop.f32.mrf.mxu0
          %v892 = vadd.f32 %v632, %v891
          %v893 = vpop.f32.mrf.mxu0
          %v894 = vpop.f32.mrf.mxu0
          %v895 = vadd.f32 %v632, %v894
          %v896 = vpop.f32.mrf.mxu0
          %897 = vmatprep.mubr.bf16.mxu0 0
          %898 = vmatmul.mubr.bf16.gmra.mxu0 %v758
          %v899 = vpop.f32.mrf.mxu0
          %v900 = vadd.f32 %v632, %v899
          %v901 = vpop.f32.mrf.mxu0
          %v902 = vpop.f32.mrf.mxu0
          %v903 = vadd.f32 %v632, %v902
          %v904 = vpop.f32.mrf.mxu0
          %905 = vmatprep.mubr.bf16.mxu0 0
          %906 = vmatmul.mubr.bf16.gmra.mxu0 %v761
          %v907 = vpop.f32.mrf.mxu0
          %v908 = vadd.f32 %v632, %v907
          %v909 = vpop.f32.mrf.mxu0
          %v910 = vpop.f32.mrf.mxu0
          %v911 = vadd.f32 %v632, %v910
          %v912 = vpop.f32.mrf.mxu0
          %913 = vmatprep.mubr.bf16.mxu0 0
          %914 = vmatmul.mubr.bf16.gmra.mxu0 %v764
          %v915 = vpop.f32.mrf.mxu0
          %v916 = vadd.f32 %v632, %v915
          %v917 = vpop.f32.mrf.mxu0
          %v918 = vpop.f32.mrf.mxu0
          %v919 = vadd.f32 %v632, %v918
          %v920 = vpop.f32.mrf.mxu0
          %921 = vmatprep.mubr.bf16.mxu0 0
          %922 = vmatmul.mubr.bf16.gmra.mxu0 %v767
          %v923 = vpop.f32.mrf.mxu0
          %v924 = vadd.f32 %v632, %v923
          %v925 = vpop.f32.mrf.mxu0
          %v926 = vpop.f32.mrf.mxu0
          %v927 = vadd.f32 %v632, %v926
          %v928 = vpop.f32.mrf.mxu0
          %929 = vdwg.mxu0
          %v930 = vmul.f32 %v804, 0.2
          %v931 = vmul.f32 %v807, 0.2
          %v932 = vmul.f32 %v812, 0.2
          %v933 = vmul.f32 %v815, 0.2
          %v934 = vmul.f32 %v820, 0.2
          %v935 = vmul.f32 %v823, 0.2
          %v936 = vmul.f32 %v828, 0.2
          %v937 = vmul.f32 %v831, 0.2
          %v938 = vmul.f32 %v836, 0.2
          %v939 = vmul.f32 %v839, 0.2
          %v940 = vmul.f32 %v844, 0.2
          %v941 = vmul.f32 %v847, 0.2
          %v942 = vmul.f32 %v852, 0.2
          %v943 = vmul.f32 %v855, 0.2
          %v944 = vmul.f32 %v860, 0.2
          %v945 = vmul.f32 %v863, 0.2
          %v946 = vmul.f32 %v868, 0.2
          %v947 = vmul.f32 %v871, 0.2
          %v948 = vmul.f32 %v876, 0.2
          %v949 = vmul.f32 %v879, 0.2
          %v950 = vmul.f32 %v884, 0.2
          %v951 = vmul.f32 %v887, 0.2
          %v952 = vmul.f32 %v892, 0.2
          %v953 = vmul.f32 %v895, 0.2
          %v954 = vmul.f32 %v900, 0.2
          %v955 = vmul.f32 %v903, 0.2
          %v956 = vmul.f32 %v908, 0.2
          %v957 = vmul.f32 %v911, 0.2
          %v958 = vmul.f32 %v916, 0.2
          %v959 = vmul.f32 %v919, 0.2
          %v960 = vmul.f32 %v924, 0.2
          %v961 = vmul.f32 %v927, 0.2
          %v962 = vmax.f32 %v804, %v930
          %v963 = vmax.f32 %v807, %v931
          %v964 = vmax.f32 %v812, %v932
          %v965 = vmax.f32 %v815, %v933
          %v966 = vmax.f32 %v820, %v934
          %v967 = vmax.f32 %v823, %v935
          %v968 = vmax.f32 %v828, %v936
          %v969 = vmax.f32 %v831, %v937
          %v970 = vmax.f32 %v836, %v938
          %v971 = vmax.f32 %v839, %v939
          %v972 = vmax.f32 %v844, %v940
          %v973 = vmax.f32 %v847, %v941
          %v974 = vmax.f32 %v852, %v942
          %v975 = vmax.f32 %v855, %v943
          %v976 = vmax.f32 %v860, %v944
          %v977 = vmax.f32 %v863, %v945
          %v978 = vmax.f32 %v868, %v946
          %v979 = vmax.f32 %v871, %v947
          %v980 = vmax.f32 %v876, %v948
          %v981 = vmax.f32 %v879, %v949
          %v982 = vmax.f32 %v884, %v950
          %v983 = vmax.f32 %v887, %v951
          %v984 = vmax.f32 %v892, %v952
          %v985 = vmax.f32 %v895, %v953
          %v986 = vmax.f32 %v900, %v954
          %v987 = vmax.f32 %v903, %v955
          %v988 = vmax.f32 %v908, %v956
          %v989 = vmax.f32 %v911, %v957
          %v990 = vmax.f32 %v916, %v958
          %v991 = vmax.f32 %v919, %v959
          %v992 = vmax.f32 %v924, %v960
          %v993 = vmax.f32 %v927, %v961
          %v994 = vpack.c.bf16 %v963, %v962
          %v995 = vpack.c.bf16 %v965, %v964
          %v996 = vpack.c.bf16 %v967, %v966
          %v997 = vpack.c.bf16 %v969, %v968
          %v998 = vpack.c.bf16 %v971, %v970
          %v999 = vpack.c.bf16 %v973, %v972
          %v1000 = vpack.c.bf16 %v975, %v974
          %v1001 = vpack.c.bf16 %v977, %v976
          %v1002 = vpack.c.bf16 %v979, %v978
          %v1003 = vpack.c.bf16 %v981, %v980
          %v1004 = vpack.c.bf16 %v983, %v982
          %v1005 = vpack.c.bf16 %v985, %v984
          %v1006 = vpack.c.bf16 %v987, %v986
          %v1007 = vpack.c.bf16 %v989, %v988
          %v1008 = vpack.c.bf16 %v991, %v990
          %v1009 = vpack.c.bf16 %v993, %v992
          %vm1010 = vcmask 519168
          %1011 = vst.msk [vmem:[#allocation2] sm:$0xf] %vm1010, 0
          %1012 = vst.msk [vmem:[#allocation2 + $0x4] sm:$0xf] %vm1010, 0
          %vm1013 = vcmask 517120
          %1014 = vst.msk [vmem:[#allocation2 + $0x8] sm:$0x3] %vm1013, 0
          %1015 = vst.msk [vmem:[#allocation2] sm:$0x3] %vm1013, 0
          %1016 = vst.msk [vmem:[#allocation2 + $0xc] sm:$0x3] %vm1013, 0
          %1017 = vst.msk [vmem:[#allocation2 + $0x18] sm:$0x3] %vm1013, 0
          %1018 = vst.msk [vmem:[#allocation2 + $0x24] sm:$0x3] %vm1013, 0
          %1019 = vst.msk [vmem:[#allocation2 + $0x30] sm:$0x3] %vm1013, 0
          %v1024 = vunpack.c.l.b16 %v994
          %v1025 = vunpack.c.h.b16 %v994
          %v1026 = vunpack.c.l.b16 %v995
          %v1027 = vunpack.c.h.b16 %v995
          %v1028 = vunpack.c.l.b16 %v996
          %v1029 = vunpack.c.h.b16 %v996
          %v1030 = vunpack.c.l.b16 %v997
          %v1031 = vunpack.c.h.b16 %v997
          %v1032 = vpack.c.b16 %v1024, %v1024
          %v1033 = vpack.c.b16 %v1025, %v1025
          %v1034 = vpack.c.b16 %v1026, %v1026
          %v1035 = vpack.c.b16 %v1027, %v1027
          %v1036 = vpack.c.b16 %v1028, %v1028
          %v1037 = vpack.c.b16 %v1029, %v1029
          %v1038 = vpack.c.b16 %v1030, %v1030
          %v1039 = vpack.c.b16 %v1031, %v1031
          %vm1040 = vcmask 1041408
          %vm1041 = vcmask 1045508
          %vm1042 = vmor %vm1040, %vm1041
          %v1043 = vrot.slane %v1032, 6
          %v1044 = vrot.slane %v1043, 4
          %v1045 = vrot.slane %v1033, 6
          %v1046 = vsel %vm1042, %v1044, %v1045
          %v1047 = vrot.slane %v1045, 4
          %v1048 = vrot.slane %v1034, 6
          %v1049 = vrot.slane %v1048, 4
          %v1050 = vrot.slane %v1035, 6
          %v1051 = vsel %vm1042, %v1049, %v1050
          %v1052 = vrot.slane %v1050, 4
          %v1053 = vrot.slane %v1036, 6
          %v1054 = vrot.slane %v1053, 4
          %v1055 = vrot.slane %v1037, 6
          %v1056 = vsel %vm1042, %v1054, %v1055
          %v1057 = vrot.slane %v1055, 4
          %v1058 = vrot.slane %v1038, 6
          %v1059 = vrot.slane %v1058, 4
          %v1060 = vrot.slane %v1039, 6
          %v1061 = vsel %vm1042, %v1059, %v1060
          %v1062 = vrot.slane %v1060, 4
          %s1075 = scalar_lea.vmem [#allocation2], 12
          %vm1076 = vcmask 519170
          %1077 = vst.msk [vmem:[%s1075] sm:$0xc] %vm1076, %v1043
          %1078 = vst.msk [vmem:[%s1075 + $0x4] sm:$0xf] %vm1010, %v1046
          %1079 = vst.msk [vmem:[%s1075 + $0x8] sm:$0x3] %vm1013, %v1047
          %1080 = vst.msk [vmem:[%s1075 + $0xc] sm:$0xc] %vm1076, %v1048
          %1081 = vst.msk [vmem:[%s1075 + $0x10] sm:$0xf] %vm1010, %v1051
          %1082 = vst.msk [vmem:[%s1075 + $0x14] sm:$0x3] %vm1013, %v1052
          %1083 = vst.msk [vmem:[%s1075 + $0x18] sm:$0xc] %vm1076, %v1053
          %1084 = vst.msk [vmem:[%s1075 + $0x1c] sm:$0xf] %vm1010, %v1056
          %1085 = vst.msk [vmem:[%s1075 + $0x20] sm:$0x3] %vm1013, %v1057
          %1086 = vst.msk [vmem:[%s1075 + $0x24] sm:$0xc] %vm1076, %v1058
          %1087 = vst.msk [vmem:[%s1075 + $0x28] sm:$0xf] %vm1010, %v1061
          %1088 = vst.msk [vmem:[%s1075 + $0x2c] sm:$0x3] %vm1013, %v1062
          %1089 = vst.msk [vmem:[#allocation3] sm:$0xf] %vm1010, 0
          %1090 = vst.msk [vmem:[#allocation3 + $0x4] sm:$0xf] %vm1010, 0
          %1091 = vst.msk [vmem:[#allocation3 + $0x8] sm:$0x3] %vm1013, 0
          %1092 = vst.msk [vmem:[#allocation3 + $0x8] sm:$0x3] %vm1013, 0
          %1093 = vst.msk [vmem:[#allocation3 + $0x14] sm:$0x3] %vm1013, 0
          %1094 = vst.msk [vmem:[#allocation3 + $0x20] sm:$0x3] %vm1013, 0
          %1095 = vst.msk [vmem:[#allocation3 + $0x2c] sm:$0x3] %vm1013, 0
          %1096 = vst.msk [vmem:[#allocation3 + $0x38] sm:$0x3] %vm1013, 0
          %v1101 = vunpack.c.l.b16 %v998
          %v1102 = vunpack.c.h.b16 %v998
          %v1103 = vunpack.c.l.b16 %v999
          %v1104 = vunpack.c.h.b16 %v999
          %v1105 = vunpack.c.l.b16 %v1000
          %v1106 = vunpack.c.h.b16 %v1000
          %v1107 = vunpack.c.l.b16 %v1001
          %v1108 = vunpack.c.h.b16 %v1001
          %v1109 = vpack.c.b16 %v1101, %v1101
          %v1110 = vpack.c.b16 %v1102, %v1102
          %v1111 = vpack.c.b16 %v1103, %v1103
          %v1112 = vpack.c.b16 %v1104, %v1104
          %v1113 = vpack.c.b16 %v1105, %v1105
          %v1114 = vpack.c.b16 %v1106, %v1106
          %v1115 = vpack.c.b16 %v1107, %v1107
          %v1116 = vpack.c.b16 %v1108, %v1108
          %s1125 = scalar_lea.vmem [#allocation3], 12
          %1126 = vst.msk [vmem:[%s1125] sm:$0xf] %vm1010, %v1109
          %1127 = vst.msk [vmem:[%s1125 + $0x4] sm:$0xf] %vm1010, %v1110
          %1128 = vst.msk [vmem:[%s1125 + $0xc] sm:$0xf] %vm1010, %v1111
          %1129 = vst.msk [vmem:[%s1125 + $0x10] sm:$0xf] %vm1010, %v1112
          %1130 = vst.msk [vmem:[%s1125 + $0x18] sm:$0xf] %vm1010, %v1113
          %1131 = vst.msk [vmem:[%s1125 + $0x1c] sm:$0xf] %vm1010, %v1114
          %1132 = vst.msk [vmem:[%s1125 + $0x24] sm:$0xf] %vm1010, %v1115
          %1133 = vst.msk [vmem:[%s1125 + $0x28] sm:$0xf] %vm1010, %v1116
          %s1134 = scalar_lea.vmem [#allocation4], 48
          %1135 = vst.msk [vmem:[%s1134] sm:$0xf] %vm1010, 0
          %1136 = vst.msk [vmem:[%s1134 + $0x4] sm:$0xf] %vm1010, 0
          %1137 = vst.msk [vmem:[%s1134 + $0x8] sm:$0x3] %vm1013, 0
          %1138 = vst.msk [vmem:[#allocation4] sm:$0x3] %vm1013, 0
          %1139 = vst.msk [vmem:[#allocation4 + $0xc] sm:$0x3] %vm1013, 0
          %1140 = vst.msk [vmem:[#allocation4 + $0x18] sm:$0x3] %vm1013, 0
          %1141 = vst.msk [vmem:[#allocation4 + $0x24] sm:$0x3] %vm1013, 0
          %1142 = vst.msk [vmem:[#allocation4 + $0x30] sm:$0x3] %vm1013, 0
          %v1147 = vunpack.c.l.b16 %v1002
          %v1148 = vunpack.c.h.b16 %v1002
          %v1149 = vunpack.c.l.b16 %v1003
          %v1150 = vunpack.c.h.b16 %v1003
          %v1151 = vunpack.c.l.b16 %v1004
          %v1152 = vunpack.c.h.b16 %v1004
          %v1153 = vunpack.c.l.b16 %v1005
          %v1154 = vunpack.c.h.b16 %v1005
          %v1155 = vpack.c.b16 %v1147, %v1147
          %v1156 = vpack.c.b16 %v1148, %v1148
          %v1157 = vpack.c.b16 %v1149, %v1149
          %v1158 = vpack.c.b16 %v1150, %v1150
          %v1159 = vpack.c.b16 %v1151, %v1151
          %v1160 = vpack.c.b16 %v1152, %v1152
          %v1161 = vpack.c.b16 %v1153, %v1153
          %v1162 = vpack.c.b16 %v1154, %v1154
          %v1163 = vrot.slane %v1155, 6
          %v1164 = vrot.slane %v1163, 4
          %v1165 = vrot.slane %v1156, 6
          %v1166 = vsel %vm1042, %v1164, %v1165
          %v1167 = vrot.slane %v1165, 4
          %v1168 = vrot.slane %v1157, 6
          %v1169 = vrot.slane %v1168, 4
          %v1170 = vrot.slane %v1158, 6
          %v1171 = vsel %vm1042, %v1169, %v1170
          %v1172 = vrot.slane %v1170, 4
          %v1173 = vrot.slane %v1159, 6
          %v1174 = vrot.slane %v1173, 4
          %v1175 = vrot.slane %v1160, 6
          %v1176 = vsel %vm1042, %v1174, %v1175
          %v1177 = vrot.slane %v1175, 4
          %v1178 = vrot.slane %v1161, 6
          %v1179 = vrot.slane %v1178, 4
          %v1180 = vrot.slane %v1162, 6
          %v1181 = vsel %vm1042, %v1179, %v1180
          %v1182 = vrot.slane %v1180, 4
          %1195 = vst.msk [vmem:[#allocation4] sm:$0xc] %vm1076, %v1163
          %1196 = vst.msk [vmem:[#allocation4 + $0x4] sm:$0xf] %vm1010, %v1166
          %1197 = vst.msk [vmem:[#allocation4 + $0x8] sm:$0x3] %vm1013, %v1167
          %1198 = vst.msk [vmem:[#allocation4 + $0xc] sm:$0xc] %vm1076, %v1168
          %1199 = vst.msk [vmem:[#allocation4 + $0x10] sm:$0xf] %vm1010, %v1171
          %1200 = vst.msk [vmem:[#allocation4 + $0x14] sm:$0x3] %vm1013, %v1172
          %1201 = vst.msk [vmem:[#allocation4 + $0x18] sm:$0xc] %vm1076, %v1173
          %1202 = vst.msk [vmem:[#allocation4 + $0x1c] sm:$0xf] %vm1010, %v1176
          %1203 = vst.msk [vmem:[#allocation4 + $0x20] sm:$0x3] %vm1013, %v1177
          %1204 = vst.msk [vmem:[#allocation4 + $0x24] sm:$0xc] %vm1076, %v1178
          %1205 = vst.msk [vmem:[#allocation4 + $0x28] sm:$0xf] %vm1010, %v1181
          %1206 = vst.msk [vmem:[#allocation4 + $0x2c] sm:$0x3] %vm1013, %v1182
          %s1207 = scalar_lea.vmem [#allocation5], 48
          %1208 = vst.msk [vmem:[%s1207] sm:$0xf] %vm1010, 0
          %1209 = vst.msk [vmem:[%s1207 + $0x4] sm:$0xf] %vm1010, 0
          %1210 = vst.msk [vmem:[%s1207 + $0x8] sm:$0x3] %vm1013, 0
          %1211 = vst.msk [vmem:[#allocation5 + $0x8] sm:$0x3] %vm1013, 0
          %1212 = vst.msk [vmem:[#allocation5 + $0x14] sm:$0x3] %vm1013, 0
          %1213 = vst.msk [vmem:[#allocation5 + $0x20] sm:$0x3] %vm1013, 0
          %1214 = vst.msk [vmem:[#allocation5 + $0x2c] sm:$0x3] %vm1013, 0
          %1215 = vst.msk [vmem:[#allocation5 + $0x38] sm:$0x3] %vm1013, 0
          %v1220 = vunpack.c.l.b16 %v1006
          %v1221 = vunpack.c.h.b16 %v1006
          %v1222 = vunpack.c.l.b16 %v1007
          %v1223 = vunpack.c.h.b16 %v1007
          %v1224 = vunpack.c.l.b16 %v1008
          %v1225 = vunpack.c.h.b16 %v1008
          %v1226 = vunpack.c.l.b16 %v1009
          %v1227 = vunpack.c.h.b16 %v1009
          %v1228 = vpack.c.b16 %v1220, %v1220
          %v1229 = vpack.c.b16 %v1221, %v1221
          %v1230 = vpack.c.b16 %v1222, %v1222
          %v1231 = vpack.c.b16 %v1223, %v1223
          %v1232 = vpack.c.b16 %v1224, %v1224
          %v1233 = vpack.c.b16 %v1225, %v1225
          %v1234 = vpack.c.b16 %v1226, %v1226
          %v1235 = vpack.c.b16 %v1227, %v1227
          %1244 = vst.msk [vmem:[#allocation5] sm:$0xf] %vm1010, %v1228
          %1245 = vst.msk [vmem:[#allocation5 + $0x4] sm:$0xf] %vm1010, %v1229
          %1246 = vst.msk [vmem:[#allocation5 + $0xc] sm:$0xf] %vm1010, %v1230
          %1247 = vst.msk [vmem:[#allocation5 + $0x10] sm:$0xf] %vm1010, %v1231
          %1248 = vst.msk [vmem:[#allocation5 + $0x18] sm:$0xf] %vm1010, %v1232
          %1249 = vst.msk [vmem:[#allocation5 + $0x1c] sm:$0xf] %vm1010, %v1233
          %1250 = vst.msk [vmem:[#allocation5 + $0x24] sm:$0xf] %vm1010, %v1234
          %1251 = vst.msk [vmem:[#allocation5 + $0x28] sm:$0xf] %vm1010, %v1235
          %v1252 = vld [vmem:[#allocation2] sm:$0xf]
          %v1253 = vld [vmem:[#allocation2 + $0x4] sm:$0xf]
          %v1254 = vld [vmem:[#allocation2 + $0xc] sm:$0xf]
          %v1255 = vld [vmem:[#allocation2 + $0x10] sm:$0xf]
          %v1256 = vld [vmem:[#allocation2 + $0x18] sm:$0xf]
          %v1257 = vld [vmem:[#allocation2 + $0x1c] sm:$0xf]
          %v1258 = vld [vmem:[#allocation2 + $0x24] sm:$0xf]
          %v1259 = vld [vmem:[#allocation2 + $0x28] sm:$0xf]
          %v1260 = vld [vmem:[#allocation3] sm:$0xf]
          %v1261 = vld [vmem:[#allocation3 + $0x4] sm:$0xf]
          %v1262 = vld [vmem:[#allocation3 + $0xc] sm:$0xf]
          %v1263 = vld [vmem:[#allocation3 + $0x10] sm:$0xf]
          %v1264 = vld [vmem:[#allocation3 + $0x18] sm:$0xf]
          %v1265 = vld [vmem:[#allocation3 + $0x1c] sm:$0xf]
          %v1266 = vld [vmem:[#allocation3 + $0x24] sm:$0xf]
          %v1267 = vld [vmem:[#allocation3 + $0x28] sm:$0xf]
          %v1268 = vld [vmem:[#allocation4] sm:$0xf]
          %v1269 = vld [vmem:[#allocation4 + $0x4] sm:$0xf]
          %v1270 = vld [vmem:[#allocation4 + $0xc] sm:$0xf]
          %v1271 = vld [vmem:[#allocation4 + $0x10] sm:$0xf]
          %v1272 = vld [vmem:[#allocation4 + $0x18] sm:$0xf]
          %v1273 = vld [vmem:[#allocation4 + $0x1c] sm:$0xf]
          %v1274 = vld [vmem:[#allocation4 + $0x24] sm:$0xf]
          %v1275 = vld [vmem:[#allocation4 + $0x28] sm:$0xf]
          %v1276 = vld [vmem:[#allocation5] sm:$0xf]
          %v1277 = vld [vmem:[#allocation5 + $0x4] sm:$0xf]
          %v1278 = vld [vmem:[#allocation5 + $0xc] sm:$0xf]
          %v1279 = vld [vmem:[#allocation5 + $0x10] sm:$0xf]
          %v1280 = vld [vmem:[#allocation5 + $0x18] sm:$0xf]
          %v1281 = vld [vmem:[#allocation5 + $0x1c] sm:$0xf]
          %v1282 = vld [vmem:[#allocation5 + $0x24] sm:$0xf]
          %v1283 = vld [vmem:[#allocation5 + $0x28] sm:$0xf]
          %v1292 = vunpack.c.l.b16 %v1252
          %v1293 = vunpack.c.l.b16 %v1253
          %v1294 = vunpack.c.l.b16 %v1254
          %v1295 = vunpack.c.l.b16 %v1255
          %v1296 = vunpack.c.l.b16 %v1256
          %v1297 = vunpack.c.l.b16 %v1257
          %v1298 = vunpack.c.l.b16 %v1258
          %v1299 = vunpack.c.l.b16 %v1259
          %v1300 = vpack.c.b16 %v1293, %v1292
          %v1301 = vpack.c.b16 %v1295, %v1294
          %v1302 = vpack.c.b16 %v1297, %v1296
          %v1303 = vpack.c.b16 %v1299, %v1298
          %v1312 = vunpack.c.l.b16 %v1260
          %v1313 = vunpack.c.l.b16 %v1261
          %v1314 = vunpack.c.l.b16 %v1262
          %v1315 = vunpack.c.l.b16 %v1263
          %v1316 = vunpack.c.l.b16 %v1264
          %v1317 = vunpack.c.l.b16 %v1265
          %v1318 = vunpack.c.l.b16 %v1266
          %v1319 = vunpack.c.l.b16 %v1267
          %v1320 = vpack.c.b16 %v1313, %v1312
          %v1321 = vpack.c.b16 %v1315, %v1314
          %v1322 = vpack.c.b16 %v1317, %v1316
          %v1323 = vpack.c.b16 %v1319, %v1318
          %1324 = vrot.lane.b32.xlu0 %v1320, 64
          %v1325 = vpop.permute.xlu0 %1324
          %1326 = vrot.lane.b32.xlu0 %v1321, 64
          %v1327 = vpop.permute.xlu0 %1326
          %1328 = vrot.lane.b32.xlu0 %v1322, 64
          %v1329 = vpop.permute.xlu0 %1328
          %1330 = vrot.lane.b32.xlu0 %v1323, 64
          %v1331 = vpop.permute.xlu0 %1330
          %v1340 = vunpack.c.l.b16 %v1268
          %v1341 = vunpack.c.l.b16 %v1269
          %v1342 = vunpack.c.l.b16 %v1270
          %v1343 = vunpack.c.l.b16 %v1271
          %v1344 = vunpack.c.l.b16 %v1272
          %v1345 = vunpack.c.l.b16 %v1273
          %v1346 = vunpack.c.l.b16 %v1274
          %v1347 = vunpack.c.l.b16 %v1275
          %v1348 = vpack.c.b16 %v1341, %v1340
          %v1349 = vpack.c.b16 %v1343, %v1342
          %v1350 = vpack.c.b16 %v1345, %v1344
          %v1351 = vpack.c.b16 %v1347, %v1346
          %v1360 = vunpack.c.l.b16 %v1276
          %v1361 = vunpack.c.l.b16 %v1277
          %v1362 = vunpack.c.l.b16 %v1278
          %v1363 = vunpack.c.l.b16 %v1279
          %v1364 = vunpack.c.l.b16 %v1280
          %v1365 = vunpack.c.l.b16 %v1281
          %v1366 = vunpack.c.l.b16 %v1282
          %v1367 = vunpack.c.l.b16 %v1283
          %v1368 = vpack.c.b16 %v1361, %v1360
          %v1369 = vpack.c.b16 %v1363, %v1362
          %v1370 = vpack.c.b16 %v1365, %v1364
          %v1371 = vpack.c.b16 %v1367, %v1366
          %1372 = vrot.lane.b32.xlu0 %v1368, 64
          %v1373 = vpop.permute.xlu0 %1372
          %1374 = vrot.lane.b32.xlu0 %v1369, 64
          %v1375 = vpop.permute.xlu0 %1374
          %1376 = vrot.lane.b32.xlu0 %v1370, 64
          %v1377 = vpop.permute.xlu0 %1376
          %1378 = vrot.lane.b32.xlu0 %v1371, 64
          %v1379 = vpop.permute.xlu0 %1378
          %vm1380 = vcmask 523264
          %v1383 = vsel %vm1380, %v1300, %v1325
          %v1387 = vsel %vm1380, %v1301, %v1327
          %v1391 = vsel %vm1380, %v1302, %v1329
          %v1395 = vsel %vm1380, %v1303, %v1331
          %v1399 = vsel %vm1380, %v1348, %v1373
          %v1403 = vsel %vm1380, %v1349, %v1375
          %v1407 = vsel %vm1380, %v1350, %v1377
          %v1411 = vsel %vm1380, %v1351, %v1379
          %v1413 = vld [vmem:[#allocation12] sm:$0xf]
          %v1414 = vld [vmem:[#allocation12 + $0x4] sm:$0xf]
          %v1415 = vld [vmem:[#allocation12 + $0x8] sm:$0xf]
          %v1416 = vld [vmem:[#allocation12 + $0xc] sm:$0xf]
          %v1417 = vld [vmem:[#allocation12 + $0x10] sm:$0xf]
          %v1418 = vld [vmem:[#allocation12 + $0x14] sm:$0xf]
          %v1419 = vld [vmem:[#allocation12 + $0x18] sm:$0xf]
          %v1420 = vld [vmem:[#allocation12 + $0x1c] sm:$0xf]
          %v1421 = vld [vmem:[#allocation12 + $0x20] sm:$0xf]
          %v1422 = vld [vmem:[#allocation12 + $0x24] sm:$0xf]
          %v1423 = vld [vmem:[#allocation12 + $0x28] sm:$0xf]
          %v1424 = vld [vmem:[#allocation12 + $0x2c] sm:$0xf]
          %v1425 = vld [vmem:[#allocation12 + $0x30] sm:$0xf]
          %v1426 = vld [vmem:[#allocation12 + $0x34] sm:$0xf]
          %v1427 = vld [vmem:[#allocation12 + $0x38] sm:$0xf]
          %v1428 = vld [vmem:[#allocation12 + $0x3c] sm:$0xf]
          %v1429 = vld [vmem:[#allocation12 + $0x40] sm:$0xf]
          %v1430 = vld [vmem:[#allocation12 + $0x44] sm:$0xf]
          %v1431 = vld [vmem:[#allocation12 + $0x48] sm:$0xf]
          %v1432 = vld [vmem:[#allocation12 + $0x4c] sm:$0xf]
          %v1433 = vld [vmem:[#allocation12 + $0x50] sm:$0xf]
          %v1434 = vld [vmem:[#allocation12 + $0x54] sm:$0xf]
          %v1435 = vld [vmem:[#allocation12 + $0x58] sm:$0xf]
          %v1436 = vld [vmem:[#allocation12 + $0x5c] sm:$0xf]
          %v1437 = vld [vmem:[#allocation12 + $0x60] sm:$0xf]
          %v1438 = vld [vmem:[#allocation12 + $0x64] sm:$0xf]
          %v1439 = vld [vmem:[#allocation12 + $0x68] sm:$0xf]
          %v1440 = vld [vmem:[#allocation12 + $0x6c] sm:$0xf]
          %v1441 = vld [vmem:[#allocation12 + $0x70] sm:$0xf]
          %v1442 = vld [vmem:[#allocation12 + $0x74] sm:$0xf]
          %v1443 = vld [vmem:[#allocation12 + $0x78] sm:$0xf]
          %v1444 = vld [vmem:[#allocation12 + $0x7c] sm:$0xf]
          %v1445 = vld [vmem:[#allocation2] sm:$0xc]
          %v1446 = vld [vmem:[#allocation2 + $0x8] sm:$0x3]
          %v1447 = vld [vmem:[#allocation2 + $0xc] sm:$0xc]
          %v1448 = vld [vmem:[#allocation2 + $0x14] sm:$0x3]
          %v1449 = vld [vmem:[#allocation2 + $0x18] sm:$0xc]
          %v1450 = vld [vmem:[#allocation2 + $0x20] sm:$0x3]
          %v1451 = vld [vmem:[#allocation2 + $0x24] sm:$0xc]
          %v1452 = vld [vmem:[#allocation2 + $0x2c] sm:$0x3]
          %v1453 = vld [vmem:[#allocation3] sm:$0xc]
          %v1454 = vld [vmem:[#allocation3 + $0x8] sm:$0x3]
          %v1455 = vld [vmem:[#allocation3 + $0xc] sm:$0xc]
          %v1456 = vld [vmem:[#allocation3 + $0x14] sm:$0x3]
          %v1457 = vld [vmem:[#allocation3 + $0x18] sm:$0xc]
          %v1458 = vld [vmem:[#allocation3 + $0x20] sm:$0x3]
          %v1459 = vld [vmem:[#allocation3 + $0x24] sm:$0xc]
          %v1460 = vld [vmem:[#allocation3 + $0x2c] sm:$0x3]
          %v1461 = vld [vmem:[#allocation4] sm:$0xc]
          %v1462 = vld [vmem:[#allocation4 + $0x8] sm:$0x3]
          %v1463 = vld [vmem:[#allocation4 + $0xc] sm:$0xc]
          %v1464 = vld [vmem:[#allocation4 + $0x14] sm:$0x3]
          %v1465 = vld [vmem:[#allocation4 + $0x18] sm:$0xc]
          %v1466 = vld [vmem:[#allocation4 + $0x20] sm:$0x3]
          %v1467 = vld [vmem:[#allocation4 + $0x24] sm:$0xc]
          %v1468 = vld [vmem:[#allocation4 + $0x2c] sm:$0x3]
          %v1469 = vld [vmem:[#allocation5] sm:$0xc]
          %v1470 = vld [vmem:[#allocation5 + $0x8] sm:$0x3]
          %v1471 = vld [vmem:[#allocation5 + $0xc] sm:$0xc]
          %v1472 = vld [vmem:[#allocation5 + $0x14] sm:$0x3]
          %v1473 = vld [vmem:[#allocation5 + $0x18] sm:$0xc]
          %v1474 = vld [vmem:[#allocation5 + $0x20] sm:$0x3]
          %v1475 = vld [vmem:[#allocation5 + $0x24] sm:$0xc]
          %v1476 = vld [vmem:[#allocation5 + $0x2c] sm:$0x3]
          %v1485 = vunpack.c.l.b16 %v1445
          %v1486 = vunpack.c.l.b16 %v1446
          %v1487 = vunpack.c.l.b16 %v1447
          %v1488 = vunpack.c.l.b16 %v1448
          %v1489 = vunpack.c.l.b16 %v1449
          %v1490 = vunpack.c.l.b16 %v1450
          %v1491 = vunpack.c.l.b16 %v1451
          %v1492 = vunpack.c.l.b16 %v1452
          %v1493 = vpack.c.b16 %v1293, %v1485
          %v1494 = vpack.c.b16 %v1486, %v1486
          %v1495 = vpack.c.b16 %v1295, %v1487
          %v1496 = vpack.c.b16 %v1488, %v1488
          %v1497 = vpack.c.b16 %v1297, %v1489
          %v1498 = vpack.c.b16 %v1490, %v1490
          %v1499 = vpack.c.b16 %v1299, %v1491
          %v1500 = vpack.c.b16 %v1492, %v1492
          %v1509 = vunpack.c.l.b16 %v1453
          %v1510 = vunpack.c.l.b16 %v1454
          %v1511 = vunpack.c.l.b16 %v1455
          %v1512 = vunpack.c.l.b16 %v1456
          %v1513 = vunpack.c.l.b16 %v1457
          %v1514 = vunpack.c.l.b16 %v1458
          %v1515 = vunpack.c.l.b16 %v1459
          %v1516 = vunpack.c.l.b16 %v1460
          %v1517 = vpack.c.b16 %v1313, %v1509
          %v1518 = vpack.c.b16 %v1510, %v1510
          %v1519 = vpack.c.b16 %v1315, %v1511
          %v1520 = vpack.c.b16 %v1512, %v1512
          %v1521 = vpack.c.b16 %v1317, %v1513
          %v1522 = vpack.c.b16 %v1514, %v1514
          %v1523 = vpack.c.b16 %v1319, %v1515
          %v1524 = vpack.c.b16 %v1516, %v1516
          %1525 = vrot.lane.b32.xlu0 %v1517, 64
          %v1526 = vpop.permute.xlu0 %1525
          %1527 = vrot.lane.b32.xlu0 %v1518, 64
          %v1528 = vpop.permute.xlu0 %1527
          %1529 = vrot.lane.b32.xlu0 %v1519, 64
          %v1530 = vpop.permute.xlu0 %1529
          %1531 = vrot.lane.b32.xlu0 %v1520, 64
          %v1532 = vpop.permute.xlu0 %1531
          %1533 = vrot.lane.b32.xlu0 %v1521, 64
          %v1534 = vpop.permute.xlu0 %1533
          %1535 = vrot.lane.b32.xlu0 %v1522, 64
          %v1536 = vpop.permute.xlu0 %1535
          %1537 = vrot.lane.b32.xlu0 %v1523, 64
          %v1538 = vpop.permute.xlu0 %1537
          %1539 = vrot.lane.b32.xlu0 %v1524, 64
          %v1540 = vpop.permute.xlu0 %1539
          %v1549 = vunpack.c.l.b16 %v1461
          %v1550 = vunpack.c.l.b16 %v1462
          %v1551 = vunpack.c.l.b16 %v1463
          %v1552 = vunpack.c.l.b16 %v1464
          %v1553 = vunpack.c.l.b16 %v1465
          %v1554 = vunpack.c.l.b16 %v1466
          %v1555 = vunpack.c.l.b16 %v1467
          %v1556 = vunpack.c.l.b16 %v1468
          %v1557 = vpack.c.b16 %v1341, %v1549
          %v1558 = vpack.c.b16 %v1550, %v1550
          %v1559 = vpack.c.b16 %v1343, %v1551
          %v1560 = vpack.c.b16 %v1552, %v1552
          %v1561 = vpack.c.b16 %v1345, %v1553
          %v1562 = vpack.c.b16 %v1554, %v1554
          %v1563 = vpack.c.b16 %v1347, %v1555
          %v1564 = vpack.c.b16 %v1556, %v1556
          %v1573 = vunpack.c.l.b16 %v1469
          %v1574 = vunpack.c.l.b16 %v1470
          %v1575 = vunpack.c.l.b16 %v1471
          %v1576 = vunpack.c.l.b16 %v1472
          %v1577 = vunpack.c.l.b16 %v1473
          %v1578 = vunpack.c.l.b16 %v1474
          %v1579 = vunpack.c.l.b16 %v1475
          %v1580 = vunpack.c.l.b16 %v1476
          %v1581 = vpack.c.b16 %v1361, %v1573
          %v1582 = vpack.c.b16 %v1574, %v1574
          %v1583 = vpack.c.b16 %v1363, %v1575
          %v1584 = vpack.c.b16 %v1576, %v1576
          %v1585 = vpack.c.b16 %v1365, %v1577
          %v1586 = vpack.c.b16 %v1578, %v1578
          %v1587 = vpack.c.b16 %v1367, %v1579
          %v1588 = vpack.c.b16 %v1580, %v1580
          %1589 = vrot.lane.b32.xlu0 %v1581, 64
          %v1590 = vpop.permute.xlu0 %1589
          %1591 = vrot.lane.b32.xlu0 %v1582, 64
          %v1592 = vpop.permute.xlu0 %1591
          %1593 = vrot.lane.b32.xlu0 %v1583, 64
          %v1594 = vpop.permute.xlu0 %1593
          %1595 = vrot.lane.b32.xlu0 %v1584, 64
          %v1596 = vpop.permute.xlu0 %1595
          %1597 = vrot.lane.b32.xlu0 %v1585, 64
          %v1598 = vpop.permute.xlu0 %1597
          %1599 = vrot.lane.b32.xlu0 %v1586, 64
          %v1600 = vpop.permute.xlu0 %1599
          %1601 = vrot.lane.b32.xlu0 %v1587, 64
          %v1602 = vpop.permute.xlu0 %1601
          %1603 = vrot.lane.b32.xlu0 %v1588, 64
          %v1604 = vpop.permute.xlu0 %1603
          %v1607 = vsel %vm1380, %v1493, %v1526
          %v1610 = vsel %vm1380, %v1494, %v1528
          %v1613 = vsel %vm1380, %v1495, %v1530
          %v1616 = vsel %vm1380, %v1496, %v1532
          %v1619 = vsel %vm1380, %v1497, %v1534
          %v1622 = vsel %vm1380, %v1498, %v1536
          %v1625 = vsel %vm1380, %v1499, %v1538
          %v1628 = vsel %vm1380, %v1500, %v1540
          %v1631 = vsel %vm1380, %v1557, %v1590
          %v1634 = vsel %vm1380, %v1558, %v1592
          %v1637 = vsel %vm1380, %v1559, %v1594
          %v1640 = vsel %vm1380, %v1560, %v1596
          %v1643 = vsel %vm1380, %v1561, %v1598
          %v1646 = vsel %vm1380, %v1562, %v1600
          %v1649 = vsel %vm1380, %v1563, %v1602
          %v1652 = vsel %vm1380, %v1564, %v1604
          %vm1669 = vcmask 1045504
          %v1670 = vrot.slane %v1607, 2
          %v1671 = vrot.slane %v1610, 2
          %v1672 = vsel %vm1669, %v1670, %v1671
          %v1673 = vrot.slane %v1631, 2
          %v1674 = vrot.slane %v1634, 2
          %v1675 = vsel %vm1669, %v1673, %v1674
          %v1676 = vrot.slane %v1613, 2
          %v1677 = vrot.slane %v1616, 2
          %v1678 = vsel %vm1669, %v1676, %v1677
          %v1679 = vrot.slane %v1637, 2
          %v1680 = vrot.slane %v1640, 2
          %v1681 = vsel %vm1669, %v1679, %v1680
          %v1682 = vrot.slane %v1619, 2
          %v1683 = vrot.slane %v1622, 2
          %v1684 = vsel %vm1669, %v1682, %v1683
          %v1685 = vrot.slane %v1643, 2
          %v1686 = vrot.slane %v1646, 2
          %v1687 = vsel %vm1669, %v1685, %v1686
          %v1688 = vrot.slane %v1625, 2
          %v1689 = vrot.slane %v1628, 2
          %v1690 = vsel %vm1669, %v1688, %v1689
          %v1691 = vrot.slane %v1649, 2
          %v1692 = vrot.slane %v1652, 2
          %v1693 = vsel %vm1669, %v1691, %v1692
          %s1702 = scalar_lea.vmem [#allocation12], 128
          %v1703 = vld [vmem:[%s1702] sm:$0xf]
          %v1704 = vld [vmem:[%s1702 + $0x4] sm:$0xf]
          %v1705 = vld [vmem:[%s1702 + $0x8] sm:$0xf]
          %v1706 = vld [vmem:[%s1702 + $0xc] sm:$0xf]
          %v1707 = vld [vmem:[%s1702 + $0x10] sm:$0xf]
          %v1708 = vld [vmem:[%s1702 + $0x14] sm:$0xf]
          %v1709 = vld [vmem:[%s1702 + $0x18] sm:$0xf]
          %v1710 = vld [vmem:[%s1702 + $0x1c] sm:$0xf]
          %v1711 = vld [vmem:[%s1702 + $0x20] sm:$0xf]
          %v1712 = vld [vmem:[%s1702 + $0x24] sm:$0xf]
          %v1713 = vld [vmem:[%s1702 + $0x28] sm:$0xf]
          %v1714 = vld [vmem:[%s1702 + $0x2c] sm:$0xf]
          %v1715 = vld [vmem:[%s1702 + $0x30] sm:$0xf]
          %v1716 = vld [vmem:[%s1702 + $0x34] sm:$0xf]
          %v1717 = vld [vmem:[%s1702 + $0x38] sm:$0xf]
          %v1718 = vld [vmem:[%s1702 + $0x3c] sm:$0xf]
          %v1719 = vld [vmem:[%s1702 + $0x40] sm:$0xf]
          %v1720 = vld [vmem:[%s1702 + $0x44] sm:$0xf]
          %v1721 = vld [vmem:[%s1702 + $0x48] sm:$0xf]
          %v1722 = vld [vmem:[%s1702 + $0x4c] sm:$0xf]
          %v1723 = vld [vmem:[%s1702 + $0x50] sm:$0xf]
          %v1724 = vld [vmem:[%s1702 + $0x54] sm:$0xf]
          %v1725 = vld [vmem:[%s1702 + $0x58] sm:$0xf]
          %v1726 = vld [vmem:[%s1702 + $0x5c] sm:$0xf]
          %v1727 = vld [vmem:[%s1702 + $0x60] sm:$0xf]
          %v1728 = vld [vmem:[%s1702 + $0x64] sm:$0xf]
          %v1729 = vld [vmem:[%s1702 + $0x68] sm:$0xf]
          %v1730 = vld [vmem:[%s1702 + $0x6c] sm:$0xf]
          %v1731 = vld [vmem:[%s1702 + $0x70] sm:$0xf]
          %v1732 = vld [vmem:[%s1702 + $0x74] sm:$0xf]
          %v1733 = vld [vmem:[%s1702 + $0x78] sm:$0xf]
          %v1734 = vld [vmem:[%s1702 + $0x7c] sm:$0xf]
          %v1767 = vunpack.c.l.b16 %v1703
          %v1768 = vunpack.c.l.b16 %v1704
          %v1769 = vunpack.c.l.b16 %v1705
          %v1770 = vunpack.c.l.b16 %v1706
          %v1771 = vunpack.c.l.b16 %v1707
          %v1772 = vunpack.c.l.b16 %v1708
          %v1773 = vunpack.c.l.b16 %v1709
          %v1774 = vunpack.c.l.b16 %v1710
          %v1775 = vunpack.c.l.b16 %v1711
          %v1776 = vunpack.c.l.b16 %v1712
          %v1777 = vunpack.c.l.b16 %v1713
          %v1778 = vunpack.c.l.b16 %v1714
          %v1779 = vunpack.c.l.b16 %v1715
          %v1780 = vunpack.c.l.b16 %v1716
          %v1781 = vunpack.c.l.b16 %v1717
          %v1782 = vunpack.c.l.b16 %v1718
          %v1783 = vunpack.c.l.b16 %v1719
          %v1784 = vunpack.c.l.b16 %v1720
          %v1785 = vunpack.c.l.b16 %v1721
          %v1786 = vunpack.c.l.b16 %v1722
          %v1787 = vunpack.c.l.b16 %v1723
          %v1788 = vunpack.c.l.b16 %v1724
          %v1789 = vunpack.c.l.b16 %v1725
          %v1790 = vunpack.c.l.b16 %v1726
          %v1791 = vunpack.c.l.b16 %v1727
          %v1792 = vunpack.c.l.b16 %v1728
          %v1793 = vunpack.c.l.b16 %v1729
          %v1794 = vunpack.c.l.b16 %v1730
          %v1795 = vunpack.c.l.b16 %v1731
          %v1796 = vunpack.c.l.b16 %v1732
          %v1797 = vunpack.c.l.b16 %v1733
          %v1798 = vunpack.c.l.b16 %v1734
          %v1799 = vpack.c.b16 %v1768, %v1767
          %v1800 = vpack.c.b16 %v1770, %v1769
          %v1801 = vpack.c.b16 %v1772, %v1771
          %v1802 = vpack.c.b16 %v1774, %v1773
          %v1803 = vpack.c.b16 %v1776, %v1775
          %v1804 = vpack.c.b16 %v1778, %v1777
          %v1805 = vpack.c.b16 %v1780, %v1779
          %v1806 = vpack.c.b16 %v1782, %v1781
          %v1807 = vpack.c.b16 %v1784, %v1783
          %v1808 = vpack.c.b16 %v1786, %v1785
          %v1809 = vpack.c.b16 %v1788, %v1787
          %v1810 = vpack.c.b16 %v1790, %v1789
          %v1811 = vpack.c.b16 %v1792, %v1791
          %v1812 = vpack.c.b16 %v1794, %v1793
          %v1813 = vpack.c.b16 %v1796, %v1795
          %v1814 = vpack.c.b16 %v1798, %v1797
          %1831 = vmatprep.subr.bf16.mxu0 0
          %1832 = vmatpush1.bf16.msra.mxu0 %v1806
          %1833 = vmatprep.subr.bf16.mxu0 0
          %1834 = vmatpush1.bf16.msra.mxu0 %v1805
          %1835 = vmatprep.subr.bf16.mxu0 0
          %1836 = vmatpush1.bf16.msra.mxu0 %v1804
          %1837 = vmatprep.subr.bf16.mxu0 0
          %1838 = vmatpush1.bf16.msra.mxu0 %v1803
          %1839 = vmatprep.subr.bf16.mxu0 0
          %1840 = vmatpush1.bf16.msra.mxu0 %v1802
          %1841 = vmatprep.subr.bf16.mxu0 0
          %1842 = vmatpush1.bf16.msra.mxu0 %v1801
          %1843 = vmatprep.subr.bf16.mxu0 0
          %1844 = vmatpush1.bf16.msra.mxu0 %v1800
          %1845 = vmatprep.subr.bf16.mxu0 0
          %1846 = vmatpush1.bf16.msra.mxu0 %v1799
          %1847 = vmatprep.subr.bf16.mxu0 0
          %1848 = vmatpush2.bf16.msra.mxu0 %v1814
          %1849 = vmatprep.subr.bf16.mxu0 0
          %1850 = vmatpush2.bf16.msra.mxu0 %v1813
          %1851 = vmatprep.subr.bf16.mxu0 0
          %1852 = vmatpush2.bf16.msra.mxu0 %v1812
          %1853 = vmatprep.subr.bf16.mxu0 0
          %1854 = vmatpush2.bf16.msra.mxu0 %v1811
          %1855 = vmatprep.subr.bf16.mxu0 0
          %1856 = vmatpush2.bf16.msra.mxu0 %v1810
          %1857 = vmatprep.subr.bf16.mxu0 0
          %1858 = vmatpush2.bf16.msra.mxu0 %v1809
          %1859 = vmatprep.subr.bf16.mxu0 0
          %1860 = vmatpush2.bf16.msra.mxu0 %v1808
          %1861 = vmatprep.subr.bf16.mxu0 0
          %1862 = vmatpush2.bf16.msra.mxu0 %v1807
          %1863 = vmatprep.mubr.bf16.mxu0 %v1675
          %1864 = vmatmul.mubr.bf16.gmra.mxu0 %v1672
          %v1865 = vpop.f32.mrf.mxu0
          %v1866 = vadd.f32 0.0, %v1865
          %v1867 = vpop.f32.mrf.mxu0
          %v1868 = vpop.f32.mrf.mxu0
          %v1869 = vadd.f32 0.0, %v1868
          %v1870 = vpop.f32.mrf.mxu0
          %1871 = vmatprep.mubr.bf16.mxu0 %v1681
          %1872 = vmatmul.mubr.bf16.gmra.mxu0 %v1678
          %v1873 = vpop.f32.mrf.mxu0
          %v1874 = vadd.f32 0.0, %v1873
          %v1875 = vpop.f32.mrf.mxu0
          %v1876 = vpop.f32.mrf.mxu0
          %v1877 = vadd.f32 0.0, %v1876
          %v1878 = vpop.f32.mrf.mxu0
          %1879 = vmatprep.mubr.bf16.mxu0 %v1687
          %1880 = vmatmul.mubr.bf16.gmra.mxu0 %v1684
          %v1881 = vpop.f32.mrf.mxu0
          %v1882 = vadd.f32 0.0, %v1881
          %v1883 = vpop.f32.mrf.mxu0
          %v1884 = vpop.f32.mrf.mxu0
          %v1885 = vadd.f32 0.0, %v1884
          %v1886 = vpop.f32.mrf.mxu0
          %1887 = vmatprep.mubr.bf16.mxu0 %v1693
          %1888 = vmatmul.mubr.bf16.gmra.mxu0 %v1690
          %v1889 = vpop.f32.mrf.mxu0
          %v1890 = vadd.f32 0.0, %v1889
          %v1891 = vpop.f32.mrf.mxu0
          %v1892 = vpop.f32.mrf.mxu0
          %v1893 = vadd.f32 0.0, %v1892
          %v1894 = vpop.f32.mrf.mxu0
          %1895 = vdwg.mxu0
          %v1928 = vunpack.c.l.b16 %v1413
          %v1929 = vunpack.c.l.b16 %v1414
          %v1930 = vunpack.c.l.b16 %v1415
          %v1931 = vunpack.c.l.b16 %v1416
          %v1932 = vunpack.c.l.b16 %v1417
          %v1933 = vunpack.c.l.b16 %v1418
          %v1934 = vunpack.c.l.b16 %v1419
          %v1935 = vunpack.c.l.b16 %v1420
          %v1936 = vunpack.c.l.b16 %v1421
          %v1937 = vunpack.c.l.b16 %v1422
          %v1938 = vunpack.c.l.b16 %v1423
          %v1939 = vunpack.c.l.b16 %v1424
          %v1940 = vunpack.c.l.b16 %v1425
          %v1941 = vunpack.c.l.b16 %v1426
          %v1942 = vunpack.c.l.b16 %v1427
          %v1943 = vunpack.c.l.b16 %v1428
          %v1944 = vunpack.c.l.b16 %v1429
          %v1945 = vunpack.c.l.b16 %v1430
          %v1946 = vunpack.c.l.b16 %v1431
          %v1947 = vunpack.c.l.b16 %v1432
          %v1948 = vunpack.c.l.b16 %v1433
          %v1949 = vunpack.c.l.b16 %v1434
          %v1950 = vunpack.c.l.b16 %v1435
          %v1951 = vunpack.c.l.b16 %v1436
          %v1952 = vunpack.c.l.b16 %v1437
          %v1953 = vunpack.c.l.b16 %v1438
          %v1954 = vunpack.c.l.b16 %v1439
          %v1955 = vunpack.c.l.b16 %v1440
          %v1956 = vunpack.c.l.b16 %v1441
          %v1957 = vunpack.c.l.b16 %v1442
          %v1958 = vunpack.c.l.b16 %v1443
          %v1959 = vunpack.c.l.b16 %v1444
          %v1960 = vpack.c.b16 %v1929, %v1928
          %v1961 = vpack.c.b16 %v1931, %v1930
          %v1962 = vpack.c.b16 %v1933, %v1932
          %v1963 = vpack.c.b16 %v1935, %v1934
          %v1964 = vpack.c.b16 %v1937, %v1936
          %v1965 = vpack.c.b16 %v1939, %v1938
          %v1966 = vpack.c.b16 %v1941, %v1940
          %v1967 = vpack.c.b16 %v1943, %v1942
          %v1968 = vpack.c.b16 %v1945, %v1944
          %v1969 = vpack.c.b16 %v1947, %v1946
          %v1970 = vpack.c.b16 %v1949, %v1948
          %v1971 = vpack.c.b16 %v1951, %v1950
          %v1972 = vpack.c.b16 %v1953, %v1952
          %v1973 = vpack.c.b16 %v1955, %v1954
          %v1974 = vpack.c.b16 %v1957, %v1956
          %v1975 = vpack.c.b16 %v1959, %v1958
          %1992 = vmatprep.subr.bf16.mxu0 0
          %1993 = vmatpush1.bf16.msra.mxu0 %v1967
          %1994 = vmatprep.subr.bf16.mxu0 0
          %1995 = vmatpush1.bf16.msra.mxu0 %v1966
          %1996 = vmatprep.subr.bf16.mxu0 0
          %1997 = vmatpush1.bf16.msra.mxu0 %v1965
          %1998 = vmatprep.subr.bf16.mxu0 0
          %1999 = vmatpush1.bf16.msra.mxu0 %v1964
          %2000 = vmatprep.subr.bf16.mxu0 0
          %2001 = vmatpush1.bf16.msra.mxu0 %v1963
          %2002 = vmatprep.subr.bf16.mxu0 0
          %2003 = vmatpush1.bf16.msra.mxu0 %v1962
          %2004 = vmatprep.subr.bf16.mxu0 0
          %2005 = vmatpush1.bf16.msra.mxu0 %v1961
          %2006 = vmatprep.subr.bf16.mxu0 0
          %2007 = vmatpush1.bf16.msra.mxu0 %v1960
          %2008 = vmatprep.subr.bf16.mxu0 0
          %2009 = vmatpush2.bf16.msra.mxu0 %v1975
          %2010 = vmatprep.subr.bf16.mxu0 0
          %2011 = vmatpush2.bf16.msra.mxu0 %v1974
          %2012 = vmatprep.subr.bf16.mxu0 0
          %2013 = vmatpush2.bf16.msra.mxu0 %v1973
          %2014 = vmatprep.subr.bf16.mxu0 0
          %2015 = vmatpush2.bf16.msra.mxu0 %v1972
          %2016 = vmatprep.subr.bf16.mxu0 0
          %2017 = vmatpush2.bf16.msra.mxu0 %v1971
          %2018 = vmatprep.subr.bf16.mxu0 0
          %2019 = vmatpush2.bf16.msra.mxu0 %v1970
          %2020 = vmatprep.subr.bf16.mxu0 0
          %2021 = vmatpush2.bf16.msra.mxu0 %v1969
          %2022 = vmatprep.subr.bf16.mxu0 0
          %2023 = vmatpush2.bf16.msra.mxu0 %v1968
          %2024 = vmatprep.mubr.bf16.mxu0 %v1399
          %2025 = vmatmul.mubr.bf16.gmra.mxu0 %v1383
          %v2026 = vpop.f32.mrf.mxu0
          %v2027 = vadd.f32 %v1866, %v2026
          %v2028 = vpop.f32.mrf.mxu0
          %v2029 = vpop.f32.mrf.mxu0
          %v2030 = vadd.f32 %v1869, %v2029
          %v2031 = vpop.f32.mrf.mxu0
          %2032 = vmatprep.mubr.bf16.mxu0 %v1403
          %2033 = vmatmul.mubr.bf16.gmra.mxu0 %v1387
          %v2034 = vpop.f32.mrf.mxu0
          %v2035 = vadd.f32 %v1874, %v2034
          %v2036 = vpop.f32.mrf.mxu0
          %v2037 = vpop.f32.mrf.mxu0
          %v2038 = vadd.f32 %v1877, %v2037
          %v2039 = vpop.f32.mrf.mxu0
          %2040 = vmatprep.mubr.bf16.mxu0 %v1407
          %2041 = vmatmul.mubr.bf16.gmra.mxu0 %v1391
          %v2042 = vpop.f32.mrf.mxu0
          %v2043 = vadd.f32 %v1882, %v2042
          %v2044 = vpop.f32.mrf.mxu0
          %v2045 = vpop.f32.mrf.mxu0
          %v2046 = vadd.f32 %v1885, %v2045
          %v2047 = vpop.f32.mrf.mxu0
          %2048 = vmatprep.mubr.bf16.mxu0 %v1411
          %2049 = vmatmul.mubr.bf16.gmra.mxu0 %v1395
          %v2050 = vpop.f32.mrf.mxu0
          %v2051 = vadd.f32 %v1890, %v2050
          %v2052 = vpop.f32.mrf.mxu0
          %v2053 = vpop.f32.mrf.mxu0
          %v2054 = vadd.f32 %v1893, %v2053
          %v2055 = vpop.f32.mrf.mxu0
          %2056 = vdwg.mxu0
          %v2057 = vld [vmem:[%s1075] sm:$0xf]
          %v2058 = vld [vmem:[%s1075 + $0x4] sm:$0xf]
          %v2059 = vld [vmem:[%s1075 + $0xc] sm:$0xf]
          %v2060 = vld [vmem:[%s1075 + $0x10] sm:$0xf]
          %v2061 = vld [vmem:[%s1075 + $0x18] sm:$0xf]
          %v2062 = vld [vmem:[%s1075 + $0x1c] sm:$0xf]
          %v2063 = vld [vmem:[%s1075 + $0x24] sm:$0xf]
          %v2064 = vld [vmem:[%s1075 + $0x28] sm:$0xf]
          %v2065 = vld [vmem:[%s1125] sm:$0xf]
          %v2066 = vld [vmem:[%s1125 + $0x4] sm:$0xf]
          %v2067 = vld [vmem:[%s1125 + $0xc] sm:$0xf]
          %v2068 = vld [vmem:[%s1125 + $0x10] sm:$0xf]
          %v2069 = vld [vmem:[%s1125 + $0x18] sm:$0xf]
          %v2070 = vld [vmem:[%s1125 + $0x1c] sm:$0xf]
          %v2071 = vld [vmem:[%s1125 + $0x24] sm:$0xf]
          %v2072 = vld [vmem:[%s1125 + $0x28] sm:$0xf]
          %s2073 = scalar_lea.vmem [#allocation4], 12
          %v2074 = vld [vmem:[%s2073] sm:$0xf]
          %v2075 = vld [vmem:[%s2073 + $0x4] sm:$0xf]
          %v2076 = vld [vmem:[%s2073 + $0xc] sm:$0xf]
          %v2077 = vld [vmem:[%s2073 + $0x10] sm:$0xf]
          %v2078 = vld [vmem:[%s2073 + $0x18] sm:$0xf]
          %v2079 = vld [vmem:[%s2073 + $0x1c] sm:$0xf]
          %v2080 = vld [vmem:[%s2073 + $0x24] sm:$0xf]
          %v2081 = vld [vmem:[%s2073 + $0x28] sm:$0xf]
          %s2082 = scalar_lea.vmem [#allocation5], 12
          %v2083 = vld [vmem:[%s2082] sm:$0xf]
          %v2084 = vld [vmem:[%s2082 + $0x4] sm:$0xf]
          %v2085 = vld [vmem:[%s2082 + $0xc] sm:$0xf]
          %v2086 = vld [vmem:[%s2082 + $0x10] sm:$0xf]
          %v2087 = vld [vmem:[%s2082 + $0x18] sm:$0xf]
          %v2088 = vld [vmem:[%s2082 + $0x1c] sm:$0xf]
          %v2089 = vld [vmem:[%s2082 + $0x24] sm:$0xf]
          %v2090 = vld [vmem:[%s2082 + $0x28] sm:$0xf]
          %v2099 = vunpack.c.l.b16 %v2057
          %v2100 = vunpack.c.l.b16 %v2058
          %v2101 = vunpack.c.l.b16 %v2059
          %v2102 = vunpack.c.l.b16 %v2060
          %v2103 = vunpack.c.l.b16 %v2061
          %v2104 = vunpack.c.l.b16 %v2062
          %v2105 = vunpack.c.l.b16 %v2063
          %v2106 = vunpack.c.l.b16 %v2064
          %v2107 = vpack.c.b16 %v2100, %v2099
          %v2108 = vpack.c.b16 %v2102, %v2101
          %v2109 = vpack.c.b16 %v2104, %v2103
          %v2110 = vpack.c.b16 %v2106, %v2105
          %v2119 = vunpack.c.l.b16 %v2065
          %v2120 = vunpack.c.l.b16 %v2066
          %v2121 = vunpack.c.l.b16 %v2067
          %v2122 = vunpack.c.l.b16 %v2068
          %v2123 = vunpack.c.l.b16 %v2069
          %v2124 = vunpack.c.l.b16 %v2070
          %v2125 = vunpack.c.l.b16 %v2071
          %v2126 = vunpack.c.l.b16 %v2072
          %v2127 = vpack.c.b16 %v2120, %v2119
          %v2128 = vpack.c.b16 %v2122, %v2121
          %v2129 = vpack.c.b16 %v2124, %v2123
          %v2130 = vpack.c.b16 %v2126, %v2125
          %2131 = vrot.lane.b32.xlu0 %v2127, 64
          %v2132 = vpop.permute.xlu0 %2131
          %2133 = vrot.lane.b32.xlu0 %v2128, 64
          %v2134 = vpop.permute.xlu0 %2133
          %2135 = vrot.lane.b32.xlu0 %v2129, 64
          %v2136 = vpop.permute.xlu0 %2135
          %2137 = vrot.lane.b32.xlu0 %v2130, 64
          %v2138 = vpop.permute.xlu0 %2137
          %v2147 = vunpack.c.l.b16 %v2074
          %v2148 = vunpack.c.l.b16 %v2075
          %v2149 = vunpack.c.l.b16 %v2076
          %v2150 = vunpack.c.l.b16 %v2077
          %v2151 = vunpack.c.l.b16 %v2078
          %v2152 = vunpack.c.l.b16 %v2079
          %v2153 = vunpack.c.l.b16 %v2080
          %v2154 = vunpack.c.l.b16 %v2081
          %v2155 = vpack.c.b16 %v2148, %v2147
          %v2156 = vpack.c.b16 %v2150, %v2149
          %v2157 = vpack.c.b16 %v2152, %v2151
          %v2158 = vpack.c.b16 %v2154, %v2153
          %v2167 = vunpack.c.l.b16 %v2083
          %v2168 = vunpack.c.l.b16 %v2084
          %v2169 = vunpack.c.l.b16 %v2085
          %v2170 = vunpack.c.l.b16 %v2086
          %v2171 = vunpack.c.l.b16 %v2087
          %v2172 = vunpack.c.l.b16 %v2088
          %v2173 = vunpack.c.l.b16 %v2089
          %v2174 = vunpack.c.l.b16 %v2090
          %v2175 = vpack.c.b16 %v2168, %v2167
          %v2176 = vpack.c.b16 %v2170, %v2169
          %v2177 = vpack.c.b16 %v2172, %v2171
          %v2178 = vpack.c.b16 %v2174, %v2173
          %2179 = vrot.lane.b32.xlu0 %v2175, 64
          %v2180 = vpop.permute.xlu0 %2179
          %2181 = vrot.lane.b32.xlu0 %v2176, 64
          %v2182 = vpop.permute.xlu0 %2181
          %2183 = vrot.lane.b32.xlu0 %v2177, 64
          %v2184 = vpop.permute.xlu0 %2183
          %2185 = vrot.lane.b32.xlu0 %v2178, 64
          %v2186 = vpop.permute.xlu0 %2185
          %v2189 = vsel %vm1380, %v2107, %v2132
          %v2193 = vsel %vm1380, %v2108, %v2134
          %v2197 = vsel %vm1380, %v2109, %v2136
          %v2201 = vsel %vm1380, %v2110, %v2138
          %v2205 = vsel %vm1380, %v2155, %v2180
          %v2209 = vsel %vm1380, %v2156, %v2182
          %v2213 = vsel %vm1380, %v2157, %v2184
          %v2217 = vsel %vm1380, %v2158, %v2186
          %s2219 = scalar_lea.vmem [#allocation12], 256
          %v2220 = vld [vmem:[%s2219] sm:$0xf]
          %v2221 = vld [vmem:[%s2219 + $0x4] sm:$0xf]
          %v2222 = vld [vmem:[%s2219 + $0x8] sm:$0xf]
          %v2223 = vld [vmem:[%s2219 + $0xc] sm:$0xf]
          %v2224 = vld [vmem:[%s2219 + $0x10] sm:$0xf]
          %v2225 = vld [vmem:[%s2219 + $0x14] sm:$0xf]
          %v2226 = vld [vmem:[%s2219 + $0x18] sm:$0xf]
          %v2227 = vld [vmem:[%s2219 + $0x1c] sm:$0xf]
          %v2228 = vld [vmem:[%s2219 + $0x20] sm:$0xf]
          %v2229 = vld [vmem:[%s2219 + $0x24] sm:$0xf]
          %v2230 = vld [vmem:[%s2219 + $0x28] sm:$0xf]
          %v2231 = vld [vmem:[%s2219 + $0x2c] sm:$0xf]
          %v2232 = vld [vmem:[%s2219 + $0x30] sm:$0xf]
          %v2233 = vld [vmem:[%s2219 + $0x34] sm:$0xf]
          %v2234 = vld [vmem:[%s2219 + $0x38] sm:$0xf]
          %v2235 = vld [vmem:[%s2219 + $0x3c] sm:$0xf]
          %v2236 = vld [vmem:[%s2219 + $0x40] sm:$0xf]
          %v2237 = vld [vmem:[%s2219 + $0x44] sm:$0xf]
          %v2238 = vld [vmem:[%s2219 + $0x48] sm:$0xf]
          %v2239 = vld [vmem:[%s2219 + $0x4c] sm:$0xf]
          %v2240 = vld [vmem:[%s2219 + $0x50] sm:$0xf]
          %v2241 = vld [vmem:[%s2219 + $0x54] sm:$0xf]
          %v2242 = vld [vmem:[%s2219 + $0x58] sm:$0xf]
          %v2243 = vld [vmem:[%s2219 + $0x5c] sm:$0xf]
          %v2244 = vld [vmem:[%s2219 + $0x60] sm:$0xf]
          %v2245 = vld [vmem:[%s2219 + $0x64] sm:$0xf]
          %v2246 = vld [vmem:[%s2219 + $0x68] sm:$0xf]
          %v2247 = vld [vmem:[%s2219 + $0x6c] sm:$0xf]
          %v2248 = vld [vmem:[%s2219 + $0x70] sm:$0xf]
          %v2249 = vld [vmem:[%s2219 + $0x74] sm:$0xf]
          %v2250 = vld [vmem:[%s2219 + $0x78] sm:$0xf]
          %v2251 = vld [vmem:[%s2219 + $0x7c] sm:$0xf]
          %v2284 = vunpack.c.l.b16 %v2220
          %v2285 = vunpack.c.l.b16 %v2221
          %v2286 = vunpack.c.l.b16 %v2222
          %v2287 = vunpack.c.l.b16 %v2223
          %v2288 = vunpack.c.l.b16 %v2224
          %v2289 = vunpack.c.l.b16 %v2225
          %v2290 = vunpack.c.l.b16 %v2226
          %v2291 = vunpack.c.l.b16 %v2227
          %v2292 = vunpack.c.l.b16 %v2228
          %v2293 = vunpack.c.l.b16 %v2229
          %v2294 = vunpack.c.l.b16 %v2230
          %v2295 = vunpack.c.l.b16 %v2231
          %v2296 = vunpack.c.l.b16 %v2232
          %v2297 = vunpack.c.l.b16 %v2233
          %v2298 = vunpack.c.l.b16 %v2234
          %v2299 = vunpack.c.l.b16 %v2235
          %v2300 = vunpack.c.l.b16 %v2236
          %v2301 = vunpack.c.l.b16 %v2237
          %v2302 = vunpack.c.l.b16 %v2238
          %v2303 = vunpack.c.l.b16 %v2239
          %v2304 = vunpack.c.l.b16 %v2240
          %v2305 = vunpack.c.l.b16 %v2241
          %v2306 = vunpack.c.l.b16 %v2242
          %v2307 = vunpack.c.l.b16 %v2243
          %v2308 = vunpack.c.l.b16 %v2244
          %v2309 = vunpack.c.l.b16 %v2245
          %v2310 = vunpack.c.l.b16 %v2246
          %v2311 = vunpack.c.l.b16 %v2247
          %v2312 = vunpack.c.l.b16 %v2248
          %v2313 = vunpack.c.l.b16 %v2249
          %v2314 = vunpack.c.l.b16 %v2250
          %v2315 = vunpack.c.l.b16 %v2251
          %v2316 = vpack.c.b16 %v2285, %v2284
          %v2317 = vpack.c.b16 %v2287, %v2286
          %v2318 = vpack.c.b16 %v2289, %v2288
          %v2319 = vpack.c.b16 %v2291, %v2290
          %v2320 = vpack.c.b16 %v2293, %v2292
          %v2321 = vpack.c.b16 %v2295, %v2294
          %v2322 = vpack.c.b16 %v2297, %v2296
          %v2323 = vpack.c.b16 %v2299, %v2298
          %v2324 = vpack.c.b16 %v2301, %v2300
          %v2325 = vpack.c.b16 %v2303, %v2302
          %v2326 = vpack.c.b16 %v2305, %v2304
          %v2327 = vpack.c.b16 %v2307, %v2306
          %v2328 = vpack.c.b16 %v2309, %v2308
          %v2329 = vpack.c.b16 %v2311, %v2310
          %v2330 = vpack.c.b16 %v2313, %v2312
          %v2331 = vpack.c.b16 %v2315, %v2314
          %2348 = vmatprep.subr.bf16.mxu0 0
          %2349 = vmatpush1.bf16.msra.mxu0 %v2323
          %2350 = vmatprep.subr.bf16.mxu0 0
          %2351 = vmatpush1.bf16.msra.mxu0 %v2322
          %2352 = vmatprep.subr.bf16.mxu0 0
          %2353 = vmatpush1.bf16.msra.mxu0 %v2321
          %2354 = vmatprep.subr.bf16.mxu0 0
          %2355 = vmatpush1.bf16.msra.mxu0 %v2320
          %2356 = vmatprep.subr.bf16.mxu0 0
          %2357 = vmatpush1.bf16.msra.mxu0 %v2319
          %2358 = vmatprep.subr.bf16.mxu0 0
          %2359 = vmatpush1.bf16.msra.mxu0 %v2318
          %2360 = vmatprep.subr.bf16.mxu0 0
          %2361 = vmatpush1.bf16.msra.mxu0 %v2317
          %2362 = vmatprep.subr.bf16.mxu0 0
          %2363 = vmatpush1.bf16.msra.mxu0 %v2316
          %2364 = vmatprep.subr.bf16.mxu0 0
          %2365 = vmatpush2.bf16.msra.mxu0 %v2331
          %2366 = vmatprep.subr.bf16.mxu0 0
          %2367 = vmatpush2.bf16.msra.mxu0 %v2330
          %2368 = vmatprep.subr.bf16.mxu0 0
          %2369 = vmatpush2.bf16.msra.mxu0 %v2329
          %2370 = vmatprep.subr.bf16.mxu0 0
          %2371 = vmatpush2.bf16.msra.mxu0 %v2328
          %2372 = vmatprep.subr.bf16.mxu0 0
          %2373 = vmatpush2.bf16.msra.mxu0 %v2327
          %2374 = vmatprep.subr.bf16.mxu0 0
          %2375 = vmatpush2.bf16.msra.mxu0 %v2326
          %2376 = vmatprep.subr.bf16.mxu0 0
          %2377 = vmatpush2.bf16.msra.mxu0 %v2325
          %2378 = vmatprep.subr.bf16.mxu0 0
          %2379 = vmatpush2.bf16.msra.mxu0 %v2324
          %2380 = vmatprep.mubr.bf16.mxu0 %v2205
          %2381 = vmatmul.mubr.bf16.gmra.mxu0 %v2189
          %v2382 = vpop.f32.mrf.mxu0
          %v2383 = vadd.f32 0.0, %v2382
          %v2384 = vpop.f32.mrf.mxu0
          %v2385 = vpop.f32.mrf.mxu0
          %v2386 = vadd.f32 0.0, %v2385
          %v2387 = vpop.f32.mrf.mxu0
          %2388 = vmatprep.mubr.bf16.mxu0 %v2209
          %2389 = vmatmul.mubr.bf16.gmra.mxu0 %v2193
          %v2390 = vpop.f32.mrf.mxu0
          %v2391 = vadd.f32 0.0, %v2390
          %v2392 = vpop.f32.mrf.mxu0
          %v2393 = vpop.f32.mrf.mxu0
          %v2394 = vadd.f32 0.0, %v2393
          %v2395 = vpop.f32.mrf.mxu0
          %2396 = vmatprep.mubr.bf16.mxu0 %v2213
          %2397 = vmatmul.mubr.bf16.gmra.mxu0 %v2197
          %v2398 = vpop.f32.mrf.mxu0
          %v2399 = vadd.f32 0.0, %v2398
          %v2400 = vpop.f32.mrf.mxu0
          %v2401 = vpop.f32.mrf.mxu0
          %v2402 = vadd.f32 0.0, %v2401
          %v2403 = vpop.f32.mrf.mxu0
          %2404 = vmatprep.mubr.bf16.mxu0 %v2217
          %2405 = vmatmul.mubr.bf16.gmra.mxu0 %v2201
          %v2406 = vpop.f32.mrf.mxu0
          %v2407 = vadd.f32 0.0, %v2406
          %v2408 = vpop.f32.mrf.mxu0
          %v2409 = vpop.f32.mrf.mxu0
          %v2410 = vadd.f32 0.0, %v2409
          %v2411 = vpop.f32.mrf.mxu0
          %2412 = vdwg.mxu0
          %v2413 = vadd.f32 %v2027, %v2383
          %v2414 = vadd.f32 %v2030, %v2386
          %v2415 = vadd.f32 %v2035, %v2391
          %v2416 = vadd.f32 %v2038, %v2394
          %v2417 = vadd.f32 %v2043, %v2399
          %v2418 = vadd.f32 %v2046, %v2402
          %v2419 = vadd.f32 %v2051, %v2407
          %v2420 = vadd.f32 %v2054, %v2410
          %v2421 = vld [vmem:[%s1075] sm:$0xc]
          %v2422 = vld [vmem:[%s1075 + $0x4] sm:$0xf]
          %v2423 = vld [vmem:[%s1075 + $0x8] sm:$0x3]
          %v2424 = vld [vmem:[%s1075 + $0xc] sm:$0xc]
          %v2425 = vld [vmem:[%s1075 + $0x10] sm:$0xf]
          %v2426 = vld [vmem:[%s1075 + $0x14] sm:$0x3]
          %v2427 = vld [vmem:[%s1075 + $0x18] sm:$0xc]
          %v2428 = vld [vmem:[%s1075 + $0x1c] sm:$0xf]
          %v2429 = vld [vmem:[%s1075 + $0x20] sm:$0x3]
          %v2430 = vld [vmem:[%s1075 + $0x24] sm:$0xc]
          %v2431 = vld [vmem:[%s1075 + $0x28] sm:$0xf]
          %v2432 = vld [vmem:[%s1075 + $0x2c] sm:$0x3]
          %v2433 = vld [vmem:[%s1125] sm:$0xc]
          %v2434 = vld [vmem:[%s1125 + $0x4] sm:$0xf]
          %v2435 = vld [vmem:[%s1125 + $0x8] sm:$0x3]
          %v2436 = vld [vmem:[%s1125 + $0xc] sm:$0xc]
          %v2437 = vld [vmem:[%s1125 + $0x10] sm:$0xf]
          %v2438 = vld [vmem:[%s1125 + $0x14] sm:$0x3]
          %v2439 = vld [vmem:[%s1125 + $0x18] sm:$0xc]
          %v2440 = vld [vmem:[%s1125 + $0x1c] sm:$0xf]
          %v2441 = vld [vmem:[%s1125 + $0x20] sm:$0x3]
          %v2442 = vld [vmem:[%s1125 + $0x24] sm:$0xc]
          %v2443 = vld [vmem:[%s1125 + $0x28] sm:$0xf]
          %v2444 = vld [vmem:[%s1125 + $0x2c] sm:$0x3]
          %v2445 = vld [vmem:[%s2073] sm:$0xc]
          %v2446 = vld [vmem:[%s2073 + $0x4] sm:$0xf]
          %v2447 = vld [vmem:[%s2073 + $0x8] sm:$0x3]
          %v2448 = vld [vmem:[%s2073 + $0xc] sm:$0xc]
          %v2449 = vld [vmem:[%s2073 + $0x10] sm:$0xf]
          %v2450 = vld [vmem:[%s2073 + $0x14] sm:$0x3]
          %v2451 = vld [vmem:[%s2073 + $0x18] sm:$0xc]
          %v2452 = vld [vmem:[%s2073 + $0x1c] sm:$0xf]
          %v2453 = vld [vmem:[%s2073 + $0x20] sm:$0x3]
          %v2454 = vld [vmem:[%s2073 + $0x24] sm:$0xc]
          %v2455 = vld [vmem:[%s2073 + $0x28] sm:$0xf]
          %v2456 = vld [vmem:[%s2073 + $0x2c] sm:$0x3]
          %v2457 = vld [vmem:[%s2082] sm:$0xc]
          %v2458 = vld [vmem:[%s2082 + $0x4] sm:$0xf]
          %v2459 = vld [vmem:[%s2082 + $0x8] sm:$0x3]
          %v2460 = vld [vmem:[%s2082 + $0xc] sm:$0xc]
          %v2461 = vld [vmem:[%s2082 + $0x10] sm:$0xf]
          %v2462 = vld [vmem:[%s2082 + $0x14] sm:$0x3]
          %v2463 = vld [vmem:[%s2082 + $0x18] sm:$0xc]
          %v2464 = vld [vmem:[%s2082 + $0x1c] sm:$0xf]
          %v2465 = vld [vmem:[%s2082 + $0x20] sm:$0x3]
          %v2466 = vld [vmem:[%s2082 + $0x24] sm:$0xc]
          %v2467 = vld [vmem:[%s2082 + $0x28] sm:$0xf]
          %v2468 = vld [vmem:[%s2082 + $0x2c] sm:$0x3]
          %v2481 = vunpack.c.l.b16 %v2421
          %v2482 = vunpack.c.l.b16 %v2422
          %v2483 = vunpack.c.l.b16 %v2423
          %v2484 = vunpack.c.l.b16 %v2424
          %v2485 = vunpack.c.l.b16 %v2425
          %v2486 = vunpack.c.l.b16 %v2426
          %v2487 = vunpack.c.l.b16 %v2427
          %v2488 = vunpack.c.l.b16 %v2428
          %v2489 = vunpack.c.l.b16 %v2429
          %v2490 = vunpack.c.l.b16 %v2430
          %v2491 = vunpack.c.l.b16 %v2431
          %v2492 = vunpack.c.l.b16 %v2432
          %v2493 = vpack.c.b16 %v2482, %v2481
          %v2494 = vpack.c.b16 %v2483, %v2483
          %v2495 = vpack.c.b16 %v2485, %v2484
          %v2496 = vpack.c.b16 %v2486, %v2486
          %v2497 = vpack.c.b16 %v2488, %v2487
          %v2498 = vpack.c.b16 %v2489, %v2489
          %v2499 = vpack.c.b16 %v2491, %v2490
          %v2500 = vpack.c.b16 %v2492, %v2492
          %v2513 = vunpack.c.l.b16 %v2433
          %v2514 = vunpack.c.l.b16 %v2434
          %v2515 = vunpack.c.l.b16 %v2435
          %v2516 = vunpack.c.l.b16 %v2436
          %v2517 = vunpack.c.l.b16 %v2437
          %v2518 = vunpack.c.l.b16 %v2438
          %v2519 = vunpack.c.l.b16 %v2439
          %v2520 = vunpack.c.l.b16 %v2440
          %v2521 = vunpack.c.l.b16 %v2441
          %v2522 = vunpack.c.l.b16 %v2442
          %v2523 = vunpack.c.l.b16 %v2443
          %v2524 = vunpack.c.l.b16 %v2444
          %v2525 = vpack.c.b16 %v2514, %v2513
          %v2526 = vpack.c.b16 %v2515, %v2515
          %v2527 = vpack.c.b16 %v2517, %v2516
          %v2528 = vpack.c.b16 %v2518, %v2518
          %v2529 = vpack.c.b16 %v2520, %v2519
          %v2530 = vpack.c.b16 %v2521, %v2521
          %v2531 = vpack.c.b16 %v2523, %v2522
          %v2532 = vpack.c.b16 %v2524, %v2524
          %2533 = vrot.lane.b32.xlu0 %v2525, 64
          %v2534 = vpop.permute.xlu0 %2533
          %2535 = vrot.lane.b32.xlu0 %v2526, 64
          %v2536 = vpop.permute.xlu0 %2535
          %2537 = vrot.lane.b32.xlu0 %v2527, 64
          %v2538 = vpop.permute.xlu0 %2537
          %2539 = vrot.lane.b32.xlu0 %v2528, 64
          %v2540 = vpop.permute.xlu0 %2539
          %2541 = vrot.lane.b32.xlu0 %v2529, 64
          %v2542 = vpop.permute.xlu0 %2541
          %2543 = vrot.lane.b32.xlu0 %v2530, 64
          %v2544 = vpop.permute.xlu0 %2543
          %2545 = vrot.lane.b32.xlu0 %v2531, 64
          %v2546 = vpop.permute.xlu0 %2545
          %2547 = vrot.lane.b32.xlu0 %v2532, 64
          %v2548 = vpop.permute.xlu0 %2547
          %v2561 = vunpack.c.l.b16 %v2445
          %v2562 = vunpack.c.l.b16 %v2446
          %v2563 = vunpack.c.l.b16 %v2447
          %v2564 = vunpack.c.l.b16 %v2448
          %v2565 = vunpack.c.l.b16 %v2449
          %v2566 = vunpack.c.l.b16 %v2450
          %v2567 = vunpack.c.l.b16 %v2451
          %v2568 = vunpack.c.l.b16 %v2452
          %v2569 = vunpack.c.l.b16 %v2453
          %v2570 = vunpack.c.l.b16 %v2454
          %v2571 = vunpack.c.l.b16 %v2455
          %v2572 = vunpack.c.l.b16 %v2456
          %v2573 = vpack.c.b16 %v2562, %v2561
          %v2574 = vpack.c.b16 %v2563, %v2563
          %v2575 = vpack.c.b16 %v2565, %v2564
          %v2576 = vpack.c.b16 %v2566, %v2566
          %v2577 = vpack.c.b16 %v2568, %v2567
          %v2578 = vpack.c.b16 %v2569, %v2569
          %v2579 = vpack.c.b16 %v2571, %v2570
          %v2580 = vpack.c.b16 %v2572, %v2572
          %v2593 = vunpack.c.l.b16 %v2457
          %v2594 = vunpack.c.l.b16 %v2458
          %v2595 = vunpack.c.l.b16 %v2459
          %v2596 = vunpack.c.l.b16 %v2460
          %v2597 = vunpack.c.l.b16 %v2461
          %v2598 = vunpack.c.l.b16 %v2462
          %v2599 = vunpack.c.l.b16 %v2463
          %v2600 = vunpack.c.l.b16 %v2464
          %v2601 = vunpack.c.l.b16 %v2465
          %v2602 = vunpack.c.l.b16 %v2466
          %v2603 = vunpack.c.l.b16 %v2467
          %v2604 = vunpack.c.l.b16 %v2468
          %v2605 = vpack.c.b16 %v2594, %v2593
          %v2606 = vpack.c.b16 %v2595, %v2595
          %v2607 = vpack.c.b16 %v2597, %v2596
          %v2608 = vpack.c.b16 %v2598, %v2598
          %v2609 = vpack.c.b16 %v2600, %v2599
          %v2610 = vpack.c.b16 %v2601, %v2601
          %v2611 = vpack.c.b16 %v2603, %v2602
          %v2612 = vpack.c.b16 %v2604, %v2604
          %2613 = vrot.lane.b32.xlu0 %v2605, 64
          %v2614 = vpop.permute.xlu0 %2613
          %2615 = vrot.lane.b32.xlu0 %v2606, 64
          %v2616 = vpop.permute.xlu0 %2615
          %2617 = vrot.lane.b32.xlu0 %v2607, 64
          %v2618 = vpop.permute.xlu0 %2617
          %2619 = vrot.lane.b32.xlu0 %v2608, 64
          %v2620 = vpop.permute.xlu0 %2619
          %2621 = vrot.lane.b32.xlu0 %v2609, 64
          %v2622 = vpop.permute.xlu0 %2621
          %2623 = vrot.lane.b32.xlu0 %v2610, 64
          %v2624 = vpop.permute.xlu0 %2623
          %2625 = vrot.lane.b32.xlu0 %v2611, 64
          %v2626 = vpop.permute.xlu0 %2625
          %2627 = vrot.lane.b32.xlu0 %v2612, 64
          %v2628 = vpop.permute.xlu0 %2627
          %v2631 = vsel %vm1380, %v2493, %v2534
          %v2634 = vsel %vm1380, %v2494, %v2536
          %v2637 = vsel %vm1380, %v2495, %v2538
          %v2640 = vsel %vm1380, %v2496, %v2540
          %v2643 = vsel %vm1380, %v2497, %v2542
          %v2646 = vsel %vm1380, %v2498, %v2544
          %v2649 = vsel %vm1380, %v2499, %v2546
          %v2652 = vsel %vm1380, %v2500, %v2548
          %v2655 = vsel %vm1380, %v2573, %v2614
          %v2658 = vsel %vm1380, %v2574, %v2616
          %v2661 = vsel %vm1380, %v2575, %v2618
          %v2664 = vsel %vm1380, %v2576, %v2620
          %v2667 = vsel %vm1380, %v2577, %v2622
          %v2670 = vsel %vm1380, %v2578, %v2624
          %v2673 = vsel %vm1380, %v2579, %v2626
          %v2676 = vsel %vm1380, %v2580, %v2628
          %v2693 = vrot.slane %v2631, 2
          %v2694 = vrot.slane %v2634, 2
          %v2695 = vsel %vm1669, %v2693, %v2694
          %v2696 = vrot.slane %v2655, 2
          %v2697 = vrot.slane %v2658, 2
          %v2698 = vsel %vm1669, %v2696, %v2697
          %v2699 = vrot.slane %v2637, 2
          %v2700 = vrot.slane %v2640, 2
          %v2701 = vsel %vm1669, %v2699, %v2700
          %v2702 = vrot.slane %v2661, 2
          %v2703 = vrot.slane %v2664, 2
          %v2704 = vsel %vm1669, %v2702, %v2703
          %v2705 = vrot.slane %v2643, 2
          %v2706 = vrot.slane %v2646, 2
          %v2707 = vsel %vm1669, %v2705, %v2706
          %v2708 = vrot.slane %v2667, 2
          %v2709 = vrot.slane %v2670, 2
          %v2710 = vsel %vm1669, %v2708, %v2709
          %v2711 = vrot.slane %v2649, 2
          %v2712 = vrot.slane %v2652, 2
          %v2713 = vsel %vm1669, %v2711, %v2712
          %v2714 = vrot.slane %v2673, 2
          %v2715 = vrot.slane %v2676, 2
          %v2716 = vsel %vm1669, %v2714, %v2715
          %s2725 = scalar_lea.vmem [#allocation12], 384
          %v2726 = vld [vmem:[%s2725] sm:$0xf]
          %v2727 = vld [vmem:[%s2725 + $0x4] sm:$0xf]
          %v2728 = vld [vmem:[%s2725 + $0x8] sm:$0xf]
          %v2729 = vld [vmem:[%s2725 + $0xc] sm:$0xf]
          %v2730 = vld [vmem:[%s2725 + $0x10] sm:$0xf]
          %v2731 = vld [vmem:[%s2725 + $0x14] sm:$0xf]
          %v2732 = vld [vmem:[%s2725 + $0x18] sm:$0xf]
          %v2733 = vld [vmem:[%s2725 + $0x1c] sm:$0xf]
          %v2734 = vld [vmem:[%s2725 + $0x20] sm:$0xf]
          %v2735 = vld [vmem:[%s2725 + $0x24] sm:$0xf]
          %v2736 = vld [vmem:[%s2725 + $0x28] sm:$0xf]
          %v2737 = vld [vmem:[%s2725 + $0x2c] sm:$0xf]
          %v2738 = vld [vmem:[%s2725 + $0x30] sm:$0xf]
          %v2739 = vld [vmem:[%s2725 + $0x34] sm:$0xf]
          %v2740 = vld [vmem:[%s2725 + $0x38] sm:$0xf]
          %v2741 = vld [vmem:[%s2725 + $0x3c] sm:$0xf]
          %v2742 = vld [vmem:[%s2725 + $0x40] sm:$0xf]
          %v2743 = vld [vmem:[%s2725 + $0x44] sm:$0xf]
          %v2744 = vld [vmem:[%s2725 + $0x48] sm:$0xf]
          %v2745 = vld [vmem:[%s2725 + $0x4c] sm:$0xf]
          %v2746 = vld [vmem:[%s2725 + $0x50] sm:$0xf]
          %v2747 = vld [vmem:[%s2725 + $0x54] sm:$0xf]
          %v2748 = vld [vmem:[%s2725 + $0x58] sm:$0xf]
          %v2749 = vld [vmem:[%s2725 + $0x5c] sm:$0xf]
          %v2750 = vld [vmem:[%s2725 + $0x60] sm:$0xf]
          %v2751 = vld [vmem:[%s2725 + $0x64] sm:$0xf]
          %v2752 = vld [vmem:[%s2725 + $0x68] sm:$0xf]
          %v2753 = vld [vmem:[%s2725 + $0x6c] sm:$0xf]
          %v2754 = vld [vmem:[%s2725 + $0x70] sm:$0xf]
          %v2755 = vld [vmem:[%s2725 + $0x74] sm:$0xf]
          %v2756 = vld [vmem:[%s2725 + $0x78] sm:$0xf]
          %v2757 = vld [vmem:[%s2725 + $0x7c] sm:$0xf]
          %v2790 = vunpack.c.l.b16 %v2726
          %v2791 = vunpack.c.l.b16 %v2727
          %v2792 = vunpack.c.l.b16 %v2728
          %v2793 = vunpack.c.l.b16 %v2729
          %v2794 = vunpack.c.l.b16 %v2730
          %v2795 = vunpack.c.l.b16 %v2731
          %v2796 = vunpack.c.l.b16 %v2732
          %v2797 = vunpack.c.l.b16 %v2733
          %v2798 = vunpack.c.l.b16 %v2734
          %v2799 = vunpack.c.l.b16 %v2735
          %v2800 = vunpack.c.l.b16 %v2736
          %v2801 = vunpack.c.l.b16 %v2737
          %v2802 = vunpack.c.l.b16 %v2738
          %v2803 = vunpack.c.l.b16 %v2739
          %v2804 = vunpack.c.l.b16 %v2740
          %v2805 = vunpack.c.l.b16 %v2741
          %v2806 = vunpack.c.l.b16 %v2742
          %v2807 = vunpack.c.l.b16 %v2743
          %v2808 = vunpack.c.l.b16 %v2744
          %v2809 = vunpack.c.l.b16 %v2745
          %v2810 = vunpack.c.l.b16 %v2746
          %v2811 = vunpack.c.l.b16 %v2747
          %v2812 = vunpack.c.l.b16 %v2748
          %v2813 = vunpack.c.l.b16 %v2749
          %v2814 = vunpack.c.l.b16 %v2750
          %v2815 = vunpack.c.l.b16 %v2751
          %v2816 = vunpack.c.l.b16 %v2752
          %v2817 = vunpack.c.l.b16 %v2753
          %v2818 = vunpack.c.l.b16 %v2754
          %v2819 = vunpack.c.l.b16 %v2755
          %v2820 = vunpack.c.l.b16 %v2756
          %v2821 = vunpack.c.l.b16 %v2757
          %v2822 = vpack.c.b16 %v2791, %v2790
          %v2823 = vpack.c.b16 %v2793, %v2792
          %v2824 = vpack.c.b16 %v2795, %v2794
          %v2825 = vpack.c.b16 %v2797, %v2796
          %v2826 = vpack.c.b16 %v2799, %v2798
          %v2827 = vpack.c.b16 %v2801, %v2800
          %v2828 = vpack.c.b16 %v2803, %v2802
          %v2829 = vpack.c.b16 %v2805, %v2804
          %v2830 = vpack.c.b16 %v2807, %v2806
          %v2831 = vpack.c.b16 %v2809, %v2808
          %v2832 = vpack.c.b16 %v2811, %v2810
          %v2833 = vpack.c.b16 %v2813, %v2812
          %v2834 = vpack.c.b16 %v2815, %v2814
          %v2835 = vpack.c.b16 %v2817, %v2816
          %v2836 = vpack.c.b16 %v2819, %v2818
          %v2837 = vpack.c.b16 %v2821, %v2820
          %2854 = vmatprep.subr.bf16.mxu0 0
          %2855 = vmatpush1.bf16.msra.mxu0 %v2829
          %2856 = vmatprep.subr.bf16.mxu0 0
          %2857 = vmatpush1.bf16.msra.mxu0 %v2828
          %2858 = vmatprep.subr.bf16.mxu0 0
          %2859 = vmatpush1.bf16.msra.mxu0 %v2827
          %2860 = vmatprep.subr.bf16.mxu0 0
          %2861 = vmatpush1.bf16.msra.mxu0 %v2826
          %2862 = vmatprep.subr.bf16.mxu0 0
          %2863 = vmatpush1.bf16.msra.mxu0 %v2825
          %2864 = vmatprep.subr.bf16.mxu0 0
          %2865 = vmatpush1.bf16.msra.mxu0 %v2824
          %2866 = vmatprep.subr.bf16.mxu0 0
          %2867 = vmatpush1.bf16.msra.mxu0 %v2823
          %2868 = vmatprep.subr.bf16.mxu0 0
          %2869 = vmatpush1.bf16.msra.mxu0 %v2822
          %2870 = vmatprep.subr.bf16.mxu0 0
          %2871 = vmatpush2.bf16.msra.mxu0 %v2837
          %2872 = vmatprep.subr.bf16.mxu0 0
          %2873 = vmatpush2.bf16.msra.mxu0 %v2836
          %2874 = vmatprep.subr.bf16.mxu0 0
          %2875 = vmatpush2.bf16.msra.mxu0 %v2835
          %2876 = vmatprep.subr.bf16.mxu0 0
          %2877 = vmatpush2.bf16.msra.mxu0 %v2834
          %2878 = vmatprep.subr.bf16.mxu0 0
          %2879 = vmatpush2.bf16.msra.mxu0 %v2833
          %2880 = vmatprep.subr.bf16.mxu0 0
          %2881 = vmatpush2.bf16.msra.mxu0 %v2832
          %2882 = vmatprep.subr.bf16.mxu0 0
          %2883 = vmatpush2.bf16.msra.mxu0 %v2831
          %2884 = vmatprep.subr.bf16.mxu0 0
          %2885 = vmatpush2.bf16.msra.mxu0 %v2830
          %2886 = vmatprep.mubr.bf16.mxu0 %v2698
          %2887 = vmatmul.mubr.bf16.gmra.mxu0 %v2695
          %v2888 = vpop.f32.mrf.mxu0
          %v2889 = vadd.f32 0.0, %v2888
          %v2890 = vpop.f32.mrf.mxu0
          %v2891 = vpop.f32.mrf.mxu0
          %v2892 = vadd.f32 0.0, %v2891
          %v2893 = vpop.f32.mrf.mxu0
          %2894 = vmatprep.mubr.bf16.mxu0 %v2704
          %2895 = vmatmul.mubr.bf16.gmra.mxu0 %v2701
          %v2896 = vpop.f32.mrf.mxu0
          %v2897 = vadd.f32 0.0, %v2896
          %v2898 = vpop.f32.mrf.mxu0
          %v2899 = vpop.f32.mrf.mxu0
          %v2900 = vadd.f32 0.0, %v2899
          %v2901 = vpop.f32.mrf.mxu0
          %2902 = vmatprep.mubr.bf16.mxu0 %v2710
          %2903 = vmatmul.mubr.bf16.gmra.mxu0 %v2707
          %v2904 = vpop.f32.mrf.mxu0
          %v2905 = vadd.f32 0.0, %v2904
          %v2906 = vpop.f32.mrf.mxu0
          %v2907 = vpop.f32.mrf.mxu0
          %v2908 = vadd.f32 0.0, %v2907
          %v2909 = vpop.f32.mrf.mxu0
          %2910 = vmatprep.mubr.bf16.mxu0 %v2716
          %2911 = vmatmul.mubr.bf16.gmra.mxu0 %v2713
          %v2912 = vpop.f32.mrf.mxu0
          %v2913 = vadd.f32 0.0, %v2912
          %v2914 = vpop.f32.mrf.mxu0
          %v2915 = vpop.f32.mrf.mxu0
          %v2916 = vadd.f32 0.0, %v2915
          %v2917 = vpop.f32.mrf.mxu0
          %2918 = vdwg.mxu0
          %v2919 = vadd.f32 %v2413, %v2889
          %v2920 = vadd.f32 %v2414, %v2892
          %v2921 = vadd.f32 %v2415, %v2897
          %v2922 = vadd.f32 %v2416, %v2900
          %v2923 = vadd.f32 %v2417, %v2905
          %v2924 = vadd.f32 %v2418, %v2908
          %v2925 = vadd.f32 %v2419, %v2913
          %v2926 = vadd.f32 %v2420, %v2916
          %v2927 = vld [vmem:[#allocation13] sm:$0x1]
          %v2929 = vlaneseq
          %v2930 = vshrl.u32 %v2929, 7
          %v2931 = vsub.s32 0, %v2930
          %v2932 = vrot.slane %v2927, %v2931
          %v2934 = vadd.f32 %v2919, %v2932
          %v2935 = vadd.f32 %v2920, %v2932
          %v2936 = vadd.f32 %v2921, %v2932
          %v2937 = vadd.f32 %v2922, %v2932
          %v2938 = vadd.f32 %v2923, %v2932
          %v2939 = vadd.f32 %v2924, %v2932
          %v2940 = vadd.f32 %v2925, %v2932
          %v2941 = vadd.f32 %v2926, %v2932
          %v2942 = vadd.f32 %v2934, %v2935
          %v2943 = vadd.f32 %v2942, %v2936
          %v2944 = vadd.f32 %v2943, %v2937
          %v2945 = vadd.f32 %v2944, %v2938
          %v2946 = vadd.f32 %v2945, %v2939
          %v2947 = vadd.f32 %v2946, %v2940
          %v2948 = vadd.f32 %v2947, %v2941
          %v2949 = vrot.slane %v2948, 4
          %v2950 = vadd.f32 %v2948, %v2949
          %v2951 = vrot.slane %v2950, 2
          %v2952 = vadd.f32 %v2950, %v2951
          %v2953 = vrot.slane %v2952, 1
          %v2954 = vadd.f32 %v2952, %v2953
          %v2955 = vrcp.pop 64.0
          %v2956 = vmul.f32 %v2954, %v2955
          %v2957 = vsub.f32 %v2934, %v2956
          %v2958 = vsub.f32 %v2935, %v2956
          %v2959 = vsub.f32 %v2936, %v2956
          %v2960 = vsub.f32 %v2937, %v2956
          %v2961 = vsub.f32 %v2938, %v2956
          %v2962 = vsub.f32 %v2939, %v2956
          %v2963 = vsub.f32 %v2940, %v2956
          %v2964 = vsub.f32 %v2941, %v2956
          %v2965 = vmul.f32 %v2957, %v2957
          %v2966 = vmul.f32 %v2958, %v2958
          %v2967 = vmul.f32 %v2959, %v2959
          %v2968 = vmul.f32 %v2960, %v2960
          %v2969 = vmul.f32 %v2961, %v2961
          %v2970 = vmul.f32 %v2962, %v2962
          %v2971 = vmul.f32 %v2963, %v2963
          %v2972 = vmul.f32 %v2964, %v2964
          %v2973 = vadd.f32 %v2965, %v2966
          %v2974 = vadd.f32 %v2973, %v2967
          %v2975 = vadd.f32 %v2974, %v2968
          %v2976 = vadd.f32 %v2975, %v2969
          %v2977 = vadd.f32 %v2976, %v2970
          %v2978 = vadd.f32 %v2977, %v2971
          %v2979 = vadd.f32 %v2978, %v2972
          %v2980 = vrot.slane %v2979, 4
          %v2981 = vadd.f32 %v2979, %v2980
          %v2982 = vrot.slane %v2981, 2
          %v2983 = vadd.f32 %v2981, %v2982
          %v2984 = vrot.slane %v2983, 1
          %v2985 = vadd.f32 %v2983, %v2984
          %v2986 = vmul.f32 %v2985, %v2955
          %v2987 = vadd.f32 %v2986, 1e-05
          %v2988 = vrsqrt.pop %v2987
          %v2989 = vmul.f32 %v2957, %v2988
          %v2990 = vmul.f32 %v2958, %v2988
          %v2991 = vmul.f32 %v2959, %v2988
          %v2992 = vmul.f32 %v2960, %v2988
          %v2993 = vmul.f32 %v2961, %v2988
          %v2994 = vmul.f32 %v2962, %v2988
          %v2995 = vmul.f32 %v2963, %v2988
          %v2996 = vmul.f32 %v2964, %v2988
          %v2997 = vld [vmem:[#allocation15] sm:$0x1]
          %v2999 = vlaneseq
          %v3000 = vshrl.u32 %v2999, 7
          %v3001 = vsub.s32 0, %v3000
          %v3002 = vrot.slane %v2997, %v3001
          %v3004 = vmul.f32 %v2989, %v3002
          %v3005 = vmul.f32 %v2990, %v3002
          %v3006 = vmul.f32 %v2991, %v3002
          %v3007 = vmul.f32 %v2992, %v3002
          %v3008 = vmul.f32 %v2993, %v3002
          %v3009 = vmul.f32 %v2994, %v3002
          %v3010 = vmul.f32 %v2995, %v3002
          %v3011 = vmul.f32 %v2996, %v3002
          %v3012 = vld [vmem:[#allocation16] sm:$0x1]
          %v3014 = vlaneseq
          %v3015 = vshrl.u32 %v3014, 7
          %v3016 = vsub.s32 0, %v3015
          %v3017 = vrot.slane %v3012, %v3016
          %v3019 = vadd.f32 %v3004, %v3017
          %v3020 = vadd.f32 %v3005, %v3017
          %v3021 = vadd.f32 %v3006, %v3017
          %v3022 = vadd.f32 %v3007, %v3017
          %v3023 = vadd.f32 %v3008, %v3017
          %v3024 = vadd.f32 %v3009, %v3017
          %v3025 = vadd.f32 %v3010, %v3017
          %v3026 = vadd.f32 %v3011, %v3017
          %v3027 = vmul.f32 %v3019, 0.2
          %v3028 = vmul.f32 %v3020, 0.2
          %v3029 = vmul.f32 %v3021, 0.2
          %v3030 = vmul.f32 %v3022, 0.2
          %v3031 = vmul.f32 %v3023, 0.2
          %v3032 = vmul.f32 %v3024, 0.2
          %v3033 = vmul.f32 %v3025, 0.2
          %v3034 = vmul.f32 %v3026, 0.2
          %v3035 = vmax.f32 %v3019, %v3027
          %v3036 = vmax.f32 %v3020, %v3028
          %v3037 = vmax.f32 %v3021, %v3029
          %v3038 = vmax.f32 %v3022, %v3030
          %v3039 = vmax.f32 %v3023, %v3031
          %v3040 = vmax.f32 %v3024, %v3032
          %v3041 = vmax.f32 %v3025, %v3033
          %v3042 = vmax.f32 %v3026, %v3034
          %v3043 = vpack.c.bf16 %v3036, %v3035
          %v3044 = vpack.c.bf16 %v3038, %v3037
          %v3045 = vpack.c.bf16 %v3040, %v3039
          %v3046 = vpack.c.bf16 %v3042, %v3041
          %3047 = vst [vmem:[#allocation6] sm:$0x3] %v3043
          %v3050 = vunpack.c.l.s4 1983009808
          %v3051 = vunpack.c.0.s8 %v3050
          %v3052 = vlaneseq
          %v3053 = vshrl.u32 %v3052, 7
          %v3054 = vsub.s32 %v3051, %v3053
          %v3055 = vrot.slane %v3043, %v3054
          %v3056 = vcombine.high %v3055, %v3055
          %3058 = vst [vmem:[#allocation6 + $0x2] sm:$0x3] %v3056
          %v3059 = vcombine.high %v3043, %v3043
          %v3061 = vunpack.c.l.s4 1983009808
          %v3062 = vunpack.c.0.s8 %v3061
          %v3063 = vlaneseq
          %v3064 = vshrl.u32 %v3063, 7
          %v3065 = vsub.s32 %v3062, %v3064
          %v3066 = vrot.slane %v3059, %v3065
          %3068 = vst [vmem:[#allocation6 + $0x4] sm:$0x3] %v3066
          %v3069 = vcombine.high %v3066, %v3066
          %3071 = vst [vmem:[#allocation6 + $0x6] sm:$0x3] %v3069
          %3072 = vst [vmem:[#allocation6 + $0x8] sm:$0x3] %v3044
          %v3075 = vunpack.c.l.s4 1983009808
          %v3076 = vunpack.c.0.s8 %v3075
          %v3077 = vlaneseq
          %v3078 = vshrl.u32 %v3077, 7
          %v3079 = vsub.s32 %v3076, %v3078
          %v3080 = vrot.slane %v3044, %v3079
          %v3081 = vcombine.high %v3080, %v3080
          %3083 = vst [vmem:[#allocation6 + $0xa] sm:$0x3] %v3081
          %v3084 = vcombine.high %v3044, %v3044
          %v3086 = vunpack.c.l.s4 1983009808
          %v3087 = vunpack.c.0.s8 %v3086
          %v3088 = vlaneseq
          %v3089 = vshrl.u32 %v3088, 7
          %v3090 = vsub.s32 %v3087, %v3089
          %v3091 = vrot.slane %v3084, %v3090
          %3093 = vst [vmem:[#allocation6 + $0xc] sm:$0x3] %v3091
          %v3094 = vcombine.high %v3091, %v3091
          %3096 = vst [vmem:[#allocation6 + $0xe] sm:$0x3] %v3094
          %s3097 = scalar_lea.vmem [#allocation6], 16
          %3098 = vst [vmem:[%s3097] sm:$0x3] %v3045
          %v3101 = vunpack.c.l.s4 1983009808
          %v3102 = vunpack.c.0.s8 %v3101
          %v3103 = vlaneseq
          %v3104 = vshrl.u32 %v3103, 7
          %v3105 = vsub.s32 %v3102, %v3104
          %v3106 = vrot.slane %v3045, %v3105
          %v3107 = vcombine.high %v3106, %v3106
          %3109 = vst [vmem:[%s3097 + $0x2] sm:$0x3] %v3107
          %v3110 = vcombine.high %v3045, %v3045
          %v3112 = vunpack.c.l.s4 1983009808
          %v3113 = vunpack.c.0.s8 %v3112
          %v3114 = vlaneseq
          %v3115 = vshrl.u32 %v3114, 7
          %v3116 = vsub.s32 %v3113, %v3115
          %v3117 = vrot.slane %v3110, %v3116
          %3119 = vst [vmem:[%s3097 + $0x4] sm:$0x3] %v3117
          %v3120 = vcombine.high %v3117, %v3117
          %3122 = vst [vmem:[%s3097 + $0x6] sm:$0x3] %v3120
          %3123 = vst [vmem:[%s3097 + $0x8] sm:$0x3] %v3046
          %v3126 = vunpack.c.l.s4 1983009808
          %v3127 = vunpack.c.0.s8 %v3126
          %v3128 = vlaneseq
          %v3129 = vshrl.u32 %v3128, 7
          %v3130 = vsub.s32 %v3127, %v3129
          %v3131 = vrot.slane %v3046, %v3130
          %v3132 = vcombine.high %v3131, %v3131
          %3134 = vst [vmem:[%s3097 + $0xa] sm:$0x3] %v3132
          %v3135 = vcombine.high %v3046, %v3046
          %v3137 = vunpack.c.l.s4 1983009808
          %v3138 = vunpack.c.0.s8 %v3137
          %v3139 = vlaneseq
          %v3140 = vshrl.u32 %v3139, 7
          %v3141 = vsub.s32 %v3138, %v3140
          %v3142 = vrot.slane %v3135, %v3141
          %3144 = vst [vmem:[%s3097 + $0xc] sm:$0x3] %v3142
          %v3145 = vcombine.high %v3142, %v3142
          %3147 = vst [vmem:[%s3097 + $0xe] sm:$0x3] %v3145
          %3148 = vst [vmem:[#allocation7] sm:$0xff] 0.0
          %3149 = vst [vmem:[#allocation7 + $0x8] sm:$0xff] 0.0
          %3150 = vst [vmem:[#allocation7 + $0x10] sm:$0xff] 0.0
          %3151 = vst [vmem:[#allocation7 + $0x18] sm:$0xff] 0.0
        $region124: #{discriminator_forward.1} parent=71 // pred_fallthru
          _
        %v3152 = vld [vmem:[#allocation7] sm:$0xff]
        %v3153 = vld [vmem:[#allocation7 + $0x8] sm:$0xff]
        %v3154 = vld [vmem:[#allocation7 + $0x10] sm:$0xff]
        %v3155 = vld [vmem:[#allocation7 + $0x18] sm:$0xff]
        %s3156 = smul.u32 %s29, 8
        %s3157 = smul.addr %s3156, 2
        %s3158 = scalar_lea.vmem [#allocation6], %s3157
        %v3159 = vld [vmem:[%s3158] sm:$0xff]
        %v3160 = vld [vmem:[%s3158 + $0x8] sm:$0xff]
        %v3161 = vld [vmem:[%s529] sm:$0xff]
        %v3162 = vld [vmem:[%s529 + $0x8] sm:$0xff]
        %v3163 = vld [vmem:[%s529 + $0x10] sm:$0xff]
        %v3164 = vld [vmem:[%s529 + $0x18] sm:$0xff]
        %v3165 = vld [vmem:[%s529 + $0x20] sm:$0xff]
        %v3166 = vld [vmem:[%s529 + $0x28] sm:$0xff]
        %v3167 = vld [vmem:[%s529 + $0x30] sm:$0xff]
        %v3168 = vld [vmem:[%s529 + $0x38] sm:$0xff]
        %v3169 = vld [vmem:[%s529 + $0x40] sm:$0xff]
        %v3170 = vld [vmem:[%s529 + $0x48] sm:$0xff]
        %v3171 = vld [vmem:[%s529 + $0x50] sm:$0xff]
        %v3172 = vld [vmem:[%s529 + $0x58] sm:$0xff]
        %v3173 = vld [vmem:[%s529 + $0x60] sm:$0xff]
        %v3174 = vld [vmem:[%s529 + $0x68] sm:$0xff]
        %v3175 = vld [vmem:[%s529 + $0x70] sm:$0xff]
        %v3176 = vld [vmem:[%s529 + $0x78] sm:$0xff]
        %v3177 = vld [vmem:[%s529 + $0x80] sm:$0xff]
        %v3178 = vld [vmem:[%s529 + $0x88] sm:$0xff]
        %v3179 = vld [vmem:[%s529 + $0x90] sm:$0xff]
        %v3180 = vld [vmem:[%s529 + $0x98] sm:$0xff]
        %v3181 = vld [vmem:[%s529 + $0xa0] sm:$0xff]
        %v3182 = vld [vmem:[%s529 + $0xa8] sm:$0xff]
        %v3183 = vld [vmem:[%s529 + $0xb0] sm:$0xff]
        %v3184 = vld [vmem:[%s529 + $0xb8] sm:$0xff]
        %v3185 = vld [vmem:[%s529 + $0xc0] sm:$0xff]
        %v3186 = vld [vmem:[%s529 + $0xc8] sm:$0xff]
        %v3187 = vld [vmem:[%s529 + $0xd0] sm:$0xff]
        %v3188 = vld [vmem:[%s529 + $0xd8] sm:$0xff]
        %v3189 = vld [vmem:[%s529 + $0xe0] sm:$0xff]
        %v3190 = vld [vmem:[%s529 + $0xe8] sm:$0xff]
        %v3191 = vld [vmem:[%s529 + $0xf0] sm:$0xff]
        %v3192 = vld [vmem:[%s529 + $0xf8] sm:$0xff]
        %v3193 = vld [vmem:[%s529 + $0x100] sm:$0xff]
        %v3194 = vld [vmem:[%s529 + $0x108] sm:$0xff]
        %v3195 = vld [vmem:[%s529 + $0x110] sm:$0xff]
        %v3196 = vld [vmem:[%s529 + $0x118] sm:$0xff]
        %v3197 = vld [vmem:[%s529 + $0x120] sm:$0xff]
        %v3198 = vld [vmem:[%s529 + $0x128] sm:$0xff]
        %v3199 = vld [vmem:[%s529 + $0x130] sm:$0xff]
        %v3200 = vld [vmem:[%s529 + $0x138] sm:$0xff]
        %v3201 = vld [vmem:[%s529 + $0x140] sm:$0xff]
        %v3202 = vld [vmem:[%s529 + $0x148] sm:$0xff]
        %v3203 = vld [vmem:[%s529 + $0x150] sm:$0xff]
        %v3204 = vld [vmem:[%s529 + $0x158] sm:$0xff]
        %v3205 = vld [vmem:[%s529 + $0x160] sm:$0xff]
        %v3206 = vld [vmem:[%s529 + $0x168] sm:$0xff]
        %v3207 = vld [vmem:[%s529 + $0x170] sm:$0xff]
        %v3208 = vld [vmem:[%s529 + $0x178] sm:$0xff]
        %v3209 = vld [vmem:[%s529 + $0x180] sm:$0xff]
        %v3210 = vld [vmem:[%s529 + $0x188] sm:$0xff]
        %v3211 = vld [vmem:[%s529 + $0x190] sm:$0xff]
        %v3212 = vld [vmem:[%s529 + $0x198] sm:$0xff]
        %v3213 = vld [vmem:[%s529 + $0x1a0] sm:$0xff]
        %v3214 = vld [vmem:[%s529 + $0x1a8] sm:$0xff]
        %v3215 = vld [vmem:[%s529 + $0x1b0] sm:$0xff]
        %v3216 = vld [vmem:[%s529 + $0x1b8] sm:$0xff]
        %v3217 = vld [vmem:[%s529 + $0x1c0] sm:$0xff]
        %v3218 = vld [vmem:[%s529 + $0x1c8] sm:$0xff]
        %v3219 = vld [vmem:[%s529 + $0x1d0] sm:$0xff]
        %v3220 = vld [vmem:[%s529 + $0x1d8] sm:$0xff]
        %v3221 = vld [vmem:[%s529 + $0x1e0] sm:$0xff]
        %v3222 = vld [vmem:[%s529 + $0x1e8] sm:$0xff]
        %v3223 = vld [vmem:[%s529 + $0x1f0] sm:$0xff]
        %v3224 = vld [vmem:[%s529 + $0x1f8] sm:$0xff]
        %v3225 = vld [vmem:[%s529 + $0x200] sm:$0xff]
        %v3226 = vld [vmem:[%s529 + $0x208] sm:$0xff]
        %v3227 = vld [vmem:[%s529 + $0x210] sm:$0xff]
        %v3228 = vld [vmem:[%s529 + $0x218] sm:$0xff]
        %v3229 = vld [vmem:[%s529 + $0x220] sm:$0xff]
        %v3230 = vld [vmem:[%s529 + $0x228] sm:$0xff]
        %v3231 = vld [vmem:[%s529 + $0x230] sm:$0xff]
        %v3232 = vld [vmem:[%s529 + $0x238] sm:$0xff]
        %v3233 = vld [vmem:[%s529 + $0x240] sm:$0xff]
        %v3234 = vld [vmem:[%s529 + $0x248] sm:$0xff]
        %v3235 = vld [vmem:[%s529 + $0x250] sm:$0xff]
        %v3236 = vld [vmem:[%s529 + $0x258] sm:$0xff]
        %v3237 = vld [vmem:[%s529 + $0x260] sm:$0xff]
        %v3238 = vld [vmem:[%s529 + $0x268] sm:$0xff]
        %v3239 = vld [vmem:[%s529 + $0x270] sm:$0xff]
        %v3240 = vld [vmem:[%s529 + $0x278] sm:$0xff]
        %v3241 = vld [vmem:[%s529 + $0x280] sm:$0xff]
        %v3242 = vld [vmem:[%s529 + $0x288] sm:$0xff]
        %v3243 = vld [vmem:[%s529 + $0x290] sm:$0xff]
        %v3244 = vld [vmem:[%s529 + $0x298] sm:$0xff]
        %v3245 = vld [vmem:[%s529 + $0x2a0] sm:$0xff]
        %v3246 = vld [vmem:[%s529 + $0x2a8] sm:$0xff]
        %v3247 = vld [vmem:[%s529 + $0x2b0] sm:$0xff]
        %v3248 = vld [vmem:[%s529 + $0x2b8] sm:$0xff]
        %v3249 = vld [vmem:[%s529 + $0x2c0] sm:$0xff]
        %v3250 = vld [vmem:[%s529 + $0x2c8] sm:$0xff]
        %v3251 = vld [vmem:[%s529 + $0x2d0] sm:$0xff]
        %v3252 = vld [vmem:[%s529 + $0x2d8] sm:$0xff]
        %v3253 = vld [vmem:[%s529 + $0x2e0] sm:$0xff]
        %v3254 = vld [vmem:[%s529 + $0x2e8] sm:$0xff]
        %v3255 = vld [vmem:[%s529 + $0x2f0] sm:$0xff]
        %v3256 = vld [vmem:[%s529 + $0x2f8] sm:$0xff]
        %v3257 = vld [vmem:[%s529 + $0x300] sm:$0xff]
        %v3258 = vld [vmem:[%s529 + $0x308] sm:$0xff]
        %v3259 = vld [vmem:[%s529 + $0x310] sm:$0xff]
        %v3260 = vld [vmem:[%s529 + $0x318] sm:$0xff]
        %v3261 = vld [vmem:[%s529 + $0x320] sm:$0xff]
        %v3262 = vld [vmem:[%s529 + $0x328] sm:$0xff]
        %v3263 = vld [vmem:[%s529 + $0x330] sm:$0xff]
        %v3264 = vld [vmem:[%s529 + $0x338] sm:$0xff]
        %v3265 = vld [vmem:[%s529 + $0x340] sm:$0xff]
        %v3266 = vld [vmem:[%s529 + $0x348] sm:$0xff]
        %v3267 = vld [vmem:[%s529 + $0x350] sm:$0xff]
        %v3268 = vld [vmem:[%s529 + $0x358] sm:$0xff]
        %v3269 = vld [vmem:[%s529 + $0x360] sm:$0xff]
        %v3270 = vld [vmem:[%s529 + $0x368] sm:$0xff]
        %v3271 = vld [vmem:[%s529 + $0x370] sm:$0xff]
        %v3272 = vld [vmem:[%s529 + $0x378] sm:$0xff]
        %v3273 = vld [vmem:[%s529 + $0x380] sm:$0xff]
        %v3274 = vld [vmem:[%s529 + $0x388] sm:$0xff]
        %v3275 = vld [vmem:[%s529 + $0x390] sm:$0xff]
        %v3276 = vld [vmem:[%s529 + $0x398] sm:$0xff]
        %v3277 = vld [vmem:[%s529 + $0x3a0] sm:$0xff]
        %v3278 = vld [vmem:[%s529 + $0x3a8] sm:$0xff]
        %v3279 = vld [vmem:[%s529 + $0x3b0] sm:$0xff]
        %v3280 = vld [vmem:[%s529 + $0x3b8] sm:$0xff]
        %v3281 = vld [vmem:[%s529 + $0x3c0] sm:$0xff]
        %v3282 = vld [vmem:[%s529 + $0x3c8] sm:$0xff]
        %v3283 = vld [vmem:[%s529 + $0x3d0] sm:$0xff]
        %v3284 = vld [vmem:[%s529 + $0x3d8] sm:$0xff]
        %v3285 = vld [vmem:[%s529 + $0x3e0] sm:$0xff]
        %v3286 = vld [vmem:[%s529 + $0x3e8] sm:$0xff]
        %v3287 = vld [vmem:[%s529 + $0x3f0] sm:$0xff]
        %v3288 = vld [vmem:[%s529 + $0x3f8] sm:$0xff]
        %v3289 = vld [vmem:[%s529 + $0x400] sm:$0xff]
        %v3290 = vld [vmem:[%s529 + $0x408] sm:$0xff]
        %v3291 = vld [vmem:[%s529 + $0x410] sm:$0xff]
        %v3292 = vld [vmem:[%s529 + $0x418] sm:$0xff]
        %v3293 = vld [vmem:[%s529 + $0x420] sm:$0xff]
        %v3294 = vld [vmem:[%s529 + $0x428] sm:$0xff]
        %v3295 = vld [vmem:[%s529 + $0x430] sm:$0xff]
        %v3296 = vld [vmem:[%s529 + $0x438] sm:$0xff]
        %v3297 = vld [vmem:[%s529 + $0x440] sm:$0xff]
        %v3298 = vld [vmem:[%s529 + $0x448] sm:$0xff]
        %v3299 = vld [vmem:[%s529 + $0x450] sm:$0xff]
        %v3300 = vld [vmem:[%s529 + $0x458] sm:$0xff]
        %v3301 = vld [vmem:[%s529 + $0x460] sm:$0xff]
        %v3302 = vld [vmem:[%s529 + $0x468] sm:$0xff]
        %v3303 = vld [vmem:[%s529 + $0x470] sm:$0xff]
        %v3304 = vld [vmem:[%s529 + $0x478] sm:$0xff]
        %v3305 = vld [vmem:[%s529 + $0x480] sm:$0xff]
        %v3306 = vld [vmem:[%s529 + $0x488] sm:$0xff]
        %v3307 = vld [vmem:[%s529 + $0x490] sm:$0xff]
        %v3308 = vld [vmem:[%s529 + $0x498] sm:$0xff]
        %v3309 = vld [vmem:[%s529 + $0x4a0] sm:$0xff]
        %v3310 = vld [vmem:[%s529 + $0x4a8] sm:$0xff]
        %v3311 = vld [vmem:[%s529 + $0x4b0] sm:$0xff]
        %v3312 = vld [vmem:[%s529 + $0x4b8] sm:$0xff]
        %v3313 = vld [vmem:[%s529 + $0x4c0] sm:$0xff]
        %v3314 = vld [vmem:[%s529 + $0x4c8] sm:$0xff]
        %v3315 = vld [vmem:[%s529 + $0x4d0] sm:$0xff]
        %v3316 = vld [vmem:[%s529 + $0x4d8] sm:$0xff]
        %v3317 = vld [vmem:[%s529 + $0x4e0] sm:$0xff]
        %v3318 = vld [vmem:[%s529 + $0x4e8] sm:$0xff]
        %v3319 = vld [vmem:[%s529 + $0x4f0] sm:$0xff]
        %v3320 = vld [vmem:[%s529 + $0x4f8] sm:$0xff]
        %v3321 = vld [vmem:[%s529 + $0x500] sm:$0xff]
        %v3322 = vld [vmem:[%s529 + $0x508] sm:$0xff]
        %v3323 = vld [vmem:[%s529 + $0x510] sm:$0xff]
        %v3324 = vld [vmem:[%s529 + $0x518] sm:$0xff]
        %v3325 = vld [vmem:[%s529 + $0x520] sm:$0xff]
        %v3326 = vld [vmem:[%s529 + $0x528] sm:$0xff]
        %v3327 = vld [vmem:[%s529 + $0x530] sm:$0xff]
        %v3328 = vld [vmem:[%s529 + $0x538] sm:$0xff]
        %v3329 = vld [vmem:[%s529 + $0x540] sm:$0xff]
        %v3330 = vld [vmem:[%s529 + $0x548] sm:$0xff]
        %v3331 = vld [vmem:[%s529 + $0x550] sm:$0xff]
        %v3332 = vld [vmem:[%s529 + $0x558] sm:$0xff]
        %v3333 = vld [vmem:[%s529 + $0x560] sm:$0xff]
        %v3334 = vld [vmem:[%s529 + $0x568] sm:$0xff]
        %v3335 = vld [vmem:[%s529 + $0x570] sm:$0xff]
        %v3336 = vld [vmem:[%s529 + $0x578] sm:$0xff]
        %v3337 = vld [vmem:[%s529 + $0x580] sm:$0xff]
        %v3338 = vld [vmem:[%s529 + $0x588] sm:$0xff]
        %v3339 = vld [vmem:[%s529 + $0x590] sm:$0xff]
        %v3340 = vld [vmem:[%s529 + $0x598] sm:$0xff]
        %v3341 = vld [vmem:[%s529 + $0x5a0] sm:$0xff]
        %v3342 = vld [vmem:[%s529 + $0x5a8] sm:$0xff]
        %v3343 = vld [vmem:[%s529 + $0x5b0] sm:$0xff]
        %v3344 = vld [vmem:[%s529 + $0x5b8] sm:$0xff]
        %v3345 = vld [vmem:[%s529 + $0x5c0] sm:$0xff]
        %v3346 = vld [vmem:[%s529 + $0x5c8] sm:$0xff]
        %v3347 = vld [vmem:[%s529 + $0x5d0] sm:$0xff]
        %v3348 = vld [vmem:[%s529 + $0x5d8] sm:$0xff]
        %v3349 = vld [vmem:[%s529 + $0x5e0] sm:$0xff]
        %v3350 = vld [vmem:[%s529 + $0x5e8] sm:$0xff]
        %v3351 = vld [vmem:[%s529 + $0x5f0] sm:$0xff]
        %v3352 = vld [vmem:[%s529 + $0x5f8] sm:$0xff]
        %v3353 = vld [vmem:[%s529 + $0x600] sm:$0xff]
        %v3354 = vld [vmem:[%s529 + $0x608] sm:$0xff]
        %v3355 = vld [vmem:[%s529 + $0x610] sm:$0xff]
        %v3356 = vld [vmem:[%s529 + $0x618] sm:$0xff]
        %v3357 = vld [vmem:[%s529 + $0x620] sm:$0xff]
        %v3358 = vld [vmem:[%s529 + $0x628] sm:$0xff]
        %v3359 = vld [vmem:[%s529 + $0x630] sm:$0xff]
        %v3360 = vld [vmem:[%s529 + $0x638] sm:$0xff]
        %v3361 = vld [vmem:[%s529 + $0x640] sm:$0xff]
        %v3362 = vld [vmem:[%s529 + $0x648] sm:$0xff]
        %v3363 = vld [vmem:[%s529 + $0x650] sm:$0xff]
        %v3364 = vld [vmem:[%s529 + $0x658] sm:$0xff]
        %v3365 = vld [vmem:[%s529 + $0x660] sm:$0xff]
        %v3366 = vld [vmem:[%s529 + $0x668] sm:$0xff]
        %v3367 = vld [vmem:[%s529 + $0x670] sm:$0xff]
        %v3368 = vld [vmem:[%s529 + $0x678] sm:$0xff]
        %v3369 = vld [vmem:[%s529 + $0x680] sm:$0xff]
        %v3370 = vld [vmem:[%s529 + $0x688] sm:$0xff]
        %v3371 = vld [vmem:[%s529 + $0x690] sm:$0xff]
        %v3372 = vld [vmem:[%s529 + $0x698] sm:$0xff]
        %v3373 = vld [vmem:[%s529 + $0x6a0] sm:$0xff]
        %v3374 = vld [vmem:[%s529 + $0x6a8] sm:$0xff]
        %v3375 = vld [vmem:[%s529 + $0x6b0] sm:$0xff]
        %v3376 = vld [vmem:[%s529 + $0x6b8] sm:$0xff]
        %v3377 = vld [vmem:[%s529 + $0x6c0] sm:$0xff]
        %v3378 = vld [vmem:[%s529 + $0x6c8] sm:$0xff]
        %v3379 = vld [vmem:[%s529 + $0x6d0] sm:$0xff]
        %v3380 = vld [vmem:[%s529 + $0x6d8] sm:$0xff]
        %v3381 = vld [vmem:[%s529 + $0x6e0] sm:$0xff]
        %v3382 = vld [vmem:[%s529 + $0x6e8] sm:$0xff]
        %v3383 = vld [vmem:[%s529 + $0x6f0] sm:$0xff]
        %v3384 = vld [vmem:[%s529 + $0x6f8] sm:$0xff]
        %v3385 = vld [vmem:[%s529 + $0x700] sm:$0xff]
        %v3386 = vld [vmem:[%s529 + $0x708] sm:$0xff]
        %v3387 = vld [vmem:[%s529 + $0x710] sm:$0xff]
        %v3388 = vld [vmem:[%s529 + $0x718] sm:$0xff]
        %v3389 = vld [vmem:[%s529 + $0x720] sm:$0xff]
        %v3390 = vld [vmem:[%s529 + $0x728] sm:$0xff]
        %v3391 = vld [vmem:[%s529 + $0x730] sm:$0xff]
        %v3392 = vld [vmem:[%s529 + $0x738] sm:$0xff]
        %v3393 = vld [vmem:[%s529 + $0x740] sm:$0xff]
        %v3394 = vld [vmem:[%s529 + $0x748] sm:$0xff]
        %v3395 = vld [vmem:[%s529 + $0x750] sm:$0xff]
        %v3396 = vld [vmem:[%s529 + $0x758] sm:$0xff]
        %v3397 = vld [vmem:[%s529 + $0x760] sm:$0xff]
        %v3398 = vld [vmem:[%s529 + $0x768] sm:$0xff]
        %v3399 = vld [vmem:[%s529 + $0x770] sm:$0xff]
        %v3400 = vld [vmem:[%s529 + $0x778] sm:$0xff]
        %v3401 = vld [vmem:[%s529 + $0x780] sm:$0xff]
        %v3402 = vld [vmem:[%s529 + $0x788] sm:$0xff]
        %v3403 = vld [vmem:[%s529 + $0x790] sm:$0xff]
        %v3404 = vld [vmem:[%s529 + $0x798] sm:$0xff]
        %v3405 = vld [vmem:[%s529 + $0x7a0] sm:$0xff]
        %v3406 = vld [vmem:[%s529 + $0x7a8] sm:$0xff]
        %v3407 = vld [vmem:[%s529 + $0x7b0] sm:$0xff]
        %v3408 = vld [vmem:[%s529 + $0x7b8] sm:$0xff]
        %v3409 = vld [vmem:[%s529 + $0x7c0] sm:$0xff]
        %v3410 = vld [vmem:[%s529 + $0x7c8] sm:$0xff]
        %v3411 = vld [vmem:[%s529 + $0x7d0] sm:$0xff]
        %v3412 = vld [vmem:[%s529 + $0x7d8] sm:$0xff]
        %v3413 = vld [vmem:[%s529 + $0x7e0] sm:$0xff]
        %v3414 = vld [vmem:[%s529 + $0x7e8] sm:$0xff]
        %v3415 = vld [vmem:[%s529 + $0x7f0] sm:$0xff]
        %v3416 = vld [vmem:[%s529 + $0x7f8] sm:$0xff]
        %v3417 = vld [vmem:[%s529 + $0x800] sm:$0xff]
        %v3418 = vld [vmem:[%s529 + $0x808] sm:$0xff]
        %v3419 = vld [vmem:[%s529 + $0x810] sm:$0xff]
        %v3420 = vld [vmem:[%s529 + $0x818] sm:$0xff]
        %v3421 = vld [vmem:[%s529 + $0x820] sm:$0xff]
        %v3422 = vld [vmem:[%s529 + $0x828] sm:$0xff]
        %v3423 = vld [vmem:[%s529 + $0x830] sm:$0xff]
        %v3424 = vld [vmem:[%s529 + $0x838] sm:$0xff]
        %v3425 = vld [vmem:[%s529 + $0x840] sm:$0xff]
        %v3426 = vld [vmem:[%s529 + $0x848] sm:$0xff]
        %v3427 = vld [vmem:[%s529 + $0x850] sm:$0xff]
        %v3428 = vld [vmem:[%s529 + $0x858] sm:$0xff]
        %v3429 = vld [vmem:[%s529 + $0x860] sm:$0xff]
        %v3430 = vld [vmem:[%s529 + $0x868] sm:$0xff]
        %v3431 = vld [vmem:[%s529 + $0x870] sm:$0xff]
        %v3432 = vld [vmem:[%s529 + $0x878] sm:$0xff]
        %v3433 = vld [vmem:[%s529 + $0x880] sm:$0xff]
        %v3434 = vld [vmem:[%s529 + $0x888] sm:$0xff]
        %v3435 = vld [vmem:[%s529 + $0x890] sm:$0xff]
        %v3436 = vld [vmem:[%s529 + $0x898] sm:$0xff]
        %v3437 = vld [vmem:[%s529 + $0x8a0] sm:$0xff]
        %v3438 = vld [vmem:[%s529 + $0x8a8] sm:$0xff]
        %v3439 = vld [vmem:[%s529 + $0x8b0] sm:$0xff]
        %v3440 = vld [vmem:[%s529 + $0x8b8] sm:$0xff]
        %v3441 = vld [vmem:[%s529 + $0x8c0] sm:$0xff]
        %v3442 = vld [vmem:[%s529 + $0x8c8] sm:$0xff]
        %v3443 = vld [vmem:[%s529 + $0x8d0] sm:$0xff]
        %v3444 = vld [vmem:[%s529 + $0x8d8] sm:$0xff]
        %v3445 = vld [vmem:[%s529 + $0x8e0] sm:$0xff]
        %v3446 = vld [vmem:[%s529 + $0x8e8] sm:$0xff]
        %v3447 = vld [vmem:[%s529 + $0x8f0] sm:$0xff]
        %v3448 = vld [vmem:[%s529 + $0x8f8] sm:$0xff]
        %v3449 = vld [vmem:[%s529 + $0x900] sm:$0xff]
        %v3450 = vld [vmem:[%s529 + $0x908] sm:$0xff]
        %v3451 = vld [vmem:[%s529 + $0x910] sm:$0xff]
        %v3452 = vld [vmem:[%s529 + $0x918] sm:$0xff]
        %v3453 = vld [vmem:[%s529 + $0x920] sm:$0xff]
        %v3454 = vld [vmem:[%s529 + $0x928] sm:$0xff]
        %v3455 = vld [vmem:[%s529 + $0x930] sm:$0xff]
        %v3456 = vld [vmem:[%s529 + $0x938] sm:$0xff]
        %v3457 = vld [vmem:[%s529 + $0x940] sm:$0xff]
        %v3458 = vld [vmem:[%s529 + $0x948] sm:$0xff]
        %v3459 = vld [vmem:[%s529 + $0x950] sm:$0xff]
        %v3460 = vld [vmem:[%s529 + $0x958] sm:$0xff]
        %v3461 = vld [vmem:[%s529 + $0x960] sm:$0xff]
        %v3462 = vld [vmem:[%s529 + $0x968] sm:$0xff]
        %v3463 = vld [vmem:[%s529 + $0x970] sm:$0xff]
        %v3464 = vld [vmem:[%s529 + $0x978] sm:$0xff]
        %v3465 = vld [vmem:[%s529 + $0x980] sm:$0xff]
        %v3466 = vld [vmem:[%s529 + $0x988] sm:$0xff]
        %v3467 = vld [vmem:[%s529 + $0x990] sm:$0xff]
        %v3468 = vld [vmem:[%s529 + $0x998] sm:$0xff]
        %v3469 = vld [vmem:[%s529 + $0x9a0] sm:$0xff]
        %v3470 = vld [vmem:[%s529 + $0x9a8] sm:$0xff]
        %v3471 = vld [vmem:[%s529 + $0x9b0] sm:$0xff]
        %v3472 = vld [vmem:[%s529 + $0x9b8] sm:$0xff]
        %v3473 = vld [vmem:[%s529 + $0x9c0] sm:$0xff]
        %v3474 = vld [vmem:[%s529 + $0x9c8] sm:$0xff]
        %v3475 = vld [vmem:[%s529 + $0x9d0] sm:$0xff]
        %v3476 = vld [vmem:[%s529 + $0x9d8] sm:$0xff]
        %v3477 = vld [vmem:[%s529 + $0x9e0] sm:$0xff]
        %v3478 = vld [vmem:[%s529 + $0x9e8] sm:$0xff]
        %v3479 = vld [vmem:[%s529 + $0x9f0] sm:$0xff]
        %v3480 = vld [vmem:[%s529 + $0x9f8] sm:$0xff]
        %v3481 = vld [vmem:[%s529 + $0xa00] sm:$0xff]
        %v3482 = vld [vmem:[%s529 + $0xa08] sm:$0xff]
        %v3483 = vld [vmem:[%s529 + $0xa10] sm:$0xff]
        %v3484 = vld [vmem:[%s529 + $0xa18] sm:$0xff]
        %v3485 = vld [vmem:[%s529 + $0xa20] sm:$0xff]
        %v3486 = vld [vmem:[%s529 + $0xa28] sm:$0xff]
        %v3487 = vld [vmem:[%s529 + $0xa30] sm:$0xff]
        %v3488 = vld [vmem:[%s529 + $0xa38] sm:$0xff]
        %v3489 = vld [vmem:[%s529 + $0xa40] sm:$0xff]
        %v3490 = vld [vmem:[%s529 + $0xa48] sm:$0xff]
        %v3491 = vld [vmem:[%s529 + $0xa50] sm:$0xff]
        %v3492 = vld [vmem:[%s529 + $0xa58] sm:$0xff]
        %v3493 = vld [vmem:[%s529 + $0xa60] sm:$0xff]
        %v3494 = vld [vmem:[%s529 + $0xa68] sm:$0xff]
        %v3495 = vld [vmem:[%s529 + $0xa70] sm:$0xff]
        %v3496 = vld [vmem:[%s529 + $0xa78] sm:$0xff]
        %v3497 = vld [vmem:[%s529 + $0xa80] sm:$0xff]
        %v3498 = vld [vmem:[%s529 + $0xa88] sm:$0xff]
        %v3499 = vld [vmem:[%s529 + $0xa90] sm:$0xff]
        %v3500 = vld [vmem:[%s529 + $0xa98] sm:$0xff]
        %v3501 = vld [vmem:[%s529 + $0xaa0] sm:$0xff]
        %v3502 = vld [vmem:[%s529 + $0xaa8] sm:$0xff]
        %v3503 = vld [vmem:[%s529 + $0xab0] sm:$0xff]
        %v3504 = vld [vmem:[%s529 + $0xab8] sm:$0xff]
        %v3505 = vld [vmem:[%s529 + $0xac0] sm:$0xff]
        %v3506 = vld [vmem:[%s529 + $0xac8] sm:$0xff]
        %v3507 = vld [vmem:[%s529 + $0xad0] sm:$0xff]
        %v3508 = vld [vmem:[%s529 + $0xad8] sm:$0xff]
        %v3509 = vld [vmem:[%s529 + $0xae0] sm:$0xff]
        %v3510 = vld [vmem:[%s529 + $0xae8] sm:$0xff]
        %v3511 = vld [vmem:[%s529 + $0xaf0] sm:$0xff]
        %v3512 = vld [vmem:[%s529 + $0xaf8] sm:$0xff]
        %v3513 = vld [vmem:[%s529 + $0xb00] sm:$0xff]
        %v3514 = vld [vmem:[%s529 + $0xb08] sm:$0xff]
        %v3515 = vld [vmem:[%s529 + $0xb10] sm:$0xff]
        %v3516 = vld [vmem:[%s529 + $0xb18] sm:$0xff]
        %v3517 = vld [vmem:[%s529 + $0xb20] sm:$0xff]
        %v3518 = vld [vmem:[%s529 + $0xb28] sm:$0xff]
        %v3519 = vld [vmem:[%s529 + $0xb30] sm:$0xff]
        %v3520 = vld [vmem:[%s529 + $0xb38] sm:$0xff]
        %v3521 = vld [vmem:[%s529 + $0xb40] sm:$0xff]
        %v3522 = vld [vmem:[%s529 + $0xb48] sm:$0xff]
        %v3523 = vld [vmem:[%s529 + $0xb50] sm:$0xff]
        %v3524 = vld [vmem:[%s529 + $0xb58] sm:$0xff]
        %v3525 = vld [vmem:[%s529 + $0xb60] sm:$0xff]
        %v3526 = vld [vmem:[%s529 + $0xb68] sm:$0xff]
        %v3527 = vld [vmem:[%s529 + $0xb70] sm:$0xff]
        %v3528 = vld [vmem:[%s529 + $0xb78] sm:$0xff]
        %v3529 = vld [vmem:[%s529 + $0xb80] sm:$0xff]
        %v3530 = vld [vmem:[%s529 + $0xb88] sm:$0xff]
        %v3531 = vld [vmem:[%s529 + $0xb90] sm:$0xff]
        %v3532 = vld [vmem:[%s529 + $0xb98] sm:$0xff]
        %v3533 = vld [vmem:[%s529 + $0xba0] sm:$0xff]
        %v3534 = vld [vmem:[%s529 + $0xba8] sm:$0xff]
        %v3535 = vld [vmem:[%s529 + $0xbb0] sm:$0xff]
        %v3536 = vld [vmem:[%s529 + $0xbb8] sm:$0xff]
        %v3537 = vld [vmem:[%s529 + $0xbc0] sm:$0xff]
        %v3538 = vld [vmem:[%s529 + $0xbc8] sm:$0xff]
        %v3539 = vld [vmem:[%s529 + $0xbd0] sm:$0xff]
        %v3540 = vld [vmem:[%s529 + $0xbd8] sm:$0xff]
        %v3541 = vld [vmem:[%s529 + $0xbe0] sm:$0xff]
        %v3542 = vld [vmem:[%s529 + $0xbe8] sm:$0xff]
        %v3543 = vld [vmem:[%s529 + $0xbf0] sm:$0xff]
        %v3544 = vld [vmem:[%s529 + $0xbf8] sm:$0xff]
        %v3545 = vld [vmem:[%s529 + $0xc00] sm:$0xff]
        %v3546 = vld [vmem:[%s529 + $0xc08] sm:$0xff]
        %v3547 = vld [vmem:[%s529 + $0xc10] sm:$0xff]
        %v3548 = vld [vmem:[%s529 + $0xc18] sm:$0xff]
        %v3549 = vld [vmem:[%s529 + $0xc20] sm:$0xff]
        %v3550 = vld [vmem:[%s529 + $0xc28] sm:$0xff]
        %v3551 = vld [vmem:[%s529 + $0xc30] sm:$0xff]
        %v3552 = vld [vmem:[%s529 + $0xc38] sm:$0xff]
        %v3553 = vld [vmem:[%s529 + $0xc40] sm:$0xff]
        %v3554 = vld [vmem:[%s529 + $0xc48] sm:$0xff]
        %v3555 = vld [vmem:[%s529 + $0xc50] sm:$0xff]
        %v3556 = vld [vmem:[%s529 + $0xc58] sm:$0xff]
        %v3557 = vld [vmem:[%s529 + $0xc60] sm:$0xff]
        %v3558 = vld [vmem:[%s529 + $0xc68] sm:$0xff]
        %v3559 = vld [vmem:[%s529 + $0xc70] sm:$0xff]
        %v3560 = vld [vmem:[%s529 + $0xc78] sm:$0xff]
        %v3561 = vld [vmem:[%s529 + $0xc80] sm:$0xff]
        %v3562 = vld [vmem:[%s529 + $0xc88] sm:$0xff]
        %v3563 = vld [vmem:[%s529 + $0xc90] sm:$0xff]
        %v3564 = vld [vmem:[%s529 + $0xc98] sm:$0xff]
        %v3565 = vld [vmem:[%s529 + $0xca0] sm:$0xff]
        %v3566 = vld [vmem:[%s529 + $0xca8] sm:$0xff]
        %v3567 = vld [vmem:[%s529 + $0xcb0] sm:$0xff]
        %v3568 = vld [vmem:[%s529 + $0xcb8] sm:$0xff]
        %v3569 = vld [vmem:[%s529 + $0xcc0] sm:$0xff]
        %v3570 = vld [vmem:[%s529 + $0xcc8] sm:$0xff]
        %v3571 = vld [vmem:[%s529 + $0xcd0] sm:$0xff]
        %v3572 = vld [vmem:[%s529 + $0xcd8] sm:$0xff]
        %v3573 = vld [vmem:[%s529 + $0xce0] sm:$0xff]
        %v3574 = vld [vmem:[%s529 + $0xce8] sm:$0xff]
        %v3575 = vld [vmem:[%s529 + $0xcf0] sm:$0xff]
        %v3576 = vld [vmem:[%s529 + $0xcf8] sm:$0xff]
        %v3577 = vld [vmem:[%s529 + $0xd00] sm:$0xff]
        %v3578 = vld [vmem:[%s529 + $0xd08] sm:$0xff]
        %v3579 = vld [vmem:[%s529 + $0xd10] sm:$0xff]
        %v3580 = vld [vmem:[%s529 + $0xd18] sm:$0xff]
        %v3581 = vld [vmem:[%s529 + $0xd20] sm:$0xff]
        %v3582 = vld [vmem:[%s529 + $0xd28] sm:$0xff]
        %v3583 = vld [vmem:[%s529 + $0xd30] sm:$0xff]
        %v3584 = vld [vmem:[%s529 + $0xd38] sm:$0xff]
        %v3585 = vld [vmem:[%s529 + $0xd40] sm:$0xff]
        %v3586 = vld [vmem:[%s529 + $0xd48] sm:$0xff]
        %v3587 = vld [vmem:[%s529 + $0xd50] sm:$0xff]
        %v3588 = vld [vmem:[%s529 + $0xd58] sm:$0xff]
        %v3589 = vld [vmem:[%s529 + $0xd60] sm:$0xff]
        %v3590 = vld [vmem:[%s529 + $0xd68] sm:$0xff]
        %v3591 = vld [vmem:[%s529 + $0xd70] sm:$0xff]
        %v3592 = vld [vmem:[%s529 + $0xd78] sm:$0xff]
        %v3593 = vld [vmem:[%s529 + $0xd80] sm:$0xff]
        %v3594 = vld [vmem:[%s529 + $0xd88] sm:$0xff]
        %v3595 = vld [vmem:[%s529 + $0xd90] sm:$0xff]
        %v3596 = vld [vmem:[%s529 + $0xd98] sm:$0xff]
        %v3597 = vld [vmem:[%s529 + $0xda0] sm:$0xff]
        %v3598 = vld [vmem:[%s529 + $0xda8] sm:$0xff]
        %v3599 = vld [vmem:[%s529 + $0xdb0] sm:$0xff]
        %v3600 = vld [vmem:[%s529 + $0xdb8] sm:$0xff]
        %v3601 = vld [vmem:[%s529 + $0xdc0] sm:$0xff]
        %v3602 = vld [vmem:[%s529 + $0xdc8] sm:$0xff]
        %v3603 = vld [vmem:[%s529 + $0xdd0] sm:$0xff]
        %v3604 = vld [vmem:[%s529 + $0xdd8] sm:$0xff]
        %v3605 = vld [vmem:[%s529 + $0xde0] sm:$0xff]
        %v3606 = vld [vmem:[%s529 + $0xde8] sm:$0xff]
        %v3607 = vld [vmem:[%s529 + $0xdf0] sm:$0xff]
        %v3608 = vld [vmem:[%s529 + $0xdf8] sm:$0xff]
        %v3609 = vld [vmem:[%s529 + $0xe00] sm:$0xff]
        %v3610 = vld [vmem:[%s529 + $0xe08] sm:$0xff]
        %v3611 = vld [vmem:[%s529 + $0xe10] sm:$0xff]
        %v3612 = vld [vmem:[%s529 + $0xe18] sm:$0xff]
        %v3613 = vld [vmem:[%s529 + $0xe20] sm:$0xff]
        %v3614 = vld [vmem:[%s529 + $0xe28] sm:$0xff]
        %v3615 = vld [vmem:[%s529 + $0xe30] sm:$0xff]
        %v3616 = vld [vmem:[%s529 + $0xe38] sm:$0xff]
        %v3617 = vld [vmem:[%s529 + $0xe40] sm:$0xff]
        %v3618 = vld [vmem:[%s529 + $0xe48] sm:$0xff]
        %v3619 = vld [vmem:[%s529 + $0xe50] sm:$0xff]
        %v3620 = vld [vmem:[%s529 + $0xe58] sm:$0xff]
        %v3621 = vld [vmem:[%s529 + $0xe60] sm:$0xff]
        %v3622 = vld [vmem:[%s529 + $0xe68] sm:$0xff]
        %v3623 = vld [vmem:[%s529 + $0xe70] sm:$0xff]
        %v3624 = vld [vmem:[%s529 + $0xe78] sm:$0xff]
        %v3625 = vld [vmem:[%s529 + $0xe80] sm:$0xff]
        %v3626 = vld [vmem:[%s529 + $0xe88] sm:$0xff]
        %v3627 = vld [vmem:[%s529 + $0xe90] sm:$0xff]
        %v3628 = vld [vmem:[%s529 + $0xe98] sm:$0xff]
        %v3629 = vld [vmem:[%s529 + $0xea0] sm:$0xff]
        %v3630 = vld [vmem:[%s529 + $0xea8] sm:$0xff]
        %v3631 = vld [vmem:[%s529 + $0xeb0] sm:$0xff]
        %v3632 = vld [vmem:[%s529 + $0xeb8] sm:$0xff]
        %v3633 = vld [vmem:[%s529 + $0xec0] sm:$0xff]
        %v3634 = vld [vmem:[%s529 + $0xec8] sm:$0xff]
        %v3635 = vld [vmem:[%s529 + $0xed0] sm:$0xff]
        %v3636 = vld [vmem:[%s529 + $0xed8] sm:$0xff]
        %v3637 = vld [vmem:[%s529 + $0xee0] sm:$0xff]
        %v3638 = vld [vmem:[%s529 + $0xee8] sm:$0xff]
        %v3639 = vld [vmem:[%s529 + $0xef0] sm:$0xff]
        %v3640 = vld [vmem:[%s529 + $0xef8] sm:$0xff]
        %v3641 = vld [vmem:[%s529 + $0xf00] sm:$0xff]
        %v3642 = vld [vmem:[%s529 + $0xf08] sm:$0xff]
        %v3643 = vld [vmem:[%s529 + $0xf10] sm:$0xff]
        %v3644 = vld [vmem:[%s529 + $0xf18] sm:$0xff]
        %v3645 = vld [vmem:[%s529 + $0xf20] sm:$0xff]
        %v3646 = vld [vmem:[%s529 + $0xf28] sm:$0xff]
        %v3647 = vld [vmem:[%s529 + $0xf30] sm:$0xff]
        %v3648 = vld [vmem:[%s529 + $0xf38] sm:$0xff]
        %v3649 = vld [vmem:[%s529 + $0xf40] sm:$0xff]
        %v3650 = vld [vmem:[%s529 + $0xf48] sm:$0xff]
        %v3651 = vld [vmem:[%s529 + $0xf50] sm:$0xff]
        %v3652 = vld [vmem:[%s529 + $0xf58] sm:$0xff]
        %v3653 = vld [vmem:[%s529 + $0xf60] sm:$0xff]
        %v3654 = vld [vmem:[%s529 + $0xf68] sm:$0xff]
        %v3655 = vld [vmem:[%s529 + $0xf70] sm:$0xff]
        %v3656 = vld [vmem:[%s529 + $0xf78] sm:$0xff]
        %v3657 = vld [vmem:[%s529 + $0xf80] sm:$0xff]
        %v3658 = vld [vmem:[%s529 + $0xf88] sm:$0xff]
        %v3659 = vld [vmem:[%s529 + $0xf90] sm:$0xff]
        %v3660 = vld [vmem:[%s529 + $0xf98] sm:$0xff]
        %v3661 = vld [vmem:[%s529 + $0xfa0] sm:$0xff]
        %v3662 = vld [vmem:[%s529 + $0xfa8] sm:$0xff]
        %v3663 = vld [vmem:[%s529 + $0xfb0] sm:$0xff]
        %v3664 = vld [vmem:[%s529 + $0xfb8] sm:$0xff]
        %v3665 = vld [vmem:[%s529 + $0xfc0] sm:$0xff]
        %v3666 = vld [vmem:[%s529 + $0xfc8] sm:$0xff]
        %v3667 = vld [vmem:[%s529 + $0xfd0] sm:$0xff]
        %v3668 = vld [vmem:[%s529 + $0xfd8] sm:$0xff]
        %v3669 = vld [vmem:[%s529 + $0xfe0] sm:$0xff]
        %v3670 = vld [vmem:[%s529 + $0xfe8] sm:$0xff]
        %v3671 = vld [vmem:[%s529 + $0xff0] sm:$0xff]
        %v3672 = vld [vmem:[%s529 + $0xff8] sm:$0xff]
        %v3675 = vcombine.high %v3159, %v3159
        %v3677 = vunpack.c.l.s4 1983009808
        %v3678 = vunpack.c.0.s8 %v3677
        %v3679 = vlaneseq
        %v3680 = vshrl.u32 %v3679, 7
        %v3681 = vsub.s32 %v3678, %v3680
        %v3682 = vrot.slane %v3159, %v3681
        %v3684 = vunpack.c.l.s4 1983009808
        %v3685 = vunpack.c.0.s8 %v3684
        %v3686 = vlaneseq
        %v3687 = vshrl.u32 %v3686, 7
        %v3688 = vsub.s32 %v3685, %v3687
        %v3689 = vrot.slane %v3675, %v3688
        %v3690 = vcombine.high %v3682, %v3682
        %v3691 = vcombine.high %v3689, %v3689
        %v3692 = vcombine.high %v3160, %v3160
        %v3694 = vunpack.c.l.s4 1983009808
        %v3695 = vunpack.c.0.s8 %v3694
        %v3696 = vlaneseq
        %v3697 = vshrl.u32 %v3696, 7
        %v3698 = vsub.s32 %v3695, %v3697
        %v3699 = vrot.slane %v3160, %v3698
        %v3701 = vunpack.c.l.s4 1983009808
        %v3702 = vunpack.c.0.s8 %v3701
        %v3703 = vlaneseq
        %v3704 = vshrl.u32 %v3703, 7
        %v3705 = vsub.s32 %v3702, %v3704
        %v3706 = vrot.slane %v3692, %v3705
        %v3707 = vcombine.high %v3699, %v3699
        %v3708 = vcombine.high %v3706, %v3706
        %v4229 = vunpack.c.l.b16 %v3161
        %v4230 = vunpack.c.h.b16 %v3161
        %v4231 = vunpack.c.l.b16 %v3162
        %v4232 = vunpack.c.h.b16 %v3162
        %v4233 = vunpack.c.l.b16 %v3163
        %v4234 = vunpack.c.h.b16 %v3163
        %v4235 = vunpack.c.l.b16 %v3164
        %v4236 = vunpack.c.h.b16 %v3164
        %v4237 = vunpack.c.l.b16 %v3165
        %v4238 = vunpack.c.h.b16 %v3165
        %v4239 = vunpack.c.l.b16 %v3166
        %v4240 = vunpack.c.h.b16 %v3166
        %v4241 = vunpack.c.l.b16 %v3167
        %v4242 = vunpack.c.h.b16 %v3167
        %v4243 = vunpack.c.l.b16 %v3168
        %v4244 = vunpack.c.h.b16 %v3168
        %v4245 = vunpack.c.l.b16 %v3169
        %v4246 = vunpack.c.h.b16 %v3169
        %v4247 = vunpack.c.l.b16 %v3170
        %v4248 = vunpack.c.h.b16 %v3170
        %v4249 = vunpack.c.l.b16 %v3171
        %v4250 = vunpack.c.h.b16 %v3171
        %v4251 = vunpack.c.l.b16 %v3172
        %v4252 = vunpack.c.h.b16 %v3172
        %v4253 = vunpack.c.l.b16 %v3173
        %v4254 = vunpack.c.h.b16 %v3173
        %v4255 = vunpack.c.l.b16 %v3174
        %v4256 = vunpack.c.h.b16 %v3174
        %v4257 = vunpack.c.l.b16 %v3175
        %v4258 = vunpack.c.h.b16 %v3175
        %v4259 = vunpack.c.l.b16 %v3176
        %v4260 = vunpack.c.h.b16 %v3176
        %v4261 = vunpack.c.l.b16 %v3177
        %v4262 = vunpack.c.h.b16 %v3177
        %v4263 = vunpack.c.l.b16 %v3178
        %v4264 = vunpack.c.h.b16 %v3178
        %v4265 = vunpack.c.l.b16 %v3179
        %v4266 = vunpack.c.h.b16 %v3179
        %v4267 = vunpack.c.l.b16 %v3180
        %v4268 = vunpack.c.h.b16 %v3180
        %v4269 = vunpack.c.l.b16 %v3181
        %v4270 = vunpack.c.h.b16 %v3181
        %v4271 = vunpack.c.l.b16 %v3182
        %v4272 = vunpack.c.h.b16 %v3182
        %v4273 = vunpack.c.l.b16 %v3183
        %v4274 = vunpack.c.h.b16 %v3183
        %v4275 = vunpack.c.l.b16 %v3184
        %v4276 = vunpack.c.h.b16 %v3184
        %v4277 = vunpack.c.l.b16 %v3185
        %v4278 = vunpack.c.h.b16 %v3185
        %v4279 = vunpack.c.l.b16 %v3186
        %v4280 = vunpack.c.h.b16 %v3186
        %v4281 = vunpack.c.l.b16 %v3187
        %v4282 = vunpack.c.h.b16 %v3187
        %v4283 = vunpack.c.l.b16 %v3188
        %v4284 = vunpack.c.h.b16 %v3188
        %v4285 = vunpack.c.l.b16 %v3189
        %v4286 = vunpack.c.h.b16 %v3189
        %v4287 = vunpack.c.l.b16 %v3190
        %v4288 = vunpack.c.h.b16 %v3190
        %v4289 = vunpack.c.l.b16 %v3191
        %v4290 = vunpack.c.h.b16 %v3191
        %v4291 = vunpack.c.l.b16 %v3192
        %v4292 = vunpack.c.h.b16 %v3192
        %v4293 = vunpack.c.l.b16 %v3193
        %v4294 = vunpack.c.h.b16 %v3193
        %v4295 = vunpack.c.l.b16 %v3194
        %v4296 = vunpack.c.h.b16 %v3194
        %v4297 = vunpack.c.l.b16 %v3195
        %v4298 = vunpack.c.h.b16 %v3195
        %v4299 = vunpack.c.l.b16 %v3196
        %v4300 = vunpack.c.h.b16 %v3196
        %v4301 = vunpack.c.l.b16 %v3197
        %v4302 = vunpack.c.h.b16 %v3197
        %v4303 = vunpack.c.l.b16 %v3198
        %v4304 = vunpack.c.h.b16 %v3198
        %v4305 = vunpack.c.l.b16 %v3199
        %v4306 = vunpack.c.h.b16 %v3199
        %v4307 = vunpack.c.l.b16 %v3200
        %v4308 = vunpack.c.h.b16 %v3200
        %v4309 = vunpack.c.l.b16 %v3201
        %v4310 = vunpack.c.h.b16 %v3201
        %v4311 = vunpack.c.l.b16 %v3202
        %v4312 = vunpack.c.h.b16 %v3202
        %v4313 = vunpack.c.l.b16 %v3203
        %v4314 = vunpack.c.h.b16 %v3203
        %v4315 = vunpack.c.l.b16 %v3204
        %v4316 = vunpack.c.h.b16 %v3204
        %v4317 = vunpack.c.l.b16 %v3205
        %v4318 = vunpack.c.h.b16 %v3205
        %v4319 = vunpack.c.l.b16 %v3206
        %v4320 = vunpack.c.h.b16 %v3206
        %v4321 = vunpack.c.l.b16 %v3207
        %v4322 = vunpack.c.h.b16 %v3207
        %v4323 = vunpack.c.l.b16 %v3208
        %v4324 = vunpack.c.h.b16 %v3208
        %v4325 = vunpack.c.l.b16 %v3209
        %v4326 = vunpack.c.h.b16 %v3209
        %v4327 = vunpack.c.l.b16 %v3210
        %v4328 = vunpack.c.h.b16 %v3210
        %v4329 = vunpack.c.l.b16 %v3211
        %v4330 = vunpack.c.h.b16 %v3211
        %v4331 = vunpack.c.l.b16 %v3212
        %v4332 = vunpack.c.h.b16 %v3212
        %v4333 = vunpack.c.l.b16 %v3213
        %v4334 = vunpack.c.h.b16 %v3213
        %v4335 = vunpack.c.l.b16 %v3214
        %v4336 = vunpack.c.h.b16 %v3214
        %v4337 = vunpack.c.l.b16 %v3215
        %v4338 = vunpack.c.h.b16 %v3215
        %v4339 = vunpack.c.l.b16 %v3216
        %v4340 = vunpack.c.h.b16 %v3216
        %v4341 = vunpack.c.l.b16 %v3217
        %v4342 = vunpack.c.h.b16 %v3217
        %v4343 = vunpack.c.l.b16 %v3218
        %v4344 = vunpack.c.h.b16 %v3218
        %v4345 = vunpack.c.l.b16 %v3219
        %v4346 = vunpack.c.h.b16 %v3219
        %v4347 = vunpack.c.l.b16 %v3220
        %v4348 = vunpack.c.h.b16 %v3220
        %v4349 = vunpack.c.l.b16 %v3221
        %v4350 = vunpack.c.h.b16 %v3221
        %v4351 = vunpack.c.l.b16 %v3222
        %v4352 = vunpack.c.h.b16 %v3222
        %v4353 = vunpack.c.l.b16 %v3223
        %v4354 = vunpack.c.h.b16 %v3223
        %v4355 = vunpack.c.l.b16 %v3224
        %v4356 = vunpack.c.h.b16 %v3224
        %v4357 = vunpack.c.l.b16 %v3225
        %v4358 = vunpack.c.h.b16 %v3225
        %v4359 = vunpack.c.l.b16 %v3226
        %v4360 = vunpack.c.h.b16 %v3226
        %v4361 = vunpack.c.l.b16 %v3227
        %v4362 = vunpack.c.h.b16 %v3227
        %v4363 = vunpack.c.l.b16 %v3228
        %v4364 = vunpack.c.h.b16 %v3228
        %v4365 = vunpack.c.l.b16 %v3229
        %v4366 = vunpack.c.h.b16 %v3229
        %v4367 = vunpack.c.l.b16 %v3230
        %v4368 = vunpack.c.h.b16 %v3230
        %v4369 = vunpack.c.l.b16 %v3231
        %v4370 = vunpack.c.h.b16 %v3231
        %v4371 = vunpack.c.l.b16 %v3232
        %v4372 = vunpack.c.h.b16 %v3232
        %v4373 = vunpack.c.l.b16 %v3233
        %v4374 = vunpack.c.h.b16 %v3233
        %v4375 = vunpack.c.l.b16 %v3234
        %v4376 = vunpack.c.h.b16 %v3234
        %v4377 = vunpack.c.l.b16 %v3235
        %v4378 = vunpack.c.h.b16 %v3235
        %v4379 = vunpack.c.l.b16 %v3236
        %v4380 = vunpack.c.h.b16 %v3236
        %v4381 = vunpack.c.l.b16 %v3237
        %v4382 = vunpack.c.h.b16 %v3237
        %v4383 = vunpack.c.l.b16 %v3238
        %v4384 = vunpack.c.h.b16 %v3238
        %v4385 = vunpack.c.l.b16 %v3239
        %v4386 = vunpack.c.h.b16 %v3239
        %v4387 = vunpack.c.l.b16 %v3240
        %v4388 = vunpack.c.h.b16 %v3240
        %v4389 = vunpack.c.l.b16 %v3241
        %v4390 = vunpack.c.h.b16 %v3241
        %v4391 = vunpack.c.l.b16 %v3242
        %v4392 = vunpack.c.h.b16 %v3242
        %v4393 = vunpack.c.l.b16 %v3243
        %v4394 = vunpack.c.h.b16 %v3243
        %v4395 = vunpack.c.l.b16 %v3244
        %v4396 = vunpack.c.h.b16 %v3244
        %v4397 = vunpack.c.l.b16 %v3245
        %v4398 = vunpack.c.h.b16 %v3245
        %v4399 = vunpack.c.l.b16 %v3246
        %v4400 = vunpack.c.h.b16 %v3246
        %v4401 = vunpack.c.l.b16 %v3247
        %v4402 = vunpack.c.h.b16 %v3247
        %v4403 = vunpack.c.l.b16 %v3248
        %v4404 = vunpack.c.h.b16 %v3248
        %v4405 = vunpack.c.l.b16 %v3249
        %v4406 = vunpack.c.h.b16 %v3249
        %v4407 = vunpack.c.l.b16 %v3250
        %v4408 = vunpack.c.h.b16 %v3250
        %v4409 = vunpack.c.l.b16 %v3251
        %v4410 = vunpack.c.h.b16 %v3251
        %v4411 = vunpack.c.l.b16 %v3252
        %v4412 = vunpack.c.h.b16 %v3252
        %v4413 = vunpack.c.l.b16 %v3253
        %v4414 = vunpack.c.h.b16 %v3253
        %v4415 = vunpack.c.l.b16 %v3254
        %v4416 = vunpack.c.h.b16 %v3254
        %v4417 = vunpack.c.l.b16 %v3255
        %v4418 = vunpack.c.h.b16 %v3255
        %v4419 = vunpack.c.l.b16 %v3256
        %v4420 = vunpack.c.h.b16 %v3256
        %v4421 = vunpack.c.l.b16 %v3257
        %v4422 = vunpack.c.h.b16 %v3257
        %v4423 = vunpack.c.l.b16 %v3258
        %v4424 = vunpack.c.h.b16 %v3258
        %v4425 = vunpack.c.l.b16 %v3259
        %v4426 = vunpack.c.h.b16 %v3259
        %v4427 = vunpack.c.l.b16 %v3260
        %v4428 = vunpack.c.h.b16 %v3260
        %v4429 = vunpack.c.l.b16 %v3261
        %v4430 = vunpack.c.h.b16 %v3261
        %v4431 = vunpack.c.l.b16 %v3262
        %v4432 = vunpack.c.h.b16 %v3262
        %v4433 = vunpack.c.l.b16 %v3263
        %v4434 = vunpack.c.h.b16 %v3263
        %v4435 = vunpack.c.l.b16 %v3264
        %v4436 = vunpack.c.h.b16 %v3264
        %v4437 = vunpack.c.l.b16 %v3265
        %v4438 = vunpack.c.h.b16 %v3265
        %v4439 = vunpack.c.l.b16 %v3266
        %v4440 = vunpack.c.h.b16 %v3266
        %v4441 = vunpack.c.l.b16 %v3267
        %v4442 = vunpack.c.h.b16 %v3267
        %v4443 = vunpack.c.l.b16 %v3268
        %v4444 = vunpack.c.h.b16 %v3268
        %v4445 = vunpack.c.l.b16 %v3269
        %v4446 = vunpack.c.h.b16 %v3269
        %v4447 = vunpack.c.l.b16 %v3270
        %v4448 = vunpack.c.h.b16 %v3270
        %v4449 = vunpack.c.l.b16 %v3271
        %v4450 = vunpack.c.h.b16 %v3271
        %v4451 = vunpack.c.l.b16 %v3272
        %v4452 = vunpack.c.h.b16 %v3272
        %v4453 = vunpack.c.l.b16 %v3273
        %v4454 = vunpack.c.h.b16 %v3273
        %v4455 = vunpack.c.l.b16 %v3274
        %v4456 = vunpack.c.h.b16 %v3274
        %v4457 = vunpack.c.l.b16 %v3275
        %v4458 = vunpack.c.h.b16 %v3275
        %v4459 = vunpack.c.l.b16 %v3276
        %v4460 = vunpack.c.h.b16 %v3276
        %v4461 = vunpack.c.l.b16 %v3277
        %v4462 = vunpack.c.h.b16 %v3277
        %v4463 = vunpack.c.l.b16 %v3278
        %v4464 = vunpack.c.h.b16 %v3278
        %v4465 = vunpack.c.l.b16 %v3279
        %v4466 = vunpack.c.h.b16 %v3279
        %v4467 = vunpack.c.l.b16 %v3280
        %v4468 = vunpack.c.h.b16 %v3280
        %v4469 = vunpack.c.l.b16 %v3281
        %v4470 = vunpack.c.h.b16 %v3281
        %v4471 = vunpack.c.l.b16 %v3282
        %v4472 = vunpack.c.h.b16 %v3282
        %v4473 = vunpack.c.l.b16 %v3283
        %v4474 = vunpack.c.h.b16 %v3283
        %v4475 = vunpack.c.l.b16 %v3284
        %v4476 = vunpack.c.h.b16 %v3284
        %v4477 = vunpack.c.l.b16 %v3285
        %v4478 = vunpack.c.h.b16 %v3285
        %v4479 = vunpack.c.l.b16 %v3286
        %v4480 = vunpack.c.h.b16 %v3286
        %v4481 = vunpack.c.l.b16 %v3287
        %v4482 = vunpack.c.h.b16 %v3287
        %v4483 = vunpack.c.l.b16 %v3288
        %v4484 = vunpack.c.h.b16 %v3288
        %v4485 = vunpack.c.l.b16 %v3289
        %v4486 = vunpack.c.h.b16 %v3289
        %v4487 = vunpack.c.l.b16 %v3290
        %v4488 = vunpack.c.h.b16 %v3290
        %v4489 = vunpack.c.l.b16 %v3291
        %v4490 = vunpack.c.h.b16 %v3291
        %v4491 = vunpack.c.l.b16 %v3292
        %v4492 = vunpack.c.h.b16 %v3292
        %v4493 = vunpack.c.l.b16 %v3293
        %v4494 = vunpack.c.h.b16 %v3293
        %v4495 = vunpack.c.l.b16 %v3294
        %v4496 = vunpack.c.h.b16 %v3294
        %v4497 = vunpack.c.l.b16 %v3295
        %v4498 = vunpack.c.h.b16 %v3295
        %v4499 = vunpack.c.l.b16 %v3296
        %v4500 = vunpack.c.h.b16 %v3296
        %v4501 = vunpack.c.l.b16 %v3297
        %v4502 = vunpack.c.h.b16 %v3297
        %v4503 = vunpack.c.l.b16 %v3298
        %v4504 = vunpack.c.h.b16 %v3298
        %v4505 = vunpack.c.l.b16 %v3299
        %v4506 = vunpack.c.h.b16 %v3299
        %v4507 = vunpack.c.l.b16 %v3300
        %v4508 = vunpack.c.h.b16 %v3300
        %v4509 = vunpack.c.l.b16 %v3301
        %v4510 = vunpack.c.h.b16 %v3301
        %v4511 = vunpack.c.l.b16 %v3302
        %v4512 = vunpack.c.h.b16 %v3302
        %v4513 = vunpack.c.l.b16 %v3303
        %v4514 = vunpack.c.h.b16 %v3303
        %v4515 = vunpack.c.l.b16 %v3304
        %v4516 = vunpack.c.h.b16 %v3304
        %v4517 = vunpack.c.l.b16 %v3305
        %v4518 = vunpack.c.h.b16 %v3305
        %v4519 = vunpack.c.l.b16 %v3306
        %v4520 = vunpack.c.h.b16 %v3306
        %v4521 = vunpack.c.l.b16 %v3307
        %v4522 = vunpack.c.h.b16 %v3307
        %v4523 = vunpack.c.l.b16 %v3308
        %v4524 = vunpack.c.h.b16 %v3308
        %v4525 = vunpack.c.l.b16 %v3309
        %v4526 = vunpack.c.h.b16 %v3309
        %v4527 = vunpack.c.l.b16 %v3310
        %v4528 = vunpack.c.h.b16 %v3310
        %v4529 = vunpack.c.l.b16 %v3311
        %v4530 = vunpack.c.h.b16 %v3311
        %v4531 = vunpack.c.l.b16 %v3312
        %v4532 = vunpack.c.h.b16 %v3312
        %v4533 = vunpack.c.l.b16 %v3313
        %v4534 = vunpack.c.h.b16 %v3313
        %v4535 = vunpack.c.l.b16 %v3314
        %v4536 = vunpack.c.h.b16 %v3314
        %v4537 = vunpack.c.l.b16 %v3315
        %v4538 = vunpack.c.h.b16 %v3315
        %v4539 = vunpack.c.l.b16 %v3316
        %v4540 = vunpack.c.h.b16 %v3316
        %v4541 = vunpack.c.l.b16 %v3317
        %v4542 = vunpack.c.h.b16 %v3317
        %v4543 = vunpack.c.l.b16 %v3318
        %v4544 = vunpack.c.h.b16 %v3318
        %v4545 = vunpack.c.l.b16 %v3319
        %v4546 = vunpack.c.h.b16 %v3319
        %v4547 = vunpack.c.l.b16 %v3320
        %v4548 = vunpack.c.h.b16 %v3320
        %v4549 = vunpack.c.l.b16 %v3321
        %v4550 = vunpack.c.h.b16 %v3321
        %v4551 = vunpack.c.l.b16 %v3322
        %v4552 = vunpack.c.h.b16 %v3322
        %v4553 = vunpack.c.l.b16 %v3323
        %v4554 = vunpack.c.h.b16 %v3323
        %v4555 = vunpack.c.l.b16 %v3324
        %v4556 = vunpack.c.h.b16 %v3324
        %v4557 = vunpack.c.l.b16 %v3325
        %v4558 = vunpack.c.h.b16 %v3325
        %v4559 = vunpack.c.l.b16 %v3326
        %v4560 = vunpack.c.h.b16 %v3326
        %v4561 = vunpack.c.l.b16 %v3327
        %v4562 = vunpack.c.h.b16 %v3327
        %v4563 = vunpack.c.l.b16 %v3328
        %v4564 = vunpack.c.h.b16 %v3328
        %v4565 = vunpack.c.l.b16 %v3329
        %v4566 = vunpack.c.h.b16 %v3329
        %v4567 = vunpack.c.l.b16 %v3330
        %v4568 = vunpack.c.h.b16 %v3330
        %v4569 = vunpack.c.l.b16 %v3331
        %v4570 = vunpack.c.h.b16 %v3331
        %v4571 = vunpack.c.l.b16 %v3332
        %v4572 = vunpack.c.h.b16 %v3332
        %v4573 = vunpack.c.l.b16 %v3333
        %v4574 = vunpack.c.h.b16 %v3333
        %v4575 = vunpack.c.l.b16 %v3334
        %v4576 = vunpack.c.h.b16 %v3334
        %v4577 = vunpack.c.l.b16 %v3335
        %v4578 = vunpack.c.h.b16 %v3335
        %v4579 = vunpack.c.l.b16 %v3336
        %v4580 = vunpack.c.h.b16 %v3336
        %v4581 = vunpack.c.l.b16 %v3337
        %v4582 = vunpack.c.h.b16 %v3337
        %v4583 = vunpack.c.l.b16 %v3338
        %v4584 = vunpack.c.h.b16 %v3338
        %v4585 = vunpack.c.l.b16 %v3339
        %v4586 = vunpack.c.h.b16 %v3339
        %v4587 = vunpack.c.l.b16 %v3340
        %v4588 = vunpack.c.h.b16 %v3340
        %v4589 = vunpack.c.l.b16 %v3341
        %v4590 = vunpack.c.h.b16 %v3341
        %v4591 = vunpack.c.l.b16 %v3342
        %v4592 = vunpack.c.h.b16 %v3342
        %v4593 = vunpack.c.l.b16 %v3343
        %v4594 = vunpack.c.h.b16 %v3343
        %v4595 = vunpack.c.l.b16 %v3344
        %v4596 = vunpack.c.h.b16 %v3344
        %v4597 = vunpack.c.l.b16 %v3345
        %v4598 = vunpack.c.h.b16 %v3345
        %v4599 = vunpack.c.l.b16 %v3346
        %v4600 = vunpack.c.h.b16 %v3346
        %v4601 = vunpack.c.l.b16 %v3347
        %v4602 = vunpack.c.h.b16 %v3347
        %v4603 = vunpack.c.l.b16 %v3348
        %v4604 = vunpack.c.h.b16 %v3348
        %v4605 = vunpack.c.l.b16 %v3349
        %v4606 = vunpack.c.h.b16 %v3349
        %v4607 = vunpack.c.l.b16 %v3350
        %v4608 = vunpack.c.h.b16 %v3350
        %v4609 = vunpack.c.l.b16 %v3351
        %v4610 = vunpack.c.h.b16 %v3351
        %v4611 = vunpack.c.l.b16 %v3352
        %v4612 = vunpack.c.h.b16 %v3352
        %v4613 = vunpack.c.l.b16 %v3353
        %v4614 = vunpack.c.h.b16 %v3353
        %v4615 = vunpack.c.l.b16 %v3354
        %v4616 = vunpack.c.h.b16 %v3354
        %v4617 = vunpack.c.l.b16 %v3355
        %v4618 = vunpack.c.h.b16 %v3355
        %v4619 = vunpack.c.l.b16 %v3356
        %v4620 = vunpack.c.h.b16 %v3356
        %v4621 = vunpack.c.l.b16 %v3357
        %v4622 = vunpack.c.h.b16 %v3357
        %v4623 = vunpack.c.l.b16 %v3358
        %v4624 = vunpack.c.h.b16 %v3358
        %v4625 = vunpack.c.l.b16 %v3359
        %v4626 = vunpack.c.h.b16 %v3359
        %v4627 = vunpack.c.l.b16 %v3360
        %v4628 = vunpack.c.h.b16 %v3360
        %v4629 = vunpack.c.l.b16 %v3361
        %v4630 = vunpack.c.h.b16 %v3361
        %v4631 = vunpack.c.l.b16 %v3362
        %v4632 = vunpack.c.h.b16 %v3362
        %v4633 = vunpack.c.l.b16 %v3363
        %v4634 = vunpack.c.h.b16 %v3363
        %v4635 = vunpack.c.l.b16 %v3364
        %v4636 = vunpack.c.h.b16 %v3364
        %v4637 = vunpack.c.l.b16 %v3365
        %v4638 = vunpack.c.h.b16 %v3365
        %v4639 = vunpack.c.l.b16 %v3366
        %v4640 = vunpack.c.h.b16 %v3366
        %v4641 = vunpack.c.l.b16 %v3367
        %v4642 = vunpack.c.h.b16 %v3367
        %v4643 = vunpack.c.l.b16 %v3368
        %v4644 = vunpack.c.h.b16 %v3368
        %v4645 = vunpack.c.l.b16 %v3369
        %v4646 = vunpack.c.h.b16 %v3369
        %v4647 = vunpack.c.l.b16 %v3370
        %v4648 = vunpack.c.h.b16 %v3370
        %v4649 = vunpack.c.l.b16 %v3371
        %v4650 = vunpack.c.h.b16 %v3371
        %v4651 = vunpack.c.l.b16 %v3372
        %v4652 = vunpack.c.h.b16 %v3372
        %v4653 = vunpack.c.l.b16 %v3373
        %v4654 = vunpack.c.h.b16 %v3373
        %v4655 = vunpack.c.l.b16 %v3374
        %v4656 = vunpack.c.h.b16 %v3374
        %v4657 = vunpack.c.l.b16 %v3375
        %v4658 = vunpack.c.h.b16 %v3375
        %v4659 = vunpack.c.l.b16 %v3376
        %v4660 = vunpack.c.h.b16 %v3376
        %v4661 = vunpack.c.l.b16 %v3377
        %v4662 = vunpack.c.h.b16 %v3377
        %v4663 = vunpack.c.l.b16 %v3378
        %v4664 = vunpack.c.h.b16 %v3378
        %v4665 = vunpack.c.l.b16 %v3379
        %v4666 = vunpack.c.h.b16 %v3379
        %v4667 = vunpack.c.l.b16 %v3380
        %v4668 = vunpack.c.h.b16 %v3380
        %v4669 = vunpack.c.l.b16 %v3381
        %v4670 = vunpack.c.h.b16 %v3381
        %v4671 = vunpack.c.l.b16 %v3382
        %v4672 = vunpack.c.h.b16 %v3382
        %v4673 = vunpack.c.l.b16 %v3383
        %v4674 = vunpack.c.h.b16 %v3383
        %v4675 = vunpack.c.l.b16 %v3384
        %v4676 = vunpack.c.h.b16 %v3384
        %v4677 = vunpack.c.l.b16 %v3385
        %v4678 = vunpack.c.h.b16 %v3385
        %v4679 = vunpack.c.l.b16 %v3386
        %v4680 = vunpack.c.h.b16 %v3386
        %v4681 = vunpack.c.l.b16 %v3387
        %v4682 = vunpack.c.h.b16 %v3387
        %v4683 = vunpack.c.l.b16 %v3388
        %v4684 = vunpack.c.h.b16 %v3388
        %v4685 = vunpack.c.l.b16 %v3389
        %v4686 = vunpack.c.h.b16 %v3389
        %v4687 = vunpack.c.l.b16 %v3390
        %v4688 = vunpack.c.h.b16 %v3390
        %v4689 = vunpack.c.l.b16 %v3391
        %v4690 = vunpack.c.h.b16 %v3391
        %v4691 = vunpack.c.l.b16 %v3392
        %v4692 = vunpack.c.h.b16 %v3392
        %v4693 = vunpack.c.l.b16 %v3393
        %v4694 = vunpack.c.h.b16 %v3393
        %v4695 = vunpack.c.l.b16 %v3394
        %v4696 = vunpack.c.h.b16 %v3394
        %v4697 = vunpack.c.l.b16 %v3395
        %v4698 = vunpack.c.h.b16 %v3395
        %v4699 = vunpack.c.l.b16 %v3396
        %v4700 = vunpack.c.h.b16 %v3396
        %v4701 = vunpack.c.l.b16 %v3397
        %v4702 = vunpack.c.h.b16 %v3397
        %v4703 = vunpack.c.l.b16 %v3398
        %v4704 = vunpack.c.h.b16 %v3398
        %v4705 = vunpack.c.l.b16 %v3399
        %v4706 = vunpack.c.h.b16 %v3399
        %v4707 = vunpack.c.l.b16 %v3400
        %v4708 = vunpack.c.h.b16 %v3400
        %v4709 = vunpack.c.l.b16 %v3401
        %v4710 = vunpack.c.h.b16 %v3401
        %v4711 = vunpack.c.l.b16 %v3402
        %v4712 = vunpack.c.h.b16 %v3402
        %v4713 = vunpack.c.l.b16 %v3403
        %v4714 = vunpack.c.h.b16 %v3403
        %v4715 = vunpack.c.l.b16 %v3404
        %v4716 = vunpack.c.h.b16 %v3404
        %v4717 = vunpack.c.l.b16 %v3405
        %v4718 = vunpack.c.h.b16 %v3405
        %v4719 = vunpack.c.l.b16 %v3406
        %v4720 = vunpack.c.h.b16 %v3406
        %v4721 = vunpack.c.l.b16 %v3407
        %v4722 = vunpack.c.h.b16 %v3407
        %v4723 = vunpack.c.l.b16 %v3408
        %v4724 = vunpack.c.h.b16 %v3408
        %v4725 = vunpack.c.l.b16 %v3409
        %v4726 = vunpack.c.h.b16 %v3409
        %v4727 = vunpack.c.l.b16 %v3410
        %v4728 = vunpack.c.h.b16 %v3410
        %v4729 = vunpack.c.l.b16 %v3411
        %v4730 = vunpack.c.h.b16 %v3411
        %v4731 = vunpack.c.l.b16 %v3412
        %v4732 = vunpack.c.h.b16 %v3412
        %v4733 = vunpack.c.l.b16 %v3413
        %v4734 = vunpack.c.h.b16 %v3413
        %v4735 = vunpack.c.l.b16 %v3414
        %v4736 = vunpack.c.h.b16 %v3414
        %v4737 = vunpack.c.l.b16 %v3415
        %v4738 = vunpack.c.h.b16 %v3415
        %v4739 = vunpack.c.l.b16 %v3416
        %v4740 = vunpack.c.h.b16 %v3416
        %v4741 = vunpack.c.l.b16 %v3417
        %v4742 = vunpack.c.h.b16 %v3417
        %v4743 = vunpack.c.l.b16 %v3418
        %v4744 = vunpack.c.h.b16 %v3418
        %v4745 = vunpack.c.l.b16 %v3419
        %v4746 = vunpack.c.h.b16 %v3419
        %v4747 = vunpack.c.l.b16 %v3420
        %v4748 = vunpack.c.h.b16 %v3420
        %v4749 = vunpack.c.l.b16 %v3421
        %v4750 = vunpack.c.h.b16 %v3421
        %v4751 = vunpack.c.l.b16 %v3422
        %v4752 = vunpack.c.h.b16 %v3422
        %v4753 = vunpack.c.l.b16 %v3423
        %v4754 = vunpack.c.h.b16 %v3423
        %v4755 = vunpack.c.l.b16 %v3424
        %v4756 = vunpack.c.h.b16 %v3424
        %v4757 = vunpack.c.l.b16 %v3425
        %v4758 = vunpack.c.h.b16 %v3425
        %v4759 = vunpack.c.l.b16 %v3426
        %v4760 = vunpack.c.h.b16 %v3426
        %v4761 = vunpack.c.l.b16 %v3427
        %v4762 = vunpack.c.h.b16 %v3427
        %v4763 = vunpack.c.l.b16 %v3428
        %v4764 = vunpack.c.h.b16 %v3428
        %v4765 = vunpack.c.l.b16 %v3429
        %v4766 = vunpack.c.h.b16 %v3429
        %v4767 = vunpack.c.l.b16 %v3430
        %v4768 = vunpack.c.h.b16 %v3430
        %v4769 = vunpack.c.l.b16 %v3431
        %v4770 = vunpack.c.h.b16 %v3431
        %v4771 = vunpack.c.l.b16 %v3432
        %v4772 = vunpack.c.h.b16 %v3432
        %v4773 = vunpack.c.l.b16 %v3433
        %v4774 = vunpack.c.h.b16 %v3433
        %v4775 = vunpack.c.l.b16 %v3434
        %v4776 = vunpack.c.h.b16 %v3434
        %v4777 = vunpack.c.l.b16 %v3435
        %v4778 = vunpack.c.h.b16 %v3435
        %v4779 = vunpack.c.l.b16 %v3436
        %v4780 = vunpack.c.h.b16 %v3436
        %v4781 = vunpack.c.l.b16 %v3437
        %v4782 = vunpack.c.h.b16 %v3437
        %v4783 = vunpack.c.l.b16 %v3438
        %v4784 = vunpack.c.h.b16 %v3438
        %v4785 = vunpack.c.l.b16 %v3439
        %v4786 = vunpack.c.h.b16 %v3439
        %v4787 = vunpack.c.l.b16 %v3440
        %v4788 = vunpack.c.h.b16 %v3440
        %v4789 = vunpack.c.l.b16 %v3441
        %v4790 = vunpack.c.h.b16 %v3441
        %v4791 = vunpack.c.l.b16 %v3442
        %v4792 = vunpack.c.h.b16 %v3442
        %v4793 = vunpack.c.l.b16 %v3443
        %v4794 = vunpack.c.h.b16 %v3443
        %v4795 = vunpack.c.l.b16 %v3444
        %v4796 = vunpack.c.h.b16 %v3444
        %v4797 = vunpack.c.l.b16 %v3445
        %v4798 = vunpack.c.h.b16 %v3445
        %v4799 = vunpack.c.l.b16 %v3446
        %v4800 = vunpack.c.h.b16 %v3446
        %v4801 = vunpack.c.l.b16 %v3447
        %v4802 = vunpack.c.h.b16 %v3447
        %v4803 = vunpack.c.l.b16 %v3448
        %v4804 = vunpack.c.h.b16 %v3448
        %v4805 = vunpack.c.l.b16 %v3449
        %v4806 = vunpack.c.h.b16 %v3449
        %v4807 = vunpack.c.l.b16 %v3450
        %v4808 = vunpack.c.h.b16 %v3450
        %v4809 = vunpack.c.l.b16 %v3451
        %v4810 = vunpack.c.h.b16 %v3451
        %v4811 = vunpack.c.l.b16 %v3452
        %v4812 = vunpack.c.h.b16 %v3452
        %v4813 = vunpack.c.l.b16 %v3453
        %v4814 = vunpack.c.h.b16 %v3453
        %v4815 = vunpack.c.l.b16 %v3454
        %v4816 = vunpack.c.h.b16 %v3454
        %v4817 = vunpack.c.l.b16 %v3455
        %v4818 = vunpack.c.h.b16 %v3455
        %v4819 = vunpack.c.l.b16 %v3456
        %v4820 = vunpack.c.h.b16 %v3456
        %v4821 = vunpack.c.l.b16 %v3457
        %v4822 = vunpack.c.h.b16 %v3457
        %v4823 = vunpack.c.l.b16 %v3458
        %v4824 = vunpack.c.h.b16 %v3458
        %v4825 = vunpack.c.l.b16 %v3459
        %v4826 = vunpack.c.h.b16 %v3459
        %v4827 = vunpack.c.l.b16 %v3460
        %v4828 = vunpack.c.h.b16 %v3460
        %v4829 = vunpack.c.l.b16 %v3461
        %v4830 = vunpack.c.h.b16 %v3461
        %v4831 = vunpack.c.l.b16 %v3462
        %v4832 = vunpack.c.h.b16 %v3462
        %v4833 = vunpack.c.l.b16 %v3463
        %v4834 = vunpack.c.h.b16 %v3463
        %v4835 = vunpack.c.l.b16 %v3464
        %v4836 = vunpack.c.h.b16 %v3464
        %v4837 = vunpack.c.l.b16 %v3465
        %v4838 = vunpack.c.h.b16 %v3465
        %v4839 = vunpack.c.l.b16 %v3466
        %v4840 = vunpack.c.h.b16 %v3466
        %v4841 = vunpack.c.l.b16 %v3467
        %v4842 = vunpack.c.h.b16 %v3467
        %v4843 = vunpack.c.l.b16 %v3468
        %v4844 = vunpack.c.h.b16 %v3468
        %v4845 = vunpack.c.l.b16 %v3469
        %v4846 = vunpack.c.h.b16 %v3469
        %v4847 = vunpack.c.l.b16 %v3470
        %v4848 = vunpack.c.h.b16 %v3470
        %v4849 = vunpack.c.l.b16 %v3471
        %v4850 = vunpack.c.h.b16 %v3471
        %v4851 = vunpack.c.l.b16 %v3472
        %v4852 = vunpack.c.h.b16 %v3472
        %v4853 = vunpack.c.l.b16 %v3473
        %v4854 = vunpack.c.h.b16 %v3473
        %v4855 = vunpack.c.l.b16 %v3474
        %v4856 = vunpack.c.h.b16 %v3474
        %v4857 = vunpack.c.l.b16 %v3475
        %v4858 = vunpack.c.h.b16 %v3475
        %v4859 = vunpack.c.l.b16 %v3476
        %v4860 = vunpack.c.h.b16 %v3476
        %v4861 = vunpack.c.l.b16 %v3477
        %v4862 = vunpack.c.h.b16 %v3477
        %v4863 = vunpack.c.l.b16 %v3478
        %v4864 = vunpack.c.h.b16 %v3478
        %v4865 = vunpack.c.l.b16 %v3479
        %v4866 = vunpack.c.h.b16 %v3479
        %v4867 = vunpack.c.l.b16 %v3480
        %v4868 = vunpack.c.h.b16 %v3480
        %v4869 = vunpack.c.l.b16 %v3481
        %v4870 = vunpack.c.h.b16 %v3481
        %v4871 = vunpack.c.l.b16 %v3482
        %v4872 = vunpack.c.h.b16 %v3482
        %v4873 = vunpack.c.l.b16 %v3483
        %v4874 = vunpack.c.h.b16 %v3483
        %v4875 = vunpack.c.l.b16 %v3484
        %v4876 = vunpack.c.h.b16 %v3484
        %v4877 = vunpack.c.l.b16 %v3485
        %v4878 = vunpack.c.h.b16 %v3485
        %v4879 = vunpack.c.l.b16 %v3486
        %v4880 = vunpack.c.h.b16 %v3486
        %v4881 = vunpack.c.l.b16 %v3487
        %v4882 = vunpack.c.h.b16 %v3487
        %v4883 = vunpack.c.l.b16 %v3488
        %v4884 = vunpack.c.h.b16 %v3488
        %v4885 = vunpack.c.l.b16 %v3489
        %v4886 = vunpack.c.h.b16 %v3489
        %v4887 = vunpack.c.l.b16 %v3490
        %v4888 = vunpack.c.h.b16 %v3490
        %v4889 = vunpack.c.l.b16 %v3491
        %v4890 = vunpack.c.h.b16 %v3491
        %v4891 = vunpack.c.l.b16 %v3492
        %v4892 = vunpack.c.h.b16 %v3492
        %v4893 = vunpack.c.l.b16 %v3493
        %v4894 = vunpack.c.h.b16 %v3493
        %v4895 = vunpack.c.l.b16 %v3494
        %v4896 = vunpack.c.h.b16 %v3494
        %v4897 = vunpack.c.l.b16 %v3495
        %v4898 = vunpack.c.h.b16 %v3495
        %v4899 = vunpack.c.l.b16 %v3496
        %v4900 = vunpack.c.h.b16 %v3496
        %v4901 = vunpack.c.l.b16 %v3497
        %v4902 = vunpack.c.h.b16 %v3497
        %v4903 = vunpack.c.l.b16 %v3498
        %v4904 = vunpack.c.h.b16 %v3498
        %v4905 = vunpack.c.l.b16 %v3499
        %v4906 = vunpack.c.h.b16 %v3499
        %v4907 = vunpack.c.l.b16 %v3500
        %v4908 = vunpack.c.h.b16 %v3500
        %v4909 = vunpack.c.l.b16 %v3501
        %v4910 = vunpack.c.h.b16 %v3501
        %v4911 = vunpack.c.l.b16 %v3502
        %v4912 = vunpack.c.h.b16 %v3502
        %v4913 = vunpack.c.l.b16 %v3503
        %v4914 = vunpack.c.h.b16 %v3503
        %v4915 = vunpack.c.l.b16 %v3504
        %v4916 = vunpack.c.h.b16 %v3504
        %v4917 = vunpack.c.l.b16 %v3505
        %v4918 = vunpack.c.h.b16 %v3505
        %v4919 = vunpack.c.l.b16 %v3506
        %v4920 = vunpack.c.h.b16 %v3506
        %v4921 = vunpack.c.l.b16 %v3507
        %v4922 = vunpack.c.h.b16 %v3507
        %v4923 = vunpack.c.l.b16 %v3508
        %v4924 = vunpack.c.h.b16 %v3508
        %v4925 = vunpack.c.l.b16 %v3509
        %v4926 = vunpack.c.h.b16 %v3509
        %v4927 = vunpack.c.l.b16 %v3510
        %v4928 = vunpack.c.h.b16 %v3510
        %v4929 = vunpack.c.l.b16 %v3511
        %v4930 = vunpack.c.h.b16 %v3511
        %v4931 = vunpack.c.l.b16 %v3512
        %v4932 = vunpack.c.h.b16 %v3512
        %v4933 = vunpack.c.l.b16 %v3513
        %v4934 = vunpack.c.h.b16 %v3513
        %v4935 = vunpack.c.l.b16 %v3514
        %v4936 = vunpack.c.h.b16 %v3514
        %v4937 = vunpack.c.l.b16 %v3515
        %v4938 = vunpack.c.h.b16 %v3515
        %v4939 = vunpack.c.l.b16 %v3516
        %v4940 = vunpack.c.h.b16 %v3516
        %v4941 = vunpack.c.l.b16 %v3517
        %v4942 = vunpack.c.h.b16 %v3517
        %v4943 = vunpack.c.l.b16 %v3518
        %v4944 = vunpack.c.h.b16 %v3518
        %v4945 = vunpack.c.l.b16 %v3519
        %v4946 = vunpack.c.h.b16 %v3519
        %v4947 = vunpack.c.l.b16 %v3520
        %v4948 = vunpack.c.h.b16 %v3520
        %v4949 = vunpack.c.l.b16 %v3521
        %v4950 = vunpack.c.h.b16 %v3521
        %v4951 = vunpack.c.l.b16 %v3522
        %v4952 = vunpack.c.h.b16 %v3522
        %v4953 = vunpack.c.l.b16 %v3523
        %v4954 = vunpack.c.h.b16 %v3523
        %v4955 = vunpack.c.l.b16 %v3524
        %v4956 = vunpack.c.h.b16 %v3524
        %v4957 = vunpack.c.l.b16 %v3525
        %v4958 = vunpack.c.h.b16 %v3525
        %v4959 = vunpack.c.l.b16 %v3526
        %v4960 = vunpack.c.h.b16 %v3526
        %v4961 = vunpack.c.l.b16 %v3527
        %v4962 = vunpack.c.h.b16 %v3527
        %v4963 = vunpack.c.l.b16 %v3528
        %v4964 = vunpack.c.h.b16 %v3528
        %v4965 = vunpack.c.l.b16 %v3529
        %v4966 = vunpack.c.h.b16 %v3529
        %v4967 = vunpack.c.l.b16 %v3530
        %v4968 = vunpack.c.h.b16 %v3530
        %v4969 = vunpack.c.l.b16 %v3531
        %v4970 = vunpack.c.h.b16 %v3531
        %v4971 = vunpack.c.l.b16 %v3532
        %v4972 = vunpack.c.h.b16 %v3532
        %v4973 = vunpack.c.l.b16 %v3533
        %v4974 = vunpack.c.h.b16 %v3533
        %v4975 = vunpack.c.l.b16 %v3534
        %v4976 = vunpack.c.h.b16 %v3534
        %v4977 = vunpack.c.l.b16 %v3535
        %v4978 = vunpack.c.h.b16 %v3535
        %v4979 = vunpack.c.l.b16 %v3536
        %v4980 = vunpack.c.h.b16 %v3536
        %v4981 = vunpack.c.l.b16 %v3537
        %v4982 = vunpack.c.h.b16 %v3537
        %v4983 = vunpack.c.l.b16 %v3538
        %v4984 = vunpack.c.h.b16 %v3538
        %v4985 = vunpack.c.l.b16 %v3539
        %v4986 = vunpack.c.h.b16 %v3539
        %v4987 = vunpack.c.l.b16 %v3540
        %v4988 = vunpack.c.h.b16 %v3540
        %v4989 = vunpack.c.l.b16 %v3541
        %v4990 = vunpack.c.h.b16 %v3541
        %v4991 = vunpack.c.l.b16 %v3542
        %v4992 = vunpack.c.h.b16 %v3542
        %v4993 = vunpack.c.l.b16 %v3543
        %v4994 = vunpack.c.h.b16 %v3543
        %v4995 = vunpack.c.l.b16 %v3544
        %v4996 = vunpack.c.h.b16 %v3544
        %v4997 = vunpack.c.l.b16 %v3545
        %v4998 = vunpack.c.h.b16 %v3545
        %v4999 = vunpack.c.l.b16 %v3546
        %v5000 = vunpack.c.h.b16 %v3546
        %v5001 = vunpack.c.l.b16 %v3547
        %v5002 = vunpack.c.h.b16 %v3547
        %v5003 = vunpack.c.l.b16 %v3548
        %v5004 = vunpack.c.h.b16 %v3548
        %v5005 = vunpack.c.l.b16 %v3549
        %v5006 = vunpack.c.h.b16 %v3549
        %v5007 = vunpack.c.l.b16 %v3550
        %v5008 = vunpack.c.h.b16 %v3550
        %v5009 = vunpack.c.l.b16 %v3551
        %v5010 = vunpack.c.h.b16 %v3551
        %v5011 = vunpack.c.l.b16 %v3552
        %v5012 = vunpack.c.h.b16 %v3552
        %v5013 = vunpack.c.l.b16 %v3553
        %v5014 = vunpack.c.h.b16 %v3553
        %v5015 = vunpack.c.l.b16 %v3554
        %v5016 = vunpack.c.h.b16 %v3554
        %v5017 = vunpack.c.l.b16 %v3555
        %v5018 = vunpack.c.h.b16 %v3555
        %v5019 = vunpack.c.l.b16 %v3556
        %v5020 = vunpack.c.h.b16 %v3556
        %v5021 = vunpack.c.l.b16 %v3557
        %v5022 = vunpack.c.h.b16 %v3557
        %v5023 = vunpack.c.l.b16 %v3558
        %v5024 = vunpack.c.h.b16 %v3558
        %v5025 = vunpack.c.l.b16 %v3559
        %v5026 = vunpack.c.h.b16 %v3559
        %v5027 = vunpack.c.l.b16 %v3560
        %v5028 = vunpack.c.h.b16 %v3560
        %v5029 = vunpack.c.l.b16 %v3561
        %v5030 = vunpack.c.h.b16 %v3561
        %v5031 = vunpack.c.l.b16 %v3562
        %v5032 = vunpack.c.h.b16 %v3562
        %v5033 = vunpack.c.l.b16 %v3563
        %v5034 = vunpack.c.h.b16 %v3563
        %v5035 = vunpack.c.l.b16 %v3564
        %v5036 = vunpack.c.h.b16 %v3564
        %v5037 = vunpack.c.l.b16 %v3565
        %v5038 = vunpack.c.h.b16 %v3565
        %v5039 = vunpack.c.l.b16 %v3566
        %v5040 = vunpack.c.h.b16 %v3566
        %v5041 = vunpack.c.l.b16 %v3567
        %v5042 = vunpack.c.h.b16 %v3567
        %v5043 = vunpack.c.l.b16 %v3568
        %v5044 = vunpack.c.h.b16 %v3568
        %v5045 = vunpack.c.l.b16 %v3569
        %v5046 = vunpack.c.h.b16 %v3569
        %v5047 = vunpack.c.l.b16 %v3570
        %v5048 = vunpack.c.h.b16 %v3570
        %v5049 = vunpack.c.l.b16 %v3571
        %v5050 = vunpack.c.h.b16 %v3571
        %v5051 = vunpack.c.l.b16 %v3572
        %v5052 = vunpack.c.h.b16 %v3572
        %v5053 = vunpack.c.l.b16 %v3573
        %v5054 = vunpack.c.h.b16 %v3573
        %v5055 = vunpack.c.l.b16 %v3574
        %v5056 = vunpack.c.h.b16 %v3574
        %v5057 = vunpack.c.l.b16 %v3575
        %v5058 = vunpack.c.h.b16 %v3575
        %v5059 = vunpack.c.l.b16 %v3576
        %v5060 = vunpack.c.h.b16 %v3576
        %v5061 = vunpack.c.l.b16 %v3577
        %v5062 = vunpack.c.h.b16 %v3577
        %v5063 = vunpack.c.l.b16 %v3578
        %v5064 = vunpack.c.h.b16 %v3578
        %v5065 = vunpack.c.l.b16 %v3579
        %v5066 = vunpack.c.h.b16 %v3579
        %v5067 = vunpack.c.l.b16 %v3580
        %v5068 = vunpack.c.h.b16 %v3580
        %v5069 = vunpack.c.l.b16 %v3581
        %v5070 = vunpack.c.h.b16 %v3581
        %v5071 = vunpack.c.l.b16 %v3582
        %v5072 = vunpack.c.h.b16 %v3582
        %v5073 = vunpack.c.l.b16 %v3583
        %v5074 = vunpack.c.h.b16 %v3583
        %v5075 = vunpack.c.l.b16 %v3584
        %v5076 = vunpack.c.h.b16 %v3584
        %v5077 = vunpack.c.l.b16 %v3585
        %v5078 = vunpack.c.h.b16 %v3585
        %v5079 = vunpack.c.l.b16 %v3586
        %v5080 = vunpack.c.h.b16 %v3586
        %v5081 = vunpack.c.l.b16 %v3587
        %v5082 = vunpack.c.h.b16 %v3587
        %v5083 = vunpack.c.l.b16 %v3588
        %v5084 = vunpack.c.h.b16 %v3588
        %v5085 = vunpack.c.l.b16 %v3589
        %v5086 = vunpack.c.h.b16 %v3589
        %v5087 = vunpack.c.l.b16 %v3590
        %v5088 = vunpack.c.h.b16 %v3590
        %v5089 = vunpack.c.l.b16 %v3591
        %v5090 = vunpack.c.h.b16 %v3591
        %v5091 = vunpack.c.l.b16 %v3592
        %v5092 = vunpack.c.h.b16 %v3592
        %v5093 = vunpack.c.l.b16 %v3593
        %v5094 = vunpack.c.h.b16 %v3593
        %v5095 = vunpack.c.l.b16 %v3594
        %v5096 = vunpack.c.h.b16 %v3594
        %v5097 = vunpack.c.l.b16 %v3595
        %v5098 = vunpack.c.h.b16 %v3595
        %v5099 = vunpack.c.l.b16 %v3596
        %v5100 = vunpack.c.h.b16 %v3596
        %v5101 = vunpack.c.l.b16 %v3597
        %v5102 = vunpack.c.h.b16 %v3597
        %v5103 = vunpack.c.l.b16 %v3598
        %v5104 = vunpack.c.h.b16 %v3598
        %v5105 = vunpack.c.l.b16 %v3599
        %v5106 = vunpack.c.h.b16 %v3599
        %v5107 = vunpack.c.l.b16 %v3600
        %v5108 = vunpack.c.h.b16 %v3600
        %v5109 = vunpack.c.l.b16 %v3601
        %v5110 = vunpack.c.h.b16 %v3601
        %v5111 = vunpack.c.l.b16 %v3602
        %v5112 = vunpack.c.h.b16 %v3602
        %v5113 = vunpack.c.l.b16 %v3603
        %v5114 = vunpack.c.h.b16 %v3603
        %v5115 = vunpack.c.l.b16 %v3604
        %v5116 = vunpack.c.h.b16 %v3604
        %v5117 = vunpack.c.l.b16 %v3605
        %v5118 = vunpack.c.h.b16 %v3605
        %v5119 = vunpack.c.l.b16 %v3606
        %v5120 = vunpack.c.h.b16 %v3606
        %v5121 = vunpack.c.l.b16 %v3607
        %v5122 = vunpack.c.h.b16 %v3607
        %v5123 = vunpack.c.l.b16 %v3608
        %v5124 = vunpack.c.h.b16 %v3608
        %v5125 = vunpack.c.l.b16 %v3609
        %v5126 = vunpack.c.h.b16 %v3609
        %v5127 = vunpack.c.l.b16 %v3610
        %v5128 = vunpack.c.h.b16 %v3610
        %v5129 = vunpack.c.l.b16 %v3611
        %v5130 = vunpack.c.h.b16 %v3611
        %v5131 = vunpack.c.l.b16 %v3612
        %v5132 = vunpack.c.h.b16 %v3612
        %v5133 = vunpack.c.l.b16 %v3613
        %v5134 = vunpack.c.h.b16 %v3613
        %v5135 = vunpack.c.l.b16 %v3614
        %v5136 = vunpack.c.h.b16 %v3614
        %v5137 = vunpack.c.l.b16 %v3615
        %v5138 = vunpack.c.h.b16 %v3615
        %v5139 = vunpack.c.l.b16 %v3616
        %v5140 = vunpack.c.h.b16 %v3616
        %v5141 = vunpack.c.l.b16 %v3617
        %v5142 = vunpack.c.h.b16 %v3617
        %v5143 = vunpack.c.l.b16 %v3618
        %v5144 = vunpack.c.h.b16 %v3618
        %v5145 = vunpack.c.l.b16 %v3619
        %v5146 = vunpack.c.h.b16 %v3619
        %v5147 = vunpack.c.l.b16 %v3620
        %v5148 = vunpack.c.h.b16 %v3620
        %v5149 = vunpack.c.l.b16 %v3621
        %v5150 = vunpack.c.h.b16 %v3621
        %v5151 = vunpack.c.l.b16 %v3622
        %v5152 = vunpack.c.h.b16 %v3622
        %v5153 = vunpack.c.l.b16 %v3623
        %v5154 = vunpack.c.h.b16 %v3623
        %v5155 = vunpack.c.l.b16 %v3624
        %v5156 = vunpack.c.h.b16 %v3624
        %v5157 = vunpack.c.l.b16 %v3625
        %v5158 = vunpack.c.h.b16 %v3625
        %v5159 = vunpack.c.l.b16 %v3626
        %v5160 = vunpack.c.h.b16 %v3626
        %v5161 = vunpack.c.l.b16 %v3627
        %v5162 = vunpack.c.h.b16 %v3627
        %v5163 = vunpack.c.l.b16 %v3628
        %v5164 = vunpack.c.h.b16 %v3628
        %v5165 = vunpack.c.l.b16 %v3629
        %v5166 = vunpack.c.h.b16 %v3629
        %v5167 = vunpack.c.l.b16 %v3630
        %v5168 = vunpack.c.h.b16 %v3630
        %v5169 = vunpack.c.l.b16 %v3631
        %v5170 = vunpack.c.h.b16 %v3631
        %v5171 = vunpack.c.l.b16 %v3632
        %v5172 = vunpack.c.h.b16 %v3632
        %v5173 = vunpack.c.l.b16 %v3633
        %v5174 = vunpack.c.h.b16 %v3633
        %v5175 = vunpack.c.l.b16 %v3634
        %v5176 = vunpack.c.h.b16 %v3634
        %v5177 = vunpack.c.l.b16 %v3635
        %v5178 = vunpack.c.h.b16 %v3635
        %v5179 = vunpack.c.l.b16 %v3636
        %v5180 = vunpack.c.h.b16 %v3636
        %v5181 = vunpack.c.l.b16 %v3637
        %v5182 = vunpack.c.h.b16 %v3637
        %v5183 = vunpack.c.l.b16 %v3638
        %v5184 = vunpack.c.h.b16 %v3638
        %v5185 = vunpack.c.l.b16 %v3639
        %v5186 = vunpack.c.h.b16 %v3639
        %v5187 = vunpack.c.l.b16 %v3640
        %v5188 = vunpack.c.h.b16 %v3640
        %v5189 = vunpack.c.l.b16 %v3641
        %v5190 = vunpack.c.h.b16 %v3641
        %v5191 = vunpack.c.l.b16 %v3642
        %v5192 = vunpack.c.h.b16 %v3642
        %v5193 = vunpack.c.l.b16 %v3643
        %v5194 = vunpack.c.h.b16 %v3643
        %v5195 = vunpack.c.l.b16 %v3644
        %v5196 = vunpack.c.h.b16 %v3644
        %v5197 = vunpack.c.l.b16 %v3645
        %v5198 = vunpack.c.h.b16 %v3645
        %v5199 = vunpack.c.l.b16 %v3646
        %v5200 = vunpack.c.h.b16 %v3646
        %v5201 = vunpack.c.l.b16 %v3647
        %v5202 = vunpack.c.h.b16 %v3647
        %v5203 = vunpack.c.l.b16 %v3648
        %v5204 = vunpack.c.h.b16 %v3648
        %v5205 = vunpack.c.l.b16 %v3649
        %v5206 = vunpack.c.h.b16 %v3649
        %v5207 = vunpack.c.l.b16 %v3650
        %v5208 = vunpack.c.h.b16 %v3650
        %v5209 = vunpack.c.l.b16 %v3651
        %v5210 = vunpack.c.h.b16 %v3651
        %v5211 = vunpack.c.l.b16 %v3652
        %v5212 = vunpack.c.h.b16 %v3652
        %v5213 = vunpack.c.l.b16 %v3653
        %v5214 = vunpack.c.h.b16 %v3653
        %v5215 = vunpack.c.l.b16 %v3654
        %v5216 = vunpack.c.h.b16 %v3654
        %v5217 = vunpack.c.l.b16 %v3655
        %v5218 = vunpack.c.h.b16 %v3655
        %v5219 = vunpack.c.l.b16 %v3656
        %v5220 = vunpack.c.h.b16 %v3656
        %v5221 = vunpack.c.l.b16 %v3657
        %v5222 = vunpack.c.h.b16 %v3657
        %v5223 = vunpack.c.l.b16 %v3658
        %v5224 = vunpack.c.h.b16 %v3658
        %v5225 = vunpack.c.l.b16 %v3659
        %v5226 = vunpack.c.h.b16 %v3659
        %v5227 = vunpack.c.l.b16 %v3660
        %v5228 = vunpack.c.h.b16 %v3660
        %v5229 = vunpack.c.l.b16 %v3661
        %v5230 = vunpack.c.h.b16 %v3661
        %v5231 = vunpack.c.l.b16 %v3662
        %v5232 = vunpack.c.h.b16 %v3662
        %v5233 = vunpack.c.l.b16 %v3663
        %v5234 = vunpack.c.h.b16 %v3663
        %v5235 = vunpack.c.l.b16 %v3664
        %v5236 = vunpack.c.h.b16 %v3664
        %v5237 = vunpack.c.l.b16 %v3665
        %v5238 = vunpack.c.h.b16 %v3665
        %v5239 = vunpack.c.l.b16 %v3666
        %v5240 = vunpack.c.h.b16 %v3666
        %v5241 = vunpack.c.l.b16 %v3667
        %v5242 = vunpack.c.h.b16 %v3667
        %v5243 = vunpack.c.l.b16 %v3668
        %v5244 = vunpack.c.h.b16 %v3668
        %v5245 = vunpack.c.l.b16 %v3669
        %v5246 = vunpack.c.h.b16 %v3669
        %v5247 = vunpack.c.l.b16 %v3670
        %v5248 = vunpack.c.h.b16 %v3670
        %v5249 = vunpack.c.l.b16 %v3671
        %v5250 = vunpack.c.h.b16 %v3671
        %v5251 = vunpack.c.l.b16 %v3672
        %v5252 = vunpack.c.h.b16 %v3672
        %v5253 = vpack.c.b16 %v4237, %v4229
        %v5254 = vpack.c.b16 %v4238, %v4230
        %v5255 = vpack.c.b16 %v4239, %v4231
        %v5256 = vpack.c.b16 %v4240, %v4232
        %v5257 = vpack.c.b16 %v4241, %v4233
        %v5258 = vpack.c.b16 %v4242, %v4234
        %v5259 = vpack.c.b16 %v4243, %v4235
        %v5260 = vpack.c.b16 %v4244, %v4236
        %v5261 = vpack.c.b16 %v4253, %v4245
        %v5262 = vpack.c.b16 %v4254, %v4246
        %v5263 = vpack.c.b16 %v4255, %v4247
        %v5264 = vpack.c.b16 %v4256, %v4248
        %v5265 = vpack.c.b16 %v4257, %v4249
        %v5266 = vpack.c.b16 %v4258, %v4250
        %v5267 = vpack.c.b16 %v4259, %v4251
        %v5268 = vpack.c.b16 %v4260, %v4252
        %v5269 = vpack.c.b16 %v4269, %v4261
        %v5270 = vpack.c.b16 %v4270, %v4262
        %v5271 = vpack.c.b16 %v4271, %v4263
        %v5272 = vpack.c.b16 %v4272, %v4264
        %v5273 = vpack.c.b16 %v4273, %v4265
        %v5274 = vpack.c.b16 %v4274, %v4266
        %v5275 = vpack.c.b16 %v4275, %v4267
        %v5276 = vpack.c.b16 %v4276, %v4268
        %v5277 = vpack.c.b16 %v4285, %v4277
        %v5278 = vpack.c.b16 %v4286, %v4278
        %v5279 = vpack.c.b16 %v4287, %v4279
        %v5280 = vpack.c.b16 %v4288, %v4280
        %v5281 = vpack.c.b16 %v4289, %v4281
        %v5282 = vpack.c.b16 %v4290, %v4282
        %v5283 = vpack.c.b16 %v4291, %v4283
        %v5284 = vpack.c.b16 %v4292, %v4284
        %v5285 = vpack.c.b16 %v4301, %v4293
        %v5286 = vpack.c.b16 %v4302, %v4294
        %v5287 = vpack.c.b16 %v4303, %v4295
        %v5288 = vpack.c.b16 %v4304, %v4296
        %v5289 = vpack.c.b16 %v4305, %v4297
        %v5290 = vpack.c.b16 %v4306, %v4298
        %v5291 = vpack.c.b16 %v4307, %v4299
        %v5292 = vpack.c.b16 %v4308, %v4300
        %v5293 = vpack.c.b16 %v4317, %v4309
        %v5294 = vpack.c.b16 %v4318, %v4310
        %v5295 = vpack.c.b16 %v4319, %v4311
        %v5296 = vpack.c.b16 %v4320, %v4312
        %v5297 = vpack.c.b16 %v4321, %v4313
        %v5298 = vpack.c.b16 %v4322, %v4314
        %v5299 = vpack.c.b16 %v4323, %v4315
        %v5300 = vpack.c.b16 %v4324, %v4316
        %v5301 = vpack.c.b16 %v4333, %v4325
        %v5302 = vpack.c.b16 %v4334, %v4326
        %v5303 = vpack.c.b16 %v4335, %v4327
        %v5304 = vpack.c.b16 %v4336, %v4328
        %v5305 = vpack.c.b16 %v4337, %v4329
        %v5306 = vpack.c.b16 %v4338, %v4330
        %v5307 = vpack.c.b16 %v4339, %v4331
        %v5308 = vpack.c.b16 %v4340, %v4332
        %v5309 = vpack.c.b16 %v4349, %v4341
        %v5310 = vpack.c.b16 %v4350, %v4342
        %v5311 = vpack.c.b16 %v4351, %v4343
        %v5312 = vpack.c.b16 %v4352, %v4344
        %v5313 = vpack.c.b16 %v4353, %v4345
        %v5314 = vpack.c.b16 %v4354, %v4346
        %v5315 = vpack.c.b16 %v4355, %v4347
        %v5316 = vpack.c.b16 %v4356, %v4348
        %v5317 = vpack.c.b16 %v4365, %v4357
        %v5318 = vpack.c.b16 %v4366, %v4358
        %v5319 = vpack.c.b16 %v4367, %v4359
        %v5320 = vpack.c.b16 %v4368, %v4360
        %v5321 = vpack.c.b16 %v4369, %v4361
        %v5322 = vpack.c.b16 %v4370, %v4362
        %v5323 = vpack.c.b16 %v4371, %v4363
        %v5324 = vpack.c.b16 %v4372, %v4364
        %v5325 = vpack.c.b16 %v4381, %v4373
        %v5326 = vpack.c.b16 %v4382, %v4374
        %v5327 = vpack.c.b16 %v4383, %v4375
        %v5328 = vpack.c.b16 %v4384, %v4376
        %v5329 = vpack.c.b16 %v4385, %v4377
        %v5330 = vpack.c.b16 %v4386, %v4378
        %v5331 = vpack.c.b16 %v4387, %v4379
        %v5332 = vpack.c.b16 %v4388, %v4380
        %v5333 = vpack.c.b16 %v4397, %v4389
        %v5334 = vpack.c.b16 %v4398, %v4390
        %v5335 = vpack.c.b16 %v4399, %v4391
        %v5336 = vpack.c.b16 %v4400, %v4392
        %v5337 = vpack.c.b16 %v4401, %v4393
        %v5338 = vpack.c.b16 %v4402, %v4394
        %v5339 = vpack.c.b16 %v4403, %v4395
        %v5340 = vpack.c.b16 %v4404, %v4396
        %v5341 = vpack.c.b16 %v4413, %v4405
        %v5342 = vpack.c.b16 %v4414, %v4406
        %v5343 = vpack.c.b16 %v4415, %v4407
        %v5344 = vpack.c.b16 %v4416, %v4408
        %v5345 = vpack.c.b16 %v4417, %v4409
        %v5346 = vpack.c.b16 %v4418, %v4410
        %v5347 = vpack.c.b16 %v4419, %v4411
        %v5348 = vpack.c.b16 %v4420, %v4412
        %v5349 = vpack.c.b16 %v4429, %v4421
        %v5350 = vpack.c.b16 %v4430, %v4422
        %v5351 = vpack.c.b16 %v4431, %v4423
        %v5352 = vpack.c.b16 %v4432, %v4424
        %v5353 = vpack.c.b16 %v4433, %v4425
        %v5354 = vpack.c.b16 %v4434, %v4426
        %v5355 = vpack.c.b16 %v4435, %v4427
        %v5356 = vpack.c.b16 %v4436, %v4428
        %v5357 = vpack.c.b16 %v4445, %v4437
        %v5358 = vpack.c.b16 %v4446, %v4438
        %v5359 = vpack.c.b16 %v4447, %v4439
        %v5360 = vpack.c.b16 %v4448, %v4440
        %v5361 = vpack.c.b16 %v4449, %v4441
        %v5362 = vpack.c.b16 %v4450, %v4442
        %v5363 = vpack.c.b16 %v4451, %v4443
        %v5364 = vpack.c.b16 %v4452, %v4444
        %v5365 = vpack.c.b16 %v4461, %v4453
        %v5366 = vpack.c.b16 %v4462, %v4454
        %v5367 = vpack.c.b16 %v4463, %v4455
        %v5368 = vpack.c.b16 %v4464, %v4456
        %v5369 = vpack.c.b16 %v4465, %v4457
        %v5370 = vpack.c.b16 %v4466, %v4458
        %v5371 = vpack.c.b16 %v4467, %v4459
        %v5372 = vpack.c.b16 %v4468, %v4460
        %v5373 = vpack.c.b16 %v4477, %v4469
        %v5374 = vpack.c.b16 %v4478, %v4470
        %v5375 = vpack.c.b16 %v4479, %v4471
        %v5376 = vpack.c.b16 %v4480, %v4472
        %v5377 = vpack.c.b16 %v4481, %v4473
        %v5378 = vpack.c.b16 %v4482, %v4474
        %v5379 = vpack.c.b16 %v4483, %v4475
        %v5380 = vpack.c.b16 %v4484, %v4476
        %v5381 = vpack.c.b16 %v4493, %v4485
        %v5382 = vpack.c.b16 %v4494, %v4486
        %v5383 = vpack.c.b16 %v4495, %v4487
        %v5384 = vpack.c.b16 %v4496, %v4488
        %v5385 = vpack.c.b16 %v4497, %v4489
        %v5386 = vpack.c.b16 %v4498, %v4490
        %v5387 = vpack.c.b16 %v4499, %v4491
        %v5388 = vpack.c.b16 %v4500, %v4492
        %v5389 = vpack.c.b16 %v4509, %v4501
        %v5390 = vpack.c.b16 %v4510, %v4502
        %v5391 = vpack.c.b16 %v4511, %v4503
        %v5392 = vpack.c.b16 %v4512, %v4504
        %v5393 = vpack.c.b16 %v4513, %v4505
        %v5394 = vpack.c.b16 %v4514, %v4506
        %v5395 = vpack.c.b16 %v4515, %v4507
        %v5396 = vpack.c.b16 %v4516, %v4508
        %v5397 = vpack.c.b16 %v4525, %v4517
        %v5398 = vpack.c.b16 %v4526, %v4518
        %v5399 = vpack.c.b16 %v4527, %v4519
        %v5400 = vpack.c.b16 %v4528, %v4520
        %v5401 = vpack.c.b16 %v4529, %v4521
        %v5402 = vpack.c.b16 %v4530, %v4522
        %v5403 = vpack.c.b16 %v4531, %v4523
        %v5404 = vpack.c.b16 %v4532, %v4524
        %v5405 = vpack.c.b16 %v4541, %v4533
        %v5406 = vpack.c.b16 %v4542, %v4534
        %v5407 = vpack.c.b16 %v4543, %v4535
        %v5408 = vpack.c.b16 %v4544, %v4536
        %v5409 = vpack.c.b16 %v4545, %v4537
        %v5410 = vpack.c.b16 %v4546, %v4538
        %v5411 = vpack.c.b16 %v4547, %v4539
        %v5412 = vpack.c.b16 %v4548, %v4540
        %v5413 = vpack.c.b16 %v4557, %v4549
        %v5414 = vpack.c.b16 %v4558, %v4550
        %v5415 = vpack.c.b16 %v4559, %v4551
        %v5416 = vpack.c.b16 %v4560, %v4552
        %v5417 = vpack.c.b16 %v4561, %v4553
        %v5418 = vpack.c.b16 %v4562, %v4554
        %v5419 = vpack.c.b16 %v4563, %v4555
        %v5420 = vpack.c.b16 %v4564, %v4556
        %v5421 = vpack.c.b16 %v4573, %v4565
        %v5422 = vpack.c.b16 %v4574, %v4566
        %v5423 = vpack.c.b16 %v4575, %v4567
        %v5424 = vpack.c.b16 %v4576, %v4568
        %v5425 = vpack.c.b16 %v4577, %v4569
        %v5426 = vpack.c.b16 %v4578, %v4570
        %v5427 = vpack.c.b16 %v4579, %v4571
        %v5428 = vpack.c.b16 %v4580, %v4572
        %v5429 = vpack.c.b16 %v4589, %v4581
        %v5430 = vpack.c.b16 %v4590, %v4582
        %v5431 = vpack.c.b16 %v4591, %v4583
        %v5432 = vpack.c.b16 %v4592, %v4584
        %v5433 = vpack.c.b16 %v4593, %v4585
        %v5434 = vpack.c.b16 %v4594, %v4586
        %v5435 = vpack.c.b16 %v4595, %v4587
        %v5436 = vpack.c.b16 %v4596, %v4588
        %v5437 = vpack.c.b16 %v4605, %v4597
        %v5438 = vpack.c.b16 %v4606, %v4598
        %v5439 = vpack.c.b16 %v4607, %v4599
        %v5440 = vpack.c.b16 %v4608, %v4600
        %v5441 = vpack.c.b16 %v4609, %v4601
        %v5442 = vpack.c.b16 %v4610, %v4602
        %v5443 = vpack.c.b16 %v4611, %v4603
        %v5444 = vpack.c.b16 %v4612, %v4604
        %v5445 = vpack.c.b16 %v4621, %v4613
        %v5446 = vpack.c.b16 %v4622, %v4614
        %v5447 = vpack.c.b16 %v4623, %v4615
        %v5448 = vpack.c.b16 %v4624, %v4616
        %v5449 = vpack.c.b16 %v4625, %v4617
        %v5450 = vpack.c.b16 %v4626, %v4618
        %v5451 = vpack.c.b16 %v4627, %v4619
        %v5452 = vpack.c.b16 %v4628, %v4620
        %v5453 = vpack.c.b16 %v4637, %v4629
        %v5454 = vpack.c.b16 %v4638, %v4630
        %v5455 = vpack.c.b16 %v4639, %v4631
        %v5456 = vpack.c.b16 %v4640, %v4632
        %v5457 = vpack.c.b16 %v4641, %v4633
        %v5458 = vpack.c.b16 %v4642, %v4634
        %v5459 = vpack.c.b16 %v4643, %v4635
        %v5460 = vpack.c.b16 %v4644, %v4636
        %v5461 = vpack.c.b16 %v4653, %v4645
        %v5462 = vpack.c.b16 %v4654, %v4646
        %v5463 = vpack.c.b16 %v4655, %v4647
        %v5464 = vpack.c.b16 %v4656, %v4648
        %v5465 = vpack.c.b16 %v4657, %v4649
        %v5466 = vpack.c.b16 %v4658, %v4650
        %v5467 = vpack.c.b16 %v4659, %v4651
        %v5468 = vpack.c.b16 %v4660, %v4652
        %v5469 = vpack.c.b16 %v4669, %v4661
        %v5470 = vpack.c.b16 %v4670, %v4662
        %v5471 = vpack.c.b16 %v4671, %v4663
        %v5472 = vpack.c.b16 %v4672, %v4664
        %v5473 = vpack.c.b16 %v4673, %v4665
        %v5474 = vpack.c.b16 %v4674, %v4666
        %v5475 = vpack.c.b16 %v4675, %v4667
        %v5476 = vpack.c.b16 %v4676, %v4668
        %v5477 = vpack.c.b16 %v4685, %v4677
        %v5478 = vpack.c.b16 %v4686, %v4678
        %v5479 = vpack.c.b16 %v4687, %v4679
        %v5480 = vpack.c.b16 %v4688, %v4680
        %v5481 = vpack.c.b16 %v4689, %v4681
        %v5482 = vpack.c.b16 %v4690, %v4682
        %v5483 = vpack.c.b16 %v4691, %v4683
        %v5484 = vpack.c.b16 %v4692, %v4684
        %v5485 = vpack.c.b16 %v4701, %v4693
        %v5486 = vpack.c.b16 %v4702, %v4694
        %v5487 = vpack.c.b16 %v4703, %v4695
        %v5488 = vpack.c.b16 %v4704, %v4696
        %v5489 = vpack.c.b16 %v4705, %v4697
        %v5490 = vpack.c.b16 %v4706, %v4698
        %v5491 = vpack.c.b16 %v4707, %v4699
        %v5492 = vpack.c.b16 %v4708, %v4700
        %v5493 = vpack.c.b16 %v4717, %v4709
        %v5494 = vpack.c.b16 %v4718, %v4710
        %v5495 = vpack.c.b16 %v4719, %v4711
        %v5496 = vpack.c.b16 %v4720, %v4712
        %v5497 = vpack.c.b16 %v4721, %v4713
        %v5498 = vpack.c.b16 %v4722, %v4714
        %v5499 = vpack.c.b16 %v4723, %v4715
        %v5500 = vpack.c.b16 %v4724, %v4716
        %v5501 = vpack.c.b16 %v4733, %v4725
        %v5502 = vpack.c.b16 %v4734, %v4726
        %v5503 = vpack.c.b16 %v4735, %v4727
        %v5504 = vpack.c.b16 %v4736, %v4728
        %v5505 = vpack.c.b16 %v4737, %v4729
        %v5506 = vpack.c.b16 %v4738, %v4730
        %v5507 = vpack.c.b16 %v4739, %v4731
        %v5508 = vpack.c.b16 %v4740, %v4732
        %v5509 = vpack.c.b16 %v4749, %v4741
        %v5510 = vpack.c.b16 %v4750, %v4742
        %v5511 = vpack.c.b16 %v4751, %v4743
        %v5512 = vpack.c.b16 %v4752, %v4744
        %v5513 = vpack.c.b16 %v4753, %v4745
        %v5514 = vpack.c.b16 %v4754, %v4746
        %v5515 = vpack.c.b16 %v4755, %v4747
        %v5516 = vpack.c.b16 %v4756, %v4748
        %v5517 = vpack.c.b16 %v4765, %v4757
        %v5518 = vpack.c.b16 %v4766, %v4758
        %v5519 = vpack.c.b16 %v4767, %v4759
        %v5520 = vpack.c.b16 %v4768, %v4760
        %v5521 = vpack.c.b16 %v4769, %v4761
        %v5522 = vpack.c.b16 %v4770, %v4762
        %v5523 = vpack.c.b16 %v4771, %v4763
        %v5524 = vpack.c.b16 %v4772, %v4764
        %v5525 = vpack.c.b16 %v4781, %v4773
        %v5526 = vpack.c.b16 %v4782, %v4774
        %v5527 = vpack.c.b16 %v4783, %v4775
        %v5528 = vpack.c.b16 %v4784, %v4776
        %v5529 = vpack.c.b16 %v4785, %v4777
        %v5530 = vpack.c.b16 %v4786, %v4778
        %v5531 = vpack.c.b16 %v4787, %v4779
        %v5532 = vpack.c.b16 %v4788, %v4780
        %v5533 = vpack.c.b16 %v4797, %v4789
        %v5534 = vpack.c.b16 %v4798, %v4790
        %v5535 = vpack.c.b16 %v4799, %v4791
        %v5536 = vpack.c.b16 %v4800, %v4792
        %v5537 = vpack.c.b16 %v4801, %v4793
        %v5538 = vpack.c.b16 %v4802, %v4794
        %v5539 = vpack.c.b16 %v4803, %v4795
        %v5540 = vpack.c.b16 %v4804, %v4796
        %v5541 = vpack.c.b16 %v4813, %v4805
        %v5542 = vpack.c.b16 %v4814, %v4806
        %v5543 = vpack.c.b16 %v4815, %v4807
        %v5544 = vpack.c.b16 %v4816, %v4808
        %v5545 = vpack.c.b16 %v4817, %v4809
        %v5546 = vpack.c.b16 %v4818, %v4810
        %v5547 = vpack.c.b16 %v4819, %v4811
        %v5548 = vpack.c.b16 %v4820, %v4812
        %v5549 = vpack.c.b16 %v4829, %v4821
        %v5550 = vpack.c.b16 %v4830, %v4822
        %v5551 = vpack.c.b16 %v4831, %v4823
        %v5552 = vpack.c.b16 %v4832, %v4824
        %v5553 = vpack.c.b16 %v4833, %v4825
        %v5554 = vpack.c.b16 %v4834, %v4826
        %v5555 = vpack.c.b16 %v4835, %v4827
        %v5556 = vpack.c.b16 %v4836, %v4828
        %v5557 = vpack.c.b16 %v4845, %v4837
        %v5558 = vpack.c.b16 %v4846, %v4838
        %v5559 = vpack.c.b16 %v4847, %v4839
        %v5560 = vpack.c.b16 %v4848, %v4840
        %v5561 = vpack.c.b16 %v4849, %v4841
        %v5562 = vpack.c.b16 %v4850, %v4842
        %v5563 = vpack.c.b16 %v4851, %v4843
        %v5564 = vpack.c.b16 %v4852, %v4844
        %v5565 = vpack.c.b16 %v4861, %v4853
        %v5566 = vpack.c.b16 %v4862, %v4854
        %v5567 = vpack.c.b16 %v4863, %v4855
        %v5568 = vpack.c.b16 %v4864, %v4856
        %v5569 = vpack.c.b16 %v4865, %v4857
        %v5570 = vpack.c.b16 %v4866, %v4858
        %v5571 = vpack.c.b16 %v4867, %v4859
        %v5572 = vpack.c.b16 %v4868, %v4860
        %v5573 = vpack.c.b16 %v4877, %v4869
        %v5574 = vpack.c.b16 %v4878, %v4870
        %v5575 = vpack.c.b16 %v4879, %v4871
        %v5576 = vpack.c.b16 %v4880, %v4872
        %v5577 = vpack.c.b16 %v4881, %v4873
        %v5578 = vpack.c.b16 %v4882, %v4874
        %v5579 = vpack.c.b16 %v4883, %v4875
        %v5580 = vpack.c.b16 %v4884, %v4876
        %v5581 = vpack.c.b16 %v4893, %v4885
        %v5582 = vpack.c.b16 %v4894, %v4886
        %v5583 = vpack.c.b16 %v4895, %v4887
        %v5584 = vpack.c.b16 %v4896, %v4888
        %v5585 = vpack.c.b16 %v4897, %v4889
        %v5586 = vpack.c.b16 %v4898, %v4890
        %v5587 = vpack.c.b16 %v4899, %v4891
        %v5588 = vpack.c.b16 %v4900, %v4892
        %v5589 = vpack.c.b16 %v4909, %v4901
        %v5590 = vpack.c.b16 %v4910, %v4902
        %v5591 = vpack.c.b16 %v4911, %v4903
        %v5592 = vpack.c.b16 %v4912, %v4904
        %v5593 = vpack.c.b16 %v4913, %v4905
        %v5594 = vpack.c.b16 %v4914, %v4906
        %v5595 = vpack.c.b16 %v4915, %v4907
        %v5596 = vpack.c.b16 %v4916, %v4908
        %v5597 = vpack.c.b16 %v4925, %v4917
        %v5598 = vpack.c.b16 %v4926, %v4918
        %v5599 = vpack.c.b16 %v4927, %v4919
        %v5600 = vpack.c.b16 %v4928, %v4920
        %v5601 = vpack.c.b16 %v4929, %v4921
        %v5602 = vpack.c.b16 %v4930, %v4922
        %v5603 = vpack.c.b16 %v4931, %v4923
        %v5604 = vpack.c.b16 %v4932, %v4924
        %v5605 = vpack.c.b16 %v4941, %v4933
        %v5606 = vpack.c.b16 %v4942, %v4934
        %v5607 = vpack.c.b16 %v4943, %v4935
        %v5608 = vpack.c.b16 %v4944, %v4936
        %v5609 = vpack.c.b16 %v4945, %v4937
        %v5610 = vpack.c.b16 %v4946, %v4938
        %v5611 = vpack.c.b16 %v4947, %v4939
        %v5612 = vpack.c.b16 %v4948, %v4940
        %v5613 = vpack.c.b16 %v4957, %v4949
        %v5614 = vpack.c.b16 %v4958, %v4950
        %v5615 = vpack.c.b16 %v4959, %v4951
        %v5616 = vpack.c.b16 %v4960, %v4952
        %v5617 = vpack.c.b16 %v4961, %v4953
        %v5618 = vpack.c.b16 %v4962, %v4954
        %v5619 = vpack.c.b16 %v4963, %v4955
        %v5620 = vpack.c.b16 %v4964, %v4956
        %v5621 = vpack.c.b16 %v4973, %v4965
        %v5622 = vpack.c.b16 %v4974, %v4966
        %v5623 = vpack.c.b16 %v4975, %v4967
        %v5624 = vpack.c.b16 %v4976, %v4968
        %v5625 = vpack.c.b16 %v4977, %v4969
        %v5626 = vpack.c.b16 %v4978, %v4970
        %v5627 = vpack.c.b16 %v4979, %v4971
        %v5628 = vpack.c.b16 %v4980, %v4972
        %v5629 = vpack.c.b16 %v4989, %v4981
        %v5630 = vpack.c.b16 %v4990, %v4982
        %v5631 = vpack.c.b16 %v4991, %v4983
        %v5632 = vpack.c.b16 %v4992, %v4984
        %v5633 = vpack.c.b16 %v4993, %v4985
        %v5634 = vpack.c.b16 %v4994, %v4986
        %v5635 = vpack.c.b16 %v4995, %v4987
        %v5636 = vpack.c.b16 %v4996, %v4988
        %v5637 = vpack.c.b16 %v5005, %v4997
        %v5638 = vpack.c.b16 %v5006, %v4998
        %v5639 = vpack.c.b16 %v5007, %v4999
        %v5640 = vpack.c.b16 %v5008, %v5000
        %v5641 = vpack.c.b16 %v5009, %v5001
        %v5642 = vpack.c.b16 %v5010, %v5002
        %v5643 = vpack.c.b16 %v5011, %v5003
        %v5644 = vpack.c.b16 %v5012, %v5004
        %v5645 = vpack.c.b16 %v5021, %v5013
        %v5646 = vpack.c.b16 %v5022, %v5014
        %v5647 = vpack.c.b16 %v5023, %v5015
        %v5648 = vpack.c.b16 %v5024, %v5016
        %v5649 = vpack.c.b16 %v5025, %v5017
        %v5650 = vpack.c.b16 %v5026, %v5018
        %v5651 = vpack.c.b16 %v5027, %v5019
        %v5652 = vpack.c.b16 %v5028, %v5020
        %v5653 = vpack.c.b16 %v5037, %v5029
        %v5654 = vpack.c.b16 %v5038, %v5030
        %v5655 = vpack.c.b16 %v5039, %v5031
        %v5656 = vpack.c.b16 %v5040, %v5032
        %v5657 = vpack.c.b16 %v5041, %v5033
        %v5658 = vpack.c.b16 %v5042, %v5034
        %v5659 = vpack.c.b16 %v5043, %v5035
        %v5660 = vpack.c.b16 %v5044, %v5036
        %v5661 = vpack.c.b16 %v5053, %v5045
        %v5662 = vpack.c.b16 %v5054, %v5046
        %v5663 = vpack.c.b16 %v5055, %v5047
        %v5664 = vpack.c.b16 %v5056, %v5048
        %v5665 = vpack.c.b16 %v5057, %v5049
        %v5666 = vpack.c.b16 %v5058, %v5050
        %v5667 = vpack.c.b16 %v5059, %v5051
        %v5668 = vpack.c.b16 %v5060, %v5052
        %v5669 = vpack.c.b16 %v5069, %v5061
        %v5670 = vpack.c.b16 %v5070, %v5062
        %v5671 = vpack.c.b16 %v5071, %v5063
        %v5672 = vpack.c.b16 %v5072, %v5064
        %v5673 = vpack.c.b16 %v5073, %v5065
        %v5674 = vpack.c.b16 %v5074, %v5066
        %v5675 = vpack.c.b16 %v5075, %v5067
        %v5676 = vpack.c.b16 %v5076, %v5068
        %v5677 = vpack.c.b16 %v5085, %v5077
        %v5678 = vpack.c.b16 %v5086, %v5078
        %v5679 = vpack.c.b16 %v5087, %v5079
        %v5680 = vpack.c.b16 %v5088, %v5080
        %v5681 = vpack.c.b16 %v5089, %v5081
        %v5682 = vpack.c.b16 %v5090, %v5082
        %v5683 = vpack.c.b16 %v5091, %v5083
        %v5684 = vpack.c.b16 %v5092, %v5084
        %v5685 = vpack.c.b16 %v5101, %v5093
        %v5686 = vpack.c.b16 %v5102, %v5094
        %v5687 = vpack.c.b16 %v5103, %v5095
        %v5688 = vpack.c.b16 %v5104, %v5096
        %v5689 = vpack.c.b16 %v5105, %v5097
        %v5690 = vpack.c.b16 %v5106, %v5098
        %v5691 = vpack.c.b16 %v5107, %v5099
        %v5692 = vpack.c.b16 %v5108, %v5100
        %v5693 = vpack.c.b16 %v5117, %v5109
        %v5694 = vpack.c.b16 %v5118, %v5110
        %v5695 = vpack.c.b16 %v5119, %v5111
        %v5696 = vpack.c.b16 %v5120, %v5112
        %v5697 = vpack.c.b16 %v5121, %v5113
        %v5698 = vpack.c.b16 %v5122, %v5114
        %v5699 = vpack.c.b16 %v5123, %v5115
        %v5700 = vpack.c.b16 %v5124, %v5116
        %v5701 = vpack.c.b16 %v5133, %v5125
        %v5702 = vpack.c.b16 %v5134, %v5126
        %v5703 = vpack.c.b16 %v5135, %v5127
        %v5704 = vpack.c.b16 %v5136, %v5128
        %v5705 = vpack.c.b16 %v5137, %v5129
        %v5706 = vpack.c.b16 %v5138, %v5130
        %v5707 = vpack.c.b16 %v5139, %v5131
        %v5708 = vpack.c.b16 %v5140, %v5132
        %v5709 = vpack.c.b16 %v5149, %v5141
        %v5710 = vpack.c.b16 %v5150, %v5142
        %v5711 = vpack.c.b16 %v5151, %v5143
        %v5712 = vpack.c.b16 %v5152, %v5144
        %v5713 = vpack.c.b16 %v5153, %v5145
        %v5714 = vpack.c.b16 %v5154, %v5146
        %v5715 = vpack.c.b16 %v5155, %v5147
        %v5716 = vpack.c.b16 %v5156, %v5148
        %v5717 = vpack.c.b16 %v5165, %v5157
        %v5718 = vpack.c.b16 %v5166, %v5158
        %v5719 = vpack.c.b16 %v5167, %v5159
        %v5720 = vpack.c.b16 %v5168, %v5160
        %v5721 = vpack.c.b16 %v5169, %v5161
        %v5722 = vpack.c.b16 %v5170, %v5162
        %v5723 = vpack.c.b16 %v5171, %v5163
        %v5724 = vpack.c.b16 %v5172, %v5164
        %v5725 = vpack.c.b16 %v5181, %v5173
        %v5726 = vpack.c.b16 %v5182, %v5174
        %v5727 = vpack.c.b16 %v5183, %v5175
        %v5728 = vpack.c.b16 %v5184, %v5176
        %v5729 = vpack.c.b16 %v5185, %v5177
        %v5730 = vpack.c.b16 %v5186, %v5178
        %v5731 = vpack.c.b16 %v5187, %v5179
        %v5732 = vpack.c.b16 %v5188, %v5180
        %v5733 = vpack.c.b16 %v5197, %v5189
        %v5734 = vpack.c.b16 %v5198, %v5190
        %v5735 = vpack.c.b16 %v5199, %v5191
        %v5736 = vpack.c.b16 %v5200, %v5192
        %v5737 = vpack.c.b16 %v5201, %v5193
        %v5738 = vpack.c.b16 %v5202, %v5194
        %v5739 = vpack.c.b16 %v5203, %v5195
        %v5740 = vpack.c.b16 %v5204, %v5196
        %v5741 = vpack.c.b16 %v5213, %v5205
        %v5742 = vpack.c.b16 %v5214, %v5206
        %v5743 = vpack.c.b16 %v5215, %v5207
        %v5744 = vpack.c.b16 %v5216, %v5208
        %v5745 = vpack.c.b16 %v5217, %v5209
        %v5746 = vpack.c.b16 %v5218, %v5210
        %v5747 = vpack.c.b16 %v5219, %v5211
        %v5748 = vpack.c.b16 %v5220, %v5212
        %v5749 = vpack.c.b16 %v5229, %v5221
        %v5750 = vpack.c.b16 %v5230, %v5222
        %v5751 = vpack.c.b16 %v5231, %v5223
        %v5752 = vpack.c.b16 %v5232, %v5224
        %v5753 = vpack.c.b16 %v5233, %v5225
        %v5754 = vpack.c.b16 %v5234, %v5226
        %v5755 = vpack.c.b16 %v5235, %v5227
        %v5756 = vpack.c.b16 %v5236, %v5228
        %v5757 = vpack.c.b16 %v5245, %v5237
        %v5758 = vpack.c.b16 %v5246, %v5238
        %v5759 = vpack.c.b16 %v5247, %v5239
        %v5760 = vpack.c.b16 %v5248, %v5240
        %v5761 = vpack.c.b16 %v5249, %v5241
        %v5762 = vpack.c.b16 %v5250, %v5242
        %v5763 = vpack.c.b16 %v5251, %v5243
        %v5764 = vpack.c.b16 %v5252, %v5244
        %6277 = vmatprep.subr.bf16.mxu0 %v5310
        %6278 = vmatpush1.bf16.msra.mxu0 %v5309
        %6279 = vmatprep.subr.bf16.mxu0 %v5302
        %6280 = vmatpush1.bf16.msra.mxu0 %v5301
        %6281 = vmatprep.subr.bf16.mxu0 %v5294
        %6282 = vmatpush1.bf16.msra.mxu0 %v5293
        %6283 = vmatprep.subr.bf16.mxu0 %v5286
        %6284 = vmatpush1.bf16.msra.mxu0 %v5285
        %6285 = vmatprep.subr.bf16.mxu0 %v5278
        %6286 = vmatpush1.bf16.msra.mxu0 %v5277
        %6287 = vmatprep.subr.bf16.mxu0 %v5270
        %6288 = vmatpush1.bf16.msra.mxu0 %v5269
        %6289 = vmatprep.subr.bf16.mxu0 %v5262
        %6290 = vmatpush1.bf16.msra.mxu0 %v5261
        %6291 = vmatprep.subr.bf16.mxu0 %v5254
        %6292 = vmatpush1.bf16.msra.mxu0 %v5253
        %6293 = vmatprep.subr.bf16.mxu0 %v5374
        %6294 = vmatpush2.bf16.msra.mxu0 %v5373
        %6295 = vmatprep.subr.bf16.mxu0 %v5366
        %6296 = vmatpush2.bf16.msra.mxu0 %v5365
        %6297 = vmatprep.subr.bf16.mxu0 %v5358
        %6298 = vmatpush2.bf16.msra.mxu0 %v5357
        %6299 = vmatprep.subr.bf16.mxu0 %v5350
        %6300 = vmatpush2.bf16.msra.mxu0 %v5349
        %6301 = vmatprep.subr.bf16.mxu0 %v5342
        %6302 = vmatpush2.bf16.msra.mxu0 %v5341
        %6303 = vmatprep.subr.bf16.mxu0 %v5334
        %6304 = vmatpush2.bf16.msra.mxu0 %v5333
        %6305 = vmatprep.subr.bf16.mxu0 %v5326
        %6306 = vmatpush2.bf16.msra.mxu0 %v5325
        %6307 = vmatprep.subr.bf16.mxu0 %v5318
        %6308 = vmatpush2.bf16.msra.mxu0 %v5317
        %6309 = vmatprep.mubr.bf16.mxu0 %v3690
        %6310 = vmatmul.mubr.bf16.gmra.mxu0 %v3682
        %v6311 = vpop.f32.mrf.mxu0
        %v6312 = vadd.f32 0.0, %v6311
        %v6313 = vpop.f32.mrf.mxu0
        %v6314 = vadd.f32 0.0, %v6313
        %v6315 = vpop.f32.mrf.mxu0
        %v6316 = vpop.f32.mrf.mxu0
        %6317 = vdwg.mxu0
        %6318 = vmatprep.subr.bf16.mxu0 %v5438
        %6319 = vmatpush1.bf16.msra.mxu0 %v5437
        %6320 = vmatprep.subr.bf16.mxu0 %v5430
        %6321 = vmatpush1.bf16.msra.mxu0 %v5429
        %6322 = vmatprep.subr.bf16.mxu0 %v5422
        %6323 = vmatpush1.bf16.msra.mxu0 %v5421
        %6324 = vmatprep.subr.bf16.mxu0 %v5414
        %6325 = vmatpush1.bf16.msra.mxu0 %v5413
        %6326 = vmatprep.subr.bf16.mxu0 %v5406
        %6327 = vmatpush1.bf16.msra.mxu0 %v5405
        %6328 = vmatprep.subr.bf16.mxu0 %v5398
        %6329 = vmatpush1.bf16.msra.mxu0 %v5397
        %6330 = vmatprep.subr.bf16.mxu0 %v5390
        %6331 = vmatpush1.bf16.msra.mxu0 %v5389
        %6332 = vmatprep.subr.bf16.mxu0 %v5382
        %6333 = vmatpush1.bf16.msra.mxu0 %v5381
        %6334 = vmatprep.subr.bf16.mxu0 %v5502
        %6335 = vmatpush2.bf16.msra.mxu0 %v5501
        %6336 = vmatprep.subr.bf16.mxu0 %v5494
        %6337 = vmatpush2.bf16.msra.mxu0 %v5493
        %6338 = vmatprep.subr.bf16.mxu0 %v5486
        %6339 = vmatpush2.bf16.msra.mxu0 %v5485
        %6340 = vmatprep.subr.bf16.mxu0 %v5478
        %6341 = vmatpush2.bf16.msra.mxu0 %v5477
        %6342 = vmatprep.subr.bf16.mxu0 %v5470
        %6343 = vmatpush2.bf16.msra.mxu0 %v5469
        %6344 = vmatprep.subr.bf16.mxu0 %v5462
        %6345 = vmatpush2.bf16.msra.mxu0 %v5461
        %6346 = vmatprep.subr.bf16.mxu0 %v5454
        %6347 = vmatpush2.bf16.msra.mxu0 %v5453
        %6348 = vmatprep.subr.bf16.mxu0 %v5446
        %6349 = vmatpush2.bf16.msra.mxu0 %v5445
        %6350 = vmatprep.mubr.bf16.mxu0 %v3691
        %6351 = vmatmul.mubr.bf16.gmra.mxu0 %v3689
        %v6352 = vpop.f32.mrf.mxu0
        %v6353 = vadd.f32 %v6312, %v6352
        %v6354 = vpop.f32.mrf.mxu0
        %v6355 = vadd.f32 %v6314, %v6354
        %v6356 = vpop.f32.mrf.mxu0
        %v6357 = vpop.f32.mrf.mxu0
        %6358 = vdwg.mxu0
        %6359 = vmatprep.subr.bf16.mxu0 %v5566
        %6360 = vmatpush1.bf16.msra.mxu0 %v5565
        %6361 = vmatprep.subr.bf16.mxu0 %v5558
        %6362 = vmatpush1.bf16.msra.mxu0 %v5557
        %6363 = vmatprep.subr.bf16.mxu0 %v5550
        %6364 = vmatpush1.bf16.msra.mxu0 %v5549
        %6365 = vmatprep.subr.bf16.mxu0 %v5542
        %6366 = vmatpush1.bf16.msra.mxu0 %v5541
        %6367 = vmatprep.subr.bf16.mxu0 %v5534
        %6368 = vmatpush1.bf16.msra.mxu0 %v5533
        %6369 = vmatprep.subr.bf16.mxu0 %v5526
        %6370 = vmatpush1.bf16.msra.mxu0 %v5525
        %6371 = vmatprep.subr.bf16.mxu0 %v5518
        %6372 = vmatpush1.bf16.msra.mxu0 %v5517
        %6373 = vmatprep.subr.bf16.mxu0 %v5510
        %6374 = vmatpush1.bf16.msra.mxu0 %v5509
        %6375 = vmatprep.subr.bf16.mxu0 %v5630
        %6376 = vmatpush2.bf16.msra.mxu0 %v5629
        %6377 = vmatprep.subr.bf16.mxu0 %v5622
        %6378 = vmatpush2.bf16.msra.mxu0 %v5621
        %6379 = vmatprep.subr.bf16.mxu0 %v5614
        %6380 = vmatpush2.bf16.msra.mxu0 %v5613
        %6381 = vmatprep.subr.bf16.mxu0 %v5606
        %6382 = vmatpush2.bf16.msra.mxu0 %v5605
        %6383 = vmatprep.subr.bf16.mxu0 %v5598
        %6384 = vmatpush2.bf16.msra.mxu0 %v5597
        %6385 = vmatprep.subr.bf16.mxu0 %v5590
        %6386 = vmatpush2.bf16.msra.mxu0 %v5589
        %6387 = vmatprep.subr.bf16.mxu0 %v5582
        %6388 = vmatpush2.bf16.msra.mxu0 %v5581
        %6389 = vmatprep.subr.bf16.mxu0 %v5574
        %6390 = vmatpush2.bf16.msra.mxu0 %v5573
        %6391 = vmatprep.mubr.bf16.mxu0 %v3707
        %6392 = vmatmul.mubr.bf16.gmra.mxu0 %v3699
        %v6393 = vpop.f32.mrf.mxu0
        %v6394 = vadd.f32 %v6353, %v6393
        %v6395 = vpop.f32.mrf.mxu0
        %v6396 = vadd.f32 %v6355, %v6395
        %v6397 = vpop.f32.mrf.mxu0
        %v6398 = vpop.f32.mrf.mxu0
        %6399 = vdwg.mxu0
        %6400 = vmatprep.subr.bf16.mxu0 %v5694
        %6401 = vmatpush1.bf16.msra.mxu0 %v5693
        %6402 = vmatprep.subr.bf16.mxu0 %v5686
        %6403 = vmatpush1.bf16.msra.mxu0 %v5685
        %6404 = vmatprep.subr.bf16.mxu0 %v5678
        %6405 = vmatpush1.bf16.msra.mxu0 %v5677
        %6406 = vmatprep.subr.bf16.mxu0 %v5670
        %6407 = vmatpush1.bf16.msra.mxu0 %v5669
        %6408 = vmatprep.subr.bf16.mxu0 %v5662
        %6409 = vmatpush1.bf16.msra.mxu0 %v5661
        %6410 = vmatprep.subr.bf16.mxu0 %v5654
        %6411 = vmatpush1.bf16.msra.mxu0 %v5653
        %6412 = vmatprep.subr.bf16.mxu0 %v5646
        %6413 = vmatpush1.bf16.msra.mxu0 %v5645
        %6414 = vmatprep.subr.bf16.mxu0 %v5638
        %6415 = vmatpush1.bf16.msra.mxu0 %v5637
        %6416 = vmatprep.subr.bf16.mxu0 %v5758
        %6417 = vmatpush2.bf16.msra.mxu0 %v5757
        %6418 = vmatprep.subr.bf16.mxu0 %v5750
        %6419 = vmatpush2.bf16.msra.mxu0 %v5749
        %6420 = vmatprep.subr.bf16.mxu0 %v5742
        %6421 = vmatpush2.bf16.msra.mxu0 %v5741
        %6422 = vmatprep.subr.bf16.mxu0 %v5734
        %6423 = vmatpush2.bf16.msra.mxu0 %v5733
        %6424 = vmatprep.subr.bf16.mxu0 %v5726
        %6425 = vmatpush2.bf16.msra.mxu0 %v5725
        %6426 = vmatprep.subr.bf16.mxu0 %v5718
        %6427 = vmatpush2.bf16.msra.mxu0 %v5717
        %6428 = vmatprep.subr.bf16.mxu0 %v5710
        %6429 = vmatpush2.bf16.msra.mxu0 %v5709
        %6430 = vmatprep.subr.bf16.mxu0 %v5702
        %6431 = vmatpush2.bf16.msra.mxu0 %v5701
        %6432 = vmatprep.mubr.bf16.mxu0 %v3708
        %6433 = vmatmul.mubr.bf16.gmra.mxu0 %v3706
        %v6434 = vpop.f32.mrf.mxu0
        %v6435 = vadd.f32 %v6394, %v6434
        %v6436 = vpop.f32.mrf.mxu0
        %v6437 = vadd.f32 %v6396, %v6436
        %v6438 = vpop.f32.mrf.mxu0
        %v6439 = vpop.f32.mrf.mxu0
        %6440 = vdwg.mxu0
        %6441 = vmatprep.subr.bf16.mxu0 %v5312
        %6442 = vmatpush1.bf16.msra.mxu0 %v5311
        %6443 = vmatprep.subr.bf16.mxu0 %v5304
        %6444 = vmatpush1.bf16.msra.mxu0 %v5303
        %6445 = vmatprep.subr.bf16.mxu0 %v5296
        %6446 = vmatpush1.bf16.msra.mxu0 %v5295
        %6447 = vmatprep.subr.bf16.mxu0 %v5288
        %6448 = vmatpush1.bf16.msra.mxu0 %v5287
        %6449 = vmatprep.subr.bf16.mxu0 %v5280
        %6450 = vmatpush1.bf16.msra.mxu0 %v5279
        %6451 = vmatprep.subr.bf16.mxu0 %v5272
        %6452 = vmatpush1.bf16.msra.mxu0 %v5271
        %6453 = vmatprep.subr.bf16.mxu0 %v5264
        %6454 = vmatpush1.bf16.msra.mxu0 %v5263
        %6455 = vmatprep.subr.bf16.mxu0 %v5256
        %6456 = vmatpush1.bf16.msra.mxu0 %v5255
        %6457 = vmatprep.subr.bf16.mxu0 %v5376
        %6458 = vmatpush2.bf16.msra.mxu0 %v5375
        %6459 = vmatprep.subr.bf16.mxu0 %v5368
        %6460 = vmatpush2.bf16.msra.mxu0 %v5367
        %6461 = vmatprep.subr.bf16.mxu0 %v5360
        %6462 = vmatpush2.bf16.msra.mxu0 %v5359
        %6463 = vmatprep.subr.bf16.mxu0 %v5352
        %6464 = vmatpush2.bf16.msra.mxu0 %v5351
        %6465 = vmatprep.subr.bf16.mxu0 %v5344
        %6466 = vmatpush2.bf16.msra.mxu0 %v5343
        %6467 = vmatprep.subr.bf16.mxu0 %v5336
        %6468 = vmatpush2.bf16.msra.mxu0 %v5335
        %6469 = vmatprep.subr.bf16.mxu0 %v5328
        %6470 = vmatpush2.bf16.msra.mxu0 %v5327
        %6471 = vmatprep.subr.bf16.mxu0 %v5320
        %6472 = vmatpush2.bf16.msra.mxu0 %v5319
        %6473 = vmatprep.mubr.bf16.mxu0 %v3690
        %6474 = vmatmul.mubr.bf16.gmra.mxu0 %v3682
        %v6475 = vpop.f32.mrf.mxu0
        %v6476 = vadd.f32 0.0, %v6475
        %v6477 = vpop.f32.mrf.mxu0
        %v6478 = vadd.f32 0.0, %v6477
        %v6479 = vpop.f32.mrf.mxu0
        %v6480 = vpop.f32.mrf.mxu0
        %6481 = vdwg.mxu0
        %6482 = vmatprep.subr.bf16.mxu0 %v5440
        %6483 = vmatpush1.bf16.msra.mxu0 %v5439
        %6484 = vmatprep.subr.bf16.mxu0 %v5432
        %6485 = vmatpush1.bf16.msra.mxu0 %v5431
        %6486 = vmatprep.subr.bf16.mxu0 %v5424
        %6487 = vmatpush1.bf16.msra.mxu0 %v5423
        %6488 = vmatprep.subr.bf16.mxu0 %v5416
        %6489 = vmatpush1.bf16.msra.mxu0 %v5415
        %6490 = vmatprep.subr.bf16.mxu0 %v5408
        %6491 = vmatpush1.bf16.msra.mxu0 %v5407
        %6492 = vmatprep.subr.bf16.mxu0 %v5400
        %6493 = vmatpush1.bf16.msra.mxu0 %v5399
        %6494 = vmatprep.subr.bf16.mxu0 %v5392
        %6495 = vmatpush1.bf16.msra.mxu0 %v5391
        %6496 = vmatprep.subr.bf16.mxu0 %v5384
        %6497 = vmatpush1.bf16.msra.mxu0 %v5383
        %6498 = vmatprep.subr.bf16.mxu0 %v5504
        %6499 = vmatpush2.bf16.msra.mxu0 %v5503
        %6500 = vmatprep.subr.bf16.mxu0 %v5496
        %6501 = vmatpush2.bf16.msra.mxu0 %v5495
        %6502 = vmatprep.subr.bf16.mxu0 %v5488
        %6503 = vmatpush2.bf16.msra.mxu0 %v5487
        %6504 = vmatprep.subr.bf16.mxu0 %v5480
        %6505 = vmatpush2.bf16.msra.mxu0 %v5479
        %6506 = vmatprep.subr.bf16.mxu0 %v5472
        %6507 = vmatpush2.bf16.msra.mxu0 %v5471
        %6508 = vmatprep.subr.bf16.mxu0 %v5464
        %6509 = vmatpush2.bf16.msra.mxu0 %v5463
        %6510 = vmatprep.subr.bf16.mxu0 %v5456
        %6511 = vmatpush2.bf16.msra.mxu0 %v5455
        %6512 = vmatprep.subr.bf16.mxu0 %v5448
        %6513 = vmatpush2.bf16.msra.mxu0 %v5447
        %6514 = vmatprep.mubr.bf16.mxu0 %v3691
        %6515 = vmatmul.mubr.bf16.gmra.mxu0 %v3689
        %v6516 = vpop.f32.mrf.mxu0
        %v6517 = vadd.f32 %v6476, %v6516
        %v6518 = vpop.f32.mrf.mxu0
        %v6519 = vadd.f32 %v6478, %v6518
        %v6520 = vpop.f32.mrf.mxu0
        %v6521 = vpop.f32.mrf.mxu0
        %6522 = vdwg.mxu0
        %6523 = vmatprep.subr.bf16.mxu0 %v5568
        %6524 = vmatpush1.bf16.msra.mxu0 %v5567
        %6525 = vmatprep.subr.bf16.mxu0 %v5560
        %6526 = vmatpush1.bf16.msra.mxu0 %v5559
        %6527 = vmatprep.subr.bf16.mxu0 %v5552
        %6528 = vmatpush1.bf16.msra.mxu0 %v5551
        %6529 = vmatprep.subr.bf16.mxu0 %v5544
        %6530 = vmatpush1.bf16.msra.mxu0 %v5543
        %6531 = vmatprep.subr.bf16.mxu0 %v5536
        %6532 = vmatpush1.bf16.msra.mxu0 %v5535
        %6533 = vmatprep.subr.bf16.mxu0 %v5528
        %6534 = vmatpush1.bf16.msra.mxu0 %v5527
        %6535 = vmatprep.subr.bf16.mxu0 %v5520
        %6536 = vmatpush1.bf16.msra.mxu0 %v5519
        %6537 = vmatprep.subr.bf16.mxu0 %v5512
        %6538 = vmatpush1.bf16.msra.mxu0 %v5511
        %6539 = vmatprep.subr.bf16.mxu0 %v5632
        %6540 = vmatpush2.bf16.msra.mxu0 %v5631
        %6541 = vmatprep.subr.bf16.mxu0 %v5624
        %6542 = vmatpush2.bf16.msra.mxu0 %v5623
        %6543 = vmatprep.subr.bf16.mxu0 %v5616
        %6544 = vmatpush2.bf16.msra.mxu0 %v5615
        %6545 = vmatprep.subr.bf16.mxu0 %v5608
        %6546 = vmatpush2.bf16.msra.mxu0 %v5607
        %6547 = vmatprep.subr.bf16.mxu0 %v5600
        %6548 = vmatpush2.bf16.msra.mxu0 %v5599
        %6549 = vmatprep.subr.bf16.mxu0 %v5592
        %6550 = vmatpush2.bf16.msra.mxu0 %v5591
        %6551 = vmatprep.subr.bf16.mxu0 %v5584
        %6552 = vmatpush2.bf16.msra.mxu0 %v5583
        %6553 = vmatprep.subr.bf16.mxu0 %v5576
        %6554 = vmatpush2.bf16.msra.mxu0 %v5575
        %6555 = vmatprep.mubr.bf16.mxu0 %v3707
        %6556 = vmatmul.mubr.bf16.gmra.mxu0 %v3699
        %v6557 = vpop.f32.mrf.mxu0
        %v6558 = vadd.f32 %v6517, %v6557
        %v6559 = vpop.f32.mrf.mxu0
        %v6560 = vadd.f32 %v6519, %v6559
        %v6561 = vpop.f32.mrf.mxu0
        %v6562 = vpop.f32.mrf.mxu0
        %6563 = vdwg.mxu0
        %6564 = vmatprep.subr.bf16.mxu0 %v5696
        %6565 = vmatpush1.bf16.msra.mxu0 %v5695
        %6566 = vmatprep.subr.bf16.mxu0 %v5688
        %6567 = vmatpush1.bf16.msra.mxu0 %v5687
        %6568 = vmatprep.subr.bf16.mxu0 %v5680
        %6569 = vmatpush1.bf16.msra.mxu0 %v5679
        %6570 = vmatprep.subr.bf16.mxu0 %v5672
        %6571 = vmatpush1.bf16.msra.mxu0 %v5671
        %6572 = vmatprep.subr.bf16.mxu0 %v5664
        %6573 = vmatpush1.bf16.msra.mxu0 %v5663
        %6574 = vmatprep.subr.bf16.mxu0 %v5656
        %6575 = vmatpush1.bf16.msra.mxu0 %v5655
        %6576 = vmatprep.subr.bf16.mxu0 %v5648
        %6577 = vmatpush1.bf16.msra.mxu0 %v5647
        %6578 = vmatprep.subr.bf16.mxu0 %v5640
        %6579 = vmatpush1.bf16.msra.mxu0 %v5639
        %6580 = vmatprep.subr.bf16.mxu0 %v5760
        %6581 = vmatpush2.bf16.msra.mxu0 %v5759
        %6582 = vmatprep.subr.bf16.mxu0 %v5752
        %6583 = vmatpush2.bf16.msra.mxu0 %v5751
        %6584 = vmatprep.subr.bf16.mxu0 %v5744
        %6585 = vmatpush2.bf16.msra.mxu0 %v5743
        %6586 = vmatprep.subr.bf16.mxu0 %v5736
        %6587 = vmatpush2.bf16.msra.mxu0 %v5735
        %6588 = vmatprep.subr.bf16.mxu0 %v5728
        %6589 = vmatpush2.bf16.msra.mxu0 %v5727
        %6590 = vmatprep.subr.bf16.mxu0 %v5720
        %6591 = vmatpush2.bf16.msra.mxu0 %v5719
        %6592 = vmatprep.subr.bf16.mxu0 %v5712
        %6593 = vmatpush2.bf16.msra.mxu0 %v5711
        %6594 = vmatprep.subr.bf16.mxu0 %v5704
        %6595 = vmatpush2.bf16.msra.mxu0 %v5703
        %6596 = vmatprep.mubr.bf16.mxu0 %v3708
        %6597 = vmatmul.mubr.bf16.gmra.mxu0 %v3706
        %v6598 = vpop.f32.mrf.mxu0
        %v6599 = vadd.f32 %v6558, %v6598
        %v6600 = vpop.f32.mrf.mxu0
        %v6601 = vadd.f32 %v6560, %v6600
        %v6602 = vpop.f32.mrf.mxu0
        %v6603 = vpop.f32.mrf.mxu0
        %6604 = vdwg.mxu0
        %6605 = vmatprep.subr.bf16.mxu0 %v5314
        %6606 = vmatpush1.bf16.msra.mxu0 %v5313
        %6607 = vmatprep.subr.bf16.mxu0 %v5306
        %6608 = vmatpush1.bf16.msra.mxu0 %v5305
        %6609 = vmatprep.subr.bf16.mxu0 %v5298
        %6610 = vmatpush1.bf16.msra.mxu0 %v5297
        %6611 = vmatprep.subr.bf16.mxu0 %v5290
        %6612 = vmatpush1.bf16.msra.mxu0 %v5289
        %6613 = vmatprep.subr.bf16.mxu0 %v5282
        %6614 = vmatpush1.bf16.msra.mxu0 %v5281
        %6615 = vmatprep.subr.bf16.mxu0 %v5274
        %6616 = vmatpush1.bf16.msra.mxu0 %v5273
        %6617 = vmatprep.subr.bf16.mxu0 %v5266
        %6618 = vmatpush1.bf16.msra.mxu0 %v5265
        %6619 = vmatprep.subr.bf16.mxu0 %v5258
        %6620 = vmatpush1.bf16.msra.mxu0 %v5257
        %6621 = vmatprep.subr.bf16.mxu0 %v5378
        %6622 = vmatpush2.bf16.msra.mxu0 %v5377
        %6623 = vmatprep.subr.bf16.mxu0 %v5370
        %6624 = vmatpush2.bf16.msra.mxu0 %v5369
        %6625 = vmatprep.subr.bf16.mxu0 %v5362
        %6626 = vmatpush2.bf16.msra.mxu0 %v5361
        %6627 = vmatprep.subr.bf16.mxu0 %v5354
        %6628 = vmatpush2.bf16.msra.mxu0 %v5353
        %6629 = vmatprep.subr.bf16.mxu0 %v5346
        %6630 = vmatpush2.bf16.msra.mxu0 %v5345
        %6631 = vmatprep.subr.bf16.mxu0 %v5338
        %6632 = vmatpush2.bf16.msra.mxu0 %v5337
        %6633 = vmatprep.subr.bf16.mxu0 %v5330
        %6634 = vmatpush2.bf16.msra.mxu0 %v5329
        %6635 = vmatprep.subr.bf16.mxu0 %v5322
        %6636 = vmatpush2.bf16.msra.mxu0 %v5321
        %6637 = vmatprep.mubr.bf16.mxu0 %v3690
        %6638 = vmatmul.mubr.bf16.gmra.mxu0 %v3682
        %v6639 = vpop.f32.mrf.mxu0
        %v6640 = vadd.f32 0.0, %v6639
        %v6641 = vpop.f32.mrf.mxu0
        %v6642 = vadd.f32 0.0, %v6641
        %v6643 = vpop.f32.mrf.mxu0
        %v6644 = vpop.f32.mrf.mxu0
        %6645 = vdwg.mxu0
        %6646 = vmatprep.subr.bf16.mxu0 %v5442
        %6647 = vmatpush1.bf16.msra.mxu0 %v5441
        %6648 = vmatprep.subr.bf16.mxu0 %v5434
        %6649 = vmatpush1.bf16.msra.mxu0 %v5433
        %6650 = vmatprep.subr.bf16.mxu0 %v5426
        %6651 = vmatpush1.bf16.msra.mxu0 %v5425
        %6652 = vmatprep.subr.bf16.mxu0 %v5418
        %6653 = vmatpush1.bf16.msra.mxu0 %v5417
        %6654 = vmatprep.subr.bf16.mxu0 %v5410
        %6655 = vmatpush1.bf16.msra.mxu0 %v5409
        %6656 = vmatprep.subr.bf16.mxu0 %v5402
        %6657 = vmatpush1.bf16.msra.mxu0 %v5401
        %6658 = vmatprep.subr.bf16.mxu0 %v5394
        %6659 = vmatpush1.bf16.msra.mxu0 %v5393
        %6660 = vmatprep.subr.bf16.mxu0 %v5386
        %6661 = vmatpush1.bf16.msra.mxu0 %v5385
        %6662 = vmatprep.subr.bf16.mxu0 %v5506
        %6663 = vmatpush2.bf16.msra.mxu0 %v5505
        %6664 = vmatprep.subr.bf16.mxu0 %v5498
        %6665 = vmatpush2.bf16.msra.mxu0 %v5497
        %6666 = vmatprep.subr.bf16.mxu0 %v5490
        %6667 = vmatpush2.bf16.msra.mxu0 %v5489
        %6668 = vmatprep.subr.bf16.mxu0 %v5482
        %6669 = vmatpush2.bf16.msra.mxu0 %v5481
        %6670 = vmatprep.subr.bf16.mxu0 %v5474
        %6671 = vmatpush2.bf16.msra.mxu0 %v5473
        %6672 = vmatprep.subr.bf16.mxu0 %v5466
        %6673 = vmatpush2.bf16.msra.mxu0 %v5465
        %6674 = vmatprep.subr.bf16.mxu0 %v5458
        %6675 = vmatpush2.bf16.msra.mxu0 %v5457
        %6676 = vmatprep.subr.bf16.mxu0 %v5450
        %6677 = vmatpush2.bf16.msra.mxu0 %v5449
        %6678 = vmatprep.mubr.bf16.mxu0 %v3691
        %6679 = vmatmul.mubr.bf16.gmra.mxu0 %v3689
        %v6680 = vpop.f32.mrf.mxu0
        %v6681 = vadd.f32 %v6640, %v6680
        %v6682 = vpop.f32.mrf.mxu0
        %v6683 = vadd.f32 %v6642, %v6682
        %v6684 = vpop.f32.mrf.mxu0
        %v6685 = vpop.f32.mrf.mxu0
        %6686 = vdwg.mxu0
        %6687 = vmatprep.subr.bf16.mxu0 %v5570
        %6688 = vmatpush1.bf16.msra.mxu0 %v5569
        %6689 = vmatprep.subr.bf16.mxu0 %v5562
        %6690 = vmatpush1.bf16.msra.mxu0 %v5561
        %6691 = vmatprep.subr.bf16.mxu0 %v5554
        %6692 = vmatpush1.bf16.msra.mxu0 %v5553
        %6693 = vmatprep.subr.bf16.mxu0 %v5546
        %6694 = vmatpush1.bf16.msra.mxu0 %v5545
        %6695 = vmatprep.subr.bf16.mxu0 %v5538
        %6696 = vmatpush1.bf16.msra.mxu0 %v5537
        %6697 = vmatprep.subr.bf16.mxu0 %v5530
        %6698 = vmatpush1.bf16.msra.mxu0 %v5529
        %6699 = vmatprep.subr.bf16.mxu0 %v5522
        %6700 = vmatpush1.bf16.msra.mxu0 %v5521
        %6701 = vmatprep.subr.bf16.mxu0 %v5514
        %6702 = vmatpush1.bf16.msra.mxu0 %v5513
        %6703 = vmatprep.subr.bf16.mxu0 %v5634
        %6704 = vmatpush2.bf16.msra.mxu0 %v5633
        %6705 = vmatprep.subr.bf16.mxu0 %v5626
        %6706 = vmatpush2.bf16.msra.mxu0 %v5625
        %6707 = vmatprep.subr.bf16.mxu0 %v5618
        %6708 = vmatpush2.bf16.msra.mxu0 %v5617
        %6709 = vmatprep.subr.bf16.mxu0 %v5610
        %6710 = vmatpush2.bf16.msra.mxu0 %v5609
        %6711 = vmatprep.subr.bf16.mxu0 %v5602
        %6712 = vmatpush2.bf16.msra.mxu0 %v5601
        %6713 = vmatprep.subr.bf16.mxu0 %v5594
        %6714 = vmatpush2.bf16.msra.mxu0 %v5593
        %6715 = vmatprep.subr.bf16.mxu0 %v5586
        %6716 = vmatpush2.bf16.msra.mxu0 %v5585
        %6717 = vmatprep.subr.bf16.mxu0 %v5578
        %6718 = vmatpush2.bf16.msra.mxu0 %v5577
        %6719 = vmatprep.mubr.bf16.mxu0 %v3707
        %6720 = vmatmul.mubr.bf16.gmra.mxu0 %v3699
        %v6721 = vpop.f32.mrf.mxu0
        %v6722 = vadd.f32 %v6681, %v6721
        %v6723 = vpop.f32.mrf.mxu0
        %v6724 = vadd.f32 %v6683, %v6723
        %v6725 = vpop.f32.mrf.mxu0
        %v6726 = vpop.f32.mrf.mxu0
        %6727 = vdwg.mxu0
        %6728 = vmatprep.subr.bf16.mxu0 %v5698
        %6729 = vmatpush1.bf16.msra.mxu0 %v5697
        %6730 = vmatprep.subr.bf16.mxu0 %v5690
        %6731 = vmatpush1.bf16.msra.mxu0 %v5689
        %6732 = vmatprep.subr.bf16.mxu0 %v5682
        %6733 = vmatpush1.bf16.msra.mxu0 %v5681
        %6734 = vmatprep.subr.bf16.mxu0 %v5674
        %6735 = vmatpush1.bf16.msra.mxu0 %v5673
        %6736 = vmatprep.subr.bf16.mxu0 %v5666
        %6737 = vmatpush1.bf16.msra.mxu0 %v5665
        %6738 = vmatprep.subr.bf16.mxu0 %v5658
        %6739 = vmatpush1.bf16.msra.mxu0 %v5657
        %6740 = vmatprep.subr.bf16.mxu0 %v5650
        %6741 = vmatpush1.bf16.msra.mxu0 %v5649
        %6742 = vmatprep.subr.bf16.mxu0 %v5642
        %6743 = vmatpush1.bf16.msra.mxu0 %v5641
        %6744 = vmatprep.subr.bf16.mxu0 %v5762
        %6745 = vmatpush2.bf16.msra.mxu0 %v5761
        %6746 = vmatprep.subr.bf16.mxu0 %v5754
        %6747 = vmatpush2.bf16.msra.mxu0 %v5753
        %6748 = vmatprep.subr.bf16.mxu0 %v5746
        %6749 = vmatpush2.bf16.msra.mxu0 %v5745
        %6750 = vmatprep.subr.bf16.mxu0 %v5738
        %6751 = vmatpush2.bf16.msra.mxu0 %v5737
        %6752 = vmatprep.subr.bf16.mxu0 %v5730
        %6753 = vmatpush2.bf16.msra.mxu0 %v5729
        %6754 = vmatprep.subr.bf16.mxu0 %v5722
        %6755 = vmatpush2.bf16.msra.mxu0 %v5721
        %6756 = vmatprep.subr.bf16.mxu0 %v5714
        %6757 = vmatpush2.bf16.msra.mxu0 %v5713
        %6758 = vmatprep.subr.bf16.mxu0 %v5706
        %6759 = vmatpush2.bf16.msra.mxu0 %v5705
        %6760 = vmatprep.mubr.bf16.mxu0 %v3708
        %6761 = vmatmul.mubr.bf16.gmra.mxu0 %v3706
        %v6762 = vpop.f32.mrf.mxu0
        %v6763 = vadd.f32 %v6722, %v6762
        %v6764 = vpop.f32.mrf.mxu0
        %v6765 = vadd.f32 %v6724, %v6764
        %v6766 = vpop.f32.mrf.mxu0
        %v6767 = vpop.f32.mrf.mxu0
        %6768 = vdwg.mxu0
        %6769 = vmatprep.subr.bf16.mxu0 %v5316
        %6770 = vmatpush1.bf16.msra.mxu0 %v5315
        %6771 = vmatprep.subr.bf16.mxu0 %v5308
        %6772 = vmatpush1.bf16.msra.mxu0 %v5307
        %6773 = vmatprep.subr.bf16.mxu0 %v5300
        %6774 = vmatpush1.bf16.msra.mxu0 %v5299
        %6775 = vmatprep.subr.bf16.mxu0 %v5292
        %6776 = vmatpush1.bf16.msra.mxu0 %v5291
        %6777 = vmatprep.subr.bf16.mxu0 %v5284
        %6778 = vmatpush1.bf16.msra.mxu0 %v5283
        %6779 = vmatprep.subr.bf16.mxu0 %v5276
        %6780 = vmatpush1.bf16.msra.mxu0 %v5275
        %6781 = vmatprep.subr.bf16.mxu0 %v5268
        %6782 = vmatpush1.bf16.msra.mxu0 %v5267
        %6783 = vmatprep.subr.bf16.mxu0 %v5260
        %6784 = vmatpush1.bf16.msra.mxu0 %v5259
        %6785 = vmatprep.subr.bf16.mxu0 %v5380
        %6786 = vmatpush2.bf16.msra.mxu0 %v5379
        %6787 = vmatprep.subr.bf16.mxu0 %v5372
        %6788 = vmatpush2.bf16.msra.mxu0 %v5371
        %6789 = vmatprep.subr.bf16.mxu0 %v5364
        %6790 = vmatpush2.bf16.msra.mxu0 %v5363
        %6791 = vmatprep.subr.bf16.mxu0 %v5356
        %6792 = vmatpush2.bf16.msra.mxu0 %v5355
        %6793 = vmatprep.subr.bf16.mxu0 %v5348
        %6794 = vmatpush2.bf16.msra.mxu0 %v5347
        %6795 = vmatprep.subr.bf16.mxu0 %v5340
        %6796 = vmatpush2.bf16.msra.mxu0 %v5339
        %6797 = vmatprep.subr.bf16.mxu0 %v5332
        %6798 = vmatpush2.bf16.msra.mxu0 %v5331
        %6799 = vmatprep.subr.bf16.mxu0 %v5324
        %6800 = vmatpush2.bf16.msra.mxu0 %v5323
        %6801 = vmatprep.mubr.bf16.mxu0 %v3690
        %6802 = vmatmul.mubr.bf16.gmra.mxu0 %v3682
        %v6803 = vpop.f32.mrf.mxu0
        %v6804 = vadd.f32 0.0, %v6803
        %v6805 = vpop.f32.mrf.mxu0
        %v6806 = vadd.f32 0.0, %v6805
        %v6807 = vpop.f32.mrf.mxu0
        %v6808 = vpop.f32.mrf.mxu0
        %6809 = vdwg.mxu0
        %6810 = vmatprep.subr.bf16.mxu0 %v5444
        %6811 = vmatpush1.bf16.msra.mxu0 %v5443
        %6812 = vmatprep.subr.bf16.mxu0 %v5436
        %6813 = vmatpush1.bf16.msra.mxu0 %v5435
        %6814 = vmatprep.subr.bf16.mxu0 %v5428
        %6815 = vmatpush1.bf16.msra.mxu0 %v5427
        %6816 = vmatprep.subr.bf16.mxu0 %v5420
        %6817 = vmatpush1.bf16.msra.mxu0 %v5419
        %6818 = vmatprep.subr.bf16.mxu0 %v5412
        %6819 = vmatpush1.bf16.msra.mxu0 %v5411
        %6820 = vmatprep.subr.bf16.mxu0 %v5404
        %6821 = vmatpush1.bf16.msra.mxu0 %v5403
        %6822 = vmatprep.subr.bf16.mxu0 %v5396
        %6823 = vmatpush1.bf16.msra.mxu0 %v5395
        %6824 = vmatprep.subr.bf16.mxu0 %v5388
        %6825 = vmatpush1.bf16.msra.mxu0 %v5387
        %6826 = vmatprep.subr.bf16.mxu0 %v5508
        %6827 = vmatpush2.bf16.msra.mxu0 %v5507
        %6828 = vmatprep.subr.bf16.mxu0 %v5500
        %6829 = vmatpush2.bf16.msra.mxu0 %v5499
        %6830 = vmatprep.subr.bf16.mxu0 %v5492
        %6831 = vmatpush2.bf16.msra.mxu0 %v5491
        %6832 = vmatprep.subr.bf16.mxu0 %v5484
        %6833 = vmatpush2.bf16.msra.mxu0 %v5483
        %6834 = vmatprep.subr.bf16.mxu0 %v5476
        %6835 = vmatpush2.bf16.msra.mxu0 %v5475
        %6836 = vmatprep.subr.bf16.mxu0 %v5468
        %6837 = vmatpush2.bf16.msra.mxu0 %v5467
        %6838 = vmatprep.subr.bf16.mxu0 %v5460
        %6839 = vmatpush2.bf16.msra.mxu0 %v5459
        %6840 = vmatprep.subr.bf16.mxu0 %v5452
        %6841 = vmatpush2.bf16.msra.mxu0 %v5451
        %6842 = vmatprep.mubr.bf16.mxu0 %v3691
        %6843 = vmatmul.mubr.bf16.gmra.mxu0 %v3689
        %v6844 = vpop.f32.mrf.mxu0
        %v6845 = vadd.f32 %v6804, %v6844
        %v6846 = vpop.f32.mrf.mxu0
        %v6847 = vadd.f32 %v6806, %v6846
        %v6848 = vpop.f32.mrf.mxu0
        %v6849 = vpop.f32.mrf.mxu0
        %6850 = vdwg.mxu0
        %6851 = vmatprep.subr.bf16.mxu0 %v5572
        %6852 = vmatpush1.bf16.msra.mxu0 %v5571
        %6853 = vmatprep.subr.bf16.mxu0 %v5564
        %6854 = vmatpush1.bf16.msra.mxu0 %v5563
        %6855 = vmatprep.subr.bf16.mxu0 %v5556
        %6856 = vmatpush1.bf16.msra.mxu0 %v5555
        %6857 = vmatprep.subr.bf16.mxu0 %v5548
        %6858 = vmatpush1.bf16.msra.mxu0 %v5547
        %6859 = vmatprep.subr.bf16.mxu0 %v5540
        %6860 = vmatpush1.bf16.msra.mxu0 %v5539
        %6861 = vmatprep.subr.bf16.mxu0 %v5532
        %6862 = vmatpush1.bf16.msra.mxu0 %v5531
        %6863 = vmatprep.subr.bf16.mxu0 %v5524
        %6864 = vmatpush1.bf16.msra.mxu0 %v5523
        %6865 = vmatprep.subr.bf16.mxu0 %v5516
        %6866 = vmatpush1.bf16.msra.mxu0 %v5515
        %6867 = vmatprep.subr.bf16.mxu0 %v5636
        %6868 = vmatpush2.bf16.msra.mxu0 %v5635
        %6869 = vmatprep.subr.bf16.mxu0 %v5628
        %6870 = vmatpush2.bf16.msra.mxu0 %v5627
        %6871 = vmatprep.subr.bf16.mxu0 %v5620
        %6872 = vmatpush2.bf16.msra.mxu0 %v5619
        %6873 = vmatprep.subr.bf16.mxu0 %v5612
        %6874 = vmatpush2.bf16.msra.mxu0 %v5611
        %6875 = vmatprep.subr.bf16.mxu0 %v5604
        %6876 = vmatpush2.bf16.msra.mxu0 %v5603
        %6877 = vmatprep.subr.bf16.mxu0 %v5596
        %6878 = vmatpush2.bf16.msra.mxu0 %v5595
        %6879 = vmatprep.subr.bf16.mxu0 %v5588
        %6880 = vmatpush2.bf16.msra.mxu0 %v5587
        %6881 = vmatprep.subr.bf16.mxu0 %v5580
        %6882 = vmatpush2.bf16.msra.mxu0 %v5579
        %6883 = vmatprep.mubr.bf16.mxu0 %v3707
        %6884 = vmatmul.mubr.bf16.gmra.mxu0 %v3699
        %v6885 = vpop.f32.mrf.mxu0
        %v6886 = vadd.f32 %v6845, %v6885
        %v6887 = vpop.f32.mrf.mxu0
        %v6888 = vadd.f32 %v6847, %v6887
        %v6889 = vpop.f32.mrf.mxu0
        %v6890 = vpop.f32.mrf.mxu0
        %6891 = vdwg.mxu0
        %6892 = vmatprep.subr.bf16.mxu0 %v5700
        %6893 = vmatpush1.bf16.msra.mxu0 %v5699
        %6894 = vmatprep.subr.bf16.mxu0 %v5692
        %6895 = vmatpush1.bf16.msra.mxu0 %v5691
        %6896 = vmatprep.subr.bf16.mxu0 %v5684
        %6897 = vmatpush1.bf16.msra.mxu0 %v5683
        %6898 = vmatprep.subr.bf16.mxu0 %v5676
        %6899 = vmatpush1.bf16.msra.mxu0 %v5675
        %6900 = vmatprep.subr.bf16.mxu0 %v5668
        %6901 = vmatpush1.bf16.msra.mxu0 %v5667
        %6902 = vmatprep.subr.bf16.mxu0 %v5660
        %6903 = vmatpush1.bf16.msra.mxu0 %v5659
        %6904 = vmatprep.subr.bf16.mxu0 %v5652
        %6905 = vmatpush1.bf16.msra.mxu0 %v5651
        %6906 = vmatprep.subr.bf16.mxu0 %v5644
        %6907 = vmatpush1.bf16.msra.mxu0 %v5643
        %6908 = vmatprep.subr.bf16.mxu0 %v5764
        %6909 = vmatpush2.bf16.msra.mxu0 %v5763
        %6910 = vmatprep.subr.bf16.mxu0 %v5756
        %6911 = vmatpush2.bf16.msra.mxu0 %v5755
        %6912 = vmatprep.subr.bf16.mxu0 %v5748
        %6913 = vmatpush2.bf16.msra.mxu0 %v5747
        %6914 = vmatprep.subr.bf16.mxu0 %v5740
        %6915 = vmatpush2.bf16.msra.mxu0 %v5739
        %6916 = vmatprep.subr.bf16.mxu0 %v5732
        %6917 = vmatpush2.bf16.msra.mxu0 %v5731
        %6918 = vmatprep.subr.bf16.mxu0 %v5724
        %6919 = vmatpush2.bf16.msra.mxu0 %v5723
        %6920 = vmatprep.subr.bf16.mxu0 %v5716
        %6921 = vmatpush2.bf16.msra.mxu0 %v5715
        %6922 = vmatprep.subr.bf16.mxu0 %v5708
        %6923 = vmatpush2.bf16.msra.mxu0 %v5707
        %6924 = vmatprep.mubr.bf16.mxu0 %v3708
        %6925 = vmatmul.mubr.bf16.gmra.mxu0 %v3706
        %v6926 = vpop.f32.mrf.mxu0
        %v6927 = vadd.f32 %v6886, %v6926
        %v6928 = vpop.f32.mrf.mxu0
        %v6929 = vadd.f32 %v6888, %v6928
        %v6930 = vpop.f32.mrf.mxu0
        %v6931 = vpop.f32.mrf.mxu0
        %6932 = vdwg.mxu0
        %v6941 = vcombine.low %v6435, %v6437
        %v6942 = vcombine.low %v6599, %v6601
        %v6943 = vcombine.low %v6763, %v6765
        %v6944 = vcombine.low %v6927, %v6929
        %v6949 = vadd.f32 %v3152, %v6941
        %v6950 = vadd.f32 %v3153, %v6942
        %v6951 = vadd.f32 %v3154, %v6943
        %v6952 = vadd.f32 %v3155, %v6944
        %6953 = vst [vmem:[#allocation7] sm:$0xff] %v6949
        %6954 = vst [vmem:[#allocation7 + $0x8] sm:$0xff] %v6950
        %6955 = vst [vmem:[#allocation7 + $0x10] sm:$0xff] %v6951
        %6956 = vst [vmem:[#allocation7 + $0x18] sm:$0xff] %v6952
        %p6957 = scmp.eq.s32.totalorder %s29, 1
        // Predicated region
        $region125: #{discriminator_forward.1} parent=71 // pred_check
          %p6958 = pneg %p6957
        $region126: #{discriminator_forward.1} parent=71 // pred_check_branch
          %6960 = sbr.rel (%p6958) target = $region128
        $region127: #{discriminator_forward.1} parent=71 // pred_region
          %v6961 = vld [vmem:[#allocation7] sm:$0xff]
          %v6962 = vld [vmem:[#allocation7 + $0x8] sm:$0xff]
          %v6963 = vld [vmem:[#allocation7 + $0x10] sm:$0xff]
          %v6964 = vld [vmem:[#allocation7 + $0x18] sm:$0xff]
          %v6965 = vld [vmem:[#allocation19] sm:$0xff]
          %v6967 = vlaneseq
          %v6968 = vshrl.u32 %v6967, 7
          %v6969 = vsub.s32 0, %v6968
          %v6970 = vrot.slane %v6965, %v6969
          %v6971 = vlaneseq
          %v6972 = vshrl.u32 %v6971, 7
          %v6973 = vsub.s32 1, %v6972
          %v6974 = vrot.slane %v6965, %v6973
          %v6975 = vlaneseq
          %v6976 = vshrl.u32 %v6975, 7
          %v6977 = vsub.s32 2, %v6976
          %v6978 = vrot.slane %v6965, %v6977
          %v6979 = vlaneseq
          %v6980 = vshrl.u32 %v6979, 7
          %v6981 = vsub.s32 3, %v6980
          %v6982 = vrot.slane %v6965, %v6981
          %v6983 = vlaneseq
          %v6984 = vshrl.u32 %v6983, 7
          %v6985 = vsub.s32 4, %v6984
          %v6986 = vrot.slane %v6965, %v6985
          %v6987 = vlaneseq
          %v6988 = vshrl.u32 %v6987, 7
          %v6989 = vsub.s32 5, %v6988
          %v6990 = vrot.slane %v6965, %v6989
          %v6991 = vlaneseq
          %v6992 = vshrl.u32 %v6991, 7
          %v6993 = vsub.s32 6, %v6992
          %v6994 = vrot.slane %v6965, %v6993
          %v6995 = vlaneseq
          %v6996 = vshrl.u32 %v6995, 7
          %v6997 = vsub.s32 7, %v6996
          %v6998 = vrot.slane %v6965, %v6997
          %v6999 = vcombine.low %v6970, %v6974
          %v7000 = vcombine.low %v6978, %v6982
          %v7001 = vcombine.low %v6986, %v6990
          %v7002 = vcombine.low %v6994, %v6998
          %v7007 = vadd.f32 %v6961, %v6999
          %v7008 = vadd.f32 %v6962, %v7000
          %v7009 = vadd.f32 %v6963, %v7001
          %v7010 = vadd.f32 %v6964, %v7002
          %v7015 = vcombine.high %v7007, %v7007
          %v7016 = vcombine.high %v7008, %v7008
          %v7017 = vcombine.high %v7009, %v7009
          %v7018 = vcombine.high %v7010, %v7010
          %vm7023 = vcmask 1043456
          %v7024 = vsel %vm7023, %v7007, 0.0
          %v7025 = vrot.slane %v7024, 4
          %v7026 = vadd.f32 %v7024, %v7025
          %v7027 = vrot.slane %v7026, 2
          %v7028 = vadd.f32 %v7026, %v7027
          %v7029 = vrot.slane %v7028, 1
          %v7030 = vadd.f32 %v7028, %v7029
          %v7031 = vsel %vm7023, %v7015, 0.0
          %v7032 = vrot.slane %v7031, 4
          %v7033 = vadd.f32 %v7031, %v7032
          %v7034 = vrot.slane %v7033, 2
          %v7035 = vadd.f32 %v7033, %v7034
          %v7036 = vrot.slane %v7035, 1
          %v7037 = vadd.f32 %v7035, %v7036
          %v7038 = vsel %vm7023, %v7008, 0.0
          %v7039 = vrot.slane %v7038, 4
          %v7040 = vadd.f32 %v7038, %v7039
          %v7041 = vrot.slane %v7040, 2
          %v7042 = vadd.f32 %v7040, %v7041
          %v7043 = vrot.slane %v7042, 1
          %v7044 = vadd.f32 %v7042, %v7043
          %v7045 = vsel %vm7023, %v7016, 0.0
          %v7046 = vrot.slane %v7045, 4
          %v7047 = vadd.f32 %v7045, %v7046
          %v7048 = vrot.slane %v7047, 2
          %v7049 = vadd.f32 %v7047, %v7048
          %v7050 = vrot.slane %v7049, 1
          %v7051 = vadd.f32 %v7049, %v7050
          %v7052 = vsel %vm7023, %v7009, 0.0
          %v7053 = vrot.slane %v7052, 4
          %v7054 = vadd.f32 %v7052, %v7053
          %v7055 = vrot.slane %v7054, 2
          %v7056 = vadd.f32 %v7054, %v7055
          %v7057 = vrot.slane %v7056, 1
          %v7058 = vadd.f32 %v7056, %v7057
          %v7059 = vsel %vm7023, %v7017, 0.0
          %v7060 = vrot.slane %v7059, 4
          %v7061 = vadd.f32 %v7059, %v7060
          %v7062 = vrot.slane %v7061, 2
          %v7063 = vadd.f32 %v7061, %v7062
          %v7064 = vrot.slane %v7063, 1
          %v7065 = vadd.f32 %v7063, %v7064
          %v7066 = vsel %vm7023, %v7010, 0.0
          %v7067 = vrot.slane %v7066, 4
          %v7068 = vadd.f32 %v7066, %v7067
          %v7069 = vrot.slane %v7068, 2
          %v7070 = vadd.f32 %v7068, %v7069
          %v7071 = vrot.slane %v7070, 1
          %v7072 = vadd.f32 %v7070, %v7071
          %v7073 = vsel %vm7023, %v7018, 0.0
          %v7074 = vrot.slane %v7073, 4
          %v7075 = vadd.f32 %v7073, %v7074
          %v7076 = vrot.slane %v7075, 2
          %v7077 = vadd.f32 %v7075, %v7076
          %v7078 = vrot.slane %v7077, 1
          %v7079 = vadd.f32 %v7077, %v7078
          %v7080 = vrcp.pop 4.0
          %v7081 = vmul.f32 %v7030, %v7080
          %v7082 = vmul.f32 %v7037, %v7080
          %v7083 = vmul.f32 %v7044, %v7080
          %v7084 = vmul.f32 %v7051, %v7080
          %v7085 = vmul.f32 %v7058, %v7080
          %v7086 = vmul.f32 %v7065, %v7080
          %v7087 = vmul.f32 %v7072, %v7080
          %v7088 = vmul.f32 %v7079, %v7080
          %v7097 = vcombine.low %v7081, %v7082
          %v7098 = vcombine.low %v7083, %v7084
          %v7099 = vcombine.low %v7085, %v7086
          %v7100 = vcombine.low %v7087, %v7088
          %v7105 = vsub.f32 %v7007, %v7097
          %v7106 = vsub.f32 %v7008, %v7098
          %v7107 = vsub.f32 %v7009, %v7099
          %v7108 = vsub.f32 %v7010, %v7100
          %v7109 = vmul.f32 %v7105, %v7105
          %v7110 = vmul.f32 %v7106, %v7106
          %v7111 = vmul.f32 %v7107, %v7107
          %v7112 = vmul.f32 %v7108, %v7108
          %v7117 = vcombine.high %v7109, %v7109
          %v7118 = vcombine.high %v7110, %v7110
          %v7119 = vcombine.high %v7111, %v7111
          %v7120 = vcombine.high %v7112, %v7112
          %v7125 = vsel %vm7023, %v7109, 0.0
          %v7126 = vrot.slane %v7125, 4
          %v7127 = vadd.f32 %v7125, %v7126
          %v7128 = vrot.slane %v7127, 2
          %v7129 = vadd.f32 %v7127, %v7128
          %v7130 = vrot.slane %v7129, 1
          %v7131 = vadd.f32 %v7129, %v7130
          %v7132 = vsel %vm7023, %v7117, 0.0
          %v7133 = vrot.slane %v7132, 4
          %v7134 = vadd.f32 %v7132, %v7133
          %v7135 = vrot.slane %v7134, 2
          %v7136 = vadd.f32 %v7134, %v7135
          %v7137 = vrot.slane %v7136, 1
          %v7138 = vadd.f32 %v7136, %v7137
          %v7139 = vsel %vm7023, %v7110, 0.0
          %v7140 = vrot.slane %v7139, 4
          %v7141 = vadd.f32 %v7139, %v7140
          %v7142 = vrot.slane %v7141, 2
          %v7143 = vadd.f32 %v7141, %v7142
          %v7144 = vrot.slane %v7143, 1
          %v7145 = vadd.f32 %v7143, %v7144
          %v7146 = vsel %vm7023, %v7118, 0.0
          %v7147 = vrot.slane %v7146, 4
          %v7148 = vadd.f32 %v7146, %v7147
          %v7149 = vrot.slane %v7148, 2
          %v7150 = vadd.f32 %v7148, %v7149
          %v7151 = vrot.slane %v7150, 1
          %v7152 = vadd.f32 %v7150, %v7151
          %v7153 = vsel %vm7023, %v7111, 0.0
          %v7154 = vrot.slane %v7153, 4
          %v7155 = vadd.f32 %v7153, %v7154
          %v7156 = vrot.slane %v7155, 2
          %v7157 = vadd.f32 %v7155, %v7156
          %v7158 = vrot.slane %v7157, 1
          %v7159 = vadd.f32 %v7157, %v7158
          %v7160 = vsel %vm7023, %v7119, 0.0
          %v7161 = vrot.slane %v7160, 4
          %v7162 = vadd.f32 %v7160, %v7161
          %v7163 = vrot.slane %v7162, 2
          %v7164 = vadd.f32 %v7162, %v7163
          %v7165 = vrot.slane %v7164, 1
          %v7166 = vadd.f32 %v7164, %v7165
          %v7167 = vsel %vm7023, %v7112, 0.0
          %v7168 = vrot.slane %v7167, 4
          %v7169 = vadd.f32 %v7167, %v7168
          %v7170 = vrot.slane %v7169, 2
          %v7171 = vadd.f32 %v7169, %v7170
          %v7172 = vrot.slane %v7171, 1
          %v7173 = vadd.f32 %v7171, %v7172
          %v7174 = vsel %vm7023, %v7120, 0.0
          %v7175 = vrot.slane %v7174, 4
          %v7176 = vadd.f32 %v7174, %v7175
          %v7177 = vrot.slane %v7176, 2
          %v7178 = vadd.f32 %v7176, %v7177
          %v7179 = vrot.slane %v7178, 1
          %v7180 = vadd.f32 %v7178, %v7179
          %v7181 = vmul.f32 %v7131, %v7080
          %v7182 = vmul.f32 %v7138, %v7080
          %v7183 = vmul.f32 %v7145, %v7080
          %v7184 = vmul.f32 %v7152, %v7080
          %v7185 = vmul.f32 %v7159, %v7080
          %v7186 = vmul.f32 %v7166, %v7080
          %v7187 = vmul.f32 %v7173, %v7080
          %v7188 = vmul.f32 %v7180, %v7080
          %v7189 = vadd.f32 %v7181, 1e-05
          %v7190 = vadd.f32 %v7182, 1e-05
          %v7191 = vadd.f32 %v7183, 1e-05
          %v7192 = vadd.f32 %v7184, 1e-05
          %v7193 = vadd.f32 %v7185, 1e-05
          %v7194 = vadd.f32 %v7186, 1e-05
          %v7195 = vadd.f32 %v7187, 1e-05
          %v7196 = vadd.f32 %v7188, 1e-05
          %v7197 = vrsqrt.pop %v7189
          %v7198 = vrsqrt.pop %v7190
          %v7199 = vrsqrt.pop %v7191
          %v7200 = vrsqrt.pop %v7192
          %v7201 = vrsqrt.pop %v7193
          %v7202 = vrsqrt.pop %v7194
          %v7203 = vrsqrt.pop %v7195
          %v7204 = vrsqrt.pop %v7196
          %v7213 = vcombine.low %v7197, %v7198
          %v7214 = vcombine.low %v7199, %v7200
          %v7215 = vcombine.low %v7201, %v7202
          %v7216 = vcombine.low %v7203, %v7204
          %v7221 = vmul.f32 %v7105, %v7213
          %v7222 = vmul.f32 %v7106, %v7214
          %v7223 = vmul.f32 %v7107, %v7215
          %v7224 = vmul.f32 %v7108, %v7216
          %v7225 = vld [vmem:[#allocation20] sm:$0xff]
          %v7227 = vlaneseq
          %v7228 = vshrl.u32 %v7227, 7
          %v7229 = vsub.s32 0, %v7228
          %v7230 = vrot.slane %v7225, %v7229
          %v7231 = vlaneseq
          %v7232 = vshrl.u32 %v7231, 7
          %v7233 = vsub.s32 1, %v7232
          %v7234 = vrot.slane %v7225, %v7233
          %v7235 = vlaneseq
          %v7236 = vshrl.u32 %v7235, 7
          %v7237 = vsub.s32 2, %v7236
          %v7238 = vrot.slane %v7225, %v7237
          %v7239 = vlaneseq
          %v7240 = vshrl.u32 %v7239, 7
          %v7241 = vsub.s32 3, %v7240
          %v7242 = vrot.slane %v7225, %v7241
          %v7243 = vlaneseq
          %v7244 = vshrl.u32 %v7243, 7
          %v7245 = vsub.s32 4, %v7244
          %v7246 = vrot.slane %v7225, %v7245
          %v7247 = vlaneseq
          %v7248 = vshrl.u32 %v7247, 7
          %v7249 = vsub.s32 5, %v7248
          %v7250 = vrot.slane %v7225, %v7249
          %v7251 = vlaneseq
          %v7252 = vshrl.u32 %v7251, 7
          %v7253 = vsub.s32 6, %v7252
          %v7254 = vrot.slane %v7225, %v7253
          %v7255 = vlaneseq
          %v7256 = vshrl.u32 %v7255, 7
          %v7257 = vsub.s32 7, %v7256
          %v7258 = vrot.slane %v7225, %v7257
          %v7259 = vcombine.low %v7230, %v7234
          %v7260 = vcombine.low %v7238, %v7242
          %v7261 = vcombine.low %v7246, %v7250
          %v7262 = vcombine.low %v7254, %v7258
          %v7267 = vmul.f32 %v7221, %v7259
          %v7268 = vmul.f32 %v7222, %v7260
          %v7269 = vmul.f32 %v7223, %v7261
          %v7270 = vmul.f32 %v7224, %v7262
          %v7271 = vld [vmem:[#allocation21] sm:$0xff]
          %v7273 = vlaneseq
          %v7274 = vshrl.u32 %v7273, 7
          %v7275 = vsub.s32 0, %v7274
          %v7276 = vrot.slane %v7271, %v7275
          %v7277 = vlaneseq
          %v7278 = vshrl.u32 %v7277, 7
          %v7279 = vsub.s32 1, %v7278
          %v7280 = vrot.slane %v7271, %v7279
          %v7281 = vlaneseq
          %v7282 = vshrl.u32 %v7281, 7
          %v7283 = vsub.s32 2, %v7282
          %v7284 = vrot.slane %v7271, %v7283
          %v7285 = vlaneseq
          %v7286 = vshrl.u32 %v7285, 7
          %v7287 = vsub.s32 3, %v7286
          %v7288 = vrot.slane %v7271, %v7287
          %v7289 = vlaneseq
          %v7290 = vshrl.u32 %v7289, 7
          %v7291 = vsub.s32 4, %v7290
          %v7292 = vrot.slane %v7271, %v7291
          %v7293 = vlaneseq
          %v7294 = vshrl.u32 %v7293, 7
          %v7295 = vsub.s32 5, %v7294
          %v7296 = vrot.slane %v7271, %v7295
          %v7297 = vlaneseq
          %v7298 = vshrl.u32 %v7297, 7
          %v7299 = vsub.s32 6, %v7298
          %v7300 = vrot.slane %v7271, %v7299
          %v7301 = vlaneseq
          %v7302 = vshrl.u32 %v7301, 7
          %v7303 = vsub.s32 7, %v7302
          %v7304 = vrot.slane %v7271, %v7303
          %v7305 = vcombine.low %v7276, %v7280
          %v7306 = vcombine.low %v7284, %v7288
          %v7307 = vcombine.low %v7292, %v7296
          %v7308 = vcombine.low %v7300, %v7304
          %v7313 = vadd.f32 %v7267, %v7305
          %v7314 = vadd.f32 %v7268, %v7306
          %v7315 = vadd.f32 %v7269, %v7307
          %v7316 = vadd.f32 %v7270, %v7308
          %v7317 = vmul.f32 %v7313, 0.2
          %v7318 = vmul.f32 %v7314, 0.2
          %v7319 = vmul.f32 %v7315, 0.2
          %v7320 = vmul.f32 %v7316, 0.2
          %v7321 = vmax.f32 %v7313, %v7317
          %v7322 = vmax.f32 %v7314, %v7318
          %v7323 = vmax.f32 %v7315, %v7319
          %v7324 = vmax.f32 %v7316, %v7320
          %v7329 = vcombine.high %v7321, %v7321
          %v7330 = vcombine.high %v7322, %v7322
          %v7331 = vcombine.high %v7323, %v7323
          %v7332 = vcombine.high %v7324, %v7324
          %v7337 = vpack.c.bf16 %v7321, %v7321
          %v7338 = vpack.c.bf16 %v7329, %v7329
          %v7339 = vpack.c.bf16 %v7322, %v7322
          %v7340 = vpack.c.bf16 %v7330, %v7330
          %v7341 = vpack.c.bf16 %v7323, %v7323
          %v7342 = vpack.c.bf16 %v7331, %v7331
          %v7343 = vpack.c.bf16 %v7324, %v7324
          %v7344 = vpack.c.bf16 %v7332, %v7332
          %v7345 = vld [vmem:[#allocation22] sm:$0xf]
          %v7346 = vld [vmem:[#allocation22 + $0x4] sm:$0xf]
          %v7347 = vld [vmem:[#allocation22 + $0x8] sm:$0xf]
          %v7348 = vld [vmem:[#allocation22 + $0xc] sm:$0xf]
          %v7349 = vld [vmem:[#allocation22 + $0x10] sm:$0xf]
          %v7350 = vld [vmem:[#allocation22 + $0x14] sm:$0xf]
          %v7351 = vld [vmem:[#allocation22 + $0x18] sm:$0xf]
          %v7352 = vld [vmem:[#allocation22 + $0x1c] sm:$0xf]
          %v7353 = vld [vmem:[#allocation22 + $0x20] sm:$0xf]
          %v7354 = vld [vmem:[#allocation22 + $0x24] sm:$0xf]
          %v7355 = vld [vmem:[#allocation22 + $0x28] sm:$0xf]
          %v7356 = vld [vmem:[#allocation22 + $0x2c] sm:$0xf]
          %v7357 = vld [vmem:[#allocation22 + $0x30] sm:$0xf]
          %v7358 = vld [vmem:[#allocation22 + $0x34] sm:$0xf]
          %v7359 = vld [vmem:[#allocation22 + $0x38] sm:$0xf]
          %v7360 = vld [vmem:[#allocation22 + $0x3c] sm:$0xf]
          %v7361 = vld [vmem:[#allocation22 + $0x40] sm:$0xf]
          %v7362 = vld [vmem:[#allocation22 + $0x44] sm:$0xf]
          %v7363 = vld [vmem:[#allocation22 + $0x48] sm:$0xf]
          %v7364 = vld [vmem:[#allocation22 + $0x4c] sm:$0xf]
          %v7365 = vld [vmem:[#allocation22 + $0x50] sm:$0xf]
          %v7366 = vld [vmem:[#allocation22 + $0x54] sm:$0xf]
          %v7367 = vld [vmem:[#allocation22 + $0x58] sm:$0xf]
          %v7368 = vld [vmem:[#allocation22 + $0x5c] sm:$0xf]
          %v7369 = vld [vmem:[#allocation22 + $0x60] sm:$0xf]
          %v7370 = vld [vmem:[#allocation22 + $0x64] sm:$0xf]
          %v7371 = vld [vmem:[#allocation22 + $0x68] sm:$0xf]
          %v7372 = vld [vmem:[#allocation22 + $0x6c] sm:$0xf]
          %v7373 = vld [vmem:[#allocation22 + $0x70] sm:$0xf]
          %v7374 = vld [vmem:[#allocation22 + $0x74] sm:$0xf]
          %v7375 = vld [vmem:[#allocation22 + $0x78] sm:$0xf]
          %v7376 = vld [vmem:[#allocation22 + $0x7c] sm:$0xf]
          %v7377 = vld [vmem:[#allocation22 + $0x80] sm:$0xf]
          %v7378 = vld [vmem:[#allocation22 + $0x84] sm:$0xf]
          %v7379 = vld [vmem:[#allocation22 + $0x88] sm:$0xf]
          %v7380 = vld [vmem:[#allocation22 + $0x8c] sm:$0xf]
          %v7381 = vld [vmem:[#allocation22 + $0x90] sm:$0xf]
          %v7382 = vld [vmem:[#allocation22 + $0x94] sm:$0xf]
          %v7383 = vld [vmem:[#allocation22 + $0x98] sm:$0xf]
          %v7384 = vld [vmem:[#allocation22 + $0x9c] sm:$0xf]
          %v7385 = vld [vmem:[#allocation22 + $0xa0] sm:$0xf]
          %v7386 = vld [vmem:[#allocation22 + $0xa4] sm:$0xf]
          %v7387 = vld [vmem:[#allocation22 + $0xa8] sm:$0xf]
          %v7388 = vld [vmem:[#allocation22 + $0xac] sm:$0xf]
          %v7389 = vld [vmem:[#allocation22 + $0xb0] sm:$0xf]
          %v7390 = vld [vmem:[#allocation22 + $0xb4] sm:$0xf]
          %v7391 = vld [vmem:[#allocation22 + $0xb8] sm:$0xf]
          %v7392 = vld [vmem:[#allocation22 + $0xbc] sm:$0xf]
          %v7393 = vld [vmem:[#allocation22 + $0xc0] sm:$0xf]
          %v7394 = vld [vmem:[#allocation22 + $0xc4] sm:$0xf]
          %v7395 = vld [vmem:[#allocation22 + $0xc8] sm:$0xf]
          %v7396 = vld [vmem:[#allocation22 + $0xcc] sm:$0xf]
          %v7397 = vld [vmem:[#allocation22 + $0xd0] sm:$0xf]
          %v7398 = vld [vmem:[#allocation22 + $0xd4] sm:$0xf]
          %v7399 = vld [vmem:[#allocation22 + $0xd8] sm:$0xf]
          %v7400 = vld [vmem:[#allocation22 + $0xdc] sm:$0xf]
          %v7401 = vld [vmem:[#allocation22 + $0xe0] sm:$0xf]
          %v7402 = vld [vmem:[#allocation22 + $0xe4] sm:$0xf]
          %v7403 = vld [vmem:[#allocation22 + $0xe8] sm:$0xf]
          %v7404 = vld [vmem:[#allocation22 + $0xec] sm:$0xf]
          %v7405 = vld [vmem:[#allocation22 + $0xf0] sm:$0xf]
          %v7406 = vld [vmem:[#allocation22 + $0xf4] sm:$0xf]
          %v7407 = vld [vmem:[#allocation22 + $0xf8] sm:$0xf]
          %v7408 = vld [vmem:[#allocation22 + $0xfc] sm:$0xf]
          %v7409 = vld [vmem:[#allocation22 + $0x100] sm:$0xf]
          %v7410 = vld [vmem:[#allocation22 + $0x104] sm:$0xf]
          %v7411 = vld [vmem:[#allocation22 + $0x108] sm:$0xf]
          %v7412 = vld [vmem:[#allocation22 + $0x10c] sm:$0xf]
          %v7413 = vld [vmem:[#allocation22 + $0x110] sm:$0xf]
          %v7414 = vld [vmem:[#allocation22 + $0x114] sm:$0xf]
          %v7415 = vld [vmem:[#allocation22 + $0x118] sm:$0xf]
          %v7416 = vld [vmem:[#allocation22 + $0x11c] sm:$0xf]
          %v7417 = vld [vmem:[#allocation22 + $0x120] sm:$0xf]
          %v7418 = vld [vmem:[#allocation22 + $0x124] sm:$0xf]
          %v7419 = vld [vmem:[#allocation22 + $0x128] sm:$0xf]
          %v7420 = vld [vmem:[#allocation22 + $0x12c] sm:$0xf]
          %v7421 = vld [vmem:[#allocation22 + $0x130] sm:$0xf]
          %v7422 = vld [vmem:[#allocation22 + $0x134] sm:$0xf]
          %v7423 = vld [vmem:[#allocation22 + $0x138] sm:$0xf]
          %v7424 = vld [vmem:[#allocation22 + $0x13c] sm:$0xf]
          %v7425 = vld [vmem:[#allocation22 + $0x140] sm:$0xf]
          %v7426 = vld [vmem:[#allocation22 + $0x144] sm:$0xf]
          %v7427 = vld [vmem:[#allocation22 + $0x148] sm:$0xf]
          %v7428 = vld [vmem:[#allocation22 + $0x14c] sm:$0xf]
          %v7429 = vld [vmem:[#allocation22 + $0x150] sm:$0xf]
          %v7430 = vld [vmem:[#allocation22 + $0x154] sm:$0xf]
          %v7431 = vld [vmem:[#allocation22 + $0x158] sm:$0xf]
          %v7432 = vld [vmem:[#allocation22 + $0x15c] sm:$0xf]
          %v7433 = vld [vmem:[#allocation22 + $0x160] sm:$0xf]
          %v7434 = vld [vmem:[#allocation22 + $0x164] sm:$0xf]
          %v7435 = vld [vmem:[#allocation22 + $0x168] sm:$0xf]
          %v7436 = vld [vmem:[#allocation22 + $0x16c] sm:$0xf]
          %v7437 = vld [vmem:[#allocation22 + $0x170] sm:$0xf]
          %v7438 = vld [vmem:[#allocation22 + $0x174] sm:$0xf]
          %v7439 = vld [vmem:[#allocation22 + $0x178] sm:$0xf]
          %v7440 = vld [vmem:[#allocation22 + $0x17c] sm:$0xf]
          %v7441 = vld [vmem:[#allocation22 + $0x180] sm:$0xf]
          %v7442 = vld [vmem:[#allocation22 + $0x184] sm:$0xf]
          %v7443 = vld [vmem:[#allocation22 + $0x188] sm:$0xf]
          %v7444 = vld [vmem:[#allocation22 + $0x18c] sm:$0xf]
          %v7445 = vld [vmem:[#allocation22 + $0x190] sm:$0xf]
          %v7446 = vld [vmem:[#allocation22 + $0x194] sm:$0xf]
          %v7447 = vld [vmem:[#allocation22 + $0x198] sm:$0xf]
          %v7448 = vld [vmem:[#allocation22 + $0x19c] sm:$0xf]
          %v7449 = vld [vmem:[#allocation22 + $0x1a0] sm:$0xf]
          %v7450 = vld [vmem:[#allocation22 + $0x1a4] sm:$0xf]
          %v7451 = vld [vmem:[#allocation22 + $0x1a8] sm:$0xf]
          %v7452 = vld [vmem:[#allocation22 + $0x1ac] sm:$0xf]
          %v7453 = vld [vmem:[#allocation22 + $0x1b0] sm:$0xf]
          %v7454 = vld [vmem:[#allocation22 + $0x1b4] sm:$0xf]
          %v7455 = vld [vmem:[#allocation22 + $0x1b8] sm:$0xf]
          %v7456 = vld [vmem:[#allocation22 + $0x1bc] sm:$0xf]
          %v7457 = vld [vmem:[#allocation22 + $0x1c0] sm:$0xf]
          %v7458 = vld [vmem:[#allocation22 + $0x1c4] sm:$0xf]
          %v7459 = vld [vmem:[#allocation22 + $0x1c8] sm:$0xf]
          %v7460 = vld [vmem:[#allocation22 + $0x1cc] sm:$0xf]
          %v7461 = vld [vmem:[#allocation22 + $0x1d0] sm:$0xf]
          %v7462 = vld [vmem:[#allocation22 + $0x1d4] sm:$0xf]
          %v7463 = vld [vmem:[#allocation22 + $0x1d8] sm:$0xf]
          %v7464 = vld [vmem:[#allocation22 + $0x1dc] sm:$0xf]
          %v7465 = vld [vmem:[#allocation22 + $0x1e0] sm:$0xf]
          %v7466 = vld [vmem:[#allocation22 + $0x1e4] sm:$0xf]
          %v7467 = vld [vmem:[#allocation22 + $0x1e8] sm:$0xf]
          %v7468 = vld [vmem:[#allocation22 + $0x1ec] sm:$0xf]
          %v7469 = vld [vmem:[#allocation22 + $0x1f0] sm:$0xf]
          %v7470 = vld [vmem:[#allocation22 + $0x1f4] sm:$0xf]
          %v7471 = vld [vmem:[#allocation22 + $0x1f8] sm:$0xf]
          %v7472 = vld [vmem:[#allocation22 + $0x1fc] sm:$0xf]
          %v7473 = vld [vmem:[#allocation24] sm:$0x1]
          %v7475 = vlaneseq
          %v7476 = vshrl.u32 %v7475, 7
          %v7477 = vsub.s32 0, %v7476
          %v7478 = vrot.slane %v7473, %v7477
          %v7608 = vunpack.c.l.b16 %v7345
          %v7609 = vunpack.c.l.b16 %v7346
          %v7610 = vunpack.c.l.b16 %v7347
          %v7611 = vunpack.c.l.b16 %v7348
          %v7612 = vunpack.c.l.b16 %v7349
          %v7613 = vunpack.c.l.b16 %v7350
          %v7614 = vunpack.c.l.b16 %v7351
          %v7615 = vunpack.c.l.b16 %v7352
          %v7616 = vunpack.c.l.b16 %v7353
          %v7617 = vunpack.c.l.b16 %v7354
          %v7618 = vunpack.c.l.b16 %v7355
          %v7619 = vunpack.c.l.b16 %v7356
          %v7620 = vunpack.c.l.b16 %v7357
          %v7621 = vunpack.c.l.b16 %v7358
          %v7622 = vunpack.c.l.b16 %v7359
          %v7623 = vunpack.c.l.b16 %v7360
          %v7624 = vunpack.c.l.b16 %v7361
          %v7625 = vunpack.c.l.b16 %v7362
          %v7626 = vunpack.c.l.b16 %v7363
          %v7627 = vunpack.c.l.b16 %v7364
          %v7628 = vunpack.c.l.b16 %v7365
          %v7629 = vunpack.c.l.b16 %v7366
          %v7630 = vunpack.c.l.b16 %v7367
          %v7631 = vunpack.c.l.b16 %v7368
          %v7632 = vunpack.c.l.b16 %v7369
          %v7633 = vunpack.c.l.b16 %v7370
          %v7634 = vunpack.c.l.b16 %v7371
          %v7635 = vunpack.c.l.b16 %v7372
          %v7636 = vunpack.c.l.b16 %v7373
          %v7637 = vunpack.c.l.b16 %v7374
          %v7638 = vunpack.c.l.b16 %v7375
          %v7639 = vunpack.c.l.b16 %v7376
          %v7640 = vunpack.c.l.b16 %v7377
          %v7641 = vunpack.c.l.b16 %v7378
          %v7642 = vunpack.c.l.b16 %v7379
          %v7643 = vunpack.c.l.b16 %v7380
          %v7644 = vunpack.c.l.b16 %v7381
          %v7645 = vunpack.c.l.b16 %v7382
          %v7646 = vunpack.c.l.b16 %v7383
          %v7647 = vunpack.c.l.b16 %v7384
          %v7648 = vunpack.c.l.b16 %v7385
          %v7649 = vunpack.c.l.b16 %v7386
          %v7650 = vunpack.c.l.b16 %v7387
          %v7651 = vunpack.c.l.b16 %v7388
          %v7652 = vunpack.c.l.b16 %v7389
          %v7653 = vunpack.c.l.b16 %v7390
          %v7654 = vunpack.c.l.b16 %v7391
          %v7655 = vunpack.c.l.b16 %v7392
          %v7656 = vunpack.c.l.b16 %v7393
          %v7657 = vunpack.c.l.b16 %v7394
          %v7658 = vunpack.c.l.b16 %v7395
          %v7659 = vunpack.c.l.b16 %v7396
          %v7660 = vunpack.c.l.b16 %v7397
          %v7661 = vunpack.c.l.b16 %v7398
          %v7662 = vunpack.c.l.b16 %v7399
          %v7663 = vunpack.c.l.b16 %v7400
          %v7664 = vunpack.c.l.b16 %v7401
          %v7665 = vunpack.c.l.b16 %v7402
          %v7666 = vunpack.c.l.b16 %v7403
          %v7667 = vunpack.c.l.b16 %v7404
          %v7668 = vunpack.c.l.b16 %v7405
          %v7669 = vunpack.c.l.b16 %v7406
          %v7670 = vunpack.c.l.b16 %v7407
          %v7671 = vunpack.c.l.b16 %v7408
          %v7672 = vunpack.c.l.b16 %v7409
          %v7673 = vunpack.c.l.b16 %v7410
          %v7674 = vunpack.c.l.b16 %v7411
          %v7675 = vunpack.c.l.b16 %v7412
          %v7676 = vunpack.c.l.b16 %v7413
          %v7677 = vunpack.c.l.b16 %v7414
          %v7678 = vunpack.c.l.b16 %v7415
          %v7679 = vunpack.c.l.b16 %v7416
          %v7680 = vunpack.c.l.b16 %v7417
          %v7681 = vunpack.c.l.b16 %v7418
          %v7682 = vunpack.c.l.b16 %v7419
          %v7683 = vunpack.c.l.b16 %v7420
          %v7684 = vunpack.c.l.b16 %v7421
          %v7685 = vunpack.c.l.b16 %v7422
          %v7686 = vunpack.c.l.b16 %v7423
          %v7687 = vunpack.c.l.b16 %v7424
          %v7688 = vunpack.c.l.b16 %v7425
          %v7689 = vunpack.c.l.b16 %v7426
          %v7690 = vunpack.c.l.b16 %v7427
          %v7691 = vunpack.c.l.b16 %v7428
          %v7692 = vunpack.c.l.b16 %v7429
          %v7693 = vunpack.c.l.b16 %v7430
          %v7694 = vunpack.c.l.b16 %v7431
          %v7695 = vunpack.c.l.b16 %v7432
          %v7696 = vunpack.c.l.b16 %v7433
          %v7697 = vunpack.c.l.b16 %v7434
          %v7698 = vunpack.c.l.b16 %v7435
          %v7699 = vunpack.c.l.b16 %v7436
          %v7700 = vunpack.c.l.b16 %v7437
          %v7701 = vunpack.c.l.b16 %v7438
          %v7702 = vunpack.c.l.b16 %v7439
          %v7703 = vunpack.c.l.b16 %v7440
          %v7704 = vunpack.c.l.b16 %v7441
          %v7705 = vunpack.c.l.b16 %v7442
          %v7706 = vunpack.c.l.b16 %v7443
          %v7707 = vunpack.c.l.b16 %v7444
          %v7708 = vunpack.c.l.b16 %v7445
          %v7709 = vunpack.c.l.b16 %v7446
          %v7710 = vunpack.c.l.b16 %v7447
          %v7711 = vunpack.c.l.b16 %v7448
          %v7712 = vunpack.c.l.b16 %v7449
          %v7713 = vunpack.c.l.b16 %v7450
          %v7714 = vunpack.c.l.b16 %v7451
          %v7715 = vunpack.c.l.b16 %v7452
          %v7716 = vunpack.c.l.b16 %v7453
          %v7717 = vunpack.c.l.b16 %v7454
          %v7718 = vunpack.c.l.b16 %v7455
          %v7719 = vunpack.c.l.b16 %v7456
          %v7720 = vunpack.c.l.b16 %v7457
          %v7721 = vunpack.c.l.b16 %v7458
          %v7722 = vunpack.c.l.b16 %v7459
          %v7723 = vunpack.c.l.b16 %v7460
          %v7724 = vunpack.c.l.b16 %v7461
          %v7725 = vunpack.c.l.b16 %v7462
          %v7726 = vunpack.c.l.b16 %v7463
          %v7727 = vunpack.c.l.b16 %v7464
          %v7728 = vunpack.c.l.b16 %v7465
          %v7729 = vunpack.c.l.b16 %v7466
          %v7730 = vunpack.c.l.b16 %v7467
          %v7731 = vunpack.c.l.b16 %v7468
          %v7732 = vunpack.c.l.b16 %v7469
          %v7733 = vunpack.c.l.b16 %v7470
          %v7734 = vunpack.c.l.b16 %v7471
          %v7735 = vunpack.c.l.b16 %v7472
          %v7736 = vpack.c.b16 %v7609, %v7608
          %v7737 = vpack.c.b16 %v7611, %v7610
          %v7738 = vpack.c.b16 %v7613, %v7612
          %v7739 = vpack.c.b16 %v7615, %v7614
          %v7740 = vpack.c.b16 %v7617, %v7616
          %v7741 = vpack.c.b16 %v7619, %v7618
          %v7742 = vpack.c.b16 %v7621, %v7620
          %v7743 = vpack.c.b16 %v7623, %v7622
          %v7744 = vpack.c.b16 %v7625, %v7624
          %v7745 = vpack.c.b16 %v7627, %v7626
          %v7746 = vpack.c.b16 %v7629, %v7628
          %v7747 = vpack.c.b16 %v7631, %v7630
          %v7748 = vpack.c.b16 %v7633, %v7632
          %v7749 = vpack.c.b16 %v7635, %v7634
          %v7750 = vpack.c.b16 %v7637, %v7636
          %v7751 = vpack.c.b16 %v7639, %v7638
          %v7752 = vpack.c.b16 %v7641, %v7640
          %v7753 = vpack.c.b16 %v7643, %v7642
          %v7754 = vpack.c.b16 %v7645, %v7644
          %v7755 = vpack.c.b16 %v7647, %v7646
          %v7756 = vpack.c.b16 %v7649, %v7648
          %v7757 = vpack.c.b16 %v7651, %v7650
          %v7758 = vpack.c.b16 %v7653, %v7652
          %v7759 = vpack.c.b16 %v7655, %v7654
          %v7760 = vpack.c.b16 %v7657, %v7656
          %v7761 = vpack.c.b16 %v7659, %v7658
          %v7762 = vpack.c.b16 %v7661, %v7660
          %v7763 = vpack.c.b16 %v7663, %v7662
          %v7764 = vpack.c.b16 %v7665, %v7664
          %v7765 = vpack.c.b16 %v7667, %v7666
          %v7766 = vpack.c.b16 %v7669, %v7668
          %v7767 = vpack.c.b16 %v7671, %v7670
          %v7768 = vpack.c.b16 %v7673, %v7672
          %v7769 = vpack.c.b16 %v7675, %v7674
          %v7770 = vpack.c.b16 %v7677, %v7676
          %v7771 = vpack.c.b16 %v7679, %v7678
          %v7772 = vpack.c.b16 %v7681, %v7680
          %v7773 = vpack.c.b16 %v7683, %v7682
          %v7774 = vpack.c.b16 %v7685, %v7684
          %v7775 = vpack.c.b16 %v7687, %v7686
          %v7776 = vpack.c.b16 %v7689, %v7688
          %v7777 = vpack.c.b16 %v7691, %v7690
          %v7778 = vpack.c.b16 %v7693, %v7692
          %v7779 = vpack.c.b16 %v7695, %v7694
          %v7780 = vpack.c.b16 %v7697, %v7696
          %v7781 = vpack.c.b16 %v7699, %v7698
          %v7782 = vpack.c.b16 %v7701, %v7700
          %v7783 = vpack.c.b16 %v7703, %v7702
          %v7784 = vpack.c.b16 %v7705, %v7704
          %v7785 = vpack.c.b16 %v7707, %v7706
          %v7786 = vpack.c.b16 %v7709, %v7708
          %v7787 = vpack.c.b16 %v7711, %v7710
          %v7788 = vpack.c.b16 %v7713, %v7712
          %v7789 = vpack.c.b16 %v7715, %v7714
          %v7790 = vpack.c.b16 %v7717, %v7716
          %v7791 = vpack.c.b16 %v7719, %v7718
          %v7792 = vpack.c.b16 %v7721, %v7720
          %v7793 = vpack.c.b16 %v7723, %v7722
          %v7794 = vpack.c.b16 %v7725, %v7724
          %v7795 = vpack.c.b16 %v7727, %v7726
          %v7796 = vpack.c.b16 %v7729, %v7728
          %v7797 = vpack.c.b16 %v7731, %v7730
          %v7798 = vpack.c.b16 %v7733, %v7732
          %v7799 = vpack.c.b16 %v7735, %v7734
          %7864 = vmatprep.subr.bf16.mxu0 0
          %7865 = vmatpush1.bf16.msra.mxu0 %v7743
          %7866 = vmatprep.subr.bf16.mxu0 0
          %7867 = vmatpush1.bf16.msra.mxu0 %v7742
          %7868 = vmatprep.subr.bf16.mxu0 0
          %7869 = vmatpush1.bf16.msra.mxu0 %v7741
          %7870 = vmatprep.subr.bf16.mxu0 0
          %7871 = vmatpush1.bf16.msra.mxu0 %v7740
          %7872 = vmatprep.subr.bf16.mxu0 0
          %7873 = vmatpush1.bf16.msra.mxu0 %v7739
          %7874 = vmatprep.subr.bf16.mxu0 0
          %7875 = vmatpush1.bf16.msra.mxu0 %v7738
          %7876 = vmatprep.subr.bf16.mxu0 0
          %7877 = vmatpush1.bf16.msra.mxu0 %v7737
          %7878 = vmatprep.subr.bf16.mxu0 0
          %7879 = vmatpush1.bf16.msra.mxu0 %v7736
          %7880 = vmatprep.subr.bf16.mxu0 0
          %7881 = vmatpush2.bf16.msra.mxu0 %v7751
          %7882 = vmatprep.subr.bf16.mxu0 0
          %7883 = vmatpush2.bf16.msra.mxu0 %v7750
          %7884 = vmatprep.subr.bf16.mxu0 0
          %7885 = vmatpush2.bf16.msra.mxu0 %v7749
          %7886 = vmatprep.subr.bf16.mxu0 0
          %7887 = vmatpush2.bf16.msra.mxu0 %v7748
          %7888 = vmatprep.subr.bf16.mxu0 0
          %7889 = vmatpush2.bf16.msra.mxu0 %v7747
          %7890 = vmatprep.subr.bf16.mxu0 0
          %7891 = vmatpush2.bf16.msra.mxu0 %v7746
          %7892 = vmatprep.subr.bf16.mxu0 0
          %7893 = vmatpush2.bf16.msra.mxu0 %v7745
          %7894 = vmatprep.subr.bf16.mxu0 0
          %7895 = vmatpush2.bf16.msra.mxu0 %v7744
          %7896 = vmatprep.mubr.bf16.mxu0 %v7338
          %7897 = vmatmul.mubr.bf16.gmra.mxu0 %v7337
          %v7898 = vpop.f32.mrf.mxu0
          %v7899 = vadd.f32 %v7478, %v7898
          %v7900 = vpop.f32.mrf.mxu0
          %v7901 = vpop.f32.mrf.mxu0
          %v7902 = vpop.f32.mrf.mxu0
          %7903 = vdwg.mxu0
          %7904 = vmatprep.subr.bf16.mxu0 0
          %7905 = vmatpush1.bf16.msra.mxu0 %v7759
          %7906 = vmatprep.subr.bf16.mxu0 0
          %7907 = vmatpush1.bf16.msra.mxu0 %v7758
          %7908 = vmatprep.subr.bf16.mxu0 0
          %7909 = vmatpush1.bf16.msra.mxu0 %v7757
          %7910 = vmatprep.subr.bf16.mxu0 0
          %7911 = vmatpush1.bf16.msra.mxu0 %v7756
          %7912 = vmatprep.subr.bf16.mxu0 0
          %7913 = vmatpush1.bf16.msra.mxu0 %v7755
          %7914 = vmatprep.subr.bf16.mxu0 0
          %7915 = vmatpush1.bf16.msra.mxu0 %v7754
          %7916 = vmatprep.subr.bf16.mxu0 0
          %7917 = vmatpush1.bf16.msra.mxu0 %v7753
          %7918 = vmatprep.subr.bf16.mxu0 0
          %7919 = vmatpush1.bf16.msra.mxu0 %v7752
          %7920 = vmatprep.subr.bf16.mxu0 0
          %7921 = vmatpush2.bf16.msra.mxu0 %v7767
          %7922 = vmatprep.subr.bf16.mxu0 0
          %7923 = vmatpush2.bf16.msra.mxu0 %v7766
          %7924 = vmatprep.subr.bf16.mxu0 0
          %7925 = vmatpush2.bf16.msra.mxu0 %v7765
          %7926 = vmatprep.subr.bf16.mxu0 0
          %7927 = vmatpush2.bf16.msra.mxu0 %v7764
          %7928 = vmatprep.subr.bf16.mxu0 0
          %7929 = vmatpush2.bf16.msra.mxu0 %v7763
          %7930 = vmatprep.subr.bf16.mxu0 0
          %7931 = vmatpush2.bf16.msra.mxu0 %v7762
          %7932 = vmatprep.subr.bf16.mxu0 0
          %7933 = vmatpush2.bf16.msra.mxu0 %v7761
          %7934 = vmatprep.subr.bf16.mxu0 0
          %7935 = vmatpush2.bf16.msra.mxu0 %v7760
          %7936 = vmatprep.mubr.bf16.mxu0 %v7340
          %7937 = vmatmul.mubr.bf16.gmra.mxu0 %v7339
          %v7938 = vpop.f32.mrf.mxu0
          %v7939 = vadd.f32 %v7899, %v7938
          %v7940 = vpop.f32.mrf.mxu0
          %v7941 = vpop.f32.mrf.mxu0
          %v7942 = vpop.f32.mrf.mxu0
          %7943 = vdwg.mxu0
          %7944 = vmatprep.subr.bf16.mxu0 0
          %7945 = vmatpush1.bf16.msra.mxu0 %v7775
          %7946 = vmatprep.subr.bf16.mxu0 0
          %7947 = vmatpush1.bf16.msra.mxu0 %v7774
          %7948 = vmatprep.subr.bf16.mxu0 0
          %7949 = vmatpush1.bf16.msra.mxu0 %v7773
          %7950 = vmatprep.subr.bf16.mxu0 0
          %7951 = vmatpush1.bf16.msra.mxu0 %v7772
          %7952 = vmatprep.subr.bf16.mxu0 0
          %7953 = vmatpush1.bf16.msra.mxu0 %v7771
          %7954 = vmatprep.subr.bf16.mxu0 0
          %7955 = vmatpush1.bf16.msra.mxu0 %v7770
          %7956 = vmatprep.subr.bf16.mxu0 0
          %7957 = vmatpush1.bf16.msra.mxu0 %v7769
          %7958 = vmatprep.subr.bf16.mxu0 0
          %7959 = vmatpush1.bf16.msra.mxu0 %v7768
          %7960 = vmatprep.subr.bf16.mxu0 0
          %7961 = vmatpush2.bf16.msra.mxu0 %v7783
          %7962 = vmatprep.subr.bf16.mxu0 0
          %7963 = vmatpush2.bf16.msra.mxu0 %v7782
          %7964 = vmatprep.subr.bf16.mxu0 0
          %7965 = vmatpush2.bf16.msra.mxu0 %v7781
          %7966 = vmatprep.subr.bf16.mxu0 0
          %7967 = vmatpush2.bf16.msra.mxu0 %v7780
          %7968 = vmatprep.subr.bf16.mxu0 0
          %7969 = vmatpush2.bf16.msra.mxu0 %v7779
          %7970 = vmatprep.subr.bf16.mxu0 0
          %7971 = vmatpush2.bf16.msra.mxu0 %v7778
          %7972 = vmatprep.subr.bf16.mxu0 0
          %7973 = vmatpush2.bf16.msra.mxu0 %v7777
          %7974 = vmatprep.subr.bf16.mxu0 0
          %7975 = vmatpush2.bf16.msra.mxu0 %v7776
          %7976 = vmatprep.mubr.bf16.mxu0 %v7342
          %7977 = vmatmul.mubr.bf16.gmra.mxu0 %v7341
          %v7978 = vpop.f32.mrf.mxu0
          %v7979 = vadd.f32 %v7939, %v7978
          %v7980 = vpop.f32.mrf.mxu0
          %v7981 = vpop.f32.mrf.mxu0
          %v7982 = vpop.f32.mrf.mxu0
          %7983 = vdwg.mxu0
          %7984 = vmatprep.subr.bf16.mxu0 0
          %7985 = vmatpush1.bf16.msra.mxu0 %v7791
          %7986 = vmatprep.subr.bf16.mxu0 0
          %7987 = vmatpush1.bf16.msra.mxu0 %v7790
          %7988 = vmatprep.subr.bf16.mxu0 0
          %7989 = vmatpush1.bf16.msra.mxu0 %v7789
          %7990 = vmatprep.subr.bf16.mxu0 0
          %7991 = vmatpush1.bf16.msra.mxu0 %v7788
          %7992 = vmatprep.subr.bf16.mxu0 0
          %7993 = vmatpush1.bf16.msra.mxu0 %v7787
          %7994 = vmatprep.subr.bf16.mxu0 0
          %7995 = vmatpush1.bf16.msra.mxu0 %v7786
          %7996 = vmatprep.subr.bf16.mxu0 0
          %7997 = vmatpush1.bf16.msra.mxu0 %v7785
          %7998 = vmatprep.subr.bf16.mxu0 0
          %7999 = vmatpush1.bf16.msra.mxu0 %v7784
          %8000 = vmatprep.subr.bf16.mxu0 0
          %8001 = vmatpush2.bf16.msra.mxu0 %v7799
          %8002 = vmatprep.subr.bf16.mxu0 0
          %8003 = vmatpush2.bf16.msra.mxu0 %v7798
          %8004 = vmatprep.subr.bf16.mxu0 0
          %8005 = vmatpush2.bf16.msra.mxu0 %v7797
          %8006 = vmatprep.subr.bf16.mxu0 0
          %8007 = vmatpush2.bf16.msra.mxu0 %v7796
          %8008 = vmatprep.subr.bf16.mxu0 0
          %8009 = vmatpush2.bf16.msra.mxu0 %v7795
          %8010 = vmatprep.subr.bf16.mxu0 0
          %8011 = vmatpush2.bf16.msra.mxu0 %v7794
          %8012 = vmatprep.subr.bf16.mxu0 0
          %8013 = vmatpush2.bf16.msra.mxu0 %v7793
          %8014 = vmatprep.subr.bf16.mxu0 0
          %8015 = vmatpush2.bf16.msra.mxu0 %v7792
          %8016 = vmatprep.mubr.bf16.mxu0 %v7344
          %8017 = vmatmul.mubr.bf16.gmra.mxu0 %v7343
          %v8018 = vpop.f32.mrf.mxu0
          %v8019 = vadd.f32 %v7979, %v8018
          %v8020 = vpop.f32.mrf.mxu0
          %v8021 = vpop.f32.mrf.mxu0
          %v8022 = vpop.f32.mrf.mxu0
          %8023 = vdwg.mxu0
          %v8024 = vxor.u32 %v8019, 2147483648
          %v8025 = vmul.f32 %v8024, 1.442695
          %v8026 = vpow.pop %v8025
          %v8027 = vadd.f32 %v8026, 1.0
          %v8028 = vrcp.pop %v8027
          %v8029 = vmul.f32 1.0, %v8028
          %8030 = vst [vmem:[%s13] sm:$0xf] %v8029
        $region128: #{discriminator_forward.1} parent=71 // pred_fallthru
          _
        // Predicated region
        $region129: #{discriminator_forward.1} parent=71 // pred_check
          %p8031 = pneg %p320
        $region130: #{discriminator_forward.1} parent=71 // pred_check_branch
          %8033 = sbr.rel (%p8031) target = $region132
        $region131: #{discriminator_forward.1} parent=71 // pred_region
          _
        $region132: #{discriminator_forward.1} parent=71 // pred_fallthru
          _
        // Predicated region
        $region133: #{discriminator_forward.1} parent=71 // pred_check
          %p8034 = pneg %p320
        $region134: #{discriminator_forward.1} parent=71 // pred_check_branch
          %8036 = sbr.rel (%p8034) target = $region136
        $region135: #{discriminator_forward.1} parent=71 // pred_region
          _
        $region136: #{discriminator_forward.1} parent=71 // pred_fallthru
          _
      $region72: #{discriminator_forward.1} parent=5 // pred_fallthru
        _
      %p8037 = scmp.le.s32.totalorder 2, %s24
      // Predicated region
      $region137: #{discriminator_forward.1} parent=5 // pred_check
        %p8038 = pneg %p8037
      $region138: #{discriminator_forward.1} parent=5 // pred_check_branch
        %8040 = sbr.rel (%p8038) target = $region140
      $region139: #{discriminator_forward.1} parent=5 // pred_region
        %s8041 = ssub.s32 %s24, 2
      $region140: #{discriminator_forward.1} parent=5 // pred_fallthru
        _
    $region6: #{discriminator_forward.1} parent=1 // loop_footer
      %s28 = sadd.s32 1, %s24
    $region7: #{discriminator_forward.1} parent=1 // loop_footer_branch
      %23 = sbr.rel target = $region3
    $region8: #{discriminator_forward.1} parent=1 // loop_exit
      _
    %8042 = vsyncpa [#allocation9], 1
    %s8043 = scalar_lea.sflag [#allocation9], 1
    %8044 = vsyncpa %s8043, 1
    %8045 = vsyncpa [#allocation11], 1
    %8046 = vsyncpa [#allocation14], 1
    %8047 = vsyncpa [#allocation17], 1
    %8048 = vsyncpa [#allocation23], 1

</llo_original>
